<compile_context>
chip_gen: v6e
topology: v6e:2x2x1
jax: 0.10.0
libtpu: 0.0.40
codegen_flags: <defaults>
</compile_context>

<pallas_src>
import jax
import jax.numpy as jnp
import numpy as np
from jax.experimental import pallas as pl
from jax.experimental.pallas import tpu as pltpu

INPUT = 768
HIDDEN = 128
NUM_CLASSES = 2


def fused_lstm_fc_kernel(x_ref, wih0_ref, b0_ref, whh0_hbm, wl1_hbm, b1_ref,
                         wfc_hbm, bfc_ref, out_ref,
                         whh0_v, wl1_v, wfc_v, sems):
    """Whole forward pass in one shot.

    x_ref:     (B, T, 768)  f32 batch-first input               [VMEM]
    wih0_ref:  (768, 512)   bf16 W_ih_l0^T                      [VMEM]
    b0_ref:    (1, 512)     f32  b_ih_l0 + b_hh_l0              [VMEM]
    whh0_hbm:  (128, 512)   bf16 W_hh_l0^T                      [HBM, manual DMA]
    wl1_hbm:   (256, 512)   bf16 concat(W_ih_l1^T, W_hh_l1^T)   [HBM, manual DMA]
    b1_ref:    (1, 512)     f32  b_ih_l1 + b_hh_l1              [VMEM]
    wfc_hbm:   (T*128, 2)   bf16 W_fc^T                         [HBM, manual DMA]
    bfc_ref:   (1, 2)       f32                                 [VMEM]
    out_ref:   (B, 2)       f32
    """
    B, T, _ = x_ref.shape

    # ---- Kick off weight DMAs so they overlap with the hoisted projection ----
    cp_whh0 = pltpu.make_async_copy(whh0_hbm, whh0_v, sems.at[0])
    cp_wl1 = pltpu.make_async_copy(wl1_hbm, wl1_v, sems.at[1])
    cp_wfc = pltpu.make_async_copy(wfc_hbm, wfc_v, sems.at[2])
    cp_whh0.start()
    cp_wl1.start()
    cp_wfc.start()

    # ---- Hoisted input projection: one (B*T, 768) x (768, 512) bf16 matmul ----
    x_all = x_ref[...].reshape(B * T, INPUT).astype(jnp.bfloat16)
    pre0 = (jnp.dot(x_all, wih0_ref[...], preferred_element_type=jnp.float32)
            + b0_ref[...])                               # (B*T, 4H) f32
    pre0 = pre0.reshape(B, T, 4 * HIDDEN)
    # Per-step layer-0 pre-activations; static slices, no loop-carried deps, so
    # the scheduler hoists them off the serial recurrence chain.
    pre0_t = [pre0[:, t, :] for t in range(T)]

    # Recurrence weights must be resident before step 0.
    cp_whh0.wait()
    cp_wl1.wait()
    whh0 = whh0_v[...]                                   # (128, 512) bf16
    wl1 = wl1_v[...]                                     # (256, 512) bf16
    b1 = b1_ref[...]                                     # (1, 512)   f32

    def gates_to_hc(gates, c):
        # PyTorch gate layout: [i | f | g | o], each HIDDEN wide. All math f32.
        i = jax.nn.sigmoid(gates[:, 0 * HIDDEN:1 * HIDDEN])
        f = jax.nn.sigmoid(gates[:, 1 * HIDDEN:2 * HIDDEN])
        g = jnp.tanh(gates[:, 2 * HIDDEN:3 * HIDDEN])
        o = jax.nn.sigmoid(gates[:, 3 * HIDDEN:4 * HIDDEN])
        c_new = f * c + i * g
        h_new = o * jnp.tanh(c_new)
        return h_new, c_new

    zeros = jnp.zeros((B, HIDDEN), jnp.float32)
    h0, c0, h1, c1 = zeros, zeros, zeros, zeros

    hs = []
    # Strictly serial in t; fully unrolled (T is static and small).
    for t in range(T):
        g0 = pre0_t[t] + jnp.dot(h0.astype(jnp.bfloat16), whh0,
                                 preferred_element_type=jnp.float32)
        h0, c0 = gates_to_hc(g0, c0)

        # Folded layer-1 recurrence: [h0 | h1] @ [W_ih_l1^T ; W_hh_l1^T], K=256.
        h01 = jnp.concatenate([h0, h1], axis=-1).astype(jnp.bfloat16)
        g1 = jnp.dot(h01, wl1, preferred_element_type=jnp.float32) + b1
        h1, c1 = gates_to_hc(g1, c1)
        hs.append(h1)

    # ---- Fused final Linear: (B, T*128) @ (T*128, 2) ----
    cp_wfc.wait()
    h_seq = jnp.concatenate(hs, axis=-1).astype(jnp.bfloat16)   # (B, T*128)
    out_ref[...] = (jnp.dot(h_seq, wfc_v[...], preferred_element_type=jnp.float32)
                    + bfc_ref[...])


def prepare_params(params):
    """One-time (host-side) param prep: bf16 weights + layer-1 weight fold."""
    wih0, whh0, b0, wih1, whh1, b1, wfc_t, bfc = params
    wl1 = jnp.concatenate([wih1, whh1], axis=0)          # (256, 4H)
    return (wih0.astype(jnp.bfloat16),
            b0.astype(jnp.float32).reshape(1, -1),
            whh0.astype(jnp.bfloat16),
            wl1.astype(jnp.bfloat16),
            b1.astype(jnp.float32).reshape(1, -1),
            wfc_t.astype(jnp.bfloat16),
            bfc.astype(jnp.float32).reshape(1, -1))


def back_channel_sentence_forward(bert_feature, prepared):
    """bert_feature: (B, T, 768) f32 batch-first, like the PyTorch module."""
    wih0, b0, whh0, wl1, b1, wfc, bfc = prepared
    B, T, _ = bert_feature.shape
    vmem = pltpu.MemorySpace.VMEM
    return pl.pallas_call(
        fused_lstm_fc_kernel,
        out_shape=jax.ShapeDtypeStruct((B, NUM_CLASSES), jnp.float32),
        in_specs=[
            pl.BlockSpec(memory_space=vmem),    # x
            pl.BlockSpec(memory_space=vmem),    # W_ih_l0^T (needed immediately)
            pl.BlockSpec(memory_space=vmem),    # b0
            pl.BlockSpec(memory_space=pl.ANY),  # W_hh_l0^T   -> manual DMA
            pl.BlockSpec(memory_space=pl.ANY),  # W_l1_cat^T  -> manual DMA
            pl.BlockSpec(memory_space=vmem),    # b1
            pl.BlockSpec(memory_space=pl.ANY),  # W_fc^T      -> manual DMA
            pl.BlockSpec(memory_space=vmem),    # b_fc
        ],
        out_specs=pl.BlockSpec(memory_space=vmem),
        scratch_shapes=[
            pltpu.VMEM((HIDDEN, 4 * HIDDEN), jnp.bfloat16),       # whh0
            pltpu.VMEM((2 * HIDDEN, 4 * HIDDEN), jnp.bfloat16),   # wl1_cat
            pltpu.VMEM((T * HIDDEN, NUM_CLASSES), jnp.bfloat16),  # wfc
            pltpu.SemaphoreType.DMA((3,)),
        ],
        compiler_params=pltpu.CompilerParams(
            vmem_limit_bytes=32 * 1024 * 1024,
        ),
    )(bert_feature, wih0, b0, whh0, wl1, b1, wfc, bfc)


def ref_forward(bert_feature, params):
    """Pure-JAX f32 reference of the PyTorch semantics (2-layer LSTM + Linear)."""
    wih0, whh0, b0, wih1, whh1, b1, wfc_t, bfc = params
    B, T, _ = bert_feature.shape

    def cell(x_t, h, c, wih, whh, b):
        gates = x_t @ wih + h @ whh + b
        i = jax.nn.sigmoid(gates[:, :HIDDEN])
        f = jax.nn.sigmoid(gates[:, HIDDEN:2 * HIDDEN])
        g = jnp.tanh(gates[:, 2 * HIDDEN:3 * HIDDEN])
        o = jax.nn.sigmoid(gates[:, 3 * HIDDEN:])
        c_new = f * c + i * g
        return o * jnp.tanh(c_new), c_new

    h0 = c0 = h1 = c1 = jnp.zeros((B, HIDDEN), jnp.float32)
    outs = []
    for t in range(T):
        h0, c0 = cell(bert_feature[:, t], h0, c0, wih0, whh0, b0)
        h1, c1 = cell(h0, h1, c1, wih1, whh1, b1)
        outs.append(h1)
    hseq = jnp.stack(outs, axis=1).reshape(B, T * HIDDEN)
    return hseq @ wfc_t + bfc


if __name__ == "__main__":
    len_block = 4
    batch_size = 8             # multiple of 8 per perf feedback (fills all sublanes)
    T = 2 * len_block          # self.len_block = 2 * len_block

    key = jax.random.PRNGKey(0)
    ks = jax.random.split(key, 9)
    s = 0.05  # small deterministic synthetic weights

    # LSTM layer 0 (input 768 -> hidden 128), weights stored transposed
    wih0 = jax.random.normal(ks[0], (INPUT, 4 * HIDDEN), jnp.float32) * s
    whh0 = jax.random.normal(ks[1], (HIDDEN, 4 * HIDDEN), jnp.float32) * s
    b0 = jax.random.normal(ks[2], (1, 4 * HIDDEN), jnp.float32) * s      # b_ih + b_hh fused
    # LSTM layer 1 (hidden 128 -> hidden 128)
    wih1 = jax.random.normal(ks[3], (HIDDEN, 4 * HIDDEN), jnp.float32) * s
    whh1 = jax.random.normal(ks[4], (HIDDEN, 4 * HIDDEN), jnp.float32) * s
    b1 = jax.random.normal(ks[5], (1, 4 * HIDDEN), jnp.float32) * s
    # full_connection: Linear(T*128 -> 2), stored transposed
    wfc_t = jax.random.normal(ks[6], (T * HIDDEN, NUM_CLASSES), jnp.float32) * s
    bfc = jax.random.normal(ks[7], (1, NUM_CLASSES), jnp.float32) * s

    params = (wih0, whh0, b0, wih1, whh1, b1, wfc_t, bfc)
    prepared = prepare_params(params)   # one-time: bf16 cast + layer-1 weight fold

    bert_feature = jax.random.normal(ks[8], (batch_size, T, INPUT), jnp.float32)

    out = back_channel_sentence_forward(bert_feature, prepared)
    out = jax.block_until_ready(out)
    assert out.shape == (batch_size, NUM_CLASSES)

    ref = jax.block_until_ready(ref_forward(bert_feature, params))
    # bf16 MXU operands (f32 accumulation / gate math) vs. the f32 reference:
    # differences compound over the T-step recurrence, so use a 1e-2 tolerance.
    np.testing.assert_allclose(np.asarray(out), np.asarray(ref), atol=1e-2, rtol=1e-2)

    print("KERNEL_OK")
</pallas_src>

<mosaic_0001>
module attributes {stable_mosaic.version = 11 : i64} {
  func.func @fused_lstm_fc_kernel(%arg0: memref<8x8x768xf32, #tpu.memory_space<vmem>>, %arg1: memref<768x512xbf16, #tpu.memory_space<vmem>>, %arg2: memref<1x512xf32, #tpu.memory_space<vmem>>, %arg3: memref<128x512xbf16, #tpu.memory_space<any>>, %arg4: memref<256x512xbf16, #tpu.memory_space<any>>, %arg5: memref<1x512xf32, #tpu.memory_space<vmem>>, %arg6: memref<1024x2xbf16, #tpu.memory_space<any>>, %arg7: memref<1x2xf32, #tpu.memory_space<vmem>>, %arg8: memref<8x2xf32, #tpu.memory_space<vmem>>, %arg9: memref<128x512xbf16, #tpu.memory_space<vmem>>, %arg10: memref<256x512xbf16, #tpu.memory_space<vmem>>, %arg11: memref<1024x2xbf16, #tpu.memory_space<vmem>>, %arg12: memref<3x!tpu.dma_semaphore, #tpu.memory_space<semaphore_mem>>) attributes {dimension_semantics = [], scalar_prefetch = 0 : i64, scratch_operands = 4 : i64, tpu.core_type = #tpu.core_type<tc>} {
    %c0_i32 = arith.constant 0 : i32
    %0 = tpu.memref_slice %arg12[%c0_i32] : memref<3x!tpu.dma_semaphore, #tpu.memory_space<semaphore_mem>> -> memref<1x!tpu.dma_semaphore, #tpu.memory_space<semaphore_mem>>
    %1 = tpu.memref_squeeze %0 : memref<1x!tpu.dma_semaphore, #tpu.memory_space<semaphore_mem>> -> memref<!tpu.dma_semaphore, #tpu.memory_space<semaphore_mem>>
    tpu.enqueue_dma source(%arg3 : memref<128x512xbf16, #tpu.memory_space<any>>) target(%arg9 : memref<128x512xbf16, #tpu.memory_space<vmem>>) target_semaphore(%1 : memref<!tpu.dma_semaphore, #tpu.memory_space<semaphore_mem>>)
    %c1_i32 = arith.constant 1 : i32
    %2 = tpu.memref_slice %arg12[%c1_i32] : memref<3x!tpu.dma_semaphore, #tpu.memory_space<semaphore_mem>> -> memref<1x!tpu.dma_semaphore, #tpu.memory_space<semaphore_mem>>
    %3 = tpu.memref_squeeze %2 : memref<1x!tpu.dma_semaphore, #tpu.memory_space<semaphore_mem>> -> memref<!tpu.dma_semaphore, #tpu.memory_space<semaphore_mem>>
    tpu.enqueue_dma source(%arg4 : memref<256x512xbf16, #tpu.memory_space<any>>) target(%arg10 : memref<256x512xbf16, #tpu.memory_space<vmem>>) target_semaphore(%3 : memref<!tpu.dma_semaphore, #tpu.memory_space<semaphore_mem>>)
    %c2_i32 = arith.constant 2 : i32
    %4 = tpu.memref_slice %arg12[%c2_i32] : memref<3x!tpu.dma_semaphore, #tpu.memory_space<semaphore_mem>> -> memref<1x!tpu.dma_semaphore, #tpu.memory_space<semaphore_mem>>
    %5 = tpu.memref_squeeze %4 : memref<1x!tpu.dma_semaphore, #tpu.memory_space<semaphore_mem>> -> memref<!tpu.dma_semaphore, #tpu.memory_space<semaphore_mem>>
    tpu.enqueue_dma source(%arg6 : memref<1024x2xbf16, #tpu.memory_space<any>>) target(%arg11 : memref<1024x2xbf16, #tpu.memory_space<vmem>>) target_semaphore(%5 : memref<!tpu.dma_semaphore, #tpu.memory_space<semaphore_mem>>)
    %c0 = arith.constant 0 : index
    %c0_0 = arith.constant 0 : index
    %c0_1 = arith.constant 0 : index
    %6 = vector.load %arg0[%c0, %c0_0, %c0_1] : memref<8x8x768xf32, #tpu.memory_space<vmem>>, vector<8x8x768xf32>
    %7 = vector.shape_cast %6 : vector<8x8x768xf32> to vector<64x768xf32>
    %8 = arith.truncf %7 : vector<64x768xf32> to vector<64x768xbf16>
    %c0_2 = arith.constant 0 : index
    %c0_3 = arith.constant 0 : index
    %9 = vector.load %arg1[%c0_2, %c0_3] : memref<768x512xbf16, #tpu.memory_space<vmem>>, vector<768x512xbf16>
    %cst = arith.constant dense<0.000000e+00> : vector<64x512xf32>
    %10 = tpu.matmul %8, %9, %cst {dimension_numbers = #tpu.dot_dimension_numbers<[1], [0], [0], [1], [0, 0, 1, 1], [], []>} : vector<64x768xbf16>, vector<768x512xbf16>, vector<64x512xf32> -> vector<64x512xf32>
    %c0_4 = arith.constant 0 : index
    %c0_5 = arith.constant 0 : index
    %11 = vector.load %arg2[%c0_4, %c0_5] : memref<1x512xf32, #tpu.memory_space<vmem>>, vector<1x512xf32>
    %12 = vector.broadcast %11 : vector<1x512xf32> to vector<64x512xf32>
    %13 = arith.addf %10, %12 : vector<64x512xf32>
    %14 = vector.shape_cast %13 : vector<64x512xf32> to vector<8x8x512xf32>
    %15 = vector.extract_strided_slice %14 {offsets = [0, 0, 0], sizes = [8, 1, 512], strides = [1, 1, 1]} : vector<8x8x512xf32> to vector<8x1x512xf32>
    %16 = vector.shape_cast %15 : vector<8x1x512xf32> to vector<8x512xf32>
    %17 = vector.extract_strided_slice %14 {offsets = [0, 1, 0], sizes = [8, 1, 512], strides = [1, 1, 1]} : vector<8x8x512xf32> to vector<8x1x512xf32>
    %18 = vector.shape_cast %17 : vector<8x1x512xf32> to vector<8x512xf32>
    %19 = vector.extract_strided_slice %14 {offsets = [0, 2, 0], sizes = [8, 1, 512], strides = [1, 1, 1]} : vector<8x8x512xf32> to vector<8x1x512xf32>
    %20 = vector.shape_cast %19 : vector<8x1x512xf32> to vector<8x512xf32>
    %21 = vector.extract_strided_slice %14 {offsets = [0, 3, 0], sizes = [8, 1, 512], strides = [1, 1, 1]} : vector<8x8x512xf32> to vector<8x1x512xf32>
    %22 = vector.shape_cast %21 : vector<8x1x512xf32> to vector<8x512xf32>
    %23 = vector.extract_strided_slice %14 {offsets = [0, 4, 0], sizes = [8, 1, 512], strides = [1, 1, 1]} : vector<8x8x512xf32> to vector<8x1x512xf32>
    %24 = vector.shape_cast %23 : vector<8x1x512xf32> to vector<8x512xf32>
    %25 = vector.extract_strided_slice %14 {offsets = [0, 5, 0], sizes = [8, 1, 512], strides = [1, 1, 1]} : vector<8x8x512xf32> to vector<8x1x512xf32>
    %26 = vector.shape_cast %25 : vector<8x1x512xf32> to vector<8x512xf32>
    %27 = vector.extract_strided_slice %14 {offsets = [0, 6, 0], sizes = [8, 1, 512], strides = [1, 1, 1]} : vector<8x8x512xf32> to vector<8x1x512xf32>
    %28 = vector.shape_cast %27 : vector<8x1x512xf32> to vector<8x512xf32>
    %29 = vector.extract_strided_slice %14 {offsets = [0, 7, 0], sizes = [8, 1, 512], strides = [1, 1, 1]} : vector<8x8x512xf32> to vector<8x1x512xf32>
    %30 = vector.shape_cast %29 : vector<8x1x512xf32> to vector<8x512xf32>
    %c0_i32_6 = arith.constant 0 : i32
    %31 = tpu.memref_slice %arg12[%c0_i32_6] : memref<3x!tpu.dma_semaphore, #tpu.memory_space<semaphore_mem>> -> memref<1x!tpu.dma_semaphore, #tpu.memory_space<semaphore_mem>>
    %32 = tpu.memref_squeeze %31 : memref<1x!tpu.dma_semaphore, #tpu.memory_space<semaphore_mem>> -> memref<!tpu.dma_semaphore, #tpu.memory_space<semaphore_mem>>
    tpu.wait_dma2 semaphore(%32 : memref<!tpu.dma_semaphore, #tpu.memory_space<semaphore_mem>>) src(%arg3 : memref<128x512xbf16, #tpu.memory_space<any>>) dst(%arg9 : memref<128x512xbf16, #tpu.memory_space<vmem>>)
    %c1_i32_7 = arith.constant 1 : i32
    %33 = tpu.memref_slice %arg12[%c1_i32_7] : memref<3x!tpu.dma_semaphore, #tpu.memory_space<semaphore_mem>> -> memref<1x!tpu.dma_semaphore, #tpu.memory_space<semaphore_mem>>
    %34 = tpu.memref_squeeze %33 : memref<1x!tpu.dma_semaphore, #tpu.memory_space<semaphore_mem>> -> memref<!tpu.dma_semaphore, #tpu.memory_space<semaphore_mem>>
    tpu.wait_dma2 semaphore(%34 : memref<!tpu.dma_semaphore, #tpu.memory_space<semaphore_mem>>) src(%arg4 : memref<256x512xbf16, #tpu.memory_space<any>>) dst(%arg10 : memref<256x512xbf16, #tpu.memory_space<vmem>>)
    %c0_8 = arith.constant 0 : index
    %c0_9 = arith.constant 0 : index
    %35 = vector.load %arg9[%c0_8, %c0_9] : memref<128x512xbf16, #tpu.memory_space<vmem>>, vector<128x512xbf16>
    %c0_10 = arith.constant 0 : index
    %c0_11 = arith.constant 0 : index
    %36 = vector.load %arg10[%c0_10, %c0_11] : memref<256x512xbf16, #tpu.memory_space<vmem>>, vector<256x512xbf16>
    %c0_12 = arith.constant 0 : index
    %c0_13 = arith.constant 0 : index
    %37 = vector.load %arg5[%c0_12, %c0_13] : memref<1x512xf32, #tpu.memory_space<vmem>>, vector<1x512xf32>
    %cst_14 = arith.constant 0.000000e+00 : f32
    %38 = vector.broadcast %cst_14 : f32 to vector<8x128xf32>
    %39 = arith.truncf %38 : vector<8x128xf32> to vector<8x128xbf16>
    %cst_15 = arith.constant dense<0.000000e+00> : vector<8x512xf32>
    %40 = tpu.matmul %39, %35, %cst_15 {dimension_numbers = #tpu.dot_dimension_numbers<[1], [0], [0], [1], [0, 0, 1, 1], [], []>} : vector<8x128xbf16>, vector<128x512xbf16>, vector<8x512xf32> -> vector<8x512xf32>
    %41 = arith.addf %16, %40 : vector<8x512xf32>
    %42 = vector.extract_strided_slice %41 {offsets = [0, 0], sizes = [8, 128], strides = [1, 1]} : vector<8x512xf32> to vector<8x128xf32>
    %43 = arith.negf %42 : vector<8x128xf32>
    %44 = math.exp %43 : vector<8x128xf32>
    %cst_16 = arith.constant 1.000000e+00 : f32
    %45 = vector.broadcast %cst_16 : f32 to vector<8x128xf32>
    %46 = arith.addf %45, %44 : vector<8x128xf32>
    %47 = arith.divf %45, %46 : vector<8x128xf32>
    %48 = vector.extract_strided_slice %41 {offsets = [0, 128], sizes = [8, 128], strides = [1, 1]} : vector<8x512xf32> to vector<8x128xf32>
    %49 = arith.negf %48 : vector<8x128xf32>
    %50 = math.exp %49 : vector<8x128xf32>
    %cst_17 = arith.constant 1.000000e+00 : f32
    %51 = vector.broadcast %cst_17 : f32 to vector<8x128xf32>
    %52 = arith.addf %51, %50 : vector<8x128xf32>
    %53 = arith.divf %51, %52 : vector<8x128xf32>
    %54 = vector.extract_strided_slice %41 {offsets = [0, 256], sizes = [8, 128], strides = [1, 1]} : vector<8x512xf32> to vector<8x128xf32>
    %55 = math.tanh %54 : vector<8x128xf32>
    %56 = vector.extract_strided_slice %41 {offsets = [0, 384], sizes = [8, 128], strides = [1, 1]} : vector<8x512xf32> to vector<8x128xf32>
    %57 = arith.negf %56 : vector<8x128xf32>
    %58 = math.exp %57 : vector<8x128xf32>
    %cst_18 = arith.constant 1.000000e+00 : f32
    %59 = vector.broadcast %cst_18 : f32 to vector<8x128xf32>
    %60 = arith.addf %59, %58 : vector<8x128xf32>
    %61 = arith.divf %59, %60 : vector<8x128xf32>
    %62 = arith.mulf %53, %38 : vector<8x128xf32>
    %63 = arith.mulf %47, %55 : vector<8x128xf32>
    %64 = arith.addf %62, %63 : vector<8x128xf32>
    %65 = math.tanh %64 : vector<8x128xf32>
    %66 = arith.mulf %61, %65 : vector<8x128xf32>
    %67 = tpu.concatenate %66, %38 in 1 : vector<8x128xf32>, vector<8x128xf32> -> vector<8x256xf32>
    %68 = arith.truncf %67 : vector<8x256xf32> to vector<8x256xbf16>
    %cst_19 = arith.constant dense<0.000000e+00> : vector<8x512xf32>
    %69 = tpu.matmul %68, %36, %cst_19 {dimension_numbers = #tpu.dot_dimension_numbers<[1], [0], [0], [1], [0, 0, 1, 1], [], []>} : vector<8x256xbf16>, vector<256x512xbf16>, vector<8x512xf32> -> vector<8x512xf32>
    %70 = vector.broadcast %37 : vector<1x512xf32> to vector<8x512xf32>
    %71 = arith.addf %69, %70 : vector<8x512xf32>
    %72 = vector.extract_strided_slice %71 {offsets = [0, 0], sizes = [8, 128], strides = [1, 1]} : vector<8x512xf32> to vector<8x128xf32>
    %73 = arith.negf %72 : vector<8x128xf32>
    %74 = math.exp %73 : vector<8x128xf32>
    %cst_20 = arith.constant 1.000000e+00 : f32
    %75 = vector.broadcast %cst_20 : f32 to vector<8x128xf32>
    %76 = arith.addf %75, %74 : vector<8x128xf32>
    %77 = arith.divf %75, %76 : vector<8x128xf32>
    %78 = vector.extract_strided_slice %71 {offsets = [0, 128], sizes = [8, 128], strides = [1, 1]} : vector<8x512xf32> to vector<8x128xf32>
    %79 = arith.negf %78 : vector<8x128xf32>
    %80 = math.exp %79 : vector<8x128xf32>
    %cst_21 = arith.constant 1.000000e+00 : f32
    %81 = vector.broadcast %cst_21 : f32 to vector<8x128xf32>
    %82 = arith.addf %81, %80 : vector<8x128xf32>
    %83 = arith.divf %81, %82 : vector<8x128xf32>
    %84 = vector.extract_strided_slice %71 {offsets = [0, 256], sizes = [8, 128], strides = [1, 1]} : vector<8x512xf32> to vector<8x128xf32>
    %85 = math.tanh %84 : vector<8x128xf32>
    %86 = vector.extract_strided_slice %71 {offsets = [0, 384], sizes = [8, 128], strides = [1, 1]} : vector<8x512xf32> to vector<8x128xf32>
    %87 = arith.negf %86 : vector<8x128xf32>
    %88 = math.exp %87 : vector<8x128xf32>
    %cst_22 = arith.constant 1.000000e+00 : f32
    %89 = vector.broadcast %cst_22 : f32 to vector<8x128xf32>
    %90 = arith.addf %89, %88 : vector<8x128xf32>
    %91 = arith.divf %89, %90 : vector<8x128xf32>
    %92 = arith.mulf %83, %38 : vector<8x128xf32>
    %93 = arith.mulf %77, %85 : vector<8x128xf32>
    %94 = arith.addf %92, %93 : vector<8x128xf32>
    %95 = math.tanh %94 : vector<8x128xf32>
    %96 = arith.mulf %91, %95 : vector<8x128xf32>
    %97 = arith.truncf %66 : vector<8x128xf32> to vector<8x128xbf16>
    %cst_23 = arith.constant dense<0.000000e+00> : vector<8x512xf32>
    %98 = tpu.matmul %97, %35, %cst_23 {dimension_numbers = #tpu.dot_dimension_numbers<[1], [0], [0], [1], [0, 0, 1, 1], [], []>} : vector<8x128xbf16>, vector<128x512xbf16>, vector<8x512xf32> -> vector<8x512xf32>
    %99 = arith.addf %18, %98 : vector<8x512xf32>
    %100 = vector.extract_strided_slice %99 {offsets = [0, 0], sizes = [8, 128], strides = [1, 1]} : vector<8x512xf32> to vector<8x128xf32>
    %101 = arith.negf %100 : vector<8x128xf32>
    %102 = math.exp %101 : vector<8x128xf32>
    %cst_24 = arith.constant 1.000000e+00 : f32
    %103 = vector.broadcast %cst_24 : f32 to vector<8x128xf32>
    %104 = arith.addf %103, %102 : vector<8x128xf32>
    %105 = arith.divf %103, %104 : vector<8x128xf32>
    %106 = vector.extract_strided_slice %99 {offsets = [0, 128], sizes = [8, 128], strides = [1, 1]} : vector<8x512xf32> to vector<8x128xf32>
    %107 = arith.negf %106 : vector<8x128xf32>
    %108 = math.exp %107 : vector<8x128xf32>
    %cst_25 = arith.constant 1.000000e+00 : f32
    %109 = vector.broadcast %cst_25 : f32 to vector<8x128xf32>
    %110 = arith.addf %109, %108 : vector<8x128xf32>
    %111 = arith.divf %109, %110 : vector<8x128xf32>
    %112 = vector.extract_strided_slice %99 {offsets = [0, 256], sizes = [8, 128], strides = [1, 1]} : vector<8x512xf32> to vector<8x128xf32>
    %113 = math.tanh %112 : vector<8x128xf32>
    %114 = vector.extract_strided_slice %99 {offsets = [0, 384], sizes = [8, 128], strides = [1, 1]} : vector<8x512xf32> to vector<8x128xf32>
    %115 = arith.negf %114 : vector<8x128xf32>
    %116 = math.exp %115 : vector<8x128xf32>
    %cst_26 = arith.constant 1.000000e+00 : f32
    %117 = vector.broadcast %cst_26 : f32 to vector<8x128xf32>
    %118 = arith.addf %117, %116 : vector<8x128xf32>
    %119 = arith.divf %117, %118 : vector<8x128xf32>
    %120 = arith.mulf %111, %64 : vector<8x128xf32>
    %121 = arith.mulf %105, %113 : vector<8x128xf32>
    %122 = arith.addf %120, %121 : vector<8x128xf32>
    %123 = math.tanh %122 : vector<8x128xf32>
    %124 = arith.mulf %119, %123 : vector<8x128xf32>
    %125 = tpu.concatenate %124, %96 in 1 : vector<8x128xf32>, vector<8x128xf32> -> vector<8x256xf32>
    %126 = arith.truncf %125 : vector<8x256xf32> to vector<8x256xbf16>
    %cst_27 = arith.constant dense<0.000000e+00> : vector<8x512xf32>
    %127 = tpu.matmul %126, %36, %cst_27 {dimension_numbers = #tpu.dot_dimension_numbers<[1], [0], [0], [1], [0, 0, 1, 1], [], []>} : vector<8x256xbf16>, vector<256x512xbf16>, vector<8x512xf32> -> vector<8x512xf32>
    %128 = vector.broadcast %37 : vector<1x512xf32> to vector<8x512xf32>
    %129 = arith.addf %127, %128 : vector<8x512xf32>
    %130 = vector.extract_strided_slice %129 {offsets = [0, 0], sizes = [8, 128], strides = [1, 1]} : vector<8x512xf32> to vector<8x128xf32>
    %131 = arith.negf %130 : vector<8x128xf32>
    %132 = math.exp %131 : vector<8x128xf32>
    %cst_28 = arith.constant 1.000000e+00 : f32
    %133 = vector.broadcast %cst_28 : f32 to vector<8x128xf32>
    %134 = arith.addf %133, %132 : vector<8x128xf32>
    %135 = arith.divf %133, %134 : vector<8x128xf32>
    %136 = vector.extract_strided_slice %129 {offsets = [0, 128], sizes = [8, 128], strides = [1, 1]} : vector<8x512xf32> to vector<8x128xf32>
    %137 = arith.negf %136 : vector<8x128xf32>
    %138 = math.exp %137 : vector<8x128xf32>
    %cst_29 = arith.constant 1.000000e+00 : f32
    %139 = vector.broadcast %cst_29 : f32 to vector<8x128xf32>
    %140 = arith.addf %139, %138 : vector<8x128xf32>
    %141 = arith.divf %139, %140 : vector<8x128xf32>
    %142 = vector.extract_strided_slice %129 {offsets = [0, 256], sizes = [8, 128], strides = [1, 1]} : vector<8x512xf32> to vector<8x128xf32>
    %143 = math.tanh %142 : vector<8x128xf32>
    %144 = vector.extract_strided_slice %129 {offsets = [0, 384], sizes = [8, 128], strides = [1, 1]} : vector<8x512xf32> to vector<8x128xf32>
    %145 = arith.negf %144 : vector<8x128xf32>
    %146 = math.exp %145 : vector<8x128xf32>
    %cst_30 = arith.constant 1.000000e+00 : f32
    %147 = vector.broadcast %cst_30 : f32 to vector<8x128xf32>
    %148 = arith.addf %147, %146 : vector<8x128xf32>
    %149 = arith.divf %147, %148 : vector<8x128xf32>
    %150 = arith.mulf %141, %94 : vector<8x128xf32>
    %151 = arith.mulf %135, %143 : vector<8x128xf32>
    %152 = arith.addf %150, %151 : vector<8x128xf32>
    %153 = math.tanh %152 : vector<8x128xf32>
    %154 = arith.mulf %149, %153 : vector<8x128xf32>
    %155 = arith.truncf %124 : vector<8x128xf32> to vector<8x128xbf16>
    %cst_31 = arith.constant dense<0.000000e+00> : vector<8x512xf32>
    %156 = tpu.matmul %155, %35, %cst_31 {dimension_numbers = #tpu.dot_dimension_numbers<[1], [0], [0], [1], [0, 0, 1, 1], [], []>} : vector<8x128xbf16>, vector<128x512xbf16>, vector<8x512xf32> -> vector<8x512xf32>
    %157 = arith.addf %20, %156 : vector<8x512xf32>
    %158 = vector.extract_strided_slice %157 {offsets = [0, 0], sizes = [8, 128], strides = [1, 1]} : vector<8x512xf32> to vector<8x128xf32>
    %159 = arith.negf %158 : vector<8x128xf32>
    %160 = math.exp %159 : vector<8x128xf32>
    %cst_32 = arith.constant 1.000000e+00 : f32
    %161 = vector.broadcast %cst_32 : f32 to vector<8x128xf32>
    %162 = arith.addf %161, %160 : vector<8x128xf32>
    %163 = arith.divf %161, %162 : vector<8x128xf32>
    %164 = vector.extract_strided_slice %157 {offsets = [0, 128], sizes = [8, 128], strides = [1, 1]} : vector<8x512xf32> to vector<8x128xf32>
    %165 = arith.negf %164 : vector<8x128xf32>
    %166 = math.exp %165 : vector<8x128xf32>
    %cst_33 = arith.constant 1.000000e+00 : f32
    %167 = vector.broadcast %cst_33 : f32 to vector<8x128xf32>
    %168 = arith.addf %167, %166 : vector<8x128xf32>
    %169 = arith.divf %167, %168 : vector<8x128xf32>
    %170 = vector.extract_strided_slice %157 {offsets = [0, 256], sizes = [8, 128], strides = [1, 1]} : vector<8x512xf32> to vector<8x128xf32>
    %171 = math.tanh %170 : vector<8x128xf32>
    %172 = vector.extract_strided_slice %157 {offsets = [0, 384], sizes = [8, 128], strides = [1, 1]} : vector<8x512xf32> to vector<8x128xf32>
    %173 = arith.negf %172 : vector<8x128xf32>
    %174 = math.exp %173 : vector<8x128xf32>
    %cst_34 = arith.constant 1.000000e+00 : f32
    %175 = vector.broadcast %cst_34 : f32 to vector<8x128xf32>
    %176 = arith.addf %175, %174 : vector<8x128xf32>
    %177 = arith.divf %175, %176 : vector<8x128xf32>
    %178 = arith.mulf %169, %122 : vector<8x128xf32>
    %179 = arith.mulf %163, %171 : vector<8x128xf32>
    %180 = arith.addf %178, %179 : vector<8x128xf32>
    %181 = math.tanh %180 : vector<8x128xf32>
    %182 = arith.mulf %177, %181 : vector<8x128xf32>
    %183 = tpu.concatenate %182, %154 in 1 : vector<8x128xf32>, vector<8x128xf32> -> vector<8x256xf32>
    %184 = arith.truncf %183 : vector<8x256xf32> to vector<8x256xbf16>
    %cst_35 = arith.constant dense<0.000000e+00> : vector<8x512xf32>
    %185 = tpu.matmul %184, %36, %cst_35 {dimension_numbers = #tpu.dot_dimension_numbers<[1], [0], [0], [1], [0, 0, 1, 1], [], []>} : vector<8x256xbf16>, vector<256x512xbf16>, vector<8x512xf32> -> vector<8x512xf32>
    %186 = vector.broadcast %37 : vector<1x512xf32> to vector<8x512xf32>
    %187 = arith.addf %185, %186 : vector<8x512xf32>
    %188 = vector.extract_strided_slice %187 {offsets = [0, 0], sizes = [8, 128], strides = [1, 1]} : vector<8x512xf32> to vector<8x128xf32>
    %189 = arith.negf %188 : vector<8x128xf32>
    %190 = math.exp %189 : vector<8x128xf32>
    %cst_36 = arith.constant 1.000000e+00 : f32
    %191 = vector.broadcast %cst_36 : f32 to vector<8x128xf32>
    %192 = arith.addf %191, %190 : vector<8x128xf32>
    %193 = arith.divf %191, %192 : vector<8x128xf32>
    %194 = vector.extract_strided_slice %187 {offsets = [0, 128], sizes = [8, 128], strides = [1, 1]} : vector<8x512xf32> to vector<8x128xf32>
    %195 = arith.negf %194 : vector<8x128xf32>
    %196 = math.exp %195 : vector<8x128xf32>
    %cst_37 = arith.constant 1.000000e+00 : f32
    %197 = vector.broadcast %cst_37 : f32 to vector<8x128xf32>
    %198 = arith.addf %197, %196 : vector<8x128xf32>
    %199 = arith.divf %197, %198 : vector<8x128xf32>
    %200 = vector.extract_strided_slice %187 {offsets = [0, 256], sizes = [8, 128], strides = [1, 1]} : vector<8x512xf32> to vector<8x128xf32>
    %201 = math.tanh %200 : vector<8x128xf32>
    %202 = vector.extract_strided_slice %187 {offsets = [0, 384], sizes = [8, 128], strides = [1, 1]} : vector<8x512xf32> to vector<8x128xf32>
    %203 = arith.negf %202 : vector<8x128xf32>
    %204 = math.exp %203 : vector<8x128xf32>
    %cst_38 = arith.constant 1.000000e+00 : f32
    %205 = vector.broadcast %cst_38 : f32 to vector<8x128xf32>
    %206 = arith.addf %205, %204 : vector<8x128xf32>
    %207 = arith.divf %205, %206 : vector<8x128xf32>
    %208 = arith.mulf %199, %152 : vector<8x128xf32>
    %209 = arith.mulf %193, %201 : vector<8x128xf32>
    %210 = arith.addf %208, %209 : vector<8x128xf32>
    %211 = math.tanh %210 : vector<8x128xf32>
    %212 = arith.mulf %207, %211 : vector<8x128xf32>
    %213 = arith.truncf %182 : vector<8x128xf32> to vector<8x128xbf16>
    %cst_39 = arith.constant dense<0.000000e+00> : vector<8x512xf32>
    %214 = tpu.matmul %213, %35, %cst_39 {dimension_numbers = #tpu.dot_dimension_numbers<[1], [0], [0], [1], [0, 0, 1, 1], [], []>} : vector<8x128xbf16>, vector<128x512xbf16>, vector<8x512xf32> -> vector<8x512xf32>
    %215 = arith.addf %22, %214 : vector<8x512xf32>
    %216 = vector.extract_strided_slice %215 {offsets = [0, 0], sizes = [8, 128], strides = [1, 1]} : vector<8x512xf32> to vector<8x128xf32>
    %217 = arith.negf %216 : vector<8x128xf32>
    %218 = math.exp %217 : vector<8x128xf32>
    %cst_40 = arith.constant 1.000000e+00 : f32
    %219 = vector.broadcast %cst_40 : f32 to vector<8x128xf32>
    %220 = arith.addf %219, %218 : vector<8x128xf32>
    %221 = arith.divf %219, %220 : vector<8x128xf32>
    %222 = vector.extract_strided_slice %215 {offsets = [0, 128], sizes = [8, 128], strides = [1, 1]} : vector<8x512xf32> to vector<8x128xf32>
    %223 = arith.negf %222 : vector<8x128xf32>
    %224 = math.exp %223 : vector<8x128xf32>
    %cst_41 = arith.constant 1.000000e+00 : f32
    %225 = vector.broadcast %cst_41 : f32 to vector<8x128xf32>
    %226 = arith.addf %225, %224 : vector<8x128xf32>
    %227 = arith.divf %225, %226 : vector<8x128xf32>
    %228 = vector.extract_strided_slice %215 {offsets = [0, 256], sizes = [8, 128], strides = [1, 1]} : vector<8x512xf32> to vector<8x128xf32>
    %229 = math.tanh %228 : vector<8x128xf32>
    %230 = vector.extract_strided_slice %215 {offsets = [0, 384], sizes = [8, 128], strides = [1, 1]} : vector<8x512xf32> to vector<8x128xf32>
    %231 = arith.negf %230 : vector<8x128xf32>
    %232 = math.exp %231 : vector<8x128xf32>
    %cst_42 = arith.constant 1.000000e+00 : f32
    %233 = vector.broadcast %cst_42 : f32 to vector<8x128xf32>
    %234 = arith.addf %233, %232 : vector<8x128xf32>
    %235 = arith.divf %233, %234 : vector<8x128xf32>
    %236 = arith.mulf %227, %180 : vector<8x128xf32>
    %237 = arith.mulf %221, %229 : vector<8x128xf32>
    %238 = arith.addf %236, %237 : vector<8x128xf32>
    %239 = math.tanh %238 : vector<8x128xf32>
    %240 = arith.mulf %235, %239 : vector<8x128xf32>
    %241 = tpu.concatenate %240, %212 in 1 : vector<8x128xf32>, vector<8x128xf32> -> vector<8x256xf32>
    %242 = arith.truncf %241 : vector<8x256xf32> to vector<8x256xbf16>
    %cst_43 = arith.constant dense<0.000000e+00> : vector<8x512xf32>
    %243 = tpu.matmul %242, %36, %cst_43 {dimension_numbers = #tpu.dot_dimension_numbers<[1], [0], [0], [1], [0, 0, 1, 1], [], []>} : vector<8x256xbf16>, vector<256x512xbf16>, vector<8x512xf32> -> vector<8x512xf32>
    %244 = vector.broadcast %37 : vector<1x512xf32> to vector<8x512xf32>
    %245 = arith.addf %243, %244 : vector<8x512xf32>
    %246 = vector.extract_strided_slice %245 {offsets = [0, 0], sizes = [8, 128], strides = [1, 1]} : vector<8x512xf32> to vector<8x128xf32>
    %247 = arith.negf %246 : vector<8x128xf32>
    %248 = math.exp %247 : vector<8x128xf32>
    %cst_44 = arith.constant 1.000000e+00 : f32
    %249 = vector.broadcast %cst_44 : f32 to vector<8x128xf32>
    %250 = arith.addf %249, %248 : vector<8x128xf32>
    %251 = arith.divf %249, %250 : vector<8x128xf32>
    %252 = vector.extract_strided_slice %245 {offsets = [0, 128], sizes = [8, 128], strides = [1, 1]} : vector<8x512xf32> to vector<8x128xf32>
    %253 = arith.negf %252 : vector<8x128xf32>
    %254 = math.exp %253 : vector<8x128xf32>
    %cst_45 = arith.constant 1.000000e+00 : f32
    %255 = vector.broadcast %cst_45 : f32 to vector<8x128xf32>
    %256 = arith.addf %255, %254 : vector<8x128xf32>
    %257 = arith.divf %255, %256 : vector<8x128xf32>
    %258 = vector.extract_strided_slice %245 {offsets = [0, 256], sizes = [8, 128], strides = [1, 1]} : vector<8x512xf32> to vector<8x128xf32>
    %259 = math.tanh %258 : vector<8x128xf32>
    %260 = vector.extract_strided_slice %245 {offsets = [0, 384], sizes = [8, 128], strides = [1, 1]} : vector<8x512xf32> to vector<8x128xf32>
    %261 = arith.negf %260 : vector<8x128xf32>
    %262 = math.exp %261 : vector<8x128xf32>
    %cst_46 = arith.constant 1.000000e+00 : f32
    %263 = vector.broadcast %cst_46 : f32 to vector<8x128xf32>
    %264 = arith.addf %263, %262 : vector<8x128xf32>
    %265 = arith.divf %263, %264 : vector<8x128xf32>
    %266 = arith.mulf %257, %210 : vector<8x128xf32>
    %267 = arith.mulf %251, %259 : vector<8x128xf32>
    %268 = arith.addf %266, %267 : vector<8x128xf32>
    %269 = math.tanh %268 : vector<8x128xf32>
    %270 = arith.mulf %265, %269 : vector<8x128xf32>
    %271 = arith.truncf %240 : vector<8x128xf32> to vector<8x128xbf16>
    %cst_47 = arith.constant dense<0.000000e+00> : vector<8x512xf32>
    %272 = tpu.matmul %271, %35, %cst_47 {dimension_numbers = #tpu.dot_dimension_numbers<[1], [0], [0], [1], [0, 0, 1, 1], [], []>} : vector<8x128xbf16>, vector<128x512xbf16>, vector<8x512xf32> -> vector<8x512xf32>
    %273 = arith.addf %24, %272 : vector<8x512xf32>
    %274 = vector.extract_strided_slice %273 {offsets = [0, 0], sizes = [8, 128], strides = [1, 1]} : vector<8x512xf32> to vector<8x128xf32>
    %275 = arith.negf %274 : vector<8x128xf32>
    %276 = math.exp %275 : vector<8x128xf32>
    %cst_48 = arith.constant 1.000000e+00 : f32
    %277 = vector.broadcast %cst_48 : f32 to vector<8x128xf32>
    %278 = arith.addf %277, %276 : vector<8x128xf32>
    %279 = arith.divf %277, %278 : vector<8x128xf32>
    %280 = vector.extract_strided_slice %273 {offsets = [0, 128], sizes = [8, 128], strides = [1, 1]} : vector<8x512xf32> to vector<8x128xf32>
    %281 = arith.negf %280 : vector<8x128xf32>
    %282 = math.exp %281 : vector<8x128xf32>
    %cst_49 = arith.constant 1.000000e+00 : f32
    %283 = vector.broadcast %cst_49 : f32 to vector<8x128xf32>
    %284 = arith.addf %283, %282 : vector<8x128xf32>
    %285 = arith.divf %283, %284 : vector<8x128xf32>
    %286 = vector.extract_strided_slice %273 {offsets = [0, 256], sizes = [8, 128], strides = [1, 1]} : vector<8x512xf32> to vector<8x128xf32>
    %287 = math.tanh %286 : vector<8x128xf32>
    %288 = vector.extract_strided_slice %273 {offsets = [0, 384], sizes = [8, 128], strides = [1, 1]} : vector<8x512xf32> to vector<8x128xf32>
    %289 = arith.negf %288 : vector<8x128xf32>
    %290 = math.exp %289 : vector<8x128xf32>
    %cst_50 = arith.constant 1.000000e+00 : f32
    %291 = vector.broadcast %cst_50 : f32 to vector<8x128xf32>
    %292 = arith.addf %291, %290 : vector<8x128xf32>
    %293 = arith.divf %291, %292 : vector<8x128xf32>
    %294 = arith.mulf %285, %238 : vector<8x128xf32>
    %295 = arith.mulf %279, %287 : vector<8x128xf32>
    %296 = arith.addf %294, %295 : vector<8x128xf32>
    %297 = math.tanh %296 : vector<8x128xf32>
    %298 = arith.mulf %293, %297 : vector<8x128xf32>
    %299 = tpu.concatenate %298, %270 in 1 : vector<8x128xf32>, vector<8x128xf32> -> vector<8x256xf32>
    %300 = arith.truncf %299 : vector<8x256xf32> to vector<8x256xbf16>
    %cst_51 = arith.constant dense<0.000000e+00> : vector<8x512xf32>
    %301 = tpu.matmul %300, %36, %cst_51 {dimension_numbers = #tpu.dot_dimension_numbers<[1], [0], [0], [1], [0, 0, 1, 1], [], []>} : vector<8x256xbf16>, vector<256x512xbf16>, vector<8x512xf32> -> vector<8x512xf32>
    %302 = vector.broadcast %37 : vector<1x512xf32> to vector<8x512xf32>
    %303 = arith.addf %301, %302 : vector<8x512xf32>
    %304 = vector.extract_strided_slice %303 {offsets = [0, 0], sizes = [8, 128], strides = [1, 1]} : vector<8x512xf32> to vector<8x128xf32>
    %305 = arith.negf %304 : vector<8x128xf32>
    %306 = math.exp %305 : vector<8x128xf32>
    %cst_52 = arith.constant 1.000000e+00 : f32
    %307 = vector.broadcast %cst_52 : f32 to vector<8x128xf32>
    %308 = arith.addf %307, %306 : vector<8x128xf32>
    %309 = arith.divf %307, %308 : vector<8x128xf32>
    %310 = vector.extract_strided_slice %303 {offsets = [0, 128], sizes = [8, 128], strides = [1, 1]} : vector<8x512xf32> to vector<8x128xf32>
    %311 = arith.negf %310 : vector<8x128xf32>
    %312 = math.exp %311 : vector<8x128xf32>
    %cst_53 = arith.constant 1.000000e+00 : f32
    %313 = vector.broadcast %cst_53 : f32 to vector<8x128xf32>
    %314 = arith.addf %313, %312 : vector<8x128xf32>
    %315 = arith.divf %313, %314 : vector<8x128xf32>
    %316 = vector.extract_strided_slice %303 {offsets = [0, 256], sizes = [8, 128], strides = [1, 1]} : vector<8x512xf32> to vector<8x128xf32>
    %317 = math.tanh %316 : vector<8x128xf32>
    %318 = vector.extract_strided_slice %303 {offsets = [0, 384], sizes = [8, 128], strides = [1, 1]} : vector<8x512xf32> to vector<8x128xf32>
    %319 = arith.negf %318 : vector<8x128xf32>
    %320 = math.exp %319 : vector<8x128xf32>
    %cst_54 = arith.constant 1.000000e+00 : f32
    %321 = vector.broadcast %cst_54 : f32 to vector<8x128xf32>
    %322 = arith.addf %321, %320 : vector<8x128xf32>
    %323 = arith.divf %321, %322 : vector<8x128xf32>
    %324 = arith.mulf %315, %268 : vector<8x128xf32>
    %325 = arith.mulf %309, %317 : vector<8x128xf32>
    %326 = arith.addf %324, %325 : vector<8x128xf32>
    %327 = math.tanh %326 : vector<8x128xf32>
    %328 = arith.mulf %323, %327 : vector<8x128xf32>
    %329 = arith.truncf %298 : vector<8x128xf32> to vector<8x128xbf16>
    %cst_55 = arith.constant dense<0.000000e+00> : vector<8x512xf32>
    %330 = tpu.matmul %329, %35, %cst_55 {dimension_numbers = #tpu.dot_dimension_numbers<[1], [0], [0], [1], [0, 0, 1, 1], [], []>} : vector<8x128xbf16>, vector<128x512xbf16>, vector<8x512xf32> -> vector<8x512xf32>
    %331 = arith.addf %26, %330 : vector<8x512xf32>
    %332 = vector.extract_strided_slice %331 {offsets = [0, 0], sizes = [8, 128], strides = [1, 1]} : vector<8x512xf32> to vector<8x128xf32>
    %333 = arith.negf %332 : vector<8x128xf32>
    %334 = math.exp %333 : vector<8x128xf32>
    %cst_56 = arith.constant 1.000000e+00 : f32
    %335 = vector.broadcast %cst_56 : f32 to vector<8x128xf32>
    %336 = arith.addf %335, %334 : vector<8x128xf32>
    %337 = arith.divf %335, %336 : vector<8x128xf32>
    %338 = vector.extract_strided_slice %331 {offsets = [0, 128], sizes = [8, 128], strides = [1, 1]} : vector<8x512xf32> to vector<8x128xf32>
    %339 = arith.negf %338 : vector<8x128xf32>
    %340 = math.exp %339 : vector<8x128xf32>
    %cst_57 = arith.constant 1.000000e+00 : f32
    %341 = vector.broadcast %cst_57 : f32 to vector<8x128xf32>
    %342 = arith.addf %341, %340 : vector<8x128xf32>
    %343 = arith.divf %341, %342 : vector<8x128xf32>
    %344 = vector.extract_strided_slice %331 {offsets = [0, 256], sizes = [8, 128], strides = [1, 1]} : vector<8x512xf32> to vector<8x128xf32>
    %345 = math.tanh %344 : vector<8x128xf32>
    %346 = vector.extract_strided_slice %331 {offsets = [0, 384], sizes = [8, 128], strides = [1, 1]} : vector<8x512xf32> to vector<8x128xf32>
    %347 = arith.negf %346 : vector<8x128xf32>
    %348 = math.exp %347 : vector<8x128xf32>
    %cst_58 = arith.constant 1.000000e+00 : f32
    %349 = vector.broadcast %cst_58 : f32 to vector<8x128xf32>
    %350 = arith.addf %349, %348 : vector<8x128xf32>
    %351 = arith.divf %349, %350 : vector<8x128xf32>
    %352 = arith.mulf %343, %296 : vector<8x128xf32>
    %353 = arith.mulf %337, %345 : vector<8x128xf32>
    %354 = arith.addf %352, %353 : vector<8x128xf32>
    %355 = math.tanh %354 : vector<8x128xf32>
    %356 = arith.mulf %351, %355 : vector<8x128xf32>
    %357 = tpu.concatenate %356, %328 in 1 : vector<8x128xf32>, vector<8x128xf32> -> vector<8x256xf32>
    %358 = arith.truncf %357 : vector<8x256xf32> to vector<8x256xbf16>
    %cst_59 = arith.constant dense<0.000000e+00> : vector<8x512xf32>
    %359 = tpu.matmul %358, %36, %cst_59 {dimension_numbers = #tpu.dot_dimension_numbers<[1], [0], [0], [1], [0, 0, 1, 1], [], []>} : vector<8x256xbf16>, vector<256x512xbf16>, vector<8x512xf32> -> vector<8x512xf32>
    %360 = vector.broadcast %37 : vector<1x512xf32> to vector<8x512xf32>
    %361 = arith.addf %359, %360 : vector<8x512xf32>
    %362 = vector.extract_strided_slice %361 {offsets = [0, 0], sizes = [8, 128], strides = [1, 1]} : vector<8x512xf32> to vector<8x128xf32>
    %363 = arith.negf %362 : vector<8x128xf32>
    %364 = math.exp %363 : vector<8x128xf32>
    %cst_60 = arith.constant 1.000000e+00 : f32
    %365 = vector.broadcast %cst_60 : f32 to vector<8x128xf32>
    %366 = arith.addf %365, %364 : vector<8x128xf32>
    %367 = arith.divf %365, %366 : vector<8x128xf32>
    %368 = vector.extract_strided_slice %361 {offsets = [0, 128], sizes = [8, 128], strides = [1, 1]} : vector<8x512xf32> to vector<8x128xf32>
    %369 = arith.negf %368 : vector<8x128xf32>
    %370 = math.exp %369 : vector<8x128xf32>
    %cst_61 = arith.constant 1.000000e+00 : f32
    %371 = vector.broadcast %cst_61 : f32 to vector<8x128xf32>
    %372 = arith.addf %371, %370 : vector<8x128xf32>
    %373 = arith.divf %371, %372 : vector<8x128xf32>
    %374 = vector.extract_strided_slice %361 {offsets = [0, 256], sizes = [8, 128], strides = [1, 1]} : vector<8x512xf32> to vector<8x128xf32>
    %375 = math.tanh %374 : vector<8x128xf32>
    %376 = vector.extract_strided_slice %361 {offsets = [0, 384], sizes = [8, 128], strides = [1, 1]} : vector<8x512xf32> to vector<8x128xf32>
    %377 = arith.negf %376 : vector<8x128xf32>
    %378 = math.exp %377 : vector<8x128xf32>
    %cst_62 = arith.constant 1.000000e+00 : f32
    %379 = vector.broadcast %cst_62 : f32 to vector<8x128xf32>
    %380 = arith.addf %379, %378 : vector<8x128xf32>
    %381 = arith.divf %379, %380 : vector<8x128xf32>
    %382 = arith.mulf %373, %326 : vector<8x128xf32>
    %383 = arith.mulf %367, %375 : vector<8x128xf32>
    %384 = arith.addf %382, %383 : vector<8x128xf32>
    %385 = math.tanh %384 : vector<8x128xf32>
    %386 = arith.mulf %381, %385 : vector<8x128xf32>
    %387 = arith.truncf %356 : vector<8x128xf32> to vector<8x128xbf16>
    %cst_63 = arith.constant dense<0.000000e+00> : vector<8x512xf32>
    %388 = tpu.matmul %387, %35, %cst_63 {dimension_numbers = #tpu.dot_dimension_numbers<[1], [0], [0], [1], [0, 0, 1, 1], [], []>} : vector<8x128xbf16>, vector<128x512xbf16>, vector<8x512xf32> -> vector<8x512xf32>
    %389 = arith.addf %28, %388 : vector<8x512xf32>
    %390 = vector.extract_strided_slice %389 {offsets = [0, 0], sizes = [8, 128], strides = [1, 1]} : vector<8x512xf32> to vector<8x128xf32>
    %391 = arith.negf %390 : vector<8x128xf32>
    %392 = math.exp %391 : vector<8x128xf32>
    %cst_64 = arith.constant 1.000000e+00 : f32
    %393 = vector.broadcast %cst_64 : f32 to vector<8x128xf32>
    %394 = arith.addf %393, %392 : vector<8x128xf32>
    %395 = arith.divf %393, %394 : vector<8x128xf32>
    %396 = vector.extract_strided_slice %389 {offsets = [0, 128], sizes = [8, 128], strides = [1, 1]} : vector<8x512xf32> to vector<8x128xf32>
    %397 = arith.negf %396 : vector<8x128xf32>
    %398 = math.exp %397 : vector<8x128xf32>
    %cst_65 = arith.constant 1.000000e+00 : f32
    %399 = vector.broadcast %cst_65 : f32 to vector<8x128xf32>
    %400 = arith.addf %399, %398 : vector<8x128xf32>
    %401 = arith.divf %399, %400 : vector<8x128xf32>
    %402 = vector.extract_strided_slice %389 {offsets = [0, 256], sizes = [8, 128], strides = [1, 1]} : vector<8x512xf32> to vector<8x128xf32>
    %403 = math.tanh %402 : vector<8x128xf32>
    %404 = vector.extract_strided_slice %389 {offsets = [0, 384], sizes = [8, 128], strides = [1, 1]} : vector<8x512xf32> to vector<8x128xf32>
    %405 = arith.negf %404 : vector<8x128xf32>
    %406 = math.exp %405 : vector<8x128xf32>
    %cst_66 = arith.constant 1.000000e+00 : f32
    %407 = vector.broadcast %cst_66 : f32 to vector<8x128xf32>
    %408 = arith.addf %407, %406 : vector<8x128xf32>
    %409 = arith.divf %407, %408 : vector<8x128xf32>
    %410 = arith.mulf %401, %354 : vector<8x128xf32>
    %411 = arith.mulf %395, %403 : vector<8x128xf32>
    %412 = arith.addf %410, %411 : vector<8x128xf32>
    %413 = math.tanh %412 : vector<8x128xf32>
    %414 = arith.mulf %409, %413 : vector<8x128xf32>
    %415 = tpu.concatenate %414, %386 in 1 : vector<8x128xf32>, vector<8x128xf32> -> vector<8x256xf32>
    %416 = arith.truncf %415 : vector<8x256xf32> to vector<8x256xbf16>
    %cst_67 = arith.constant dense<0.000000e+00> : vector<8x512xf32>
    %417 = tpu.matmul %416, %36, %cst_67 {dimension_numbers = #tpu.dot_dimension_numbers<[1], [0], [0], [1], [0, 0, 1, 1], [], []>} : vector<8x256xbf16>, vector<256x512xbf16>, vector<8x512xf32> -> vector<8x512xf32>
    %418 = vector.broadcast %37 : vector<1x512xf32> to vector<8x512xf32>
    %419 = arith.addf %417, %418 : vector<8x512xf32>
    %420 = vector.extract_strided_slice %419 {offsets = [0, 0], sizes = [8, 128], strides = [1, 1]} : vector<8x512xf32> to vector<8x128xf32>
    %421 = arith.negf %420 : vector<8x128xf32>
    %422 = math.exp %421 : vector<8x128xf32>
    %cst_68 = arith.constant 1.000000e+00 : f32
    %423 = vector.broadcast %cst_68 : f32 to vector<8x128xf32>
    %424 = arith.addf %423, %422 : vector<8x128xf32>
    %425 = arith.divf %423, %424 : vector<8x128xf32>
    %426 = vector.extract_strided_slice %419 {offsets = [0, 128], sizes = [8, 128], strides = [1, 1]} : vector<8x512xf32> to vector<8x128xf32>
    %427 = arith.negf %426 : vector<8x128xf32>
    %428 = math.exp %427 : vector<8x128xf32>
    %cst_69 = arith.constant 1.000000e+00 : f32
    %429 = vector.broadcast %cst_69 : f32 to vector<8x128xf32>
    %430 = arith.addf %429, %428 : vector<8x128xf32>
    %431 = arith.divf %429, %430 : vector<8x128xf32>
    %432 = vector.extract_strided_slice %419 {offsets = [0, 256], sizes = [8, 128], strides = [1, 1]} : vector<8x512xf32> to vector<8x128xf32>
    %433 = math.tanh %432 : vector<8x128xf32>
    %434 = vector.extract_strided_slice %419 {offsets = [0, 384], sizes = [8, 128], strides = [1, 1]} : vector<8x512xf32> to vector<8x128xf32>
    %435 = arith.negf %434 : vector<8x128xf32>
    %436 = math.exp %435 : vector<8x128xf32>
    %cst_70 = arith.constant 1.000000e+00 : f32
    %437 = vector.broadcast %cst_70 : f32 to vector<8x128xf32>
    %438 = arith.addf %437, %436 : vector<8x128xf32>
    %439 = arith.divf %437, %438 : vector<8x128xf32>
    %440 = arith.mulf %431, %384 : vector<8x128xf32>
    %441 = arith.mulf %425, %433 : vector<8x128xf32>
    %442 = arith.addf %440, %441 : vector<8x128xf32>
    %443 = math.tanh %442 : vector<8x128xf32>
    %444 = arith.mulf %439, %443 : vector<8x128xf32>
    %445 = arith.truncf %414 : vector<8x128xf32> to vector<8x128xbf16>
    %cst_71 = arith.constant dense<0.000000e+00> : vector<8x512xf32>
    %446 = tpu.matmul %445, %35, %cst_71 {dimension_numbers = #tpu.dot_dimension_numbers<[1], [0], [0], [1], [0, 0, 1, 1], [], []>} : vector<8x128xbf16>, vector<128x512xbf16>, vector<8x512xf32> -> vector<8x512xf32>
    %447 = arith.addf %30, %446 : vector<8x512xf32>
    %448 = vector.extract_strided_slice %447 {offsets = [0, 0], sizes = [8, 128], strides = [1, 1]} : vector<8x512xf32> to vector<8x128xf32>
    %449 = arith.negf %448 : vector<8x128xf32>
    %450 = math.exp %449 : vector<8x128xf32>
    %cst_72 = arith.constant 1.000000e+00 : f32
    %451 = vector.broadcast %cst_72 : f32 to vector<8x128xf32>
    %452 = arith.addf %451, %450 : vector<8x128xf32>
    %453 = arith.divf %451, %452 : vector<8x128xf32>
    %454 = vector.extract_strided_slice %447 {offsets = [0, 128], sizes = [8, 128], strides = [1, 1]} : vector<8x512xf32> to vector<8x128xf32>
    %455 = arith.negf %454 : vector<8x128xf32>
    %456 = math.exp %455 : vector<8x128xf32>
    %cst_73 = arith.constant 1.000000e+00 : f32
    %457 = vector.broadcast %cst_73 : f32 to vector<8x128xf32>
    %458 = arith.addf %457, %456 : vector<8x128xf32>
    %459 = arith.divf %457, %458 : vector<8x128xf32>
    %460 = vector.extract_strided_slice %447 {offsets = [0, 256], sizes = [8, 128], strides = [1, 1]} : vector<8x512xf32> to vector<8x128xf32>
    %461 = math.tanh %460 : vector<8x128xf32>
    %462 = vector.extract_strided_slice %447 {offsets = [0, 384], sizes = [8, 128], strides = [1, 1]} : vector<8x512xf32> to vector<8x128xf32>
    %463 = arith.negf %462 : vector<8x128xf32>
    %464 = math.exp %463 : vector<8x128xf32>
    %cst_74 = arith.constant 1.000000e+00 : f32
    %465 = vector.broadcast %cst_74 : f32 to vector<8x128xf32>
    %466 = arith.addf %465, %464 : vector<8x128xf32>
    %467 = arith.divf %465, %466 : vector<8x128xf32>
    %468 = arith.mulf %459, %412 : vector<8x128xf32>
    %469 = arith.mulf %453, %461 : vector<8x128xf32>
    %470 = arith.addf %468, %469 : vector<8x128xf32>
    %471 = math.tanh %470 : vector<8x128xf32>
    %472 = arith.mulf %467, %471 : vector<8x128xf32>
    %473 = tpu.concatenate %472, %444 in 1 : vector<8x128xf32>, vector<8x128xf32> -> vector<8x256xf32>
    %474 = arith.truncf %473 : vector<8x256xf32> to vector<8x256xbf16>
    %cst_75 = arith.constant dense<0.000000e+00> : vector<8x512xf32>
    %475 = tpu.matmul %474, %36, %cst_75 {dimension_numbers = #tpu.dot_dimension_numbers<[1], [0], [0], [1], [0, 0, 1, 1], [], []>} : vector<8x256xbf16>, vector<256x512xbf16>, vector<8x512xf32> -> vector<8x512xf32>
    %476 = vector.broadcast %37 : vector<1x512xf32> to vector<8x512xf32>
    %477 = arith.addf %475, %476 : vector<8x512xf32>
    %478 = vector.extract_strided_slice %477 {offsets = [0, 0], sizes = [8, 128], strides = [1, 1]} : vector<8x512xf32> to vector<8x128xf32>
    %479 = arith.negf %478 : vector<8x128xf32>
    %480 = math.exp %479 : vector<8x128xf32>
    %cst_76 = arith.constant 1.000000e+00 : f32
    %481 = vector.broadcast %cst_76 : f32 to vector<8x128xf32>
    %482 = arith.addf %481, %480 : vector<8x128xf32>
    %483 = arith.divf %481, %482 : vector<8x128xf32>
    %484 = vector.extract_strided_slice %477 {offsets = [0, 128], sizes = [8, 128], strides = [1, 1]} : vector<8x512xf32> to vector<8x128xf32>
    %485 = arith.negf %484 : vector<8x128xf32>
    %486 = math.exp %485 : vector<8x128xf32>
    %cst_77 = arith.constant 1.000000e+00 : f32
    %487 = vector.broadcast %cst_77 : f32 to vector<8x128xf32>
    %488 = arith.addf %487, %486 : vector<8x128xf32>
    %489 = arith.divf %487, %488 : vector<8x128xf32>
    %490 = vector.extract_strided_slice %477 {offsets = [0, 256], sizes = [8, 128], strides = [1, 1]} : vector<8x512xf32> to vector<8x128xf32>
    %491 = math.tanh %490 : vector<8x128xf32>
    %492 = vector.extract_strided_slice %477 {offsets = [0, 384], sizes = [8, 128], strides = [1, 1]} : vector<8x512xf32> to vector<8x128xf32>
    %493 = arith.negf %492 : vector<8x128xf32>
    %494 = math.exp %493 : vector<8x128xf32>
    %cst_78 = arith.constant 1.000000e+00 : f32
    %495 = vector.broadcast %cst_78 : f32 to vector<8x128xf32>
    %496 = arith.addf %495, %494 : vector<8x128xf32>
    %497 = arith.divf %495, %496 : vector<8x128xf32>
    %498 = arith.mulf %489, %442 : vector<8x128xf32>
    %499 = arith.mulf %483, %491 : vector<8x128xf32>
    %500 = arith.addf %498, %499 : vector<8x128xf32>
    %501 = math.tanh %500 : vector<8x128xf32>
    %502 = arith.mulf %497, %501 : vector<8x128xf32>
    %c2_i32_79 = arith.constant 2 : i32
    %503 = tpu.memref_slice %arg12[%c2_i32_79] : memref<3x!tpu.dma_semaphore, #tpu.memory_space<semaphore_mem>> -> memref<1x!tpu.dma_semaphore, #tpu.memory_space<semaphore_mem>>
    %504 = tpu.memref_squeeze %503 : memref<1x!tpu.dma_semaphore, #tpu.memory_space<semaphore_mem>> -> memref<!tpu.dma_semaphore, #tpu.memory_space<semaphore_mem>>
    tpu.wait_dma2 semaphore(%504 : memref<!tpu.dma_semaphore, #tpu.memory_space<semaphore_mem>>) src(%arg6 : memref<1024x2xbf16, #tpu.memory_space<any>>) dst(%arg11 : memref<1024x2xbf16, #tpu.memory_space<vmem>>)
    %505 = tpu.concatenate %96, %154, %212, %270, %328, %386, %444, %502 in 1 : vector<8x128xf32>, vector<8x128xf32>, vector<8x128xf32>, vector<8x128xf32>, vector<8x128xf32>, vector<8x128xf32>, vector<8x128xf32>, vector<8x128xf32> -> vector<8x1024xf32>
    %506 = arith.truncf %505 : vector<8x1024xf32> to vector<8x1024xbf16>
    %c0_80 = arith.constant 0 : index
    %c0_81 = arith.constant 0 : index
    %507 = vector.load %arg11[%c0_80, %c0_81] : memref<1024x2xbf16, #tpu.memory_space<vmem>>, vector<1024x2xbf16>
    %cst_82 = arith.constant dense<0.000000e+00> : vector<8x2xf32>
    %508 = tpu.matmul %506, %507, %cst_82 {dimension_numbers = #tpu.dot_dimension_numbers<[1], [0], [0], [1], [0, 0, 1, 1], [], []>} : vector<8x1024xbf16>, vector<1024x2xbf16>, vector<8x2xf32> -> vector<8x2xf32>
    %c0_83 = arith.constant 0 : index
    %c0_84 = arith.constant 0 : index
    %509 = vector.load %arg7[%c0_83, %c0_84] : memref<1x2xf32, #tpu.memory_space<vmem>>, vector<1x2xf32>
    %510 = vector.broadcast %509 : vector<1x2xf32> to vector<8x2xf32>
    %511 = arith.addf %508, %510 : vector<8x2xf32>
    %c0_85 = arith.constant 0 : index
    %c0_86 = arith.constant 0 : index
    %512 = vector.load %arg8[%c0_85, %c0_86] : memref<8x2xf32, #tpu.memory_space<vmem>>, vector<8x2xf32>
    tpu.vector_store %arg8[%c0_85, %c0_86], %511 {strides = array<i32>} : memref<8x2xf32, #tpu.memory_space<vmem>>, vector<8x2xf32>,
    return
  }
}

</mosaic_0001>

<llo_original>
// kernel: tpu_custom_call.1
$region0: #{tpu_custom_call.1}
  #allocation0 [shape = 'u32[]', space=smem, size = 0x4, offset = 0x4, fixed_abs, tag = 'smem constant byte address 0x4 - core index']
  #allocation1 [shape = 'u32[144,128]{1,0:T(1,128)}', space=vmem, size = 0x12000, scoped, tag = 'internal scratch']
  #allocation2 [shape = 'bf16[128,512]{1,0:T(8,128)(2,1)}', space=vmem, size = 0x20000, scoped, tag = 'scratch operand']
  #allocation3 [shape = 'bf16[256,512]{1,0:T(8,128)(2,1)}', space=vmem, size = 0x40000, scoped, tag = 'scratch operand']
  #allocation4 [shape = 'bf16[1024,2]{1,0:T(8,128)(2,1)}', space=vmem, size = 0x40000, scoped, tag = 'scratch operand']
  #allocation5 [shape = 's32[3]{0}', space=sflag, size = 0xc, scoped, tag = 'scratch operand']
  #allocation10 [shape = 's32[]', space=sflag, size = 0x4, offset = 0, fixed_abs, tag = 'sflag constant byte address 0x0 - dummy sync flag']
  #allocation11 [shape = 's32[]', space=sflag, size = 0x4, offset = 0, fixed_abs, tag = 'sflag constant byte address 0x0 - dummy sync flag']
  #allocation12 [shape = 'u32[]', space=smem, size = 0x4, offset = 0x44, fixed_abs, tag = 'smem constant byte address 0x44 - assertion arg 0']
  #allocation13 [shape = 'u32[]', space=smem, size = 0x4, offset = 0x48, fixed_abs, tag = 'smem constant byte address 0x48 - assertion arg 1']
  #allocation14 [shape = 's32[]', space=sflag, size = 0x4, offset = 0, fixed_abs, tag = 'sflag constant byte address 0x0 - dummy sync flag']
  #allocation15 [shape = 's32[]', space=sflag, size = 0x4, offset = 0, fixed_abs, tag = 'sflag constant byte address 0x0 - dummy sync flag']
  %s0 = inlined_call_operand.hbm [shape: f32[8,8,768], index: 0, kind: input, shape index: {}]
  %s1 = inlined_call_operand.hbm [shape: bf16[768,512], index: 1, kind: input, shape index: {}]
  %s2 = inlined_call_operand.vmem [shape: f32[1,512], index: 2, kind: input, shape index: {}]
  %s3 = inlined_call_operand.hbm [shape: bf16[128,512], index: 3, kind: input, shape index: {}]
  %s4 = inlined_call_operand.vmem [shape: bf16[256,512], index: 4, kind: input, shape index: {}]
  %s5 = inlined_call_operand.vmem [shape: f32[1,512], index: 5, kind: input, shape index: {}]
  %s6 = inlined_call_operand.vmem [shape: bf16[1024,2], index: 6, kind: input, shape index: {}]
  %s7 = inlined_call_operand.vmem [shape: f32[1,2], index: 7, kind: input, shape index: {}]
  %s8 = inlined_call_operand.vmem [shape: f32[8,2], index: 8, kind: output, shape index: {}]
  %s9 = sld [smem:[#allocation0]]
  $region110: #{tpu_custom_call.1} parent=0
    _
  %s11 = ssub.s32 1, %s9
  %s12 = scalar_select 0, %s11, %s9
  $region1: #{tpu_custom_call.1} parent=0
    #allocation6 [shape = 'u8[196608]{0}', space=vmem, size = 0x30000, scoped, tag = 'input window, operand 0, single buffered']
    #allocation7 [shape = 's32[1]{0}', space=sflag, size = 0x4, scoped, tag = 'scoped memory for tpu_custom_call.1']
    #allocation8 [shape = 'u8[786432]{0}', space=vmem, size = 0xc0000, scoped, tag = 'input window, operand 1, single buffered']
    #allocation9 [shape = 's32[1]{0}', space=sflag, size = 0x4, scoped, tag = 'scoped memory for tpu_custom_call.1']
    %13 = vsyncpa [#allocation7], 0
    %14 = vsyncpa [#allocation9], 0
    // Predicated region
    $region2: #{tpu_custom_call.1} parent=1 // pred_check
      _
    $region3: #{tpu_custom_call.1} parent=1 // pred_check_branch
      %16 = sbr.rel (0) target = $region5
    $region4: #{tpu_custom_call.1} parent=1 // pred_region
      %s18 = ssub.s32 6144, 6144
      %19 = vsyncadd [#allocation7], %s18
      %s20 = sshll.u32 [#allocation6], 4
      %s21 = int_to_ptr.vmem [resolvable:$true] %s20
      %26 = dma.hbm_to_vmem [thread:$0]  %s0, 6144, %s21, [#allocation7], 768, 768, 48
    $region5: #{tpu_custom_call.1} parent=1 // pred_fallthru
      _
    // Predicated region
    $region6: #{tpu_custom_call.1} parent=1 // pred_check
      _
    $region7: #{tpu_custom_call.1} parent=1 // pred_check_branch
      %28 = sbr.rel (0) target = $region9
    $region8: #{tpu_custom_call.1} parent=1 // pred_region
      %s30 = ssub.s32 24576, 24576
      %31 = vsyncadd [#allocation9], %s30
      %s32 = sshll.u32 [#allocation8], 4
      %s33 = int_to_ptr.vmem [resolvable:$true] %s32
      %38 = dma.hbm_to_vmem [thread:$0]  %s1, 24576, %s33, [#allocation9], 256, 256, 16
    $region9: #{tpu_custom_call.1} parent=1 // pred_fallthru
      _
    // Predicated region
    $region10: #{tpu_custom_call.1} parent=1 // pred_check
      _
    $region11: #{tpu_custom_call.1} parent=1 // pred_check_branch
      %40 = sbr.rel (0) target = $region13
    $region12: #{tpu_custom_call.1} parent=1 // pred_region
      _
    $region13: #{tpu_custom_call.1} parent=1 // pred_fallthru
      _
    // Predicated region
    $region14: #{tpu_custom_call.1} parent=1 // pred_check
      _
    $region15: #{tpu_custom_call.1} parent=1 // pred_check_branch
      %42 = sbr.rel (0) target = $region17
    $region16: #{tpu_custom_call.1} parent=1 // pred_region
      _
    $region17: #{tpu_custom_call.1} parent=1 // pred_fallthru
      _
    // Predicated region
    $region18: #{tpu_custom_call.1} parent=1 // pred_check
      _
    $region19: #{tpu_custom_call.1} parent=1 // pred_check_branch
      %44 = sbr.rel (0) target = $region21
    $region20: #{tpu_custom_call.1} parent=1 // pred_region
      _
    $region21: #{tpu_custom_call.1} parent=1 // pred_fallthru
      _
    // Predicated region
    $region22: #{tpu_custom_call.1} parent=1 // pred_check
      _
    $region23: #{tpu_custom_call.1} parent=1 // pred_check_branch
      %46 = sbr.rel (0) target = $region25
    $region24: #{tpu_custom_call.1} parent=1 // pred_region
      %47 = dma.done [#allocation7], 6144
    $region25: #{tpu_custom_call.1} parent=1 // pred_fallthru
      _
    // Predicated region
    $region26: #{tpu_custom_call.1} parent=1 // pred_check
      _
    $region27: #{tpu_custom_call.1} parent=1 // pred_check_branch
      %49 = sbr.rel (0) target = $region29
    $region28: #{tpu_custom_call.1} parent=1 // pred_region
      %50 = dma.done [#allocation9], 24576
    $region29: #{tpu_custom_call.1} parent=1 // pred_fallthru
      _
    // Predicated region
    $region30: #{tpu_custom_call.1} parent=1 // pred_check
      _
    $region31: #{tpu_custom_call.1} parent=1 // pred_check_branch
      %53 = sbr.rel target = $region33
    $region32: #{tpu_custom_call.1} parent=1 // pred_region
      %54 = sst [smem:[#allocation12]] [#allocation11]
      %55 = sst [smem:[#allocation13]] [#allocation10]
    $region33: #{tpu_custom_call.1} parent=1 // pred_fallthru
      _
    %57 = shalt.err (0)
    %s59 = sshll.u32 [#allocation2], 4
    %s60 = int_to_ptr.vmem [resolvable:$true] %s59
    %62 = dma.hbm_to_vmem [thread:$0]  %s3, 4096, %s60, [#allocation5]
    %s63 = scalar_lea.sflag [#allocation5], 1
    %p65 = scmp.lt.u32.totalorder 512, 8
    %p66 = pneg %p65
    // Predicated region
    $region34: #{tpu_custom_call.1} parent=1 // pred_check
      _
    $region35: #{tpu_custom_call.1} parent=1 // pred_check_branch
      %68 = sbr.rel (%p65) target = $region37
    $region36: #{tpu_custom_call.1} parent=1 // pred_region
      %s84 = sand.u32 512, 7
      %p85 = scmp.eq.s32.totalorder %s84, 0
      // Predicated region
      $region49: #{tpu_custom_call.1} parent=36 // pred_check
        %p86 = pneg %p85
      $region50: #{tpu_custom_call.1} parent=36 // pred_check_branch
        %88 = sbr.rel (%p86) target = $region52
      $region51: #{tpu_custom_call.1} parent=36 // pred_region
        loop: start=0, step=1, limit=1
        $region53: #{tpu_custom_call.1} parent=51 // loop_pre_header
          _
        $region54: #{tpu_custom_call.1} parent=51 // loop_header
          %s90 = sphi 0, %s94
          %p91 = scmp.ge.s32.totalorder %s90, 1
          %s95 = sphi %s4, %s4
          %s96 = sphi [#allocation3], [#allocation3]
        $region55: #{tpu_custom_call.1} parent=51 // loop_header_branch
          %93 = sbr.rel (%p91) target = $region59
        $region56: #{tpu_custom_call.1} parent=51 // loop_body
          %v97 = vld [vmem:[%s95] sm:$0xff]
          %98 = vst [vmem:[%s96] sm:$0xff] %v97
          %v99 = vld [vmem:[%s95 + $0x8] sm:$0xff]
          %100 = vst [vmem:[%s96 + $0x8] sm:$0xff] %v99
          %v101 = vld [vmem:[%s95 + $0x10] sm:$0xff]
          %102 = vst [vmem:[%s96 + $0x10] sm:$0xff] %v101
          %v103 = vld [vmem:[%s95 + $0x18] sm:$0xff]
          %104 = vst [vmem:[%s96 + $0x18] sm:$0xff] %v103
          %v105 = vld [vmem:[%s95 + $0x20] sm:$0xff]
          %106 = vst [vmem:[%s96 + $0x20] sm:$0xff] %v105
          %v107 = vld [vmem:[%s95 + $0x28] sm:$0xff]
          %108 = vst [vmem:[%s96 + $0x28] sm:$0xff] %v107
          %v109 = vld [vmem:[%s95 + $0x30] sm:$0xff]
          %110 = vst [vmem:[%s96 + $0x30] sm:$0xff] %v109
          %v111 = vld [vmem:[%s95 + $0x38] sm:$0xff]
          %112 = vst [vmem:[%s96 + $0x38] sm:$0xff] %v111
          %v113 = vld [vmem:[%s95 + $0x40] sm:$0xff]
          %114 = vst [vmem:[%s96 + $0x40] sm:$0xff] %v113
          %v115 = vld [vmem:[%s95 + $0x48] sm:$0xff]
          %116 = vst [vmem:[%s96 + $0x48] sm:$0xff] %v115
          %v117 = vld [vmem:[%s95 + $0x50] sm:$0xff]
          %118 = vst [vmem:[%s96 + $0x50] sm:$0xff] %v117
          %v119 = vld [vmem:[%s95 + $0x58] sm:$0xff]
          %120 = vst [vmem:[%s96 + $0x58] sm:$0xff] %v119
          %v121 = vld [vmem:[%s95 + $0x60] sm:$0xff]
          %122 = vst [vmem:[%s96 + $0x60] sm:$0xff] %v121
          %v123 = vld [vmem:[%s95 + $0x68] sm:$0xff]
          %124 = vst [vmem:[%s96 + $0x68] sm:$0xff] %v123
          %v125 = vld [vmem:[%s95 + $0x70] sm:$0xff]
          %126 = vst [vmem:[%s96 + $0x70] sm:$0xff] %v125
          %v127 = vld [vmem:[%s95 + $0x78] sm:$0xff]
          %128 = vst [vmem:[%s96 + $0x78] sm:$0xff] %v127
          %v129 = vld [vmem:[%s95 + $0x80] sm:$0xff]
          %130 = vst [vmem:[%s96 + $0x80] sm:$0xff] %v129
          %v131 = vld [vmem:[%s95 + $0x88] sm:$0xff]
          %132 = vst [vmem:[%s96 + $0x88] sm:$0xff] %v131
          %v133 = vld [vmem:[%s95 + $0x90] sm:$0xff]
          %134 = vst [vmem:[%s96 + $0x90] sm:$0xff] %v133
          %v135 = vld [vmem:[%s95 + $0x98] sm:$0xff]
          %136 = vst [vmem:[%s96 + $0x98] sm:$0xff] %v135
          %v137 = vld [vmem:[%s95 + $0xa0] sm:$0xff]
          %138 = vst [vmem:[%s96 + $0xa0] sm:$0xff] %v137
          %v139 = vld [vmem:[%s95 + $0xa8] sm:$0xff]
          %140 = vst [vmem:[%s96 + $0xa8] sm:$0xff] %v139
          %v141 = vld [vmem:[%s95 + $0xb0] sm:$0xff]
          %142 = vst [vmem:[%s96 + $0xb0] sm:$0xff] %v141
          %v143 = vld [vmem:[%s95 + $0xb8] sm:$0xff]
          %144 = vst [vmem:[%s96 + $0xb8] sm:$0xff] %v143
          %v145 = vld [vmem:[%s95 + $0xc0] sm:$0xff]
          %146 = vst [vmem:[%s96 + $0xc0] sm:$0xff] %v145
          %v147 = vld [vmem:[%s95 + $0xc8] sm:$0xff]
          %148 = vst [vmem:[%s96 + $0xc8] sm:$0xff] %v147
          %v149 = vld [vmem:[%s95 + $0xd0] sm:$0xff]
          %150 = vst [vmem:[%s96 + $0xd0] sm:$0xff] %v149
          %v151 = vld [vmem:[%s95 + $0xd8] sm:$0xff]
          %152 = vst [vmem:[%s96 + $0xd8] sm:$0xff] %v151
          %v153 = vld [vmem:[%s95 + $0xe0] sm:$0xff]
          %154 = vst [vmem:[%s96 + $0xe0] sm:$0xff] %v153
          %v155 = vld [vmem:[%s95 + $0xe8] sm:$0xff]
          %156 = vst [vmem:[%s96 + $0xe8] sm:$0xff] %v155
          %v157 = vld [vmem:[%s95 + $0xf0] sm:$0xff]
          %158 = vst [vmem:[%s96 + $0xf0] sm:$0xff] %v157
          %v159 = vld [vmem:[%s95 + $0xf8] sm:$0xff]
          %160 = vst [vmem:[%s96 + $0xf8] sm:$0xff] %v159
          %v161 = vld [vmem:[%s95 + $0x100] sm:$0xff]
          %162 = vst [vmem:[%s96 + $0x100] sm:$0xff] %v161
          %v163 = vld [vmem:[%s95 + $0x108] sm:$0xff]
          %164 = vst [vmem:[%s96 + $0x108] sm:$0xff] %v163
          %v165 = vld [vmem:[%s95 + $0x110] sm:$0xff]
          %166 = vst [vmem:[%s96 + $0x110] sm:$0xff] %v165
          %v167 = vld [vmem:[%s95 + $0x118] sm:$0xff]
          %168 = vst [vmem:[%s96 + $0x118] sm:$0xff] %v167
          %v169 = vld [vmem:[%s95 + $0x120] sm:$0xff]
          %170 = vst [vmem:[%s96 + $0x120] sm:$0xff] %v169
          %v171 = vld [vmem:[%s95 + $0x128] sm:$0xff]
          %172 = vst [vmem:[%s96 + $0x128] sm:$0xff] %v171
          %v173 = vld [vmem:[%s95 + $0x130] sm:$0xff]
          %174 = vst [vmem:[%s96 + $0x130] sm:$0xff] %v173
          %v175 = vld [vmem:[%s95 + $0x138] sm:$0xff]
          %176 = vst [vmem:[%s96 + $0x138] sm:$0xff] %v175
          %v177 = vld [vmem:[%s95 + $0x140] sm:$0xff]
          %178 = vst [vmem:[%s96 + $0x140] sm:$0xff] %v177
          %v179 = vld [vmem:[%s95 + $0x148] sm:$0xff]
          %180 = vst [vmem:[%s96 + $0x148] sm:$0xff] %v179
          %v181 = vld [vmem:[%s95 + $0x150] sm:$0xff]
          %182 = vst [vmem:[%s96 + $0x150] sm:$0xff] %v181
          %v183 = vld [vmem:[%s95 + $0x158] sm:$0xff]
          %184 = vst [vmem:[%s96 + $0x158] sm:$0xff] %v183
          %v185 = vld [vmem:[%s95 + $0x160] sm:$0xff]
          %186 = vst [vmem:[%s96 + $0x160] sm:$0xff] %v185
          %v187 = vld [vmem:[%s95 + $0x168] sm:$0xff]
          %188 = vst [vmem:[%s96 + $0x168] sm:$0xff] %v187
          %v189 = vld [vmem:[%s95 + $0x170] sm:$0xff]
          %190 = vst [vmem:[%s96 + $0x170] sm:$0xff] %v189
          %v191 = vld [vmem:[%s95 + $0x178] sm:$0xff]
          %192 = vst [vmem:[%s96 + $0x178] sm:$0xff] %v191
          %v193 = vld [vmem:[%s95 + $0x180] sm:$0xff]
          %194 = vst [vmem:[%s96 + $0x180] sm:$0xff] %v193
          %v195 = vld [vmem:[%s95 + $0x188] sm:$0xff]
          %196 = vst [vmem:[%s96 + $0x188] sm:$0xff] %v195
          %v197 = vld [vmem:[%s95 + $0x190] sm:$0xff]
          %198 = vst [vmem:[%s96 + $0x190] sm:$0xff] %v197
          %v199 = vld [vmem:[%s95 + $0x198] sm:$0xff]
          %200 = vst [vmem:[%s96 + $0x198] sm:$0xff] %v199
          %v201 = vld [vmem:[%s95 + $0x1a0] sm:$0xff]
          %202 = vst [vmem:[%s96 + $0x1a0] sm:$0xff] %v201
          %v203 = vld [vmem:[%s95 + $0x1a8] sm:$0xff]
          %204 = vst [vmem:[%s96 + $0x1a8] sm:$0xff] %v203
          %v205 = vld [vmem:[%s95 + $0x1b0] sm:$0xff]
          %206 = vst [vmem:[%s96 + $0x1b0] sm:$0xff] %v205
          %v207 = vld [vmem:[%s95 + $0x1b8] sm:$0xff]
          %208 = vst [vmem:[%s96 + $0x1b8] sm:$0xff] %v207
          %v209 = vld [vmem:[%s95 + $0x1c0] sm:$0xff]
          %210 = vst [vmem:[%s96 + $0x1c0] sm:$0xff] %v209
          %v211 = vld [vmem:[%s95 + $0x1c8] sm:$0xff]
          %212 = vst [vmem:[%s96 + $0x1c8] sm:$0xff] %v211
          %v213 = vld [vmem:[%s95 + $0x1d0] sm:$0xff]
          %214 = vst [vmem:[%s96 + $0x1d0] sm:$0xff] %v213
          %v215 = vld [vmem:[%s95 + $0x1d8] sm:$0xff]
          %216 = vst [vmem:[%s96 + $0x1d8] sm:$0xff] %v215
          %v217 = vld [vmem:[%s95 + $0x1e0] sm:$0xff]
          %218 = vst [vmem:[%s96 + $0x1e0] sm:$0xff] %v217
          %v219 = vld [vmem:[%s95 + $0x1e8] sm:$0xff]
          %220 = vst [vmem:[%s96 + $0x1e8] sm:$0xff] %v219
          %v221 = vld [vmem:[%s95 + $0x1f0] sm:$0xff]
          %222 = vst [vmem:[%s96 + $0x1f0] sm:$0xff] %v221
          %v223 = vld [vmem:[%s95 + $0x1f8] sm:$0xff]
          %224 = vst [vmem:[%s96 + $0x1f8] sm:$0xff] %v223
        $region57: #{tpu_custom_call.1} parent=51 // loop_footer
          %s94 = sadd.s32 1, %s90
        $region58: #{tpu_custom_call.1} parent=51 // loop_footer_branch
          %89 = sbr.rel target = $region54
        $region59: #{tpu_custom_call.1} parent=51 // loop_exit
          _
      $region52: #{tpu_custom_call.1} parent=36 // pred_fallthru
        _
      %p225 = pneg %p85
      // Predicated region
      $region60: #{tpu_custom_call.1} parent=36 // pred_check
        _
      $region61: #{tpu_custom_call.1} parent=36 // pred_check_branch
        %227 = sbr.rel (%p85) target = $region63
      $region62: #{tpu_custom_call.1} parent=36 // pred_region
        %s228 = sand.u32 512, 7
      $region63: #{tpu_custom_call.1} parent=36 // pred_fallthru
        _
    $region37: #{tpu_custom_call.1} parent=1 // pred_fallthru
      _
    // Predicated region
    $region38: #{tpu_custom_call.1} parent=1 // pred_check
      %p69 = pneg %p65
    $region39: #{tpu_custom_call.1} parent=1 // pred_check_branch
      %71 = sbr.rel (%p69) target = $region41
    $region40: #{tpu_custom_call.1} parent=1 // pred_region
      %s72 = sshll.u32 1, 512
      %s73 = ssub.s32 %s72, 1
      loop: start=0, step=1, limit=1
      $region42: #{tpu_custom_call.1} parent=40 // loop_pre_header
        _
      $region43: #{tpu_custom_call.1} parent=40 // loop_header
        %s75 = sphi 0, %s79
        %p76 = scmp.ge.s32.totalorder %s75, 1
        %s80 = sphi %s4, %s4
        %s81 = sphi [#allocation3], [#allocation3]
      $region44: #{tpu_custom_call.1} parent=40 // loop_header_branch
        %78 = sbr.rel (%p76) target = $region48
      $region45: #{tpu_custom_call.1} parent=40 // loop_body
        %v82 = vld [vmem:[%s80] sm:%s73]
        %83 = vst [vmem:[%s81] sm:%s73] %v82
      $region46: #{tpu_custom_call.1} parent=40 // loop_footer
        %s79 = sadd.s32 1, %s75
      $region47: #{tpu_custom_call.1} parent=40 // loop_footer_branch
        %74 = sbr.rel target = $region43
      $region48: #{tpu_custom_call.1} parent=40 // loop_exit
        _
    $region41: #{tpu_custom_call.1} parent=1 // pred_fallthru
      _
    // Predicated region
    $region64: #{tpu_custom_call.1} parent=1 // pred_check
      _
    $region65: #{tpu_custom_call.1} parent=1 // pred_check_branch
      %231 = sbr.rel (0) target = $region67
    $region66: #{tpu_custom_call.1} parent=1 // pred_region
      %232 = vsyncadd %s63, 8192
    $region67: #{tpu_custom_call.1} parent=1 // pred_fallthru
      _
    %s233 = scalar_lea.sflag [#allocation5], 2
    %p235 = scmp.lt.u32.totalorder 512, 8
    %p236 = pneg %p235
    // Predicated region
    $region68: #{tpu_custom_call.1} parent=1 // pred_check
      _
    $region69: #{tpu_custom_call.1} parent=1 // pred_check_branch
      %238 = sbr.rel (%p235) target = $region71
    $region70: #{tpu_custom_call.1} parent=1 // pred_region
      %s254 = sand.u32 512, 7
      %p255 = scmp.eq.s32.totalorder %s254, 0
      // Predicated region
      $region83: #{tpu_custom_call.1} parent=70 // pred_check
        %p256 = pneg %p255
      $region84: #{tpu_custom_call.1} parent=70 // pred_check_branch
        %258 = sbr.rel (%p256) target = $region86
      $region85: #{tpu_custom_call.1} parent=70 // pred_region
        loop: start=0, step=1, limit=1
        $region87: #{tpu_custom_call.1} parent=85 // loop_pre_header
          _
        $region88: #{tpu_custom_call.1} parent=85 // loop_header
          %s260 = sphi 0, %s264
          %p261 = scmp.ge.s32.totalorder %s260, 1
          %s265 = sphi %s6, %s6
          %s266 = sphi [#allocation4], [#allocation4]
        $region89: #{tpu_custom_call.1} parent=85 // loop_header_branch
          %263 = sbr.rel (%p261) target = $region93
        $region90: #{tpu_custom_call.1} parent=85 // loop_body
          %v267 = vld [vmem:[%s265] sm:$0xff]
          %268 = vst [vmem:[%s266] sm:$0xff] %v267
          %v269 = vld [vmem:[%s265 + $0x8] sm:$0xff]
          %270 = vst [vmem:[%s266 + $0x8] sm:$0xff] %v269
          %v271 = vld [vmem:[%s265 + $0x10] sm:$0xff]
          %272 = vst [vmem:[%s266 + $0x10] sm:$0xff] %v271
          %v273 = vld [vmem:[%s265 + $0x18] sm:$0xff]
          %274 = vst [vmem:[%s266 + $0x18] sm:$0xff] %v273
          %v275 = vld [vmem:[%s265 + $0x20] sm:$0xff]
          %276 = vst [vmem:[%s266 + $0x20] sm:$0xff] %v275
          %v277 = vld [vmem:[%s265 + $0x28] sm:$0xff]
          %278 = vst [vmem:[%s266 + $0x28] sm:$0xff] %v277
          %v279 = vld [vmem:[%s265 + $0x30] sm:$0xff]
          %280 = vst [vmem:[%s266 + $0x30] sm:$0xff] %v279
          %v281 = vld [vmem:[%s265 + $0x38] sm:$0xff]
          %282 = vst [vmem:[%s266 + $0x38] sm:$0xff] %v281
          %v283 = vld [vmem:[%s265 + $0x40] sm:$0xff]
          %284 = vst [vmem:[%s266 + $0x40] sm:$0xff] %v283
          %v285 = vld [vmem:[%s265 + $0x48] sm:$0xff]
          %286 = vst [vmem:[%s266 + $0x48] sm:$0xff] %v285
          %v287 = vld [vmem:[%s265 + $0x50] sm:$0xff]
          %288 = vst [vmem:[%s266 + $0x50] sm:$0xff] %v287
          %v289 = vld [vmem:[%s265 + $0x58] sm:$0xff]
          %290 = vst [vmem:[%s266 + $0x58] sm:$0xff] %v289
          %v291 = vld [vmem:[%s265 + $0x60] sm:$0xff]
          %292 = vst [vmem:[%s266 + $0x60] sm:$0xff] %v291
          %v293 = vld [vmem:[%s265 + $0x68] sm:$0xff]
          %294 = vst [vmem:[%s266 + $0x68] sm:$0xff] %v293
          %v295 = vld [vmem:[%s265 + $0x70] sm:$0xff]
          %296 = vst [vmem:[%s266 + $0x70] sm:$0xff] %v295
          %v297 = vld [vmem:[%s265 + $0x78] sm:$0xff]
          %298 = vst [vmem:[%s266 + $0x78] sm:$0xff] %v297
          %v299 = vld [vmem:[%s265 + $0x80] sm:$0xff]
          %300 = vst [vmem:[%s266 + $0x80] sm:$0xff] %v299
          %v301 = vld [vmem:[%s265 + $0x88] sm:$0xff]
          %302 = vst [vmem:[%s266 + $0x88] sm:$0xff] %v301
          %v303 = vld [vmem:[%s265 + $0x90] sm:$0xff]
          %304 = vst [vmem:[%s266 + $0x90] sm:$0xff] %v303
          %v305 = vld [vmem:[%s265 + $0x98] sm:$0xff]
          %306 = vst [vmem:[%s266 + $0x98] sm:$0xff] %v305
          %v307 = vld [vmem:[%s265 + $0xa0] sm:$0xff]
          %308 = vst [vmem:[%s266 + $0xa0] sm:$0xff] %v307
          %v309 = vld [vmem:[%s265 + $0xa8] sm:$0xff]
          %310 = vst [vmem:[%s266 + $0xa8] sm:$0xff] %v309
          %v311 = vld [vmem:[%s265 + $0xb0] sm:$0xff]
          %312 = vst [vmem:[%s266 + $0xb0] sm:$0xff] %v311
          %v313 = vld [vmem:[%s265 + $0xb8] sm:$0xff]
          %314 = vst [vmem:[%s266 + $0xb8] sm:$0xff] %v313
          %v315 = vld [vmem:[%s265 + $0xc0] sm:$0xff]
          %316 = vst [vmem:[%s266 + $0xc0] sm:$0xff] %v315
          %v317 = vld [vmem:[%s265 + $0xc8] sm:$0xff]
          %318 = vst [vmem:[%s266 + $0xc8] sm:$0xff] %v317
          %v319 = vld [vmem:[%s265 + $0xd0] sm:$0xff]
          %320 = vst [vmem:[%s266 + $0xd0] sm:$0xff] %v319
          %v321 = vld [vmem:[%s265 + $0xd8] sm:$0xff]
          %322 = vst [vmem:[%s266 + $0xd8] sm:$0xff] %v321
          %v323 = vld [vmem:[%s265 + $0xe0] sm:$0xff]
          %324 = vst [vmem:[%s266 + $0xe0] sm:$0xff] %v323
          %v325 = vld [vmem:[%s265 + $0xe8] sm:$0xff]
          %326 = vst [vmem:[%s266 + $0xe8] sm:$0xff] %v325
          %v327 = vld [vmem:[%s265 + $0xf0] sm:$0xff]
          %328 = vst [vmem:[%s266 + $0xf0] sm:$0xff] %v327
          %v329 = vld [vmem:[%s265 + $0xf8] sm:$0xff]
          %330 = vst [vmem:[%s266 + $0xf8] sm:$0xff] %v329
          %v331 = vld [vmem:[%s265 + $0x100] sm:$0xff]
          %332 = vst [vmem:[%s266 + $0x100] sm:$0xff] %v331
          %v333 = vld [vmem:[%s265 + $0x108] sm:$0xff]
          %334 = vst [vmem:[%s266 + $0x108] sm:$0xff] %v333
          %v335 = vld [vmem:[%s265 + $0x110] sm:$0xff]
          %336 = vst [vmem:[%s266 + $0x110] sm:$0xff] %v335
          %v337 = vld [vmem:[%s265 + $0x118] sm:$0xff]
          %338 = vst [vmem:[%s266 + $0x118] sm:$0xff] %v337
          %v339 = vld [vmem:[%s265 + $0x120] sm:$0xff]
          %340 = vst [vmem:[%s266 + $0x120] sm:$0xff] %v339
          %v341 = vld [vmem:[%s265 + $0x128] sm:$0xff]
          %342 = vst [vmem:[%s266 + $0x128] sm:$0xff] %v341
          %v343 = vld [vmem:[%s265 + $0x130] sm:$0xff]
          %344 = vst [vmem:[%s266 + $0x130] sm:$0xff] %v343
          %v345 = vld [vmem:[%s265 + $0x138] sm:$0xff]
          %346 = vst [vmem:[%s266 + $0x138] sm:$0xff] %v345
          %v347 = vld [vmem:[%s265 + $0x140] sm:$0xff]
          %348 = vst [vmem:[%s266 + $0x140] sm:$0xff] %v347
          %v349 = vld [vmem:[%s265 + $0x148] sm:$0xff]
          %350 = vst [vmem:[%s266 + $0x148] sm:$0xff] %v349
          %v351 = vld [vmem:[%s265 + $0x150] sm:$0xff]
          %352 = vst [vmem:[%s266 + $0x150] sm:$0xff] %v351
          %v353 = vld [vmem:[%s265 + $0x158] sm:$0xff]
          %354 = vst [vmem:[%s266 + $0x158] sm:$0xff] %v353
          %v355 = vld [vmem:[%s265 + $0x160] sm:$0xff]
          %356 = vst [vmem:[%s266 + $0x160] sm:$0xff] %v355
          %v357 = vld [vmem:[%s265 + $0x168] sm:$0xff]
          %358 = vst [vmem:[%s266 + $0x168] sm:$0xff] %v357
          %v359 = vld [vmem:[%s265 + $0x170] sm:$0xff]
          %360 = vst [vmem:[%s266 + $0x170] sm:$0xff] %v359
          %v361 = vld [vmem:[%s265 + $0x178] sm:$0xff]
          %362 = vst [vmem:[%s266 + $0x178] sm:$0xff] %v361
          %v363 = vld [vmem:[%s265 + $0x180] sm:$0xff]
          %364 = vst [vmem:[%s266 + $0x180] sm:$0xff] %v363
          %v365 = vld [vmem:[%s265 + $0x188] sm:$0xff]
          %366 = vst [vmem:[%s266 + $0x188] sm:$0xff] %v365
          %v367 = vld [vmem:[%s265 + $0x190] sm:$0xff]
          %368 = vst [vmem:[%s266 + $0x190] sm:$0xff] %v367
          %v369 = vld [vmem:[%s265 + $0x198] sm:$0xff]
          %370 = vst [vmem:[%s266 + $0x198] sm:$0xff] %v369
          %v371 = vld [vmem:[%s265 + $0x1a0] sm:$0xff]
          %372 = vst [vmem:[%s266 + $0x1a0] sm:$0xff] %v371
          %v373 = vld [vmem:[%s265 + $0x1a8] sm:$0xff]
          %374 = vst [vmem:[%s266 + $0x1a8] sm:$0xff] %v373
          %v375 = vld [vmem:[%s265 + $0x1b0] sm:$0xff]
          %376 = vst [vmem:[%s266 + $0x1b0] sm:$0xff] %v375
          %v377 = vld [vmem:[%s265 + $0x1b8] sm:$0xff]
          %378 = vst [vmem:[%s266 + $0x1b8] sm:$0xff] %v377
          %v379 = vld [vmem:[%s265 + $0x1c0] sm:$0xff]
          %380 = vst [vmem:[%s266 + $0x1c0] sm:$0xff] %v379
          %v381 = vld [vmem:[%s265 + $0x1c8] sm:$0xff]
          %382 = vst [vmem:[%s266 + $0x1c8] sm:$0xff] %v381
          %v383 = vld [vmem:[%s265 + $0x1d0] sm:$0xff]
          %384 = vst [vmem:[%s266 + $0x1d0] sm:$0xff] %v383
          %v385 = vld [vmem:[%s265 + $0x1d8] sm:$0xff]
          %386 = vst [vmem:[%s266 + $0x1d8] sm:$0xff] %v385
          %v387 = vld [vmem:[%s265 + $0x1e0] sm:$0xff]
          %388 = vst [vmem:[%s266 + $0x1e0] sm:$0xff] %v387
          %v389 = vld [vmem:[%s265 + $0x1e8] sm:$0xff]
          %390 = vst [vmem:[%s266 + $0x1e8] sm:$0xff] %v389
          %v391 = vld [vmem:[%s265 + $0x1f0] sm:$0xff]
          %392 = vst [vmem:[%s266 + $0x1f0] sm:$0xff] %v391
          %v393 = vld [vmem:[%s265 + $0x1f8] sm:$0xff]
          %394 = vst [vmem:[%s266 + $0x1f8] sm:$0xff] %v393
        $region91: #{tpu_custom_call.1} parent=85 // loop_footer
          %s264 = sadd.s32 1, %s260
        $region92: #{tpu_custom_call.1} parent=85 // loop_footer_branch
          %259 = sbr.rel target = $region88
        $region93: #{tpu_custom_call.1} parent=85 // loop_exit
          _
      $region86: #{tpu_custom_call.1} parent=70 // pred_fallthru
        _
      %p395 = pneg %p255
      // Predicated region
      $region94: #{tpu_custom_call.1} parent=70 // pred_check
        _
      $region95: #{tpu_custom_call.1} parent=70 // pred_check_branch
        %397 = sbr.rel (%p255) target = $region97
      $region96: #{tpu_custom_call.1} parent=70 // pred_region
        %s398 = sand.u32 512, 7
      $region97: #{tpu_custom_call.1} parent=70 // pred_fallthru
        _
    $region71: #{tpu_custom_call.1} parent=1 // pred_fallthru
      _
    // Predicated region
    $region72: #{tpu_custom_call.1} parent=1 // pred_check
      %p239 = pneg %p235
    $region73: #{tpu_custom_call.1} parent=1 // pred_check_branch
      %241 = sbr.rel (%p239) target = $region75
    $region74: #{tpu_custom_call.1} parent=1 // pred_region
      %s242 = sshll.u32 1, 512
      %s243 = ssub.s32 %s242, 1
      loop: start=0, step=1, limit=1
      $region76: #{tpu_custom_call.1} parent=74 // loop_pre_header
        _
      $region77: #{tpu_custom_call.1} parent=74 // loop_header
        %s245 = sphi 0, %s249
        %p246 = scmp.ge.s32.totalorder %s245, 1
        %s250 = sphi %s6, %s6
        %s251 = sphi [#allocation4], [#allocation4]
      $region78: #{tpu_custom_call.1} parent=74 // loop_header_branch
        %248 = sbr.rel (%p246) target = $region82
      $region79: #{tpu_custom_call.1} parent=74 // loop_body
        %v252 = vld [vmem:[%s250] sm:%s243]
        %253 = vst [vmem:[%s251] sm:%s243] %v252
      $region80: #{tpu_custom_call.1} parent=74 // loop_footer
        %s249 = sadd.s32 1, %s245
      $region81: #{tpu_custom_call.1} parent=74 // loop_footer_branch
        %244 = sbr.rel target = $region77
      $region82: #{tpu_custom_call.1} parent=74 // loop_exit
        _
    $region75: #{tpu_custom_call.1} parent=1 // pred_fallthru
      _
    // Predicated region
    $region98: #{tpu_custom_call.1} parent=1 // pred_check
      _
    $region99: #{tpu_custom_call.1} parent=1 // pred_check_branch
      %401 = sbr.rel (0) target = $region101
    $region100: #{tpu_custom_call.1} parent=1 // pred_region
      %402 = vsyncadd %s233, 8192
    $region101: #{tpu_custom_call.1} parent=1 // pred_fallthru
      _
    %v403 = vld [vmem:[#allocation6] sm:$0xff]
    %v404 = vld [vmem:[#allocation6 + $0x8] sm:$0xff]
    %v405 = vld [vmem:[#allocation6 + $0x10] sm:$0xff]
    %v406 = vld [vmem:[#allocation6 + $0x18] sm:$0xff]
    %v407 = vld [vmem:[#allocation6 + $0x20] sm:$0xff]
    %v408 = vld [vmem:[#allocation6 + $0x28] sm:$0xff]
    %v409 = vld [vmem:[#allocation6 + $0x30] sm:$0xff]
    %v410 = vld [vmem:[#allocation6 + $0x38] sm:$0xff]
    %v411 = vld [vmem:[#allocation6 + $0x40] sm:$0xff]
    %v412 = vld [vmem:[#allocation6 + $0x48] sm:$0xff]
    %v413 = vld [vmem:[#allocation6 + $0x50] sm:$0xff]
    %v414 = vld [vmem:[#allocation6 + $0x58] sm:$0xff]
    %v415 = vld [vmem:[#allocation6 + $0x60] sm:$0xff]
    %v416 = vld [vmem:[#allocation6 + $0x68] sm:$0xff]
    %v417 = vld [vmem:[#allocation6 + $0x70] sm:$0xff]
    %v418 = vld [vmem:[#allocation6 + $0x78] sm:$0xff]
    %v419 = vld [vmem:[#allocation6 + $0x80] sm:$0xff]
    %v420 = vld [vmem:[#allocation6 + $0x88] sm:$0xff]
    %v421 = vld [vmem:[#allocation6 + $0x90] sm:$0xff]
    %v422 = vld [vmem:[#allocation6 + $0x98] sm:$0xff]
    %v423 = vld [vmem:[#allocation6 + $0xa0] sm:$0xff]
    %v424 = vld [vmem:[#allocation6 + $0xa8] sm:$0xff]
    %v425 = vld [vmem:[#allocation6 + $0xb0] sm:$0xff]
    %v426 = vld [vmem:[#allocation6 + $0xb8] sm:$0xff]
    %v427 = vld [vmem:[#allocation6 + $0xc0] sm:$0xff]
    %v428 = vld [vmem:[#allocation6 + $0xc8] sm:$0xff]
    %v429 = vld [vmem:[#allocation6 + $0xd0] sm:$0xff]
    %v430 = vld [vmem:[#allocation6 + $0xd8] sm:$0xff]
    %v431 = vld [vmem:[#allocation6 + $0xe0] sm:$0xff]
    %v432 = vld [vmem:[#allocation6 + $0xe8] sm:$0xff]
    %v433 = vld [vmem:[#allocation6 + $0xf0] sm:$0xff]
    %v434 = vld [vmem:[#allocation6 + $0xf8] sm:$0xff]
    %v435 = vld [vmem:[#allocation6 + $0x100] sm:$0xff]
    %v436 = vld [vmem:[#allocation6 + $0x108] sm:$0xff]
    %v437 = vld [vmem:[#allocation6 + $0x110] sm:$0xff]
    %v438 = vld [vmem:[#allocation6 + $0x118] sm:$0xff]
    %v439 = vld [vmem:[#allocation6 + $0x120] sm:$0xff]
    %v440 = vld [vmem:[#allocation6 + $0x128] sm:$0xff]
    %v441 = vld [vmem:[#allocation6 + $0x130] sm:$0xff]
    %v442 = vld [vmem:[#allocation6 + $0x138] sm:$0xff]
    %v443 = vld [vmem:[#allocation6 + $0x140] sm:$0xff]
    %v444 = vld [vmem:[#allocation6 + $0x148] sm:$0xff]
    %v445 = vld [vmem:[#allocation6 + $0x150] sm:$0xff]
    %v446 = vld [vmem:[#allocation6 + $0x158] sm:$0xff]
    %v447 = vld [vmem:[#allocation6 + $0x160] sm:$0xff]
    %v448 = vld [vmem:[#allocation6 + $0x168] sm:$0xff]
    %v449 = vld [vmem:[#allocation6 + $0x170] sm:$0xff]
    %v450 = vld [vmem:[#allocation6 + $0x178] sm:$0xff]
    %v451 = vpack.c.bf16 %v409, %v403
    %v452 = vpack.c.bf16 %v410, %v404
    %v453 = vpack.c.bf16 %v411, %v405
    %v454 = vpack.c.bf16 %v412, %v406
    %v455 = vpack.c.bf16 %v413, %v407
    %v456 = vpack.c.bf16 %v414, %v408
    %v457 = vpack.c.bf16 %v421, %v415
    %v458 = vpack.c.bf16 %v422, %v416
    %v459 = vpack.c.bf16 %v423, %v417
    %v460 = vpack.c.bf16 %v424, %v418
    %v461 = vpack.c.bf16 %v425, %v419
    %v462 = vpack.c.bf16 %v426, %v420
    %v463 = vpack.c.bf16 %v433, %v427
    %v464 = vpack.c.bf16 %v434, %v428
    %v465 = vpack.c.bf16 %v435, %v429
    %v466 = vpack.c.bf16 %v436, %v430
    %v467 = vpack.c.bf16 %v437, %v431
    %v468 = vpack.c.bf16 %v438, %v432
    %v469 = vpack.c.bf16 %v445, %v439
    %v470 = vpack.c.bf16 %v446, %v440
    %v471 = vpack.c.bf16 %v447, %v441
    %v472 = vpack.c.bf16 %v448, %v442
    %v473 = vpack.c.bf16 %v449, %v443
    %v474 = vpack.c.bf16 %v450, %v444
    %v475 = vld [vmem:[#allocation8] sm:$0xff]
    %v476 = vld [vmem:[#allocation8 + $0x8] sm:$0xff]
    %v477 = vld [vmem:[#allocation8 + $0x10] sm:$0xff]
    %v478 = vld [vmem:[#allocation8 + $0x18] sm:$0xff]
    %v479 = vld [vmem:[#allocation8 + $0x20] sm:$0xff]
    %v480 = vld [vmem:[#allocation8 + $0x28] sm:$0xff]
    %v481 = vld [vmem:[#allocation8 + $0x30] sm:$0xff]
    %v482 = vld [vmem:[#allocation8 + $0x38] sm:$0xff]
    %v483 = vld [vmem:[#allocation8 + $0x40] sm:$0xff]
    %v484 = vld [vmem:[#allocation8 + $0x48] sm:$0xff]
    %v485 = vld [vmem:[#allocation8 + $0x50] sm:$0xff]
    %v486 = vld [vmem:[#allocation8 + $0x58] sm:$0xff]
    %v487 = vld [vmem:[#allocation8 + $0x60] sm:$0xff]
    %v488 = vld [vmem:[#allocation8 + $0x68] sm:$0xff]
    %v489 = vld [vmem:[#allocation8 + $0x70] sm:$0xff]
    %v490 = vld [vmem:[#allocation8 + $0x78] sm:$0xff]
    %v491 = vld [vmem:[#allocation8 + $0x80] sm:$0xff]
    %v492 = vld [vmem:[#allocation8 + $0x88] sm:$0xff]
    %v493 = vld [vmem:[#allocation8 + $0x90] sm:$0xff]
    %v494 = vld [vmem:[#allocation8 + $0x98] sm:$0xff]
    %v495 = vld [vmem:[#allocation8 + $0xa0] sm:$0xff]
    %v496 = vld [vmem:[#allocation8 + $0xa8] sm:$0xff]
    %v497 = vld [vmem:[#allocation8 + $0xb0] sm:$0xff]
    %v498 = vld [vmem:[#allocation8 + $0xb8] sm:$0xff]
    %v499 = vld [vmem:[#allocation8 + $0xc0] sm:$0xff]
    %v500 = vld [vmem:[#allocation8 + $0xc8] sm:$0xff]
    %v501 = vld [vmem:[#allocation8 + $0xd0] sm:$0xff]
    %v502 = vld [vmem:[#allocation8 + $0xd8] sm:$0xff]
    %v503 = vld [vmem:[#allocation8 + $0xe0] sm:$0xff]
    %v504 = vld [vmem:[#allocation8 + $0xe8] sm:$0xff]
    %v505 = vld [vmem:[#allocation8 + $0xf0] sm:$0xff]
    %v506 = vld [vmem:[#allocation8 + $0xf8] sm:$0xff]
    %v507 = vld [vmem:[#allocation8 + $0x100] sm:$0xff]
    %v508 = vld [vmem:[#allocation8 + $0x108] sm:$0xff]
    %v509 = vld [vmem:[#allocation8 + $0x110] sm:$0xff]
    %v510 = vld [vmem:[#allocation8 + $0x118] sm:$0xff]
    %v511 = vld [vmem:[#allocation8 + $0x120] sm:$0xff]
    %v512 = vld [vmem:[#allocation8 + $0x128] sm:$0xff]
    %v513 = vld [vmem:[#allocation8 + $0x130] sm:$0xff]
    %v514 = vld [vmem:[#allocation8 + $0x138] sm:$0xff]
    %v515 = vld [vmem:[#allocation8 + $0x140] sm:$0xff]
    %v516 = vld [vmem:[#allocation8 + $0x148] sm:$0xff]
    %v517 = vld [vmem:[#allocation8 + $0x150] sm:$0xff]
    %v518 = vld [vmem:[#allocation8 + $0x158] sm:$0xff]
    %v519 = vld [vmem:[#allocation8 + $0x160] sm:$0xff]
    %v520 = vld [vmem:[#allocation8 + $0x168] sm:$0xff]
    %v521 = vld [vmem:[#allocation8 + $0x170] sm:$0xff]
    %v522 = vld [vmem:[#allocation8 + $0x178] sm:$0xff]
    %v523 = vld [vmem:[#allocation8 + $0x180] sm:$0xff]
    %v524 = vld [vmem:[#allocation8 + $0x188] sm:$0xff]
    %v525 = vld [vmem:[#allocation8 + $0x190] sm:$0xff]
    %v526 = vld [vmem:[#allocation8 + $0x198] sm:$0xff]
    %v527 = vld [vmem:[#allocation8 + $0x1a0] sm:$0xff]
    %v528 = vld [vmem:[#allocation8 + $0x1a8] sm:$0xff]
    %v529 = vld [vmem:[#allocation8 + $0x1b0] sm:$0xff]
    %v530 = vld [vmem:[#allocation8 + $0x1b8] sm:$0xff]
    %v531 = vld [vmem:[#allocation8 + $0x1c0] sm:$0xff]
    %v532 = vld [vmem:[#allocation8 + $0x1c8] sm:$0xff]
    %v533 = vld [vmem:[#allocation8 + $0x1d0] sm:$0xff]
    %v534 = vld [vmem:[#allocation8 + $0x1d8] sm:$0xff]
    %v535 = vld [vmem:[#allocation8 + $0x1e0] sm:$0xff]
    %v536 = vld [vmem:[#allocation8 + $0x1e8] sm:$0xff]
    %v537 = vld [vmem:[#allocation8 + $0x1f0] sm:$0xff]
    %v538 = vld [vmem:[#allocation8 + $0x1f8] sm:$0xff]
    %v539 = vld [vmem:[#allocation8 + $0x200] sm:$0xff]
    %v540 = vld [vmem:[#allocation8 + $0x208] sm:$0xff]
    %v541 = vld [vmem:[#allocation8 + $0x210] sm:$0xff]
    %v542 = vld [vmem:[#allocation8 + $0x218] sm:$0xff]
    %v543 = vld [vmem:[#allocation8 + $0x220] sm:$0xff]
    %v544 = vld [vmem:[#allocation8 + $0x228] sm:$0xff]
    %v545 = vld [vmem:[#allocation8 + $0x230] sm:$0xff]
    %v546 = vld [vmem:[#allocation8 + $0x238] sm:$0xff]
    %v547 = vld [vmem:[#allocation8 + $0x240] sm:$0xff]
    %v548 = vld [vmem:[#allocation8 + $0x248] sm:$0xff]
    %v549 = vld [vmem:[#allocation8 + $0x250] sm:$0xff]
    %v550 = vld [vmem:[#allocation8 + $0x258] sm:$0xff]
    %v551 = vld [vmem:[#allocation8 + $0x260] sm:$0xff]
    %v552 = vld [vmem:[#allocation8 + $0x268] sm:$0xff]
    %v553 = vld [vmem:[#allocation8 + $0x270] sm:$0xff]
    %v554 = vld [vmem:[#allocation8 + $0x278] sm:$0xff]
    %v555 = vld [vmem:[#allocation8 + $0x280] sm:$0xff]
    %v556 = vld [vmem:[#allocation8 + $0x288] sm:$0xff]
    %v557 = vld [vmem:[#allocation8 + $0x290] sm:$0xff]
    %v558 = vld [vmem:[#allocation8 + $0x298] sm:$0xff]
    %v559 = vld [vmem:[#allocation8 + $0x2a0] sm:$0xff]
    %v560 = vld [vmem:[#allocation8 + $0x2a8] sm:$0xff]
    %v561 = vld [vmem:[#allocation8 + $0x2b0] sm:$0xff]
    %v562 = vld [vmem:[#allocation8 + $0x2b8] sm:$0xff]
    %v563 = vld [vmem:[#allocation8 + $0x2c0] sm:$0xff]
    %v564 = vld [vmem:[#allocation8 + $0x2c8] sm:$0xff]
    %v565 = vld [vmem:[#allocation8 + $0x2d0] sm:$0xff]
    %v566 = vld [vmem:[#allocation8 + $0x2d8] sm:$0xff]
    %v567 = vld [vmem:[#allocation8 + $0x2e0] sm:$0xff]
    %v568 = vld [vmem:[#allocation8 + $0x2e8] sm:$0xff]
    %v569 = vld [vmem:[#allocation8 + $0x2f0] sm:$0xff]
    %v570 = vld [vmem:[#allocation8 + $0x2f8] sm:$0xff]
    %v571 = vld [vmem:[#allocation8 + $0x300] sm:$0xff]
    %v572 = vld [vmem:[#allocation8 + $0x308] sm:$0xff]
    %v573 = vld [vmem:[#allocation8 + $0x310] sm:$0xff]
    %v574 = vld [vmem:[#allocation8 + $0x318] sm:$0xff]
    %v575 = vld [vmem:[#allocation8 + $0x320] sm:$0xff]
    %v576 = vld [vmem:[#allocation8 + $0x328] sm:$0xff]
    %v577 = vld [vmem:[#allocation8 + $0x330] sm:$0xff]
    %v578 = vld [vmem:[#allocation8 + $0x338] sm:$0xff]
    %v579 = vld [vmem:[#allocation8 + $0x340] sm:$0xff]
    %v580 = vld [vmem:[#allocation8 + $0x348] sm:$0xff]
    %v581 = vld [vmem:[#allocation8 + $0x350] sm:$0xff]
    %v582 = vld [vmem:[#allocation8 + $0x358] sm:$0xff]
    %v583 = vld [vmem:[#allocation8 + $0x360] sm:$0xff]
    %v584 = vld [vmem:[#allocation8 + $0x368] sm:$0xff]
    %v585 = vld [vmem:[#allocation8 + $0x370] sm:$0xff]
    %v586 = vld [vmem:[#allocation8 + $0x378] sm:$0xff]
    %v587 = vld [vmem:[#allocation8 + $0x380] sm:$0xff]
    %v588 = vld [vmem:[#allocation8 + $0x388] sm:$0xff]
    %v589 = vld [vmem:[#allocation8 + $0x390] sm:$0xff]
    %v590 = vld [vmem:[#allocation8 + $0x398] sm:$0xff]
    %v591 = vld [vmem:[#allocation8 + $0x3a0] sm:$0xff]
    %v592 = vld [vmem:[#allocation8 + $0x3a8] sm:$0xff]
    %v593 = vld [vmem:[#allocation8 + $0x3b0] sm:$0xff]
    %v594 = vld [vmem:[#allocation8 + $0x3b8] sm:$0xff]
    %v595 = vld [vmem:[#allocation8 + $0x3c0] sm:$0xff]
    %v596 = vld [vmem:[#allocation8 + $0x3c8] sm:$0xff]
    %v597 = vld [vmem:[#allocation8 + $0x3d0] sm:$0xff]
    %v598 = vld [vmem:[#allocation8 + $0x3d8] sm:$0xff]
    %v599 = vld [vmem:[#allocation8 + $0x3e0] sm:$0xff]
    %v600 = vld [vmem:[#allocation8 + $0x3e8] sm:$0xff]
    %v601 = vld [vmem:[#allocation8 + $0x3f0] sm:$0xff]
    %v602 = vld [vmem:[#allocation8 + $0x3f8] sm:$0xff]
    %v603 = vld [vmem:[#allocation8 + $0x400] sm:$0xff]
    %v604 = vld [vmem:[#allocation8 + $0x408] sm:$0xff]
    %v605 = vld [vmem:[#allocation8 + $0x410] sm:$0xff]
    %v606 = vld [vmem:[#allocation8 + $0x418] sm:$0xff]
    %v607 = vld [vmem:[#allocation8 + $0x420] sm:$0xff]
    %v608 = vld [vmem:[#allocation8 + $0x428] sm:$0xff]
    %v609 = vld [vmem:[#allocation8 + $0x430] sm:$0xff]
    %v610 = vld [vmem:[#allocation8 + $0x438] sm:$0xff]
    %v611 = vld [vmem:[#allocation8 + $0x440] sm:$0xff]
    %v612 = vld [vmem:[#allocation8 + $0x448] sm:$0xff]
    %v613 = vld [vmem:[#allocation8 + $0x450] sm:$0xff]
    %v614 = vld [vmem:[#allocation8 + $0x458] sm:$0xff]
    %v615 = vld [vmem:[#allocation8 + $0x460] sm:$0xff]
    %v616 = vld [vmem:[#allocation8 + $0x468] sm:$0xff]
    %v617 = vld [vmem:[#allocation8 + $0x470] sm:$0xff]
    %v618 = vld [vmem:[#allocation8 + $0x478] sm:$0xff]
    %v619 = vld [vmem:[#allocation8 + $0x480] sm:$0xff]
    %v620 = vld [vmem:[#allocation8 + $0x488] sm:$0xff]
    %v621 = vld [vmem:[#allocation8 + $0x490] sm:$0xff]
    %v622 = vld [vmem:[#allocation8 + $0x498] sm:$0xff]
    %v623 = vld [vmem:[#allocation8 + $0x4a0] sm:$0xff]
    %v624 = vld [vmem:[#allocation8 + $0x4a8] sm:$0xff]
    %v625 = vld [vmem:[#allocation8 + $0x4b0] sm:$0xff]
    %v626 = vld [vmem:[#allocation8 + $0x4b8] sm:$0xff]
    %v627 = vld [vmem:[#allocation8 + $0x4c0] sm:$0xff]
    %v628 = vld [vmem:[#allocation8 + $0x4c8] sm:$0xff]
    %v629 = vld [vmem:[#allocation8 + $0x4d0] sm:$0xff]
    %v630 = vld [vmem:[#allocation8 + $0x4d8] sm:$0xff]
    %v631 = vld [vmem:[#allocation8 + $0x4e0] sm:$0xff]
    %v632 = vld [vmem:[#allocation8 + $0x4e8] sm:$0xff]
    %v633 = vld [vmem:[#allocation8 + $0x4f0] sm:$0xff]
    %v634 = vld [vmem:[#allocation8 + $0x4f8] sm:$0xff]
    %v635 = vld [vmem:[#allocation8 + $0x500] sm:$0xff]
    %v636 = vld [vmem:[#allocation8 + $0x508] sm:$0xff]
    %v637 = vld [vmem:[#allocation8 + $0x510] sm:$0xff]
    %v638 = vld [vmem:[#allocation8 + $0x518] sm:$0xff]
    %v639 = vld [vmem:[#allocation8 + $0x520] sm:$0xff]
    %v640 = vld [vmem:[#allocation8 + $0x528] sm:$0xff]
    %v641 = vld [vmem:[#allocation8 + $0x530] sm:$0xff]
    %v642 = vld [vmem:[#allocation8 + $0x538] sm:$0xff]
    %v643 = vld [vmem:[#allocation8 + $0x540] sm:$0xff]
    %v644 = vld [vmem:[#allocation8 + $0x548] sm:$0xff]
    %v645 = vld [vmem:[#allocation8 + $0x550] sm:$0xff]
    %v646 = vld [vmem:[#allocation8 + $0x558] sm:$0xff]
    %v647 = vld [vmem:[#allocation8 + $0x560] sm:$0xff]
    %v648 = vld [vmem:[#allocation8 + $0x568] sm:$0xff]
    %v649 = vld [vmem:[#allocation8 + $0x570] sm:$0xff]
    %v650 = vld [vmem:[#allocation8 + $0x578] sm:$0xff]
    %v651 = vld [vmem:[#allocation8 + $0x580] sm:$0xff]
    %v652 = vld [vmem:[#allocation8 + $0x588] sm:$0xff]
    %v653 = vld [vmem:[#allocation8 + $0x590] sm:$0xff]
    %v654 = vld [vmem:[#allocation8 + $0x598] sm:$0xff]
    %v655 = vld [vmem:[#allocation8 + $0x5a0] sm:$0xff]
    %v656 = vld [vmem:[#allocation8 + $0x5a8] sm:$0xff]
    %v657 = vld [vmem:[#allocation8 + $0x5b0] sm:$0xff]
    %v658 = vld [vmem:[#allocation8 + $0x5b8] sm:$0xff]
    %v659 = vld [vmem:[#allocation8 + $0x5c0] sm:$0xff]
    %v660 = vld [vmem:[#allocation8 + $0x5c8] sm:$0xff]
    %v661 = vld [vmem:[#allocation8 + $0x5d0] sm:$0xff]
    %v662 = vld [vmem:[#allocation8 + $0x5d8] sm:$0xff]
    %v663 = vld [vmem:[#allocation8 + $0x5e0] sm:$0xff]
    %v664 = vld [vmem:[#allocation8 + $0x5e8] sm:$0xff]
    %v665 = vld [vmem:[#allocation8 + $0x5f0] sm:$0xff]
    %v666 = vld [vmem:[#allocation8 + $0x5f8] sm:$0xff]
    %v667 = vld [vmem:[%s2] sm:$0xf]
    %v669 = vlaneseq
    %v670 = vshrl.u32 %v669, 7
    %v671 = vsub.s32 0, %v670
    %v672 = vrot.slane %v667, %v671
    %v673 = vlaneseq
    %v674 = vshrl.u32 %v673, 7
    %v675 = vsub.s32 1, %v674
    %v676 = vrot.slane %v667, %v675
    %v677 = vlaneseq
    %v678 = vshrl.u32 %v677, 7
    %v679 = vsub.s32 2, %v678
    %v680 = vrot.slane %v667, %v679
    %v681 = vlaneseq
    %v682 = vshrl.u32 %v681, 7
    %v683 = vsub.s32 3, %v682
    %v684 = vrot.slane %v667, %v683
    %v881 = vunpack.c.l.b16 %v475
    %v882 = vunpack.c.h.b16 %v475
    %v883 = vunpack.c.l.b16 %v476
    %v884 = vunpack.c.h.b16 %v476
    %v885 = vunpack.c.l.b16 %v477
    %v886 = vunpack.c.h.b16 %v477
    %v887 = vunpack.c.l.b16 %v478
    %v888 = vunpack.c.h.b16 %v478
    %v889 = vunpack.c.l.b16 %v479
    %v890 = vunpack.c.h.b16 %v479
    %v891 = vunpack.c.l.b16 %v480
    %v892 = vunpack.c.h.b16 %v480
    %v893 = vunpack.c.l.b16 %v481
    %v894 = vunpack.c.h.b16 %v481
    %v895 = vunpack.c.l.b16 %v482
    %v896 = vunpack.c.h.b16 %v482
    %v897 = vunpack.c.l.b16 %v483
    %v898 = vunpack.c.h.b16 %v483
    %v899 = vunpack.c.l.b16 %v484
    %v900 = vunpack.c.h.b16 %v484
    %v901 = vunpack.c.l.b16 %v485
    %v902 = vunpack.c.h.b16 %v485
    %v903 = vunpack.c.l.b16 %v486
    %v904 = vunpack.c.h.b16 %v486
    %v905 = vunpack.c.l.b16 %v487
    %v906 = vunpack.c.h.b16 %v487
    %v907 = vunpack.c.l.b16 %v488
    %v908 = vunpack.c.h.b16 %v488
    %v909 = vunpack.c.l.b16 %v489
    %v910 = vunpack.c.h.b16 %v489
    %v911 = vunpack.c.l.b16 %v490
    %v912 = vunpack.c.h.b16 %v490
    %v913 = vunpack.c.l.b16 %v491
    %v914 = vunpack.c.h.b16 %v491
    %v915 = vunpack.c.l.b16 %v492
    %v916 = vunpack.c.h.b16 %v492
    %v917 = vunpack.c.l.b16 %v493
    %v918 = vunpack.c.h.b16 %v493
    %v919 = vunpack.c.l.b16 %v494
    %v920 = vunpack.c.h.b16 %v494
    %v921 = vunpack.c.l.b16 %v495
    %v922 = vunpack.c.h.b16 %v495
    %v923 = vunpack.c.l.b16 %v496
    %v924 = vunpack.c.h.b16 %v496
    %v925 = vunpack.c.l.b16 %v497
    %v926 = vunpack.c.h.b16 %v497
    %v927 = vunpack.c.l.b16 %v498
    %v928 = vunpack.c.h.b16 %v498
    %v929 = vunpack.c.l.b16 %v499
    %v930 = vunpack.c.h.b16 %v499
    %v931 = vunpack.c.l.b16 %v500
    %v932 = vunpack.c.h.b16 %v500
    %v933 = vunpack.c.l.b16 %v501
    %v934 = vunpack.c.h.b16 %v501
    %v935 = vunpack.c.l.b16 %v502
    %v936 = vunpack.c.h.b16 %v502
    %v937 = vunpack.c.l.b16 %v503
    %v938 = vunpack.c.h.b16 %v503
    %v939 = vunpack.c.l.b16 %v504
    %v940 = vunpack.c.h.b16 %v504
    %v941 = vunpack.c.l.b16 %v505
    %v942 = vunpack.c.h.b16 %v505
    %v943 = vunpack.c.l.b16 %v506
    %v944 = vunpack.c.h.b16 %v506
    %v945 = vunpack.c.l.b16 %v507
    %v946 = vunpack.c.h.b16 %v507
    %v947 = vunpack.c.l.b16 %v508
    %v948 = vunpack.c.h.b16 %v508
    %v949 = vunpack.c.l.b16 %v509
    %v950 = vunpack.c.h.b16 %v509
    %v951 = vunpack.c.l.b16 %v510
    %v952 = vunpack.c.h.b16 %v510
    %v953 = vunpack.c.l.b16 %v511
    %v954 = vunpack.c.h.b16 %v511
    %v955 = vunpack.c.l.b16 %v512
    %v956 = vunpack.c.h.b16 %v512
    %v957 = vunpack.c.l.b16 %v513
    %v958 = vunpack.c.h.b16 %v513
    %v959 = vunpack.c.l.b16 %v514
    %v960 = vunpack.c.h.b16 %v514
    %v961 = vunpack.c.l.b16 %v515
    %v962 = vunpack.c.h.b16 %v515
    %v963 = vunpack.c.l.b16 %v516
    %v964 = vunpack.c.h.b16 %v516
    %v965 = vunpack.c.l.b16 %v517
    %v966 = vunpack.c.h.b16 %v517
    %v967 = vunpack.c.l.b16 %v518
    %v968 = vunpack.c.h.b16 %v518
    %v969 = vunpack.c.l.b16 %v519
    %v970 = vunpack.c.h.b16 %v519
    %v971 = vunpack.c.l.b16 %v520
    %v972 = vunpack.c.h.b16 %v520
    %v973 = vunpack.c.l.b16 %v521
    %v974 = vunpack.c.h.b16 %v521
    %v975 = vunpack.c.l.b16 %v522
    %v976 = vunpack.c.h.b16 %v522
    %v977 = vunpack.c.l.b16 %v523
    %v978 = vunpack.c.h.b16 %v523
    %v979 = vunpack.c.l.b16 %v524
    %v980 = vunpack.c.h.b16 %v524
    %v981 = vunpack.c.l.b16 %v525
    %v982 = vunpack.c.h.b16 %v525
    %v983 = vunpack.c.l.b16 %v526
    %v984 = vunpack.c.h.b16 %v526
    %v985 = vunpack.c.l.b16 %v527
    %v986 = vunpack.c.h.b16 %v527
    %v987 = vunpack.c.l.b16 %v528
    %v988 = vunpack.c.h.b16 %v528
    %v989 = vunpack.c.l.b16 %v529
    %v990 = vunpack.c.h.b16 %v529
    %v991 = vunpack.c.l.b16 %v530
    %v992 = vunpack.c.h.b16 %v530
    %v993 = vunpack.c.l.b16 %v531
    %v994 = vunpack.c.h.b16 %v531
    %v995 = vunpack.c.l.b16 %v532
    %v996 = vunpack.c.h.b16 %v532
    %v997 = vunpack.c.l.b16 %v533
    %v998 = vunpack.c.h.b16 %v533
    %v999 = vunpack.c.l.b16 %v534
    %v1000 = vunpack.c.h.b16 %v534
    %v1001 = vunpack.c.l.b16 %v535
    %v1002 = vunpack.c.h.b16 %v535
    %v1003 = vunpack.c.l.b16 %v536
    %v1004 = vunpack.c.h.b16 %v536
    %v1005 = vunpack.c.l.b16 %v537
    %v1006 = vunpack.c.h.b16 %v537
    %v1007 = vunpack.c.l.b16 %v538
    %v1008 = vunpack.c.h.b16 %v538
    %v1009 = vunpack.c.l.b16 %v539
    %v1010 = vunpack.c.h.b16 %v539
    %v1011 = vunpack.c.l.b16 %v540
    %v1012 = vunpack.c.h.b16 %v540
    %v1013 = vunpack.c.l.b16 %v541
    %v1014 = vunpack.c.h.b16 %v541
    %v1015 = vunpack.c.l.b16 %v542
    %v1016 = vunpack.c.h.b16 %v542
    %v1017 = vunpack.c.l.b16 %v543
    %v1018 = vunpack.c.h.b16 %v543
    %v1019 = vunpack.c.l.b16 %v544
    %v1020 = vunpack.c.h.b16 %v544
    %v1021 = vunpack.c.l.b16 %v545
    %v1022 = vunpack.c.h.b16 %v545
    %v1023 = vunpack.c.l.b16 %v546
    %v1024 = vunpack.c.h.b16 %v546
    %v1025 = vunpack.c.l.b16 %v547
    %v1026 = vunpack.c.h.b16 %v547
    %v1027 = vunpack.c.l.b16 %v548
    %v1028 = vunpack.c.h.b16 %v548
    %v1029 = vunpack.c.l.b16 %v549
    %v1030 = vunpack.c.h.b16 %v549
    %v1031 = vunpack.c.l.b16 %v550
    %v1032 = vunpack.c.h.b16 %v550
    %v1033 = vunpack.c.l.b16 %v551
    %v1034 = vunpack.c.h.b16 %v551
    %v1035 = vunpack.c.l.b16 %v552
    %v1036 = vunpack.c.h.b16 %v552
    %v1037 = vunpack.c.l.b16 %v553
    %v1038 = vunpack.c.h.b16 %v553
    %v1039 = vunpack.c.l.b16 %v554
    %v1040 = vunpack.c.h.b16 %v554
    %v1041 = vunpack.c.l.b16 %v555
    %v1042 = vunpack.c.h.b16 %v555
    %v1043 = vunpack.c.l.b16 %v556
    %v1044 = vunpack.c.h.b16 %v556
    %v1045 = vunpack.c.l.b16 %v557
    %v1046 = vunpack.c.h.b16 %v557
    %v1047 = vunpack.c.l.b16 %v558
    %v1048 = vunpack.c.h.b16 %v558
    %v1049 = vunpack.c.l.b16 %v559
    %v1050 = vunpack.c.h.b16 %v559
    %v1051 = vunpack.c.l.b16 %v560
    %v1052 = vunpack.c.h.b16 %v560
    %v1053 = vunpack.c.l.b16 %v561
    %v1054 = vunpack.c.h.b16 %v561
    %v1055 = vunpack.c.l.b16 %v562
    %v1056 = vunpack.c.h.b16 %v562
    %v1057 = vunpack.c.l.b16 %v563
    %v1058 = vunpack.c.h.b16 %v563
    %v1059 = vunpack.c.l.b16 %v564
    %v1060 = vunpack.c.h.b16 %v564
    %v1061 = vunpack.c.l.b16 %v565
    %v1062 = vunpack.c.h.b16 %v565
    %v1063 = vunpack.c.l.b16 %v566
    %v1064 = vunpack.c.h.b16 %v566
    %v1065 = vunpack.c.l.b16 %v567
    %v1066 = vunpack.c.h.b16 %v567
    %v1067 = vunpack.c.l.b16 %v568
    %v1068 = vunpack.c.h.b16 %v568
    %v1069 = vunpack.c.l.b16 %v569
    %v1070 = vunpack.c.h.b16 %v569
    %v1071 = vunpack.c.l.b16 %v570
    %v1072 = vunpack.c.h.b16 %v570
    %v1073 = vunpack.c.l.b16 %v571
    %v1074 = vunpack.c.h.b16 %v571
    %v1075 = vunpack.c.l.b16 %v572
    %v1076 = vunpack.c.h.b16 %v572
    %v1077 = vunpack.c.l.b16 %v573
    %v1078 = vunpack.c.h.b16 %v573
    %v1079 = vunpack.c.l.b16 %v574
    %v1080 = vunpack.c.h.b16 %v574
    %v1081 = vunpack.c.l.b16 %v575
    %v1082 = vunpack.c.h.b16 %v575
    %v1083 = vunpack.c.l.b16 %v576
    %v1084 = vunpack.c.h.b16 %v576
    %v1085 = vunpack.c.l.b16 %v577
    %v1086 = vunpack.c.h.b16 %v577
    %v1087 = vunpack.c.l.b16 %v578
    %v1088 = vunpack.c.h.b16 %v578
    %v1089 = vunpack.c.l.b16 %v579
    %v1090 = vunpack.c.h.b16 %v579
    %v1091 = vunpack.c.l.b16 %v580
    %v1092 = vunpack.c.h.b16 %v580
    %v1093 = vunpack.c.l.b16 %v581
    %v1094 = vunpack.c.h.b16 %v581
    %v1095 = vunpack.c.l.b16 %v582
    %v1096 = vunpack.c.h.b16 %v582
    %v1097 = vunpack.c.l.b16 %v583
    %v1098 = vunpack.c.h.b16 %v583
    %v1099 = vunpack.c.l.b16 %v584
    %v1100 = vunpack.c.h.b16 %v584
    %v1101 = vunpack.c.l.b16 %v585
    %v1102 = vunpack.c.h.b16 %v585
    %v1103 = vunpack.c.l.b16 %v586
    %v1104 = vunpack.c.h.b16 %v586
    %v1105 = vunpack.c.l.b16 %v587
    %v1106 = vunpack.c.h.b16 %v587
    %v1107 = vunpack.c.l.b16 %v588
    %v1108 = vunpack.c.h.b16 %v588
    %v1109 = vunpack.c.l.b16 %v589
    %v1110 = vunpack.c.h.b16 %v589
    %v1111 = vunpack.c.l.b16 %v590
    %v1112 = vunpack.c.h.b16 %v590
    %v1113 = vunpack.c.l.b16 %v591
    %v1114 = vunpack.c.h.b16 %v591
    %v1115 = vunpack.c.l.b16 %v592
    %v1116 = vunpack.c.h.b16 %v592
    %v1117 = vunpack.c.l.b16 %v593
    %v1118 = vunpack.c.h.b16 %v593
    %v1119 = vunpack.c.l.b16 %v594
    %v1120 = vunpack.c.h.b16 %v594
    %v1121 = vunpack.c.l.b16 %v595
    %v1122 = vunpack.c.h.b16 %v595
    %v1123 = vunpack.c.l.b16 %v596
    %v1124 = vunpack.c.h.b16 %v596
    %v1125 = vunpack.c.l.b16 %v597
    %v1126 = vunpack.c.h.b16 %v597
    %v1127 = vunpack.c.l.b16 %v598
    %v1128 = vunpack.c.h.b16 %v598
    %v1129 = vunpack.c.l.b16 %v599
    %v1130 = vunpack.c.h.b16 %v599
    %v1131 = vunpack.c.l.b16 %v600
    %v1132 = vunpack.c.h.b16 %v600
    %v1133 = vunpack.c.l.b16 %v601
    %v1134 = vunpack.c.h.b16 %v601
    %v1135 = vunpack.c.l.b16 %v602
    %v1136 = vunpack.c.h.b16 %v602
    %v1137 = vunpack.c.l.b16 %v603
    %v1138 = vunpack.c.h.b16 %v603
    %v1139 = vunpack.c.l.b16 %v604
    %v1140 = vunpack.c.h.b16 %v604
    %v1141 = vunpack.c.l.b16 %v605
    %v1142 = vunpack.c.h.b16 %v605
    %v1143 = vunpack.c.l.b16 %v606
    %v1144 = vunpack.c.h.b16 %v606
    %v1145 = vunpack.c.l.b16 %v607
    %v1146 = vunpack.c.h.b16 %v607
    %v1147 = vunpack.c.l.b16 %v608
    %v1148 = vunpack.c.h.b16 %v608
    %v1149 = vunpack.c.l.b16 %v609
    %v1150 = vunpack.c.h.b16 %v609
    %v1151 = vunpack.c.l.b16 %v610
    %v1152 = vunpack.c.h.b16 %v610
    %v1153 = vunpack.c.l.b16 %v611
    %v1154 = vunpack.c.h.b16 %v611
    %v1155 = vunpack.c.l.b16 %v612
    %v1156 = vunpack.c.h.b16 %v612
    %v1157 = vunpack.c.l.b16 %v613
    %v1158 = vunpack.c.h.b16 %v613
    %v1159 = vunpack.c.l.b16 %v614
    %v1160 = vunpack.c.h.b16 %v614
    %v1161 = vunpack.c.l.b16 %v615
    %v1162 = vunpack.c.h.b16 %v615
    %v1163 = vunpack.c.l.b16 %v616
    %v1164 = vunpack.c.h.b16 %v616
    %v1165 = vunpack.c.l.b16 %v617
    %v1166 = vunpack.c.h.b16 %v617
    %v1167 = vunpack.c.l.b16 %v618
    %v1168 = vunpack.c.h.b16 %v618
    %v1169 = vunpack.c.l.b16 %v619
    %v1170 = vunpack.c.h.b16 %v619
    %v1171 = vunpack.c.l.b16 %v620
    %v1172 = vunpack.c.h.b16 %v620
    %v1173 = vunpack.c.l.b16 %v621
    %v1174 = vunpack.c.h.b16 %v621
    %v1175 = vunpack.c.l.b16 %v622
    %v1176 = vunpack.c.h.b16 %v622
    %v1177 = vunpack.c.l.b16 %v623
    %v1178 = vunpack.c.h.b16 %v623
    %v1179 = vunpack.c.l.b16 %v624
    %v1180 = vunpack.c.h.b16 %v624
    %v1181 = vunpack.c.l.b16 %v625
    %v1182 = vunpack.c.h.b16 %v625
    %v1183 = vunpack.c.l.b16 %v626
    %v1184 = vunpack.c.h.b16 %v626
    %v1185 = vunpack.c.l.b16 %v627
    %v1186 = vunpack.c.h.b16 %v627
    %v1187 = vunpack.c.l.b16 %v628
    %v1188 = vunpack.c.h.b16 %v628
    %v1189 = vunpack.c.l.b16 %v629
    %v1190 = vunpack.c.h.b16 %v629
    %v1191 = vunpack.c.l.b16 %v630
    %v1192 = vunpack.c.h.b16 %v630
    %v1193 = vunpack.c.l.b16 %v631
    %v1194 = vunpack.c.h.b16 %v631
    %v1195 = vunpack.c.l.b16 %v632
    %v1196 = vunpack.c.h.b16 %v632
    %v1197 = vunpack.c.l.b16 %v633
    %v1198 = vunpack.c.h.b16 %v633
    %v1199 = vunpack.c.l.b16 %v634
    %v1200 = vunpack.c.h.b16 %v634
    %v1201 = vunpack.c.l.b16 %v635
    %v1202 = vunpack.c.h.b16 %v635
    %v1203 = vunpack.c.l.b16 %v636
    %v1204 = vunpack.c.h.b16 %v636
    %v1205 = vunpack.c.l.b16 %v637
    %v1206 = vunpack.c.h.b16 %v637
    %v1207 = vunpack.c.l.b16 %v638
    %v1208 = vunpack.c.h.b16 %v638
    %v1209 = vunpack.c.l.b16 %v639
    %v1210 = vunpack.c.h.b16 %v639
    %v1211 = vunpack.c.l.b16 %v640
    %v1212 = vunpack.c.h.b16 %v640
    %v1213 = vunpack.c.l.b16 %v641
    %v1214 = vunpack.c.h.b16 %v641
    %v1215 = vunpack.c.l.b16 %v642
    %v1216 = vunpack.c.h.b16 %v642
    %v1217 = vunpack.c.l.b16 %v643
    %v1218 = vunpack.c.h.b16 %v643
    %v1219 = vunpack.c.l.b16 %v644
    %v1220 = vunpack.c.h.b16 %v644
    %v1221 = vunpack.c.l.b16 %v645
    %v1222 = vunpack.c.h.b16 %v645
    %v1223 = vunpack.c.l.b16 %v646
    %v1224 = vunpack.c.h.b16 %v646
    %v1225 = vunpack.c.l.b16 %v647
    %v1226 = vunpack.c.h.b16 %v647
    %v1227 = vunpack.c.l.b16 %v648
    %v1228 = vunpack.c.h.b16 %v648
    %v1229 = vunpack.c.l.b16 %v649
    %v1230 = vunpack.c.h.b16 %v649
    %v1231 = vunpack.c.l.b16 %v650
    %v1232 = vunpack.c.h.b16 %v650
    %v1233 = vunpack.c.l.b16 %v651
    %v1234 = vunpack.c.h.b16 %v651
    %v1235 = vunpack.c.l.b16 %v652
    %v1236 = vunpack.c.h.b16 %v652
    %v1237 = vunpack.c.l.b16 %v653
    %v1238 = vunpack.c.h.b16 %v653
    %v1239 = vunpack.c.l.b16 %v654
    %v1240 = vunpack.c.h.b16 %v654
    %v1241 = vunpack.c.l.b16 %v655
    %v1242 = vunpack.c.h.b16 %v655
    %v1243 = vunpack.c.l.b16 %v656
    %v1244 = vunpack.c.h.b16 %v656
    %v1245 = vunpack.c.l.b16 %v657
    %v1246 = vunpack.c.h.b16 %v657
    %v1247 = vunpack.c.l.b16 %v658
    %v1248 = vunpack.c.h.b16 %v658
    %v1249 = vunpack.c.l.b16 %v659
    %v1250 = vunpack.c.h.b16 %v659
    %v1251 = vunpack.c.l.b16 %v660
    %v1252 = vunpack.c.h.b16 %v660
    %v1253 = vunpack.c.l.b16 %v661
    %v1254 = vunpack.c.h.b16 %v661
    %v1255 = vunpack.c.l.b16 %v662
    %v1256 = vunpack.c.h.b16 %v662
    %v1257 = vunpack.c.l.b16 %v663
    %v1258 = vunpack.c.h.b16 %v663
    %v1259 = vunpack.c.l.b16 %v664
    %v1260 = vunpack.c.h.b16 %v664
    %v1261 = vunpack.c.l.b16 %v665
    %v1262 = vunpack.c.h.b16 %v665
    %v1263 = vunpack.c.l.b16 %v666
    %v1264 = vunpack.c.h.b16 %v666
    %v1265 = vpack.c.b16 %v885, %v881
    %v1266 = vpack.c.b16 %v886, %v882
    %v1267 = vpack.c.b16 %v887, %v883
    %v1268 = vpack.c.b16 %v888, %v884
    %v1269 = vpack.c.b16 %v893, %v889
    %v1270 = vpack.c.b16 %v894, %v890
    %v1271 = vpack.c.b16 %v895, %v891
    %v1272 = vpack.c.b16 %v896, %v892
    %v1273 = vpack.c.b16 %v901, %v897
    %v1274 = vpack.c.b16 %v902, %v898
    %v1275 = vpack.c.b16 %v903, %v899
    %v1276 = vpack.c.b16 %v904, %v900
    %v1277 = vpack.c.b16 %v909, %v905
    %v1278 = vpack.c.b16 %v910, %v906
    %v1279 = vpack.c.b16 %v911, %v907
    %v1280 = vpack.c.b16 %v912, %v908
    %v1281 = vpack.c.b16 %v917, %v913
    %v1282 = vpack.c.b16 %v918, %v914
    %v1283 = vpack.c.b16 %v919, %v915
    %v1284 = vpack.c.b16 %v920, %v916
    %v1285 = vpack.c.b16 %v925, %v921
    %v1286 = vpack.c.b16 %v926, %v922
    %v1287 = vpack.c.b16 %v927, %v923
    %v1288 = vpack.c.b16 %v928, %v924
    %v1289 = vpack.c.b16 %v933, %v929
    %v1290 = vpack.c.b16 %v934, %v930
    %v1291 = vpack.c.b16 %v935, %v931
    %v1292 = vpack.c.b16 %v936, %v932
    %v1293 = vpack.c.b16 %v941, %v937
    %v1294 = vpack.c.b16 %v942, %v938
    %v1295 = vpack.c.b16 %v943, %v939
    %v1296 = vpack.c.b16 %v944, %v940
    %v1297 = vpack.c.b16 %v949, %v945
    %v1298 = vpack.c.b16 %v950, %v946
    %v1299 = vpack.c.b16 %v951, %v947
    %v1300 = vpack.c.b16 %v952, %v948
    %v1301 = vpack.c.b16 %v957, %v953
    %v1302 = vpack.c.b16 %v958, %v954
    %v1303 = vpack.c.b16 %v959, %v955
    %v1304 = vpack.c.b16 %v960, %v956
    %v1305 = vpack.c.b16 %v965, %v961
    %v1306 = vpack.c.b16 %v966, %v962
    %v1307 = vpack.c.b16 %v967, %v963
    %v1308 = vpack.c.b16 %v968, %v964
    %v1309 = vpack.c.b16 %v973, %v969
    %v1310 = vpack.c.b16 %v974, %v970
    %v1311 = vpack.c.b16 %v975, %v971
    %v1312 = vpack.c.b16 %v976, %v972
    %v1313 = vpack.c.b16 %v981, %v977
    %v1314 = vpack.c.b16 %v982, %v978
    %v1315 = vpack.c.b16 %v983, %v979
    %v1316 = vpack.c.b16 %v984, %v980
    %v1317 = vpack.c.b16 %v989, %v985
    %v1318 = vpack.c.b16 %v990, %v986
    %v1319 = vpack.c.b16 %v991, %v987
    %v1320 = vpack.c.b16 %v992, %v988
    %v1321 = vpack.c.b16 %v997, %v993
    %v1322 = vpack.c.b16 %v998, %v994
    %v1323 = vpack.c.b16 %v999, %v995
    %v1324 = vpack.c.b16 %v1000, %v996
    %v1325 = vpack.c.b16 %v1005, %v1001
    %v1326 = vpack.c.b16 %v1006, %v1002
    %v1327 = vpack.c.b16 %v1007, %v1003
    %v1328 = vpack.c.b16 %v1008, %v1004
    %v1329 = vpack.c.b16 %v1013, %v1009
    %v1330 = vpack.c.b16 %v1014, %v1010
    %v1331 = vpack.c.b16 %v1015, %v1011
    %v1332 = vpack.c.b16 %v1016, %v1012
    %v1333 = vpack.c.b16 %v1021, %v1017
    %v1334 = vpack.c.b16 %v1022, %v1018
    %v1335 = vpack.c.b16 %v1023, %v1019
    %v1336 = vpack.c.b16 %v1024, %v1020
    %v1337 = vpack.c.b16 %v1029, %v1025
    %v1338 = vpack.c.b16 %v1030, %v1026
    %v1339 = vpack.c.b16 %v1031, %v1027
    %v1340 = vpack.c.b16 %v1032, %v1028
    %v1341 = vpack.c.b16 %v1037, %v1033
    %v1342 = vpack.c.b16 %v1038, %v1034
    %v1343 = vpack.c.b16 %v1039, %v1035
    %v1344 = vpack.c.b16 %v1040, %v1036
    %v1345 = vpack.c.b16 %v1045, %v1041
    %v1346 = vpack.c.b16 %v1046, %v1042
    %v1347 = vpack.c.b16 %v1047, %v1043
    %v1348 = vpack.c.b16 %v1048, %v1044
    %v1349 = vpack.c.b16 %v1053, %v1049
    %v1350 = vpack.c.b16 %v1054, %v1050
    %v1351 = vpack.c.b16 %v1055, %v1051
    %v1352 = vpack.c.b16 %v1056, %v1052
    %v1353 = vpack.c.b16 %v1061, %v1057
    %v1354 = vpack.c.b16 %v1062, %v1058
    %v1355 = vpack.c.b16 %v1063, %v1059
    %v1356 = vpack.c.b16 %v1064, %v1060
    %v1357 = vpack.c.b16 %v1069, %v1065
    %v1358 = vpack.c.b16 %v1070, %v1066
    %v1359 = vpack.c.b16 %v1071, %v1067
    %v1360 = vpack.c.b16 %v1072, %v1068
    %v1361 = vpack.c.b16 %v1077, %v1073
    %v1362 = vpack.c.b16 %v1078, %v1074
    %v1363 = vpack.c.b16 %v1079, %v1075
    %v1364 = vpack.c.b16 %v1080, %v1076
    %v1365 = vpack.c.b16 %v1085, %v1081
    %v1366 = vpack.c.b16 %v1086, %v1082
    %v1367 = vpack.c.b16 %v1087, %v1083
    %v1368 = vpack.c.b16 %v1088, %v1084
    %v1369 = vpack.c.b16 %v1093, %v1089
    %v1370 = vpack.c.b16 %v1094, %v1090
    %v1371 = vpack.c.b16 %v1095, %v1091
    %v1372 = vpack.c.b16 %v1096, %v1092
    %v1373 = vpack.c.b16 %v1101, %v1097
    %v1374 = vpack.c.b16 %v1102, %v1098
    %v1375 = vpack.c.b16 %v1103, %v1099
    %v1376 = vpack.c.b16 %v1104, %v1100
    %v1377 = vpack.c.b16 %v1109, %v1105
    %v1378 = vpack.c.b16 %v1110, %v1106
    %v1379 = vpack.c.b16 %v1111, %v1107
    %v1380 = vpack.c.b16 %v1112, %v1108
    %v1381 = vpack.c.b16 %v1117, %v1113
    %v1382 = vpack.c.b16 %v1118, %v1114
    %v1383 = vpack.c.b16 %v1119, %v1115
    %v1384 = vpack.c.b16 %v1120, %v1116
    %v1385 = vpack.c.b16 %v1125, %v1121
    %v1386 = vpack.c.b16 %v1126, %v1122
    %v1387 = vpack.c.b16 %v1127, %v1123
    %v1388 = vpack.c.b16 %v1128, %v1124
    %v1389 = vpack.c.b16 %v1133, %v1129
    %v1390 = vpack.c.b16 %v1134, %v1130
    %v1391 = vpack.c.b16 %v1135, %v1131
    %v1392 = vpack.c.b16 %v1136, %v1132
    %v1393 = vpack.c.b16 %v1141, %v1137
    %v1394 = vpack.c.b16 %v1142, %v1138
    %v1395 = vpack.c.b16 %v1143, %v1139
    %v1396 = vpack.c.b16 %v1144, %v1140
    %v1397 = vpack.c.b16 %v1149, %v1145
    %v1398 = vpack.c.b16 %v1150, %v1146
    %v1399 = vpack.c.b16 %v1151, %v1147
    %v1400 = vpack.c.b16 %v1152, %v1148
    %v1401 = vpack.c.b16 %v1157, %v1153
    %v1402 = vpack.c.b16 %v1158, %v1154
    %v1403 = vpack.c.b16 %v1159, %v1155
    %v1404 = vpack.c.b16 %v1160, %v1156
    %v1405 = vpack.c.b16 %v1165, %v1161
    %v1406 = vpack.c.b16 %v1166, %v1162
    %v1407 = vpack.c.b16 %v1167, %v1163
    %v1408 = vpack.c.b16 %v1168, %v1164
    %v1409 = vpack.c.b16 %v1173, %v1169
    %v1410 = vpack.c.b16 %v1174, %v1170
    %v1411 = vpack.c.b16 %v1175, %v1171
    %v1412 = vpack.c.b16 %v1176, %v1172
    %v1413 = vpack.c.b16 %v1181, %v1177
    %v1414 = vpack.c.b16 %v1182, %v1178
    %v1415 = vpack.c.b16 %v1183, %v1179
    %v1416 = vpack.c.b16 %v1184, %v1180
    %v1417 = vpack.c.b16 %v1189, %v1185
    %v1418 = vpack.c.b16 %v1190, %v1186
    %v1419 = vpack.c.b16 %v1191, %v1187
    %v1420 = vpack.c.b16 %v1192, %v1188
    %v1421 = vpack.c.b16 %v1197, %v1193
    %v1422 = vpack.c.b16 %v1198, %v1194
    %v1423 = vpack.c.b16 %v1199, %v1195
    %v1424 = vpack.c.b16 %v1200, %v1196
    %v1425 = vpack.c.b16 %v1205, %v1201
    %v1426 = vpack.c.b16 %v1206, %v1202
    %v1427 = vpack.c.b16 %v1207, %v1203
    %v1428 = vpack.c.b16 %v1208, %v1204
    %v1429 = vpack.c.b16 %v1213, %v1209
    %v1430 = vpack.c.b16 %v1214, %v1210
    %v1431 = vpack.c.b16 %v1215, %v1211
    %v1432 = vpack.c.b16 %v1216, %v1212
    %v1433 = vpack.c.b16 %v1221, %v1217
    %v1434 = vpack.c.b16 %v1222, %v1218
    %v1435 = vpack.c.b16 %v1223, %v1219
    %v1436 = vpack.c.b16 %v1224, %v1220
    %v1437 = vpack.c.b16 %v1229, %v1225
    %v1438 = vpack.c.b16 %v1230, %v1226
    %v1439 = vpack.c.b16 %v1231, %v1227
    %v1440 = vpack.c.b16 %v1232, %v1228
    %v1441 = vpack.c.b16 %v1237, %v1233
    %v1442 = vpack.c.b16 %v1238, %v1234
    %v1443 = vpack.c.b16 %v1239, %v1235
    %v1444 = vpack.c.b16 %v1240, %v1236
    %v1445 = vpack.c.b16 %v1245, %v1241
    %v1446 = vpack.c.b16 %v1246, %v1242
    %v1447 = vpack.c.b16 %v1247, %v1243
    %v1448 = vpack.c.b16 %v1248, %v1244
    %v1449 = vpack.c.b16 %v1253, %v1249
    %v1450 = vpack.c.b16 %v1254, %v1250
    %v1451 = vpack.c.b16 %v1255, %v1251
    %v1452 = vpack.c.b16 %v1256, %v1252
    %v1453 = vpack.c.b16 %v1261, %v1257
    %v1454 = vpack.c.b16 %v1262, %v1258
    %v1455 = vpack.c.b16 %v1263, %v1259
    %v1456 = vpack.c.b16 %v1264, %v1260
    %1649 = vmatprep.subr.bf16.mxu0 %v1294
    %1650 = vmatpush1.bf16.msra.mxu0 %v1293
    %1651 = vmatprep.subr.bf16.mxu0 %v1290
    %1652 = vmatpush1.bf16.msra.mxu0 %v1289
    %1653 = vmatprep.subr.bf16.mxu0 %v1286
    %1654 = vmatpush1.bf16.msra.mxu0 %v1285
    %1655 = vmatprep.subr.bf16.mxu0 %v1282
    %1656 = vmatpush1.bf16.msra.mxu0 %v1281
    %1657 = vmatprep.subr.bf16.mxu0 %v1278
    %1658 = vmatpush1.bf16.msra.mxu0 %v1277
    %1659 = vmatprep.subr.bf16.mxu0 %v1274
    %1660 = vmatpush1.bf16.msra.mxu0 %v1273
    %1661 = vmatprep.subr.bf16.mxu0 %v1270
    %1662 = vmatpush1.bf16.msra.mxu0 %v1269
    %1663 = vmatprep.subr.bf16.mxu0 %v1266
    %1664 = vmatpush1.bf16.msra.mxu0 %v1265
    %1665 = vmatprep.subr.bf16.mxu0 %v1326
    %1666 = vmatpush2.bf16.msra.mxu0 %v1325
    %1667 = vmatprep.subr.bf16.mxu0 %v1322
    %1668 = vmatpush2.bf16.msra.mxu0 %v1321
    %1669 = vmatprep.subr.bf16.mxu0 %v1318
    %1670 = vmatpush2.bf16.msra.mxu0 %v1317
    %1671 = vmatprep.subr.bf16.mxu0 %v1314
    %1672 = vmatpush2.bf16.msra.mxu0 %v1313
    %1673 = vmatprep.subr.bf16.mxu0 %v1310
    %1674 = vmatpush2.bf16.msra.mxu0 %v1309
    %1675 = vmatprep.subr.bf16.mxu0 %v1306
    %1676 = vmatpush2.bf16.msra.mxu0 %v1305
    %1677 = vmatprep.subr.bf16.mxu0 %v1302
    %1678 = vmatpush2.bf16.msra.mxu0 %v1301
    %1679 = vmatprep.subr.bf16.mxu0 %v1298
    %1680 = vmatpush2.bf16.msra.mxu0 %v1297
    %1681 = vmatprep.mubr.bf16.mxu0 %v452
    %1682 = vmatmul.mubr.bf16.gmra.mxu0 %v451
    %v1683 = vpop.f32.mrf.mxu0
    %v1684 = vadd.f32 %v672, %v1683
    %v1685 = vpop.f32.mrf.mxu0
    %v1686 = vadd.f32 %v676, %v1685
    %v1687 = vpop.f32.mrf.mxu0
    %v1688 = vadd.f32 %v672, %v1687
    %v1689 = vpop.f32.mrf.mxu0
    %v1690 = vadd.f32 %v676, %v1689
    %1691 = vmatprep.mubr.bf16.mxu0 %v458
    %1692 = vmatmul.mubr.bf16.gmra.mxu0 %v457
    %v1693 = vpop.f32.mrf.mxu0
    %v1694 = vadd.f32 %v672, %v1693
    %v1695 = vpop.f32.mrf.mxu0
    %v1696 = vadd.f32 %v676, %v1695
    %v1697 = vpop.f32.mrf.mxu0
    %v1698 = vadd.f32 %v672, %v1697
    %v1699 = vpop.f32.mrf.mxu0
    %v1700 = vadd.f32 %v676, %v1699
    %1701 = vmatprep.mubr.bf16.mxu0 %v464
    %1702 = vmatmul.mubr.bf16.gmra.mxu0 %v463
    %v1703 = vpop.f32.mrf.mxu0
    %v1704 = vadd.f32 %v672, %v1703
    %v1705 = vpop.f32.mrf.mxu0
    %v1706 = vadd.f32 %v676, %v1705
    %v1707 = vpop.f32.mrf.mxu0
    %v1708 = vadd.f32 %v672, %v1707
    %v1709 = vpop.f32.mrf.mxu0
    %v1710 = vadd.f32 %v676, %v1709
    %1711 = vmatprep.mubr.bf16.mxu0 %v470
    %1712 = vmatmul.mubr.bf16.gmra.mxu0 %v469
    %v1713 = vpop.f32.mrf.mxu0
    %v1714 = vadd.f32 %v672, %v1713
    %v1715 = vpop.f32.mrf.mxu0
    %v1716 = vadd.f32 %v676, %v1715
    %v1717 = vpop.f32.mrf.mxu0
    %v1718 = vadd.f32 %v672, %v1717
    %v1719 = vpop.f32.mrf.mxu0
    %v1720 = vadd.f32 %v676, %v1719
    %1721 = vdwg.mxu0
    %1722 = vmatprep.subr.bf16.mxu0 %v1358
    %1723 = vmatpush1.bf16.msra.mxu0 %v1357
    %1724 = vmatprep.subr.bf16.mxu0 %v1354
    %1725 = vmatpush1.bf16.msra.mxu0 %v1353
    %1726 = vmatprep.subr.bf16.mxu0 %v1350
    %1727 = vmatpush1.bf16.msra.mxu0 %v1349
    %1728 = vmatprep.subr.bf16.mxu0 %v1346
    %1729 = vmatpush1.bf16.msra.mxu0 %v1345
    %1730 = vmatprep.subr.bf16.mxu0 %v1342
    %1731 = vmatpush1.bf16.msra.mxu0 %v1341
    %1732 = vmatprep.subr.bf16.mxu0 %v1338
    %1733 = vmatpush1.bf16.msra.mxu0 %v1337
    %1734 = vmatprep.subr.bf16.mxu0 %v1334
    %1735 = vmatpush1.bf16.msra.mxu0 %v1333
    %1736 = vmatprep.subr.bf16.mxu0 %v1330
    %1737 = vmatpush1.bf16.msra.mxu0 %v1329
    %1738 = vmatprep.subr.bf16.mxu0 %v1390
    %1739 = vmatpush2.bf16.msra.mxu0 %v1389
    %1740 = vmatprep.subr.bf16.mxu0 %v1386
    %1741 = vmatpush2.bf16.msra.mxu0 %v1385
    %1742 = vmatprep.subr.bf16.mxu0 %v1382
    %1743 = vmatpush2.bf16.msra.mxu0 %v1381
    %1744 = vmatprep.subr.bf16.mxu0 %v1378
    %1745 = vmatpush2.bf16.msra.mxu0 %v1377
    %1746 = vmatprep.subr.bf16.mxu0 %v1374
    %1747 = vmatpush2.bf16.msra.mxu0 %v1373
    %1748 = vmatprep.subr.bf16.mxu0 %v1370
    %1749 = vmatpush2.bf16.msra.mxu0 %v1369
    %1750 = vmatprep.subr.bf16.mxu0 %v1366
    %1751 = vmatpush2.bf16.msra.mxu0 %v1365
    %1752 = vmatprep.subr.bf16.mxu0 %v1362
    %1753 = vmatpush2.bf16.msra.mxu0 %v1361
    %1754 = vmatprep.mubr.bf16.mxu0 %v454
    %1755 = vmatmul.mubr.bf16.gmra.mxu0 %v453
    %v1756 = vpop.f32.mrf.mxu0
    %v1757 = vadd.f32 %v1684, %v1756
    %v1758 = vpop.f32.mrf.mxu0
    %v1759 = vadd.f32 %v1686, %v1758
    %v1760 = vpop.f32.mrf.mxu0
    %v1761 = vadd.f32 %v1688, %v1760
    %v1762 = vpop.f32.mrf.mxu0
    %v1763 = vadd.f32 %v1690, %v1762
    %1764 = vmatprep.mubr.bf16.mxu0 %v460
    %1765 = vmatmul.mubr.bf16.gmra.mxu0 %v459
    %v1766 = vpop.f32.mrf.mxu0
    %v1767 = vadd.f32 %v1694, %v1766
    %v1768 = vpop.f32.mrf.mxu0
    %v1769 = vadd.f32 %v1696, %v1768
    %v1770 = vpop.f32.mrf.mxu0
    %v1771 = vadd.f32 %v1698, %v1770
    %v1772 = vpop.f32.mrf.mxu0
    %v1773 = vadd.f32 %v1700, %v1772
    %1774 = vmatprep.mubr.bf16.mxu0 %v466
    %1775 = vmatmul.mubr.bf16.gmra.mxu0 %v465
    %v1776 = vpop.f32.mrf.mxu0
    %v1777 = vadd.f32 %v1704, %v1776
    %v1778 = vpop.f32.mrf.mxu0
    %v1779 = vadd.f32 %v1706, %v1778
    %v1780 = vpop.f32.mrf.mxu0
    %v1781 = vadd.f32 %v1708, %v1780
    %v1782 = vpop.f32.mrf.mxu0
    %v1783 = vadd.f32 %v1710, %v1782
    %1784 = vmatprep.mubr.bf16.mxu0 %v472
    %1785 = vmatmul.mubr.bf16.gmra.mxu0 %v471
    %v1786 = vpop.f32.mrf.mxu0
    %v1787 = vadd.f32 %v1714, %v1786
    %v1788 = vpop.f32.mrf.mxu0
    %v1789 = vadd.f32 %v1716, %v1788
    %v1790 = vpop.f32.mrf.mxu0
    %v1791 = vadd.f32 %v1718, %v1790
    %v1792 = vpop.f32.mrf.mxu0
    %v1793 = vadd.f32 %v1720, %v1792
    %1794 = vdwg.mxu0
    %1795 = vmatprep.subr.bf16.mxu0 %v1422
    %1796 = vmatpush1.bf16.msra.mxu0 %v1421
    %1797 = vmatprep.subr.bf16.mxu0 %v1418
    %1798 = vmatpush1.bf16.msra.mxu0 %v1417
    %1799 = vmatprep.subr.bf16.mxu0 %v1414
    %1800 = vmatpush1.bf16.msra.mxu0 %v1413
    %1801 = vmatprep.subr.bf16.mxu0 %v1410
    %1802 = vmatpush1.bf16.msra.mxu0 %v1409
    %1803 = vmatprep.subr.bf16.mxu0 %v1406
    %1804 = vmatpush1.bf16.msra.mxu0 %v1405
    %1805 = vmatprep.subr.bf16.mxu0 %v1402
    %1806 = vmatpush1.bf16.msra.mxu0 %v1401
    %1807 = vmatprep.subr.bf16.mxu0 %v1398
    %1808 = vmatpush1.bf16.msra.mxu0 %v1397
    %1809 = vmatprep.subr.bf16.mxu0 %v1394
    %1810 = vmatpush1.bf16.msra.mxu0 %v1393
    %1811 = vmatprep.subr.bf16.mxu0 %v1454
    %1812 = vmatpush2.bf16.msra.mxu0 %v1453
    %1813 = vmatprep.subr.bf16.mxu0 %v1450
    %1814 = vmatpush2.bf16.msra.mxu0 %v1449
    %1815 = vmatprep.subr.bf16.mxu0 %v1446
    %1816 = vmatpush2.bf16.msra.mxu0 %v1445
    %1817 = vmatprep.subr.bf16.mxu0 %v1442
    %1818 = vmatpush2.bf16.msra.mxu0 %v1441
    %1819 = vmatprep.subr.bf16.mxu0 %v1438
    %1820 = vmatpush2.bf16.msra.mxu0 %v1437
    %1821 = vmatprep.subr.bf16.mxu0 %v1434
    %1822 = vmatpush2.bf16.msra.mxu0 %v1433
    %1823 = vmatprep.subr.bf16.mxu0 %v1430
    %1824 = vmatpush2.bf16.msra.mxu0 %v1429
    %1825 = vmatprep.subr.bf16.mxu0 %v1426
    %1826 = vmatpush2.bf16.msra.mxu0 %v1425
    %1827 = vmatprep.mubr.bf16.mxu0 %v456
    %1828 = vmatmul.mubr.bf16.gmra.mxu0 %v455
    %v1829 = vpop.f32.mrf.mxu0
    %v1830 = vadd.f32 %v1757, %v1829
    %v1831 = vpop.f32.mrf.mxu0
    %v1832 = vadd.f32 %v1759, %v1831
    %v1833 = vpop.f32.mrf.mxu0
    %v1834 = vadd.f32 %v1761, %v1833
    %v1835 = vpop.f32.mrf.mxu0
    %v1836 = vadd.f32 %v1763, %v1835
    %1837 = vmatprep.mubr.bf16.mxu0 %v462
    %1838 = vmatmul.mubr.bf16.gmra.mxu0 %v461
    %v1839 = vpop.f32.mrf.mxu0
    %v1840 = vadd.f32 %v1767, %v1839
    %v1841 = vpop.f32.mrf.mxu0
    %v1842 = vadd.f32 %v1769, %v1841
    %v1843 = vpop.f32.mrf.mxu0
    %v1844 = vadd.f32 %v1771, %v1843
    %v1845 = vpop.f32.mrf.mxu0
    %v1846 = vadd.f32 %v1773, %v1845
    %1847 = vmatprep.mubr.bf16.mxu0 %v468
    %1848 = vmatmul.mubr.bf16.gmra.mxu0 %v467
    %v1849 = vpop.f32.mrf.mxu0
    %v1850 = vadd.f32 %v1777, %v1849
    %v1851 = vpop.f32.mrf.mxu0
    %v1852 = vadd.f32 %v1779, %v1851
    %v1853 = vpop.f32.mrf.mxu0
    %v1854 = vadd.f32 %v1781, %v1853
    %v1855 = vpop.f32.mrf.mxu0
    %v1856 = vadd.f32 %v1783, %v1855
    %1857 = vmatprep.mubr.bf16.mxu0 %v474
    %1858 = vmatmul.mubr.bf16.gmra.mxu0 %v473
    %v1859 = vpop.f32.mrf.mxu0
    %v1860 = vadd.f32 %v1787, %v1859
    %v1861 = vpop.f32.mrf.mxu0
    %v1862 = vadd.f32 %v1789, %v1861
    %v1863 = vpop.f32.mrf.mxu0
    %v1864 = vadd.f32 %v1791, %v1863
    %v1865 = vpop.f32.mrf.mxu0
    %v1866 = vadd.f32 %v1793, %v1865
    %1867 = vdwg.mxu0
    %1868 = vmatprep.subr.bf16.mxu0 %v1296
    %1869 = vmatpush1.bf16.msra.mxu0 %v1295
    %1870 = vmatprep.subr.bf16.mxu0 %v1292
    %1871 = vmatpush1.bf16.msra.mxu0 %v1291
    %1872 = vmatprep.subr.bf16.mxu0 %v1288
    %1873 = vmatpush1.bf16.msra.mxu0 %v1287
    %1874 = vmatprep.subr.bf16.mxu0 %v1284
    %1875 = vmatpush1.bf16.msra.mxu0 %v1283
    %1876 = vmatprep.subr.bf16.mxu0 %v1280
    %1877 = vmatpush1.bf16.msra.mxu0 %v1279
    %1878 = vmatprep.subr.bf16.mxu0 %v1276
    %1879 = vmatpush1.bf16.msra.mxu0 %v1275
    %1880 = vmatprep.subr.bf16.mxu0 %v1272
    %1881 = vmatpush1.bf16.msra.mxu0 %v1271
    %1882 = vmatprep.subr.bf16.mxu0 %v1268
    %1883 = vmatpush1.bf16.msra.mxu0 %v1267
    %1884 = vmatprep.subr.bf16.mxu0 %v1328
    %1885 = vmatpush2.bf16.msra.mxu0 %v1327
    %1886 = vmatprep.subr.bf16.mxu0 %v1324
    %1887 = vmatpush2.bf16.msra.mxu0 %v1323
    %1888 = vmatprep.subr.bf16.mxu0 %v1320
    %1889 = vmatpush2.bf16.msra.mxu0 %v1319
    %1890 = vmatprep.subr.bf16.mxu0 %v1316
    %1891 = vmatpush2.bf16.msra.mxu0 %v1315
    %1892 = vmatprep.subr.bf16.mxu0 %v1312
    %1893 = vmatpush2.bf16.msra.mxu0 %v1311
    %1894 = vmatprep.subr.bf16.mxu0 %v1308
    %1895 = vmatpush2.bf16.msra.mxu0 %v1307
    %1896 = vmatprep.subr.bf16.mxu0 %v1304
    %1897 = vmatpush2.bf16.msra.mxu0 %v1303
    %1898 = vmatprep.subr.bf16.mxu0 %v1300
    %1899 = vmatpush2.bf16.msra.mxu0 %v1299
    %1900 = vmatprep.mubr.bf16.mxu0 %v452
    %1901 = vmatmul.mubr.bf16.gmra.mxu0 %v451
    %v1902 = vpop.f32.mrf.mxu0
    %v1903 = vadd.f32 %v680, %v1902
    %v1904 = vpop.f32.mrf.mxu0
    %v1905 = vadd.f32 %v684, %v1904
    %v1906 = vpop.f32.mrf.mxu0
    %v1907 = vadd.f32 %v680, %v1906
    %v1908 = vpop.f32.mrf.mxu0
    %v1909 = vadd.f32 %v684, %v1908
    %1910 = vmatprep.mubr.bf16.mxu0 %v458
    %1911 = vmatmul.mubr.bf16.gmra.mxu0 %v457
    %v1912 = vpop.f32.mrf.mxu0
    %v1913 = vadd.f32 %v680, %v1912
    %v1914 = vpop.f32.mrf.mxu0
    %v1915 = vadd.f32 %v684, %v1914
    %v1916 = vpop.f32.mrf.mxu0
    %v1917 = vadd.f32 %v680, %v1916
    %v1918 = vpop.f32.mrf.mxu0
    %v1919 = vadd.f32 %v684, %v1918
    %1920 = vmatprep.mubr.bf16.mxu0 %v464
    %1921 = vmatmul.mubr.bf16.gmra.mxu0 %v463
    %v1922 = vpop.f32.mrf.mxu0
    %v1923 = vadd.f32 %v680, %v1922
    %v1924 = vpop.f32.mrf.mxu0
    %v1925 = vadd.f32 %v684, %v1924
    %v1926 = vpop.f32.mrf.mxu0
    %v1927 = vadd.f32 %v680, %v1926
    %v1928 = vpop.f32.mrf.mxu0
    %v1929 = vadd.f32 %v684, %v1928
    %1930 = vmatprep.mubr.bf16.mxu0 %v470
    %1931 = vmatmul.mubr.bf16.gmra.mxu0 %v469
    %v1932 = vpop.f32.mrf.mxu0
    %v1933 = vadd.f32 %v680, %v1932
    %v1934 = vpop.f32.mrf.mxu0
    %v1935 = vadd.f32 %v684, %v1934
    %v1936 = vpop.f32.mrf.mxu0
    %v1937 = vadd.f32 %v680, %v1936
    %v1938 = vpop.f32.mrf.mxu0
    %v1939 = vadd.f32 %v684, %v1938
    %1940 = vdwg.mxu0
    %1941 = vmatprep.subr.bf16.mxu0 %v1360
    %1942 = vmatpush1.bf16.msra.mxu0 %v1359
    %1943 = vmatprep.subr.bf16.mxu0 %v1356
    %1944 = vmatpush1.bf16.msra.mxu0 %v1355
    %1945 = vmatprep.subr.bf16.mxu0 %v1352
    %1946 = vmatpush1.bf16.msra.mxu0 %v1351
    %1947 = vmatprep.subr.bf16.mxu0 %v1348
    %1948 = vmatpush1.bf16.msra.mxu0 %v1347
    %1949 = vmatprep.subr.bf16.mxu0 %v1344
    %1950 = vmatpush1.bf16.msra.mxu0 %v1343
    %1951 = vmatprep.subr.bf16.mxu0 %v1340
    %1952 = vmatpush1.bf16.msra.mxu0 %v1339
    %1953 = vmatprep.subr.bf16.mxu0 %v1336
    %1954 = vmatpush1.bf16.msra.mxu0 %v1335
    %1955 = vmatprep.subr.bf16.mxu0 %v1332
    %1956 = vmatpush1.bf16.msra.mxu0 %v1331
    %1957 = vmatprep.subr.bf16.mxu0 %v1392
    %1958 = vmatpush2.bf16.msra.mxu0 %v1391
    %1959 = vmatprep.subr.bf16.mxu0 %v1388
    %1960 = vmatpush2.bf16.msra.mxu0 %v1387
    %1961 = vmatprep.subr.bf16.mxu0 %v1384
    %1962 = vmatpush2.bf16.msra.mxu0 %v1383
    %1963 = vmatprep.subr.bf16.mxu0 %v1380
    %1964 = vmatpush2.bf16.msra.mxu0 %v1379
    %1965 = vmatprep.subr.bf16.mxu0 %v1376
    %1966 = vmatpush2.bf16.msra.mxu0 %v1375
    %1967 = vmatprep.subr.bf16.mxu0 %v1372
    %1968 = vmatpush2.bf16.msra.mxu0 %v1371
    %1969 = vmatprep.subr.bf16.mxu0 %v1368
    %1970 = vmatpush2.bf16.msra.mxu0 %v1367
    %1971 = vmatprep.subr.bf16.mxu0 %v1364
    %1972 = vmatpush2.bf16.msra.mxu0 %v1363
    %1973 = vmatprep.mubr.bf16.mxu0 %v454
    %1974 = vmatmul.mubr.bf16.gmra.mxu0 %v453
    %v1975 = vpop.f32.mrf.mxu0
    %v1976 = vadd.f32 %v1903, %v1975
    %v1977 = vpop.f32.mrf.mxu0
    %v1978 = vadd.f32 %v1905, %v1977
    %v1979 = vpop.f32.mrf.mxu0
    %v1980 = vadd.f32 %v1907, %v1979
    %v1981 = vpop.f32.mrf.mxu0
    %v1982 = vadd.f32 %v1909, %v1981
    %1983 = vmatprep.mubr.bf16.mxu0 %v460
    %1984 = vmatmul.mubr.bf16.gmra.mxu0 %v459
    %v1985 = vpop.f32.mrf.mxu0
    %v1986 = vadd.f32 %v1913, %v1985
    %v1987 = vpop.f32.mrf.mxu0
    %v1988 = vadd.f32 %v1915, %v1987
    %v1989 = vpop.f32.mrf.mxu0
    %v1990 = vadd.f32 %v1917, %v1989
    %v1991 = vpop.f32.mrf.mxu0
    %v1992 = vadd.f32 %v1919, %v1991
    %1993 = vmatprep.mubr.bf16.mxu0 %v466
    %1994 = vmatmul.mubr.bf16.gmra.mxu0 %v465
    %v1995 = vpop.f32.mrf.mxu0
    %v1996 = vadd.f32 %v1923, %v1995
    %v1997 = vpop.f32.mrf.mxu0
    %v1998 = vadd.f32 %v1925, %v1997
    %v1999 = vpop.f32.mrf.mxu0
    %v2000 = vadd.f32 %v1927, %v1999
    %v2001 = vpop.f32.mrf.mxu0
    %v2002 = vadd.f32 %v1929, %v2001
    %2003 = vmatprep.mubr.bf16.mxu0 %v472
    %2004 = vmatmul.mubr.bf16.gmra.mxu0 %v471
    %v2005 = vpop.f32.mrf.mxu0
    %v2006 = vadd.f32 %v1933, %v2005
    %v2007 = vpop.f32.mrf.mxu0
    %v2008 = vadd.f32 %v1935, %v2007
    %v2009 = vpop.f32.mrf.mxu0
    %v2010 = vadd.f32 %v1937, %v2009
    %v2011 = vpop.f32.mrf.mxu0
    %v2012 = vadd.f32 %v1939, %v2011
    %2013 = vdwg.mxu0
    %2014 = vmatprep.subr.bf16.mxu0 %v1424
    %2015 = vmatpush1.bf16.msra.mxu0 %v1423
    %2016 = vmatprep.subr.bf16.mxu0 %v1420
    %2017 = vmatpush1.bf16.msra.mxu0 %v1419
    %2018 = vmatprep.subr.bf16.mxu0 %v1416
    %2019 = vmatpush1.bf16.msra.mxu0 %v1415
    %2020 = vmatprep.subr.bf16.mxu0 %v1412
    %2021 = vmatpush1.bf16.msra.mxu0 %v1411
    %2022 = vmatprep.subr.bf16.mxu0 %v1408
    %2023 = vmatpush1.bf16.msra.mxu0 %v1407
    %2024 = vmatprep.subr.bf16.mxu0 %v1404
    %2025 = vmatpush1.bf16.msra.mxu0 %v1403
    %2026 = vmatprep.subr.bf16.mxu0 %v1400
    %2027 = vmatpush1.bf16.msra.mxu0 %v1399
    %2028 = vmatprep.subr.bf16.mxu0 %v1396
    %2029 = vmatpush1.bf16.msra.mxu0 %v1395
    %2030 = vmatprep.subr.bf16.mxu0 %v1456
    %2031 = vmatpush2.bf16.msra.mxu0 %v1455
    %2032 = vmatprep.subr.bf16.mxu0 %v1452
    %2033 = vmatpush2.bf16.msra.mxu0 %v1451
    %2034 = vmatprep.subr.bf16.mxu0 %v1448
    %2035 = vmatpush2.bf16.msra.mxu0 %v1447
    %2036 = vmatprep.subr.bf16.mxu0 %v1444
    %2037 = vmatpush2.bf16.msra.mxu0 %v1443
    %2038 = vmatprep.subr.bf16.mxu0 %v1440
    %2039 = vmatpush2.bf16.msra.mxu0 %v1439
    %2040 = vmatprep.subr.bf16.mxu0 %v1436
    %2041 = vmatpush2.bf16.msra.mxu0 %v1435
    %2042 = vmatprep.subr.bf16.mxu0 %v1432
    %2043 = vmatpush2.bf16.msra.mxu0 %v1431
    %2044 = vmatprep.subr.bf16.mxu0 %v1428
    %2045 = vmatpush2.bf16.msra.mxu0 %v1427
    %2046 = vmatprep.mubr.bf16.mxu0 %v456
    %2047 = vmatmul.mubr.bf16.gmra.mxu0 %v455
    %v2048 = vpop.f32.mrf.mxu0
    %v2049 = vadd.f32 %v1976, %v2048
    %v2050 = vpop.f32.mrf.mxu0
    %v2051 = vadd.f32 %v1978, %v2050
    %v2052 = vpop.f32.mrf.mxu0
    %v2053 = vadd.f32 %v1980, %v2052
    %v2054 = vpop.f32.mrf.mxu0
    %v2055 = vadd.f32 %v1982, %v2054
    %2056 = vmatprep.mubr.bf16.mxu0 %v462
    %2057 = vmatmul.mubr.bf16.gmra.mxu0 %v461
    %v2058 = vpop.f32.mrf.mxu0
    %v2059 = vadd.f32 %v1986, %v2058
    %v2060 = vpop.f32.mrf.mxu0
    %v2061 = vadd.f32 %v1988, %v2060
    %v2062 = vpop.f32.mrf.mxu0
    %v2063 = vadd.f32 %v1990, %v2062
    %v2064 = vpop.f32.mrf.mxu0
    %v2065 = vadd.f32 %v1992, %v2064
    %2066 = vmatprep.mubr.bf16.mxu0 %v468
    %2067 = vmatmul.mubr.bf16.gmra.mxu0 %v467
    %v2068 = vpop.f32.mrf.mxu0
    %v2069 = vadd.f32 %v1996, %v2068
    %v2070 = vpop.f32.mrf.mxu0
    %v2071 = vadd.f32 %v1998, %v2070
    %v2072 = vpop.f32.mrf.mxu0
    %v2073 = vadd.f32 %v2000, %v2072
    %v2074 = vpop.f32.mrf.mxu0
    %v2075 = vadd.f32 %v2002, %v2074
    %2076 = vmatprep.mubr.bf16.mxu0 %v474
    %2077 = vmatmul.mubr.bf16.gmra.mxu0 %v473
    %v2078 = vpop.f32.mrf.mxu0
    %v2079 = vadd.f32 %v2006, %v2078
    %v2080 = vpop.f32.mrf.mxu0
    %v2081 = vadd.f32 %v2008, %v2080
    %v2082 = vpop.f32.mrf.mxu0
    %v2083 = vadd.f32 %v2010, %v2082
    %v2084 = vpop.f32.mrf.mxu0
    %v2085 = vadd.f32 %v2012, %v2084
    %2086 = vdwg.mxu0
    %s2087 = smul.u32 4, 16
    %s2088 = smul.u32 %s2087, 4
    %s2089 = sshll.u32 %s2088, 4
    %2090 = dma.done [#allocation5], %s2089
    %s2091 = smul.u32 4, 32
    %s2092 = smul.u32 %s2091, 4
    %s2093 = sshll.u32 %s2092, 4
    %2094 = dma.done %s63, %s2093
    %v2095 = vld [vmem:[#allocation2] sm:$0xff]
    %v2096 = vld [vmem:[#allocation2 + $0x8] sm:$0xff]
    %v2097 = vld [vmem:[#allocation2 + $0x10] sm:$0xff]
    %v2098 = vld [vmem:[#allocation2 + $0x18] sm:$0xff]
    %v2099 = vld [vmem:[#allocation2 + $0x20] sm:$0xff]
    %v2100 = vld [vmem:[#allocation2 + $0x28] sm:$0xff]
    %v2101 = vld [vmem:[#allocation2 + $0x30] sm:$0xff]
    %v2102 = vld [vmem:[#allocation2 + $0x38] sm:$0xff]
    %v2103 = vld [vmem:[#allocation2 + $0x40] sm:$0xff]
    %v2104 = vld [vmem:[#allocation2 + $0x48] sm:$0xff]
    %v2105 = vld [vmem:[#allocation2 + $0x50] sm:$0xff]
    %v2106 = vld [vmem:[#allocation2 + $0x58] sm:$0xff]
    %v2107 = vld [vmem:[#allocation2 + $0x60] sm:$0xff]
    %v2108 = vld [vmem:[#allocation2 + $0x68] sm:$0xff]
    %v2109 = vld [vmem:[#allocation2 + $0x70] sm:$0xff]
    %v2110 = vld [vmem:[#allocation2 + $0x78] sm:$0xff]
    %v2111 = vld [vmem:[#allocation2 + $0x80] sm:$0xff]
    %v2112 = vld [vmem:[#allocation2 + $0x88] sm:$0xff]
    %v2113 = vld [vmem:[#allocation2 + $0x90] sm:$0xff]
    %v2114 = vld [vmem:[#allocation2 + $0x98] sm:$0xff]
    %v2115 = vld [vmem:[#allocation2 + $0xa0] sm:$0xff]
    %v2116 = vld [vmem:[#allocation2 + $0xa8] sm:$0xff]
    %v2117 = vld [vmem:[#allocation2 + $0xb0] sm:$0xff]
    %v2118 = vld [vmem:[#allocation2 + $0xb8] sm:$0xff]
    %v2119 = vld [vmem:[#allocation2 + $0xc0] sm:$0xff]
    %v2120 = vld [vmem:[#allocation2 + $0xc8] sm:$0xff]
    %v2121 = vld [vmem:[#allocation2 + $0xd0] sm:$0xff]
    %v2122 = vld [vmem:[#allocation2 + $0xd8] sm:$0xff]
    %v2123 = vld [vmem:[#allocation2 + $0xe0] sm:$0xff]
    %v2124 = vld [vmem:[#allocation2 + $0xe8] sm:$0xff]
    %v2125 = vld [vmem:[#allocation2 + $0xf0] sm:$0xff]
    %v2126 = vld [vmem:[#allocation2 + $0xf8] sm:$0xff]
    %v2127 = vld [vmem:[#allocation3] sm:$0xff]
    %v2128 = vld [vmem:[#allocation3 + $0x8] sm:$0xff]
    %v2129 = vld [vmem:[#allocation3 + $0x10] sm:$0xff]
    %v2130 = vld [vmem:[#allocation3 + $0x18] sm:$0xff]
    %v2131 = vld [vmem:[#allocation3 + $0x20] sm:$0xff]
    %v2132 = vld [vmem:[#allocation3 + $0x28] sm:$0xff]
    %v2133 = vld [vmem:[#allocation3 + $0x30] sm:$0xff]
    %v2134 = vld [vmem:[#allocation3 + $0x38] sm:$0xff]
    %v2135 = vld [vmem:[#allocation3 + $0x40] sm:$0xff]
    %v2136 = vld [vmem:[#allocation3 + $0x48] sm:$0xff]
    %v2137 = vld [vmem:[#allocation3 + $0x50] sm:$0xff]
    %v2138 = vld [vmem:[#allocation3 + $0x58] sm:$0xff]
    %v2139 = vld [vmem:[#allocation3 + $0x60] sm:$0xff]
    %v2140 = vld [vmem:[#allocation3 + $0x68] sm:$0xff]
    %v2141 = vld [vmem:[#allocation3 + $0x70] sm:$0xff]
    %v2142 = vld [vmem:[#allocation3 + $0x78] sm:$0xff]
    %v2143 = vld [vmem:[#allocation3 + $0x80] sm:$0xff]
    %v2144 = vld [vmem:[#allocation3 + $0x88] sm:$0xff]
    %v2145 = vld [vmem:[#allocation3 + $0x90] sm:$0xff]
    %v2146 = vld [vmem:[#allocation3 + $0x98] sm:$0xff]
    %v2147 = vld [vmem:[#allocation3 + $0xa0] sm:$0xff]
    %v2148 = vld [vmem:[#allocation3 + $0xa8] sm:$0xff]
    %v2149 = vld [vmem:[#allocation3 + $0xb0] sm:$0xff]
    %v2150 = vld [vmem:[#allocation3 + $0xb8] sm:$0xff]
    %v2151 = vld [vmem:[#allocation3 + $0xc0] sm:$0xff]
    %v2152 = vld [vmem:[#allocation3 + $0xc8] sm:$0xff]
    %v2153 = vld [vmem:[#allocation3 + $0xd0] sm:$0xff]
    %v2154 = vld [vmem:[#allocation3 + $0xd8] sm:$0xff]
    %v2155 = vld [vmem:[#allocation3 + $0xe0] sm:$0xff]
    %v2156 = vld [vmem:[#allocation3 + $0xe8] sm:$0xff]
    %v2157 = vld [vmem:[#allocation3 + $0xf0] sm:$0xff]
    %v2158 = vld [vmem:[#allocation3 + $0xf8] sm:$0xff]
    %v2159 = vld [vmem:[#allocation3 + $0x100] sm:$0xff]
    %v2160 = vld [vmem:[#allocation3 + $0x108] sm:$0xff]
    %v2161 = vld [vmem:[#allocation3 + $0x110] sm:$0xff]
    %v2162 = vld [vmem:[#allocation3 + $0x118] sm:$0xff]
    %v2163 = vld [vmem:[#allocation3 + $0x120] sm:$0xff]
    %v2164 = vld [vmem:[#allocation3 + $0x128] sm:$0xff]
    %v2165 = vld [vmem:[#allocation3 + $0x130] sm:$0xff]
    %v2166 = vld [vmem:[#allocation3 + $0x138] sm:$0xff]
    %v2167 = vld [vmem:[#allocation3 + $0x140] sm:$0xff]
    %v2168 = vld [vmem:[#allocation3 + $0x148] sm:$0xff]
    %v2169 = vld [vmem:[#allocation3 + $0x150] sm:$0xff]
    %v2170 = vld [vmem:[#allocation3 + $0x158] sm:$0xff]
    %v2171 = vld [vmem:[#allocation3 + $0x160] sm:$0xff]
    %v2172 = vld [vmem:[#allocation3 + $0x168] sm:$0xff]
    %v2173 = vld [vmem:[#allocation3 + $0x170] sm:$0xff]
    %v2174 = vld [vmem:[#allocation3 + $0x178] sm:$0xff]
    %v2175 = vld [vmem:[#allocation3 + $0x180] sm:$0xff]
    %v2176 = vld [vmem:[#allocation3 + $0x188] sm:$0xff]
    %v2177 = vld [vmem:[#allocation3 + $0x190] sm:$0xff]
    %v2178 = vld [vmem:[#allocation3 + $0x198] sm:$0xff]
    %v2179 = vld [vmem:[#allocation3 + $0x1a0] sm:$0xff]
    %v2180 = vld [vmem:[#allocation3 + $0x1a8] sm:$0xff]
    %v2181 = vld [vmem:[#allocation3 + $0x1b0] sm:$0xff]
    %v2182 = vld [vmem:[#allocation3 + $0x1b8] sm:$0xff]
    %v2183 = vld [vmem:[#allocation3 + $0x1c0] sm:$0xff]
    %v2184 = vld [vmem:[#allocation3 + $0x1c8] sm:$0xff]
    %v2185 = vld [vmem:[#allocation3 + $0x1d0] sm:$0xff]
    %v2186 = vld [vmem:[#allocation3 + $0x1d8] sm:$0xff]
    %v2187 = vld [vmem:[#allocation3 + $0x1e0] sm:$0xff]
    %v2188 = vld [vmem:[#allocation3 + $0x1e8] sm:$0xff]
    %v2189 = vld [vmem:[#allocation3 + $0x1f0] sm:$0xff]
    %v2190 = vld [vmem:[#allocation3 + $0x1f8] sm:$0xff]
    %v2191 = vld [vmem:[%s5] sm:$0xf]
    %v2224 = vunpack.c.l.b16 %v2095
    %v2225 = vunpack.c.h.b16 %v2095
    %v2226 = vunpack.c.l.b16 %v2096
    %v2227 = vunpack.c.h.b16 %v2096
    %v2228 = vunpack.c.l.b16 %v2097
    %v2229 = vunpack.c.h.b16 %v2097
    %v2230 = vunpack.c.l.b16 %v2098
    %v2231 = vunpack.c.h.b16 %v2098
    %v2232 = vunpack.c.l.b16 %v2099
    %v2233 = vunpack.c.h.b16 %v2099
    %v2234 = vunpack.c.l.b16 %v2100
    %v2235 = vunpack.c.h.b16 %v2100
    %v2236 = vunpack.c.l.b16 %v2101
    %v2237 = vunpack.c.h.b16 %v2101
    %v2238 = vunpack.c.l.b16 %v2102
    %v2239 = vunpack.c.h.b16 %v2102
    %v2240 = vunpack.c.l.b16 %v2103
    %v2241 = vunpack.c.h.b16 %v2103
    %v2242 = vunpack.c.l.b16 %v2104
    %v2243 = vunpack.c.h.b16 %v2104
    %v2244 = vunpack.c.l.b16 %v2105
    %v2245 = vunpack.c.h.b16 %v2105
    %v2246 = vunpack.c.l.b16 %v2106
    %v2247 = vunpack.c.h.b16 %v2106
    %v2248 = vunpack.c.l.b16 %v2107
    %v2249 = vunpack.c.h.b16 %v2107
    %v2250 = vunpack.c.l.b16 %v2108
    %v2251 = vunpack.c.h.b16 %v2108
    %v2252 = vunpack.c.l.b16 %v2109
    %v2253 = vunpack.c.h.b16 %v2109
    %v2254 = vunpack.c.l.b16 %v2110
    %v2255 = vunpack.c.h.b16 %v2110
    %v2256 = vunpack.c.l.b16 %v2111
    %v2257 = vunpack.c.h.b16 %v2111
    %v2258 = vunpack.c.l.b16 %v2112
    %v2259 = vunpack.c.h.b16 %v2112
    %v2260 = vunpack.c.l.b16 %v2113
    %v2261 = vunpack.c.h.b16 %v2113
    %v2262 = vunpack.c.l.b16 %v2114
    %v2263 = vunpack.c.h.b16 %v2114
    %v2264 = vunpack.c.l.b16 %v2115
    %v2265 = vunpack.c.h.b16 %v2115
    %v2266 = vunpack.c.l.b16 %v2116
    %v2267 = vunpack.c.h.b16 %v2116
    %v2268 = vunpack.c.l.b16 %v2117
    %v2269 = vunpack.c.h.b16 %v2117
    %v2270 = vunpack.c.l.b16 %v2118
    %v2271 = vunpack.c.h.b16 %v2118
    %v2272 = vunpack.c.l.b16 %v2119
    %v2273 = vunpack.c.h.b16 %v2119
    %v2274 = vunpack.c.l.b16 %v2120
    %v2275 = vunpack.c.h.b16 %v2120
    %v2276 = vunpack.c.l.b16 %v2121
    %v2277 = vunpack.c.h.b16 %v2121
    %v2278 = vunpack.c.l.b16 %v2122
    %v2279 = vunpack.c.h.b16 %v2122
    %v2280 = vunpack.c.l.b16 %v2123
    %v2281 = vunpack.c.h.b16 %v2123
    %v2282 = vunpack.c.l.b16 %v2124
    %v2283 = vunpack.c.h.b16 %v2124
    %v2284 = vunpack.c.l.b16 %v2125
    %v2285 = vunpack.c.h.b16 %v2125
    %v2286 = vunpack.c.l.b16 %v2126
    %v2287 = vunpack.c.h.b16 %v2126
    %v2288 = vpack.c.b16 %v2228, %v2224
    %v2289 = vpack.c.b16 %v2229, %v2225
    %v2290 = vpack.c.b16 %v2230, %v2226
    %v2291 = vpack.c.b16 %v2231, %v2227
    %v2292 = vpack.c.b16 %v2236, %v2232
    %v2293 = vpack.c.b16 %v2237, %v2233
    %v2294 = vpack.c.b16 %v2238, %v2234
    %v2295 = vpack.c.b16 %v2239, %v2235
    %v2296 = vpack.c.b16 %v2244, %v2240
    %v2297 = vpack.c.b16 %v2245, %v2241
    %v2298 = vpack.c.b16 %v2246, %v2242
    %v2299 = vpack.c.b16 %v2247, %v2243
    %v2300 = vpack.c.b16 %v2252, %v2248
    %v2301 = vpack.c.b16 %v2253, %v2249
    %v2302 = vpack.c.b16 %v2254, %v2250
    %v2303 = vpack.c.b16 %v2255, %v2251
    %v2304 = vpack.c.b16 %v2260, %v2256
    %v2305 = vpack.c.b16 %v2261, %v2257
    %v2306 = vpack.c.b16 %v2262, %v2258
    %v2307 = vpack.c.b16 %v2263, %v2259
    %v2308 = vpack.c.b16 %v2268, %v2264
    %v2309 = vpack.c.b16 %v2269, %v2265
    %v2310 = vpack.c.b16 %v2270, %v2266
    %v2311 = vpack.c.b16 %v2271, %v2267
    %v2312 = vpack.c.b16 %v2276, %v2272
    %v2313 = vpack.c.b16 %v2277, %v2273
    %v2314 = vpack.c.b16 %v2278, %v2274
    %v2315 = vpack.c.b16 %v2279, %v2275
    %v2316 = vpack.c.b16 %v2284, %v2280
    %v2317 = vpack.c.b16 %v2285, %v2281
    %v2318 = vpack.c.b16 %v2286, %v2282
    %v2319 = vpack.c.b16 %v2287, %v2283
    %2352 = vmatprep.subr.bf16.mxu0 %v2317
    %2353 = vmatpush1.bf16.msra.mxu0 %v2316
    %2354 = vmatprep.subr.bf16.mxu0 %v2313
    %2355 = vmatpush1.bf16.msra.mxu0 %v2312
    %2356 = vmatprep.subr.bf16.mxu0 %v2309
    %2357 = vmatpush1.bf16.msra.mxu0 %v2308
    %2358 = vmatprep.subr.bf16.mxu0 %v2305
    %2359 = vmatpush1.bf16.msra.mxu0 %v2304
    %2360 = vmatprep.subr.bf16.mxu0 %v2301
    %2361 = vmatpush1.bf16.msra.mxu0 %v2300
    %2362 = vmatprep.subr.bf16.mxu0 %v2297
    %2363 = vmatpush1.bf16.msra.mxu0 %v2296
    %2364 = vmatprep.subr.bf16.mxu0 %v2293
    %2365 = vmatpush1.bf16.msra.mxu0 %v2292
    %2366 = vmatprep.subr.bf16.mxu0 %v2289
    %2367 = vmatpush1.bf16.msra.mxu0 %v2288
    %2368 = vmatprep.subr.bf16.mxu0 0
    %2369 = vmatpush2.bf16.msra.mxu0 0
    %2370 = vmatprep.subr.bf16.mxu0 0
    %2371 = vmatpush2.bf16.msra.mxu0 0
    %2372 = vmatprep.subr.bf16.mxu0 0
    %2373 = vmatpush2.bf16.msra.mxu0 0
    %2374 = vmatprep.subr.bf16.mxu0 0
    %2375 = vmatpush2.bf16.msra.mxu0 0
    %2376 = vmatprep.subr.bf16.mxu0 0
    %2377 = vmatpush2.bf16.msra.mxu0 0
    %2378 = vmatprep.subr.bf16.mxu0 0
    %2379 = vmatpush2.bf16.msra.mxu0 0
    %2380 = vmatprep.subr.bf16.mxu0 0
    %2381 = vmatpush2.bf16.msra.mxu0 0
    %2382 = vmatprep.subr.bf16.mxu0 0
    %2383 = vmatpush2.bf16.msra.mxu0 0
    %2384 = vmatprep.mubr.bf16.mxu0 0
    %2385 = vmatmul.mubr.bf16.gmra.mxu0 0
    %v2386 = vpop.f32.mrf.mxu0
    %v2387 = vadd.f32 0.0, %v2386
    %v2388 = vpop.f32.mrf.mxu0
    %v2389 = vadd.f32 0.0, %v2388
    %v2390 = vpop.f32.mrf.mxu0
    %v2391 = vpop.f32.mrf.mxu0
    %2392 = vdwg.mxu0
    %2393 = vmatprep.subr.bf16.mxu0 %v2319
    %2394 = vmatpush1.bf16.msra.mxu0 %v2318
    %2395 = vmatprep.subr.bf16.mxu0 %v2315
    %2396 = vmatpush1.bf16.msra.mxu0 %v2314
    %2397 = vmatprep.subr.bf16.mxu0 %v2311
    %2398 = vmatpush1.bf16.msra.mxu0 %v2310
    %2399 = vmatprep.subr.bf16.mxu0 %v2307
    %2400 = vmatpush1.bf16.msra.mxu0 %v2306
    %2401 = vmatprep.subr.bf16.mxu0 %v2303
    %2402 = vmatpush1.bf16.msra.mxu0 %v2302
    %2403 = vmatprep.subr.bf16.mxu0 %v2299
    %2404 = vmatpush1.bf16.msra.mxu0 %v2298
    %2405 = vmatprep.subr.bf16.mxu0 %v2295
    %2406 = vmatpush1.bf16.msra.mxu0 %v2294
    %2407 = vmatprep.subr.bf16.mxu0 %v2291
    %2408 = vmatpush1.bf16.msra.mxu0 %v2290
    %2409 = vmatprep.subr.bf16.mxu0 0
    %2410 = vmatpush2.bf16.msra.mxu0 0
    %2411 = vmatprep.subr.bf16.mxu0 0
    %2412 = vmatpush2.bf16.msra.mxu0 0
    %2413 = vmatprep.subr.bf16.mxu0 0
    %2414 = vmatpush2.bf16.msra.mxu0 0
    %2415 = vmatprep.subr.bf16.mxu0 0
    %2416 = vmatpush2.bf16.msra.mxu0 0
    %2417 = vmatprep.subr.bf16.mxu0 0
    %2418 = vmatpush2.bf16.msra.mxu0 0
    %2419 = vmatprep.subr.bf16.mxu0 0
    %2420 = vmatpush2.bf16.msra.mxu0 0
    %2421 = vmatprep.subr.bf16.mxu0 0
    %2422 = vmatpush2.bf16.msra.mxu0 0
    %2423 = vmatprep.subr.bf16.mxu0 0
    %2424 = vmatpush2.bf16.msra.mxu0 0
    %2425 = vmatprep.mubr.bf16.mxu0 0
    %2426 = vmatmul.mubr.bf16.gmra.mxu0 0
    %v2427 = vpop.f32.mrf.mxu0
    %v2428 = vadd.f32 0.0, %v2427
    %v2429 = vpop.f32.mrf.mxu0
    %v2430 = vadd.f32 0.0, %v2429
    %v2431 = vpop.f32.mrf.mxu0
    %v2432 = vpop.f32.mrf.mxu0
    %2433 = vdwg.mxu0
    %v2438 = vrot.slane %v2387, 1
    %v2439 = vrot.slane %v2389, 1
    %v2440 = vrot.slane %v2428, 1
    %v2441 = vrot.slane %v2430, 1
    %v2442 = vrot.slane %v2387, 2
    %v2443 = vrot.slane %v2389, 2
    %v2444 = vrot.slane %v2428, 2
    %v2445 = vrot.slane %v2430, 2
    %v2446 = vrot.slane %v2387, 3
    %v2447 = vrot.slane %v2389, 3
    %v2448 = vrot.slane %v2428, 3
    %v2449 = vrot.slane %v2430, 3
    %v2450 = vrot.slane %v2387, 4
    %v2451 = vrot.slane %v2389, 4
    %v2452 = vrot.slane %v2428, 4
    %v2453 = vrot.slane %v2430, 4
    %v2454 = vrot.slane %v2387, 5
    %v2455 = vrot.slane %v2389, 5
    %v2456 = vrot.slane %v2428, 5
    %v2457 = vrot.slane %v2430, 5
    %v2458 = vrot.slane %v2387, 6
    %v2459 = vrot.slane %v2389, 6
    %v2460 = vrot.slane %v2428, 6
    %v2461 = vrot.slane %v2430, 6
    %v2462 = vrot.slane %v2387, 7
    %v2463 = vrot.slane %v2389, 7
    %v2464 = vrot.slane %v2428, 7
    %v2465 = vrot.slane %v2430, 7
    %v2498 = vadd.f32 %v1830, %v2387
    %v2499 = vadd.f32 %v1832, %v2389
    %v2500 = vadd.f32 %v2049, %v2428
    %v2501 = vadd.f32 %v2051, %v2430
    %v2502 = vadd.f32 %v1834, %v2438
    %v2503 = vadd.f32 %v1836, %v2439
    %v2504 = vadd.f32 %v2053, %v2440
    %v2505 = vadd.f32 %v2055, %v2441
    %v2506 = vadd.f32 %v1840, %v2442
    %v2507 = vadd.f32 %v1842, %v2443
    %v2508 = vadd.f32 %v2059, %v2444
    %v2509 = vadd.f32 %v2061, %v2445
    %v2510 = vadd.f32 %v1844, %v2446
    %v2511 = vadd.f32 %v1846, %v2447
    %v2512 = vadd.f32 %v2063, %v2448
    %v2513 = vadd.f32 %v2065, %v2449
    %v2514 = vadd.f32 %v1850, %v2450
    %v2515 = vadd.f32 %v1852, %v2451
    %v2516 = vadd.f32 %v2069, %v2452
    %v2517 = vadd.f32 %v2071, %v2453
    %v2518 = vadd.f32 %v1854, %v2454
    %v2519 = vadd.f32 %v1856, %v2455
    %v2520 = vadd.f32 %v2073, %v2456
    %v2521 = vadd.f32 %v2075, %v2457
    %v2522 = vadd.f32 %v1860, %v2458
    %v2523 = vadd.f32 %v1862, %v2459
    %v2524 = vadd.f32 %v2079, %v2460
    %v2525 = vadd.f32 %v2081, %v2461
    %v2526 = vadd.f32 %v1864, %v2462
    %v2527 = vadd.f32 %v1866, %v2463
    %v2528 = vadd.f32 %v2083, %v2464
    %v2529 = vadd.f32 %v2085, %v2465
    %v2530 = vxor.u32 %v2498, 2147483648
    %v2531 = vxor.u32 %v2502, 2147483648
    %v2532 = vxor.u32 %v2506, 2147483648
    %v2533 = vxor.u32 %v2510, 2147483648
    %v2534 = vxor.u32 %v2514, 2147483648
    %v2535 = vxor.u32 %v2518, 2147483648
    %v2536 = vxor.u32 %v2522, 2147483648
    %v2537 = vxor.u32 %v2526, 2147483648
    %v2538 = vmul.f32 %v2530, 1.442695
    %v2539 = vpow.pop %v2538
    %v2540 = vmul.f32 %v2531, 1.442695
    %v2541 = vpow.pop %v2540
    %v2542 = vmul.f32 %v2532, 1.442695
    %v2543 = vpow.pop %v2542
    %v2544 = vmul.f32 %v2533, 1.442695
    %v2545 = vpow.pop %v2544
    %v2546 = vmul.f32 %v2534, 1.442695
    %v2547 = vpow.pop %v2546
    %v2548 = vmul.f32 %v2535, 1.442695
    %v2549 = vpow.pop %v2548
    %v2550 = vmul.f32 %v2536, 1.442695
    %v2551 = vpow.pop %v2550
    %v2552 = vmul.f32 %v2537, 1.442695
    %v2553 = vpow.pop %v2552
    %v2554 = vadd.f32 %v2539, 1.0
    %v2555 = vadd.f32 %v2541, 1.0
    %v2556 = vadd.f32 %v2543, 1.0
    %v2557 = vadd.f32 %v2545, 1.0
    %v2558 = vadd.f32 %v2547, 1.0
    %v2559 = vadd.f32 %v2549, 1.0
    %v2560 = vadd.f32 %v2551, 1.0
    %v2561 = vadd.f32 %v2553, 1.0
    %v2562 = vrcp.pop %v2554
    %v2563 = vmul.f32 1.0, %v2562
    %v2564 = vrcp.pop %v2555
    %v2565 = vmul.f32 1.0, %v2564
    %v2566 = vrcp.pop %v2556
    %v2567 = vmul.f32 1.0, %v2566
    %v2568 = vrcp.pop %v2557
    %v2569 = vmul.f32 1.0, %v2568
    %v2570 = vrcp.pop %v2558
    %v2571 = vmul.f32 1.0, %v2570
    %v2572 = vrcp.pop %v2559
    %v2573 = vmul.f32 1.0, %v2572
    %v2574 = vrcp.pop %v2560
    %v2575 = vmul.f32 1.0, %v2574
    %v2576 = vrcp.pop %v2561
    %v2577 = vmul.f32 1.0, %v2576
    %v2578 = vxor.u32 %v2499, 2147483648
    %v2579 = vxor.u32 %v2503, 2147483648
    %v2580 = vxor.u32 %v2507, 2147483648
    %v2581 = vxor.u32 %v2511, 2147483648
    %v2582 = vxor.u32 %v2515, 2147483648
    %v2583 = vxor.u32 %v2519, 2147483648
    %v2584 = vxor.u32 %v2523, 2147483648
    %v2585 = vxor.u32 %v2527, 2147483648
    %v2586 = vmul.f32 %v2578, 1.442695
    %v2587 = vpow.pop %v2586
    %v2588 = vmul.f32 %v2579, 1.442695
    %v2589 = vpow.pop %v2588
    %v2590 = vmul.f32 %v2580, 1.442695
    %v2591 = vpow.pop %v2590
    %v2592 = vmul.f32 %v2581, 1.442695
    %v2593 = vpow.pop %v2592
    %v2594 = vmul.f32 %v2582, 1.442695
    %v2595 = vpow.pop %v2594
    %v2596 = vmul.f32 %v2583, 1.442695
    %v2597 = vpow.pop %v2596
    %v2598 = vmul.f32 %v2584, 1.442695
    %v2599 = vpow.pop %v2598
    %v2600 = vmul.f32 %v2585, 1.442695
    %v2601 = vpow.pop %v2600
    %v2602 = vadd.f32 %v2587, 1.0
    %v2603 = vadd.f32 %v2589, 1.0
    %v2604 = vadd.f32 %v2591, 1.0
    %v2605 = vadd.f32 %v2593, 1.0
    %v2606 = vadd.f32 %v2595, 1.0
    %v2607 = vadd.f32 %v2597, 1.0
    %v2608 = vadd.f32 %v2599, 1.0
    %v2609 = vadd.f32 %v2601, 1.0
    %v2610 = vrcp.pop %v2602
    %v2611 = vmul.f32 1.0, %v2610
    %v2612 = vrcp.pop %v2603
    %v2613 = vmul.f32 1.0, %v2612
    %v2614 = vrcp.pop %v2604
    %v2615 = vmul.f32 1.0, %v2614
    %v2616 = vrcp.pop %v2605
    %v2617 = vmul.f32 1.0, %v2616
    %v2618 = vrcp.pop %v2606
    %v2619 = vmul.f32 1.0, %v2618
    %v2620 = vrcp.pop %v2607
    %v2621 = vmul.f32 1.0, %v2620
    %v2622 = vrcp.pop %v2608
    %v2623 = vmul.f32 1.0, %v2622
    %v2624 = vrcp.pop %v2609
    %v2625 = vmul.f32 1.0, %v2624
    %v2626 = vtanh.pop %v2500
    %v2627 = vtanh.pop %v2504
    %v2628 = vtanh.pop %v2508
    %v2629 = vtanh.pop %v2512
    %v2630 = vtanh.pop %v2516
    %v2631 = vtanh.pop %v2520
    %v2632 = vtanh.pop %v2524
    %v2633 = vtanh.pop %v2528
    %v2634 = vxor.u32 %v2501, 2147483648
    %v2635 = vxor.u32 %v2505, 2147483648
    %v2636 = vxor.u32 %v2509, 2147483648
    %v2637 = vxor.u32 %v2513, 2147483648
    %v2638 = vxor.u32 %v2517, 2147483648
    %v2639 = vxor.u32 %v2521, 2147483648
    %v2640 = vxor.u32 %v2525, 2147483648
    %v2641 = vxor.u32 %v2529, 2147483648
    %v2642 = vmul.f32 %v2634, 1.442695
    %v2643 = vpow.pop %v2642
    %v2644 = vmul.f32 %v2635, 1.442695
    %v2645 = vpow.pop %v2644
    %v2646 = vmul.f32 %v2636, 1.442695
    %v2647 = vpow.pop %v2646
    %v2648 = vmul.f32 %v2637, 1.442695
    %v2649 = vpow.pop %v2648
    %v2650 = vmul.f32 %v2638, 1.442695
    %v2651 = vpow.pop %v2650
    %v2652 = vmul.f32 %v2639, 1.442695
    %v2653 = vpow.pop %v2652
    %v2654 = vmul.f32 %v2640, 1.442695
    %v2655 = vpow.pop %v2654
    %v2656 = vmul.f32 %v2641, 1.442695
    %v2657 = vpow.pop %v2656
    %v2658 = vadd.f32 %v2643, 1.0
    %v2659 = vadd.f32 %v2645, 1.0
    %v2660 = vadd.f32 %v2647, 1.0
    %v2661 = vadd.f32 %v2649, 1.0
    %v2662 = vadd.f32 %v2651, 1.0
    %v2663 = vadd.f32 %v2653, 1.0
    %v2664 = vadd.f32 %v2655, 1.0
    %v2665 = vadd.f32 %v2657, 1.0
    %v2666 = vrcp.pop %v2658
    %v2667 = vmul.f32 1.0, %v2666
    %v2668 = vrcp.pop %v2659
    %v2669 = vmul.f32 1.0, %v2668
    %v2670 = vrcp.pop %v2660
    %v2671 = vmul.f32 1.0, %v2670
    %v2672 = vrcp.pop %v2661
    %v2673 = vmul.f32 1.0, %v2672
    %v2674 = vrcp.pop %v2662
    %v2675 = vmul.f32 1.0, %v2674
    %v2676 = vrcp.pop %v2663
    %v2677 = vmul.f32 1.0, %v2676
    %v2678 = vrcp.pop %v2664
    %v2679 = vmul.f32 1.0, %v2678
    %v2680 = vrcp.pop %v2665
    %v2681 = vmul.f32 1.0, %v2680
    %v2682 = vmul.f32 %v2611, 0.0
    %v2683 = vmul.f32 %v2613, 0.0
    %v2684 = vmul.f32 %v2615, 0.0
    %v2685 = vmul.f32 %v2617, 0.0
    %v2686 = vmul.f32 %v2619, 0.0
    %v2687 = vmul.f32 %v2621, 0.0
    %v2688 = vmul.f32 %v2623, 0.0
    %v2689 = vmul.f32 %v2625, 0.0
    %v2690 = vmul.f32 %v2563, %v2626
    %v2691 = vmul.f32 %v2565, %v2627
    %v2692 = vmul.f32 %v2567, %v2628
    %v2693 = vmul.f32 %v2569, %v2629
    %v2694 = vmul.f32 %v2571, %v2630
    %v2695 = vmul.f32 %v2573, %v2631
    %v2696 = vmul.f32 %v2575, %v2632
    %v2697 = vmul.f32 %v2577, %v2633
    %v2698 = vadd.f32 %v2682, %v2690
    %v2699 = vadd.f32 %v2683, %v2691
    %v2700 = vadd.f32 %v2684, %v2692
    %v2701 = vadd.f32 %v2685, %v2693
    %v2702 = vadd.f32 %v2686, %v2694
    %v2703 = vadd.f32 %v2687, %v2695
    %v2704 = vadd.f32 %v2688, %v2696
    %v2705 = vadd.f32 %v2689, %v2697
    %v2706 = vtanh.pop %v2698
    %v2707 = vtanh.pop %v2699
    %v2708 = vtanh.pop %v2700
    %v2709 = vtanh.pop %v2701
    %v2710 = vtanh.pop %v2702
    %v2711 = vtanh.pop %v2703
    %v2712 = vtanh.pop %v2704
    %v2713 = vtanh.pop %v2705
    %v2714 = vmul.f32 %v2667, %v2706
    %v2715 = vmul.f32 %v2669, %v2707
    %v2716 = vmul.f32 %v2671, %v2708
    %v2717 = vmul.f32 %v2673, %v2709
    %v2718 = vmul.f32 %v2675, %v2710
    %v2719 = vmul.f32 %v2677, %v2711
    %v2720 = vmul.f32 %v2679, %v2712
    %v2721 = vmul.f32 %v2681, %v2713
    %v2730 = vrot.slane %v2715, 7
    %vm2731 = vcmask 1041409
    %v2732 = vsel %vm2731, %v2730, %v2714
    %v2733 = vrot.slane %v2716, 6
    %vm2734 = vcmask 1042434
    %v2735 = vsel %vm2734, %v2733, %v2732
    %v2736 = vrot.slane %v2717, 5
    %vm2737 = vcmask 1043459
    %v2738 = vsel %vm2737, %v2736, %v2735
    %v2739 = vrot.slane %v2718, 4
    %vm2740 = vcmask 1044484
    %v2741 = vsel %vm2740, %v2739, %v2738
    %v2742 = vrot.slane %v2719, 3
    %vm2743 = vcmask 1045509
    %v2744 = vsel %vm2743, %v2742, %v2741
    %v2745 = vrot.slane %v2720, 2
    %vm2746 = vcmask 1046534
    %v2747 = vsel %vm2746, %v2745, %v2744
    %v2748 = vrot.slane %v2721, 1
    %vm2749 = vcmask 1047559
    %v2750 = vsel %vm2749, %v2748, %v2747
    %v2752 = vpack.c.bf16 %v2750, %v2750
    %v2753 = vpack.c.bf16 0.0, 0.0
    %v2755 = vlaneseq
    %v2756 = vshrl.u32 %v2755, 7
    %v2757 = vsub.s32 0, %v2756
    %v2758 = vrot.slane %v2191, %v2757
    %v2759 = vlaneseq
    %v2760 = vshrl.u32 %v2759, 7
    %v2761 = vsub.s32 1, %v2760
    %v2762 = vrot.slane %v2191, %v2761
    %v2763 = vlaneseq
    %v2764 = vshrl.u32 %v2763, 7
    %v2765 = vsub.s32 2, %v2764
    %v2766 = vrot.slane %v2191, %v2765
    %v2767 = vlaneseq
    %v2768 = vshrl.u32 %v2767, 7
    %v2769 = vsub.s32 3, %v2768
    %v2770 = vrot.slane %v2191, %v2769
    %v2839 = vunpack.c.l.b16 %v2127
    %v2840 = vunpack.c.h.b16 %v2127
    %v2841 = vunpack.c.l.b16 %v2128
    %v2842 = vunpack.c.h.b16 %v2128
    %v2843 = vunpack.c.l.b16 %v2129
    %v2844 = vunpack.c.h.b16 %v2129
    %v2845 = vunpack.c.l.b16 %v2130
    %v2846 = vunpack.c.h.b16 %v2130
    %v2847 = vunpack.c.l.b16 %v2131
    %v2848 = vunpack.c.h.b16 %v2131
    %v2849 = vunpack.c.l.b16 %v2132
    %v2850 = vunpack.c.h.b16 %v2132
    %v2851 = vunpack.c.l.b16 %v2133
    %v2852 = vunpack.c.h.b16 %v2133
    %v2853 = vunpack.c.l.b16 %v2134
    %v2854 = vunpack.c.h.b16 %v2134
    %v2855 = vunpack.c.l.b16 %v2135
    %v2856 = vunpack.c.h.b16 %v2135
    %v2857 = vunpack.c.l.b16 %v2136
    %v2858 = vunpack.c.h.b16 %v2136
    %v2859 = vunpack.c.l.b16 %v2137
    %v2860 = vunpack.c.h.b16 %v2137
    %v2861 = vunpack.c.l.b16 %v2138
    %v2862 = vunpack.c.h.b16 %v2138
    %v2863 = vunpack.c.l.b16 %v2139
    %v2864 = vunpack.c.h.b16 %v2139
    %v2865 = vunpack.c.l.b16 %v2140
    %v2866 = vunpack.c.h.b16 %v2140
    %v2867 = vunpack.c.l.b16 %v2141
    %v2868 = vunpack.c.h.b16 %v2141
    %v2869 = vunpack.c.l.b16 %v2142
    %v2870 = vunpack.c.h.b16 %v2142
    %v2871 = vunpack.c.l.b16 %v2143
    %v2872 = vunpack.c.h.b16 %v2143
    %v2873 = vunpack.c.l.b16 %v2144
    %v2874 = vunpack.c.h.b16 %v2144
    %v2875 = vunpack.c.l.b16 %v2145
    %v2876 = vunpack.c.h.b16 %v2145
    %v2877 = vunpack.c.l.b16 %v2146
    %v2878 = vunpack.c.h.b16 %v2146
    %v2879 = vunpack.c.l.b16 %v2147
    %v2880 = vunpack.c.h.b16 %v2147
    %v2881 = vunpack.c.l.b16 %v2148
    %v2882 = vunpack.c.h.b16 %v2148
    %v2883 = vunpack.c.l.b16 %v2149
    %v2884 = vunpack.c.h.b16 %v2149
    %v2885 = vunpack.c.l.b16 %v2150
    %v2886 = vunpack.c.h.b16 %v2150
    %v2887 = vunpack.c.l.b16 %v2151
    %v2888 = vunpack.c.h.b16 %v2151
    %v2889 = vunpack.c.l.b16 %v2152
    %v2890 = vunpack.c.h.b16 %v2152
    %v2891 = vunpack.c.l.b16 %v2153
    %v2892 = vunpack.c.h.b16 %v2153
    %v2893 = vunpack.c.l.b16 %v2154
    %v2894 = vunpack.c.h.b16 %v2154
    %v2895 = vunpack.c.l.b16 %v2155
    %v2896 = vunpack.c.h.b16 %v2155
    %v2897 = vunpack.c.l.b16 %v2156
    %v2898 = vunpack.c.h.b16 %v2156
    %v2899 = vunpack.c.l.b16 %v2157
    %v2900 = vunpack.c.h.b16 %v2157
    %v2901 = vunpack.c.l.b16 %v2158
    %v2902 = vunpack.c.h.b16 %v2158
    %v2903 = vunpack.c.l.b16 %v2159
    %v2904 = vunpack.c.h.b16 %v2159
    %v2905 = vunpack.c.l.b16 %v2160
    %v2906 = vunpack.c.h.b16 %v2160
    %v2907 = vunpack.c.l.b16 %v2161
    %v2908 = vunpack.c.h.b16 %v2161
    %v2909 = vunpack.c.l.b16 %v2162
    %v2910 = vunpack.c.h.b16 %v2162
    %v2911 = vunpack.c.l.b16 %v2163
    %v2912 = vunpack.c.h.b16 %v2163
    %v2913 = vunpack.c.l.b16 %v2164
    %v2914 = vunpack.c.h.b16 %v2164
    %v2915 = vunpack.c.l.b16 %v2165
    %v2916 = vunpack.c.h.b16 %v2165
    %v2917 = vunpack.c.l.b16 %v2166
    %v2918 = vunpack.c.h.b16 %v2166
    %v2919 = vunpack.c.l.b16 %v2167
    %v2920 = vunpack.c.h.b16 %v2167
    %v2921 = vunpack.c.l.b16 %v2168
    %v2922 = vunpack.c.h.b16 %v2168
    %v2923 = vunpack.c.l.b16 %v2169
    %v2924 = vunpack.c.h.b16 %v2169
    %v2925 = vunpack.c.l.b16 %v2170
    %v2926 = vunpack.c.h.b16 %v2170
    %v2927 = vunpack.c.l.b16 %v2171
    %v2928 = vunpack.c.h.b16 %v2171
    %v2929 = vunpack.c.l.b16 %v2172
    %v2930 = vunpack.c.h.b16 %v2172
    %v2931 = vunpack.c.l.b16 %v2173
    %v2932 = vunpack.c.h.b16 %v2173
    %v2933 = vunpack.c.l.b16 %v2174
    %v2934 = vunpack.c.h.b16 %v2174
    %v2935 = vunpack.c.l.b16 %v2175
    %v2936 = vunpack.c.h.b16 %v2175
    %v2937 = vunpack.c.l.b16 %v2176
    %v2938 = vunpack.c.h.b16 %v2176
    %v2939 = vunpack.c.l.b16 %v2177
    %v2940 = vunpack.c.h.b16 %v2177
    %v2941 = vunpack.c.l.b16 %v2178
    %v2942 = vunpack.c.h.b16 %v2178
    %v2943 = vunpack.c.l.b16 %v2179
    %v2944 = vunpack.c.h.b16 %v2179
    %v2945 = vunpack.c.l.b16 %v2180
    %v2946 = vunpack.c.h.b16 %v2180
    %v2947 = vunpack.c.l.b16 %v2181
    %v2948 = vunpack.c.h.b16 %v2181
    %v2949 = vunpack.c.l.b16 %v2182
    %v2950 = vunpack.c.h.b16 %v2182
    %v2951 = vunpack.c.l.b16 %v2183
    %v2952 = vunpack.c.h.b16 %v2183
    %v2953 = vunpack.c.l.b16 %v2184
    %v2954 = vunpack.c.h.b16 %v2184
    %v2955 = vunpack.c.l.b16 %v2185
    %v2956 = vunpack.c.h.b16 %v2185
    %v2957 = vunpack.c.l.b16 %v2186
    %v2958 = vunpack.c.h.b16 %v2186
    %v2959 = vunpack.c.l.b16 %v2187
    %v2960 = vunpack.c.h.b16 %v2187
    %v2961 = vunpack.c.l.b16 %v2188
    %v2962 = vunpack.c.h.b16 %v2188
    %v2963 = vunpack.c.l.b16 %v2189
    %v2964 = vunpack.c.h.b16 %v2189
    %v2965 = vunpack.c.l.b16 %v2190
    %v2966 = vunpack.c.h.b16 %v2190
    %v2967 = vpack.c.b16 %v2843, %v2839
    %v2968 = vpack.c.b16 %v2844, %v2840
    %v2969 = vpack.c.b16 %v2845, %v2841
    %v2970 = vpack.c.b16 %v2846, %v2842
    %v2971 = vpack.c.b16 %v2851, %v2847
    %v2972 = vpack.c.b16 %v2852, %v2848
    %v2973 = vpack.c.b16 %v2853, %v2849
    %v2974 = vpack.c.b16 %v2854, %v2850
    %v2975 = vpack.c.b16 %v2859, %v2855
    %v2976 = vpack.c.b16 %v2860, %v2856
    %v2977 = vpack.c.b16 %v2861, %v2857
    %v2978 = vpack.c.b16 %v2862, %v2858
    %v2979 = vpack.c.b16 %v2867, %v2863
    %v2980 = vpack.c.b16 %v2868, %v2864
    %v2981 = vpack.c.b16 %v2869, %v2865
    %v2982 = vpack.c.b16 %v2870, %v2866
    %v2983 = vpack.c.b16 %v2875, %v2871
    %v2984 = vpack.c.b16 %v2876, %v2872
    %v2985 = vpack.c.b16 %v2877, %v2873
    %v2986 = vpack.c.b16 %v2878, %v2874
    %v2987 = vpack.c.b16 %v2883, %v2879
    %v2988 = vpack.c.b16 %v2884, %v2880
    %v2989 = vpack.c.b16 %v2885, %v2881
    %v2990 = vpack.c.b16 %v2886, %v2882
    %v2991 = vpack.c.b16 %v2891, %v2887
    %v2992 = vpack.c.b16 %v2892, %v2888
    %v2993 = vpack.c.b16 %v2893, %v2889
    %v2994 = vpack.c.b16 %v2894, %v2890
    %v2995 = vpack.c.b16 %v2899, %v2895
    %v2996 = vpack.c.b16 %v2900, %v2896
    %v2997 = vpack.c.b16 %v2901, %v2897
    %v2998 = vpack.c.b16 %v2902, %v2898
    %v2999 = vpack.c.b16 %v2907, %v2903
    %v3000 = vpack.c.b16 %v2908, %v2904
    %v3001 = vpack.c.b16 %v2909, %v2905
    %v3002 = vpack.c.b16 %v2910, %v2906
    %v3003 = vpack.c.b16 %v2915, %v2911
    %v3004 = vpack.c.b16 %v2916, %v2912
    %v3005 = vpack.c.b16 %v2917, %v2913
    %v3006 = vpack.c.b16 %v2918, %v2914
    %v3007 = vpack.c.b16 %v2923, %v2919
    %v3008 = vpack.c.b16 %v2924, %v2920
    %v3009 = vpack.c.b16 %v2925, %v2921
    %v3010 = vpack.c.b16 %v2926, %v2922
    %v3011 = vpack.c.b16 %v2931, %v2927
    %v3012 = vpack.c.b16 %v2932, %v2928
    %v3013 = vpack.c.b16 %v2933, %v2929
    %v3014 = vpack.c.b16 %v2934, %v2930
    %v3015 = vpack.c.b16 %v2939, %v2935
    %v3016 = vpack.c.b16 %v2940, %v2936
    %v3017 = vpack.c.b16 %v2941, %v2937
    %v3018 = vpack.c.b16 %v2942, %v2938
    %v3019 = vpack.c.b16 %v2947, %v2943
    %v3020 = vpack.c.b16 %v2948, %v2944
    %v3021 = vpack.c.b16 %v2949, %v2945
    %v3022 = vpack.c.b16 %v2950, %v2946
    %v3023 = vpack.c.b16 %v2955, %v2951
    %v3024 = vpack.c.b16 %v2956, %v2952
    %v3025 = vpack.c.b16 %v2957, %v2953
    %v3026 = vpack.c.b16 %v2958, %v2954
    %v3027 = vpack.c.b16 %v2963, %v2959
    %v3028 = vpack.c.b16 %v2964, %v2960
    %v3029 = vpack.c.b16 %v2965, %v2961
    %v3030 = vpack.c.b16 %v2966, %v2962
    %3095 = vmatprep.subr.bf16.mxu0 %v2996
    %3096 = vmatpush1.bf16.msra.mxu0 %v2995
    %3097 = vmatprep.subr.bf16.mxu0 %v2992
    %3098 = vmatpush1.bf16.msra.mxu0 %v2991
    %3099 = vmatprep.subr.bf16.mxu0 %v2988
    %3100 = vmatpush1.bf16.msra.mxu0 %v2987
    %3101 = vmatprep.subr.bf16.mxu0 %v2984
    %3102 = vmatpush1.bf16.msra.mxu0 %v2983
    %3103 = vmatprep.subr.bf16.mxu0 %v2980
    %3104 = vmatpush1.bf16.msra.mxu0 %v2979
    %3105 = vmatprep.subr.bf16.mxu0 %v2976
    %3106 = vmatpush1.bf16.msra.mxu0 %v2975
    %3107 = vmatprep.subr.bf16.mxu0 %v2972
    %3108 = vmatpush1.bf16.msra.mxu0 %v2971
    %3109 = vmatprep.subr.bf16.mxu0 %v2968
    %3110 = vmatpush1.bf16.msra.mxu0 %v2967
    %3111 = vmatprep.subr.bf16.mxu0 %v3028
    %3112 = vmatpush2.bf16.msra.mxu0 %v3027
    %3113 = vmatprep.subr.bf16.mxu0 %v3024
    %3114 = vmatpush2.bf16.msra.mxu0 %v3023
    %3115 = vmatprep.subr.bf16.mxu0 %v3020
    %3116 = vmatpush2.bf16.msra.mxu0 %v3019
    %3117 = vmatprep.subr.bf16.mxu0 %v3016
    %3118 = vmatpush2.bf16.msra.mxu0 %v3015
    %3119 = vmatprep.subr.bf16.mxu0 %v3012
    %3120 = vmatpush2.bf16.msra.mxu0 %v3011
    %3121 = vmatprep.subr.bf16.mxu0 %v3008
    %3122 = vmatpush2.bf16.msra.mxu0 %v3007
    %3123 = vmatprep.subr.bf16.mxu0 %v3004
    %3124 = vmatpush2.bf16.msra.mxu0 %v3003
    %3125 = vmatprep.subr.bf16.mxu0 %v3000
    %3126 = vmatpush2.bf16.msra.mxu0 %v2999
    %3127 = vmatprep.mubr.bf16.mxu0 %v2753
    %3128 = vmatmul.mubr.bf16.gmra.mxu0 %v2752
    %v3129 = vpop.f32.mrf.mxu0
    %v3130 = vadd.f32 %v2758, %v3129
    %v3131 = vpop.f32.mrf.mxu0
    %v3132 = vadd.f32 %v2762, %v3131
    %v3133 = vpop.f32.mrf.mxu0
    %v3134 = vpop.f32.mrf.mxu0
    %3135 = vdwg.mxu0
    %3136 = vmatprep.subr.bf16.mxu0 %v2998
    %3137 = vmatpush1.bf16.msra.mxu0 %v2997
    %3138 = vmatprep.subr.bf16.mxu0 %v2994
    %3139 = vmatpush1.bf16.msra.mxu0 %v2993
    %3140 = vmatprep.subr.bf16.mxu0 %v2990
    %3141 = vmatpush1.bf16.msra.mxu0 %v2989
    %3142 = vmatprep.subr.bf16.mxu0 %v2986
    %3143 = vmatpush1.bf16.msra.mxu0 %v2985
    %3144 = vmatprep.subr.bf16.mxu0 %v2982
    %3145 = vmatpush1.bf16.msra.mxu0 %v2981
    %3146 = vmatprep.subr.bf16.mxu0 %v2978
    %3147 = vmatpush1.bf16.msra.mxu0 %v2977
    %3148 = vmatprep.subr.bf16.mxu0 %v2974
    %3149 = vmatpush1.bf16.msra.mxu0 %v2973
    %3150 = vmatprep.subr.bf16.mxu0 %v2970
    %3151 = vmatpush1.bf16.msra.mxu0 %v2969
    %3152 = vmatprep.subr.bf16.mxu0 %v3030
    %3153 = vmatpush2.bf16.msra.mxu0 %v3029
    %3154 = vmatprep.subr.bf16.mxu0 %v3026
    %3155 = vmatpush2.bf16.msra.mxu0 %v3025
    %3156 = vmatprep.subr.bf16.mxu0 %v3022
    %3157 = vmatpush2.bf16.msra.mxu0 %v3021
    %3158 = vmatprep.subr.bf16.mxu0 %v3018
    %3159 = vmatpush2.bf16.msra.mxu0 %v3017
    %3160 = vmatprep.subr.bf16.mxu0 %v3014
    %3161 = vmatpush2.bf16.msra.mxu0 %v3013
    %3162 = vmatprep.subr.bf16.mxu0 %v3010
    %3163 = vmatpush2.bf16.msra.mxu0 %v3009
    %3164 = vmatprep.subr.bf16.mxu0 %v3006
    %3165 = vmatpush2.bf16.msra.mxu0 %v3005
    %3166 = vmatprep.subr.bf16.mxu0 %v3002
    %3167 = vmatpush2.bf16.msra.mxu0 %v3001
    %3168 = vmatprep.mubr.bf16.mxu0 %v2753
    %3169 = vmatmul.mubr.bf16.gmra.mxu0 %v2752
    %v3170 = vpop.f32.mrf.mxu0
    %v3171 = vadd.f32 %v2766, %v3170
    %v3172 = vpop.f32.mrf.mxu0
    %v3173 = vadd.f32 %v2770, %v3172
    %v3174 = vpop.f32.mrf.mxu0
    %v3175 = vpop.f32.mrf.mxu0
    %3176 = vdwg.mxu0
    %v3177 = vxor.u32 %v3130, 2147483648
    %v3178 = vmul.f32 %v3177, 1.442695
    %v3179 = vpow.pop %v3178
    %v3180 = vadd.f32 %v3179, 1.0
    %v3181 = vrcp.pop %v3180
    %v3182 = vmul.f32 1.0, %v3181
    %v3183 = vxor.u32 %v3132, 2147483648
    %v3184 = vmul.f32 %v3183, 1.442695
    %v3185 = vpow.pop %v3184
    %v3186 = vadd.f32 %v3185, 1.0
    %v3187 = vrcp.pop %v3186
    %v3188 = vmul.f32 1.0, %v3187
    %v3189 = vtanh.pop %v3171
    %v3190 = vxor.u32 %v3173, 2147483648
    %v3191 = vmul.f32 %v3190, 1.442695
    %v3192 = vpow.pop %v3191
    %v3193 = vadd.f32 %v3192, 1.0
    %v3194 = vrcp.pop %v3193
    %v3195 = vmul.f32 1.0, %v3194
    %v3196 = vmul.f32 %v3188, 0.0
    %v3197 = vmul.f32 %v3182, %v3189
    %v3198 = vadd.f32 %v3196, %v3197
    %v3199 = vtanh.pop %v3198
    %v3200 = vmul.f32 %v3195, %v3199
    %v3201 = vpack.c.bf16 %v2714, %v2714
    %v3202 = vpack.c.bf16 %v2715, %v2715
    %v3203 = vpack.c.bf16 %v2716, %v2716
    %v3204 = vpack.c.bf16 %v2717, %v2717
    %v3205 = vpack.c.bf16 %v2718, %v2718
    %v3206 = vpack.c.bf16 %v2719, %v2719
    %v3207 = vpack.c.bf16 %v2720, %v2720
    %v3208 = vpack.c.bf16 %v2721, %v2721
    %v3217 = vunpack.c.l.b16 %v3201
    %v3218 = vunpack.c.l.b16 %v3202
    %v3219 = vunpack.c.l.b16 %v3203
    %v3220 = vunpack.c.l.b16 %v3204
    %v3221 = vunpack.c.l.b16 %v3205
    %v3222 = vunpack.c.l.b16 %v3206
    %v3223 = vunpack.c.l.b16 %v3207
    %v3224 = vunpack.c.l.b16 %v3208
    %v3225 = vrot.slane %v3218, 7
    %v3226 = vsel %vm2731, %v3225, %v3217
    %v3227 = vrot.slane %v3219, 6
    %v3228 = vsel %vm2734, %v3227, %v3226
    %v3229 = vrot.slane %v3220, 5
    %v3230 = vsel %vm2737, %v3229, %v3228
    %v3231 = vrot.slane %v3221, 4
    %v3232 = vsel %vm2740, %v3231, %v3230
    %v3233 = vrot.slane %v3222, 3
    %v3234 = vsel %vm2743, %v3233, %v3232
    %v3235 = vrot.slane %v3223, 2
    %v3236 = vsel %vm2746, %v3235, %v3234
    %v3237 = vrot.slane %v3224, 1
    %v3238 = vsel %vm2749, %v3237, %v3236
    %v3239 = vpack.c.b16 %v3238, %v3238
    %3241 = vmatprep.subr.bf16.mxu0 %v2317
    %3242 = vmatpush1.bf16.msra.mxu0 %v2316
    %3243 = vmatprep.subr.bf16.mxu0 %v2313
    %3244 = vmatpush1.bf16.msra.mxu0 %v2312
    %3245 = vmatprep.subr.bf16.mxu0 %v2309
    %3246 = vmatpush1.bf16.msra.mxu0 %v2308
    %3247 = vmatprep.subr.bf16.mxu0 %v2305
    %3248 = vmatpush1.bf16.msra.mxu0 %v2304
    %3249 = vmatprep.subr.bf16.mxu0 %v2301
    %3250 = vmatpush1.bf16.msra.mxu0 %v2300
    %3251 = vmatprep.subr.bf16.mxu0 %v2297
    %3252 = vmatpush1.bf16.msra.mxu0 %v2296
    %3253 = vmatprep.subr.bf16.mxu0 %v2293
    %3254 = vmatpush1.bf16.msra.mxu0 %v2292
    %3255 = vmatprep.subr.bf16.mxu0 %v2289
    %3256 = vmatpush1.bf16.msra.mxu0 %v2288
    %3257 = vmatprep.subr.bf16.mxu0 0
    %3258 = vmatpush2.bf16.msra.mxu0 0
    %3259 = vmatprep.subr.bf16.mxu0 0
    %3260 = vmatpush2.bf16.msra.mxu0 0
    %3261 = vmatprep.subr.bf16.mxu0 0
    %3262 = vmatpush2.bf16.msra.mxu0 0
    %3263 = vmatprep.subr.bf16.mxu0 0
    %3264 = vmatpush2.bf16.msra.mxu0 0
    %3265 = vmatprep.subr.bf16.mxu0 0
    %3266 = vmatpush2.bf16.msra.mxu0 0
    %3267 = vmatprep.subr.bf16.mxu0 0
    %3268 = vmatpush2.bf16.msra.mxu0 0
    %3269 = vmatprep.subr.bf16.mxu0 0
    %3270 = vmatpush2.bf16.msra.mxu0 0
    %3271 = vmatprep.subr.bf16.mxu0 0
    %3272 = vmatpush2.bf16.msra.mxu0 0
    %3273 = vmatprep.mubr.bf16.mxu0 0
    %3274 = vmatmul.mubr.bf16.gmra.mxu0 %v3239
    %v3275 = vpop.f32.mrf.mxu0
    %v3276 = vadd.f32 0.0, %v3275
    %v3277 = vpop.f32.mrf.mxu0
    %v3278 = vadd.f32 0.0, %v3277
    %v3279 = vpop.f32.mrf.mxu0
    %v3280 = vpop.f32.mrf.mxu0
    %3281 = vdwg.mxu0
    %3282 = vmatprep.subr.bf16.mxu0 %v2319
    %3283 = vmatpush1.bf16.msra.mxu0 %v2318
    %3284 = vmatprep.subr.bf16.mxu0 %v2315
    %3285 = vmatpush1.bf16.msra.mxu0 %v2314
    %3286 = vmatprep.subr.bf16.mxu0 %v2311
    %3287 = vmatpush1.bf16.msra.mxu0 %v2310
    %3288 = vmatprep.subr.bf16.mxu0 %v2307
    %3289 = vmatpush1.bf16.msra.mxu0 %v2306
    %3290 = vmatprep.subr.bf16.mxu0 %v2303
    %3291 = vmatpush1.bf16.msra.mxu0 %v2302
    %3292 = vmatprep.subr.bf16.mxu0 %v2299
    %3293 = vmatpush1.bf16.msra.mxu0 %v2298
    %3294 = vmatprep.subr.bf16.mxu0 %v2295
    %3295 = vmatpush1.bf16.msra.mxu0 %v2294
    %3296 = vmatprep.subr.bf16.mxu0 %v2291
    %3297 = vmatpush1.bf16.msra.mxu0 %v2290
    %3298 = vmatprep.subr.bf16.mxu0 0
    %3299 = vmatpush2.bf16.msra.mxu0 0
    %3300 = vmatprep.subr.bf16.mxu0 0
    %3301 = vmatpush2.bf16.msra.mxu0 0
    %3302 = vmatprep.subr.bf16.mxu0 0
    %3303 = vmatpush2.bf16.msra.mxu0 0
    %3304 = vmatprep.subr.bf16.mxu0 0
    %3305 = vmatpush2.bf16.msra.mxu0 0
    %3306 = vmatprep.subr.bf16.mxu0 0
    %3307 = vmatpush2.bf16.msra.mxu0 0
    %3308 = vmatprep.subr.bf16.mxu0 0
    %3309 = vmatpush2.bf16.msra.mxu0 0
    %3310 = vmatprep.subr.bf16.mxu0 0
    %3311 = vmatpush2.bf16.msra.mxu0 0
    %3312 = vmatprep.subr.bf16.mxu0 0
    %3313 = vmatpush2.bf16.msra.mxu0 0
    %3314 = vmatprep.mubr.bf16.mxu0 0
    %3315 = vmatmul.mubr.bf16.gmra.mxu0 %v3239
    %v3316 = vpop.f32.mrf.mxu0
    %v3317 = vadd.f32 0.0, %v3316
    %v3318 = vpop.f32.mrf.mxu0
    %v3319 = vadd.f32 0.0, %v3318
    %v3320 = vpop.f32.mrf.mxu0
    %v3321 = vpop.f32.mrf.mxu0
    %3322 = vdwg.mxu0
    %v3327 = vrot.slane %v3276, 7
    %v3328 = vrot.slane %v3278, 7
    %v3329 = vrot.slane %v3317, 7
    %v3330 = vrot.slane %v3319, 7
    %v3331 = vrot.slane %v3276, 1
    %v3332 = vrot.slane %v3278, 1
    %v3333 = vrot.slane %v3317, 1
    %v3334 = vrot.slane %v3319, 1
    %v3335 = vrot.slane %v3276, 2
    %v3336 = vrot.slane %v3278, 2
    %v3337 = vrot.slane %v3317, 2
    %v3338 = vrot.slane %v3319, 2
    %v3339 = vrot.slane %v3276, 3
    %v3340 = vrot.slane %v3278, 3
    %v3341 = vrot.slane %v3317, 3
    %v3342 = vrot.slane %v3319, 3
    %v3343 = vrot.slane %v3276, 4
    %v3344 = vrot.slane %v3278, 4
    %v3345 = vrot.slane %v3317, 4
    %v3346 = vrot.slane %v3319, 4
    %v3347 = vrot.slane %v3276, 5
    %v3348 = vrot.slane %v3278, 5
    %v3349 = vrot.slane %v3317, 5
    %v3350 = vrot.slane %v3319, 5
    %v3351 = vrot.slane %v3276, 6
    %v3352 = vrot.slane %v3278, 6
    %v3353 = vrot.slane %v3317, 6
    %v3354 = vrot.slane %v3319, 6
    %v3387 = vadd.f32 %v1830, %v3327
    %v3388 = vadd.f32 %v1832, %v3328
    %v3389 = vadd.f32 %v2049, %v3329
    %v3390 = vadd.f32 %v2051, %v3330
    %v3391 = vadd.f32 %v1834, %v3276
    %v3392 = vadd.f32 %v1836, %v3278
    %v3393 = vadd.f32 %v2053, %v3317
    %v3394 = vadd.f32 %v2055, %v3319
    %v3395 = vadd.f32 %v1840, %v3331
    %v3396 = vadd.f32 %v1842, %v3332
    %v3397 = vadd.f32 %v2059, %v3333
    %v3398 = vadd.f32 %v2061, %v3334
    %v3399 = vadd.f32 %v1844, %v3335
    %v3400 = vadd.f32 %v1846, %v3336
    %v3401 = vadd.f32 %v2063, %v3337
    %v3402 = vadd.f32 %v2065, %v3338
    %v3403 = vadd.f32 %v1850, %v3339
    %v3404 = vadd.f32 %v1852, %v3340
    %v3405 = vadd.f32 %v2069, %v3341
    %v3406 = vadd.f32 %v2071, %v3342
    %v3407 = vadd.f32 %v1854, %v3343
    %v3408 = vadd.f32 %v1856, %v3344
    %v3409 = vadd.f32 %v2073, %v3345
    %v3410 = vadd.f32 %v2075, %v3346
    %v3411 = vadd.f32 %v1860, %v3347
    %v3412 = vadd.f32 %v1862, %v3348
    %v3413 = vadd.f32 %v2079, %v3349
    %v3414 = vadd.f32 %v2081, %v3350
    %v3415 = vadd.f32 %v1864, %v3351
    %v3416 = vadd.f32 %v1866, %v3352
    %v3417 = vadd.f32 %v2083, %v3353
    %v3418 = vadd.f32 %v2085, %v3354
    %v3419 = vxor.u32 %v3387, 2147483648
    %v3420 = vxor.u32 %v3391, 2147483648
    %v3421 = vxor.u32 %v3395, 2147483648
    %v3422 = vxor.u32 %v3399, 2147483648
    %v3423 = vxor.u32 %v3403, 2147483648
    %v3424 = vxor.u32 %v3407, 2147483648
    %v3425 = vxor.u32 %v3411, 2147483648
    %v3426 = vxor.u32 %v3415, 2147483648
    %v3427 = vmul.f32 %v3419, 1.442695
    %v3428 = vpow.pop %v3427
    %v3429 = vmul.f32 %v3420, 1.442695
    %v3430 = vpow.pop %v3429
    %v3431 = vmul.f32 %v3421, 1.442695
    %v3432 = vpow.pop %v3431
    %v3433 = vmul.f32 %v3422, 1.442695
    %v3434 = vpow.pop %v3433
    %v3435 = vmul.f32 %v3423, 1.442695
    %v3436 = vpow.pop %v3435
    %v3437 = vmul.f32 %v3424, 1.442695
    %v3438 = vpow.pop %v3437
    %v3439 = vmul.f32 %v3425, 1.442695
    %v3440 = vpow.pop %v3439
    %v3441 = vmul.f32 %v3426, 1.442695
    %v3442 = vpow.pop %v3441
    %v3443 = vadd.f32 %v3428, 1.0
    %v3444 = vadd.f32 %v3430, 1.0
    %v3445 = vadd.f32 %v3432, 1.0
    %v3446 = vadd.f32 %v3434, 1.0
    %v3447 = vadd.f32 %v3436, 1.0
    %v3448 = vadd.f32 %v3438, 1.0
    %v3449 = vadd.f32 %v3440, 1.0
    %v3450 = vadd.f32 %v3442, 1.0
    %v3451 = vrcp.pop %v3443
    %v3452 = vmul.f32 1.0, %v3451
    %v3453 = vrcp.pop %v3444
    %v3454 = vmul.f32 1.0, %v3453
    %v3455 = vrcp.pop %v3445
    %v3456 = vmul.f32 1.0, %v3455
    %v3457 = vrcp.pop %v3446
    %v3458 = vmul.f32 1.0, %v3457
    %v3459 = vrcp.pop %v3447
    %v3460 = vmul.f32 1.0, %v3459
    %v3461 = vrcp.pop %v3448
    %v3462 = vmul.f32 1.0, %v3461
    %v3463 = vrcp.pop %v3449
    %v3464 = vmul.f32 1.0, %v3463
    %v3465 = vrcp.pop %v3450
    %v3466 = vmul.f32 1.0, %v3465
    %v3467 = vxor.u32 %v3388, 2147483648
    %v3468 = vxor.u32 %v3392, 2147483648
    %v3469 = vxor.u32 %v3396, 2147483648
    %v3470 = vxor.u32 %v3400, 2147483648
    %v3471 = vxor.u32 %v3404, 2147483648
    %v3472 = vxor.u32 %v3408, 2147483648
    %v3473 = vxor.u32 %v3412, 2147483648
    %v3474 = vxor.u32 %v3416, 2147483648
    %v3475 = vmul.f32 %v3467, 1.442695
    %v3476 = vpow.pop %v3475
    %v3477 = vmul.f32 %v3468, 1.442695
    %v3478 = vpow.pop %v3477
    %v3479 = vmul.f32 %v3469, 1.442695
    %v3480 = vpow.pop %v3479
    %v3481 = vmul.f32 %v3470, 1.442695
    %v3482 = vpow.pop %v3481
    %v3483 = vmul.f32 %v3471, 1.442695
    %v3484 = vpow.pop %v3483
    %v3485 = vmul.f32 %v3472, 1.442695
    %v3486 = vpow.pop %v3485
    %v3487 = vmul.f32 %v3473, 1.442695
    %v3488 = vpow.pop %v3487
    %v3489 = vmul.f32 %v3474, 1.442695
    %v3490 = vpow.pop %v3489
    %v3491 = vadd.f32 %v3476, 1.0
    %v3492 = vadd.f32 %v3478, 1.0
    %v3493 = vadd.f32 %v3480, 1.0
    %v3494 = vadd.f32 %v3482, 1.0
    %v3495 = vadd.f32 %v3484, 1.0
    %v3496 = vadd.f32 %v3486, 1.0
    %v3497 = vadd.f32 %v3488, 1.0
    %v3498 = vadd.f32 %v3490, 1.0
    %v3499 = vrcp.pop %v3491
    %v3500 = vmul.f32 1.0, %v3499
    %v3501 = vrcp.pop %v3492
    %v3502 = vmul.f32 1.0, %v3501
    %v3503 = vrcp.pop %v3493
    %v3504 = vmul.f32 1.0, %v3503
    %v3505 = vrcp.pop %v3494
    %v3506 = vmul.f32 1.0, %v3505
    %v3507 = vrcp.pop %v3495
    %v3508 = vmul.f32 1.0, %v3507
    %v3509 = vrcp.pop %v3496
    %v3510 = vmul.f32 1.0, %v3509
    %v3511 = vrcp.pop %v3497
    %v3512 = vmul.f32 1.0, %v3511
    %v3513 = vrcp.pop %v3498
    %v3514 = vmul.f32 1.0, %v3513
    %v3515 = vtanh.pop %v3389
    %v3516 = vtanh.pop %v3393
    %v3517 = vtanh.pop %v3397
    %v3518 = vtanh.pop %v3401
    %v3519 = vtanh.pop %v3405
    %v3520 = vtanh.pop %v3409
    %v3521 = vtanh.pop %v3413
    %v3522 = vtanh.pop %v3417
    %v3523 = vxor.u32 %v3390, 2147483648
    %v3524 = vxor.u32 %v3394, 2147483648
    %v3525 = vxor.u32 %v3398, 2147483648
    %v3526 = vxor.u32 %v3402, 2147483648
    %v3527 = vxor.u32 %v3406, 2147483648
    %v3528 = vxor.u32 %v3410, 2147483648
    %v3529 = vxor.u32 %v3414, 2147483648
    %v3530 = vxor.u32 %v3418, 2147483648
    %v3531 = vmul.f32 %v3523, 1.442695
    %v3532 = vpow.pop %v3531
    %v3533 = vmul.f32 %v3524, 1.442695
    %v3534 = vpow.pop %v3533
    %v3535 = vmul.f32 %v3525, 1.442695
    %v3536 = vpow.pop %v3535
    %v3537 = vmul.f32 %v3526, 1.442695
    %v3538 = vpow.pop %v3537
    %v3539 = vmul.f32 %v3527, 1.442695
    %v3540 = vpow.pop %v3539
    %v3541 = vmul.f32 %v3528, 1.442695
    %v3542 = vpow.pop %v3541
    %v3543 = vmul.f32 %v3529, 1.442695
    %v3544 = vpow.pop %v3543
    %v3545 = vmul.f32 %v3530, 1.442695
    %v3546 = vpow.pop %v3545
    %v3547 = vadd.f32 %v3532, 1.0
    %v3548 = vadd.f32 %v3534, 1.0
    %v3549 = vadd.f32 %v3536, 1.0
    %v3550 = vadd.f32 %v3538, 1.0
    %v3551 = vadd.f32 %v3540, 1.0
    %v3552 = vadd.f32 %v3542, 1.0
    %v3553 = vadd.f32 %v3544, 1.0
    %v3554 = vadd.f32 %v3546, 1.0
    %v3555 = vrcp.pop %v3547
    %v3556 = vmul.f32 1.0, %v3555
    %v3557 = vrcp.pop %v3548
    %v3558 = vmul.f32 1.0, %v3557
    %v3559 = vrcp.pop %v3549
    %v3560 = vmul.f32 1.0, %v3559
    %v3561 = vrcp.pop %v3550
    %v3562 = vmul.f32 1.0, %v3561
    %v3563 = vrcp.pop %v3551
    %v3564 = vmul.f32 1.0, %v3563
    %v3565 = vrcp.pop %v3552
    %v3566 = vmul.f32 1.0, %v3565
    %v3567 = vrcp.pop %v3553
    %v3568 = vmul.f32 1.0, %v3567
    %v3569 = vrcp.pop %v3554
    %v3570 = vmul.f32 1.0, %v3569
    %v3579 = vrot.slane %v2698, 7
    %v3580 = vrot.slane %v2699, 7
    %v3581 = vrot.slane %v2700, 7
    %v3582 = vrot.slane %v2701, 7
    %v3583 = vrot.slane %v2702, 7
    %v3584 = vrot.slane %v2703, 7
    %v3585 = vrot.slane %v2704, 7
    %v3586 = vrot.slane %v2705, 7
    %v3595 = vmul.f32 %v3500, %v3579
    %v3596 = vmul.f32 %v3502, %v3580
    %v3597 = vmul.f32 %v3504, %v3581
    %v3598 = vmul.f32 %v3506, %v3582
    %v3599 = vmul.f32 %v3508, %v3583
    %v3600 = vmul.f32 %v3510, %v3584
    %v3601 = vmul.f32 %v3512, %v3585
    %v3602 = vmul.f32 %v3514, %v3586
    %v3603 = vmul.f32 %v3452, %v3515
    %v3604 = vmul.f32 %v3454, %v3516
    %v3605 = vmul.f32 %v3456, %v3517
    %v3606 = vmul.f32 %v3458, %v3518
    %v3607 = vmul.f32 %v3460, %v3519
    %v3608 = vmul.f32 %v3462, %v3520
    %v3609 = vmul.f32 %v3464, %v3521
    %v3610 = vmul.f32 %v3466, %v3522
    %v3611 = vadd.f32 %v3595, %v3603
    %v3612 = vadd.f32 %v3596, %v3604
    %v3613 = vadd.f32 %v3597, %v3605
    %v3614 = vadd.f32 %v3598, %v3606
    %v3615 = vadd.f32 %v3599, %v3607
    %v3616 = vadd.f32 %v3600, %v3608
    %v3617 = vadd.f32 %v3601, %v3609
    %v3618 = vadd.f32 %v3602, %v3610
    %v3619 = vtanh.pop %v3611
    %v3620 = vtanh.pop %v3612
    %v3621 = vtanh.pop %v3613
    %v3622 = vtanh.pop %v3614
    %v3623 = vtanh.pop %v3615
    %v3624 = vtanh.pop %v3616
    %v3625 = vtanh.pop %v3617
    %v3626 = vtanh.pop %v3618
    %v3627 = vmul.f32 %v3556, %v3619
    %v3628 = vmul.f32 %v3558, %v3620
    %v3629 = vmul.f32 %v3560, %v3621
    %v3630 = vmul.f32 %v3562, %v3622
    %v3631 = vmul.f32 %v3564, %v3623
    %v3632 = vmul.f32 %v3566, %v3624
    %v3633 = vmul.f32 %v3568, %v3625
    %v3634 = vmul.f32 %v3570, %v3626
    %v3643 = vrot.slane %v3628, 7
    %v3644 = vsel %vm2734, %v3643, %v3627
    %v3645 = vrot.slane %v3629, 6
    %v3646 = vsel %vm2737, %v3645, %v3644
    %v3647 = vrot.slane %v3630, 5
    %v3648 = vsel %vm2740, %v3647, %v3646
    %v3649 = vrot.slane %v3631, 4
    %v3650 = vsel %vm2743, %v3649, %v3648
    %v3651 = vrot.slane %v3632, 3
    %v3652 = vsel %vm2746, %v3651, %v3650
    %v3653 = vrot.slane %v3633, 2
    %v3654 = vsel %vm2749, %v3653, %v3652
    %v3655 = vrot.slane %v3634, 1
    %v3659 = vrot.slane %v3200, 7
    %v3661 = vpack.c.bf16 %v3655, %v3654
    %v3662 = vpack.c.bf16 %v3659, %v3659
    %v3664 = vshrl.u32 %v3661, 16
    %v3666 = vshll.u32 %v3661, 16
    %v3668 = vrot.slane %v3666, 1
    %v3669 = vor.u32 %v3664, %v3668
    %v3671 = vshrl.u32 %v3662, 16
    %v3673 = vshll.u32 %v3662, 16
    %v3675 = vrot.slane %v3673, 1
    %v3676 = vor.u32 %v3671, %v3675
    %3679 = vmatprep.subr.bf16.mxu0 %v2996
    %3680 = vmatpush1.bf16.msra.mxu0 %v2995
    %3681 = vmatprep.subr.bf16.mxu0 %v2992
    %3682 = vmatpush1.bf16.msra.mxu0 %v2991
    %3683 = vmatprep.subr.bf16.mxu0 %v2988
    %3684 = vmatpush1.bf16.msra.mxu0 %v2987
    %3685 = vmatprep.subr.bf16.mxu0 %v2984
    %3686 = vmatpush1.bf16.msra.mxu0 %v2983
    %3687 = vmatprep.subr.bf16.mxu0 %v2980
    %3688 = vmatpush1.bf16.msra.mxu0 %v2979
    %3689 = vmatprep.subr.bf16.mxu0 %v2976
    %3690 = vmatpush1.bf16.msra.mxu0 %v2975
    %3691 = vmatprep.subr.bf16.mxu0 %v2972
    %3692 = vmatpush1.bf16.msra.mxu0 %v2971
    %3693 = vmatprep.subr.bf16.mxu0 %v2968
    %3694 = vmatpush1.bf16.msra.mxu0 %v2967
    %3695 = vmatprep.subr.bf16.mxu0 %v3028
    %3696 = vmatpush2.bf16.msra.mxu0 %v3027
    %3697 = vmatprep.subr.bf16.mxu0 %v3024
    %3698 = vmatpush2.bf16.msra.mxu0 %v3023
    %3699 = vmatprep.subr.bf16.mxu0 %v3020
    %3700 = vmatpush2.bf16.msra.mxu0 %v3019
    %3701 = vmatprep.subr.bf16.mxu0 %v3016
    %3702 = vmatpush2.bf16.msra.mxu0 %v3015
    %3703 = vmatprep.subr.bf16.mxu0 %v3012
    %3704 = vmatpush2.bf16.msra.mxu0 %v3011
    %3705 = vmatprep.subr.bf16.mxu0 %v3008
    %3706 = vmatpush2.bf16.msra.mxu0 %v3007
    %3707 = vmatprep.subr.bf16.mxu0 %v3004
    %3708 = vmatpush2.bf16.msra.mxu0 %v3003
    %3709 = vmatprep.subr.bf16.mxu0 %v3000
    %3710 = vmatpush2.bf16.msra.mxu0 %v2999
    %3711 = vmatprep.mubr.bf16.mxu0 %v3676
    %3712 = vmatmul.mubr.bf16.gmra.mxu0 %v3669
    %v3713 = vpop.f32.mrf.mxu0
    %v3714 = vadd.f32 %v2758, %v3713
    %v3715 = vpop.f32.mrf.mxu0
    %v3716 = vadd.f32 %v2762, %v3715
    %v3717 = vpop.f32.mrf.mxu0
    %v3718 = vpop.f32.mrf.mxu0
    %3719 = vdwg.mxu0
    %3720 = vmatprep.subr.bf16.mxu0 %v2998
    %3721 = vmatpush1.bf16.msra.mxu0 %v2997
    %3722 = vmatprep.subr.bf16.mxu0 %v2994
    %3723 = vmatpush1.bf16.msra.mxu0 %v2993
    %3724 = vmatprep.subr.bf16.mxu0 %v2990
    %3725 = vmatpush1.bf16.msra.mxu0 %v2989
    %3726 = vmatprep.subr.bf16.mxu0 %v2986
    %3727 = vmatpush1.bf16.msra.mxu0 %v2985
    %3728 = vmatprep.subr.bf16.mxu0 %v2982
    %3729 = vmatpush1.bf16.msra.mxu0 %v2981
    %3730 = vmatprep.subr.bf16.mxu0 %v2978
    %3731 = vmatpush1.bf16.msra.mxu0 %v2977
    %3732 = vmatprep.subr.bf16.mxu0 %v2974
    %3733 = vmatpush1.bf16.msra.mxu0 %v2973
    %3734 = vmatprep.subr.bf16.mxu0 %v2970
    %3735 = vmatpush1.bf16.msra.mxu0 %v2969
    %3736 = vmatprep.subr.bf16.mxu0 %v3030
    %3737 = vmatpush2.bf16.msra.mxu0 %v3029
    %3738 = vmatprep.subr.bf16.mxu0 %v3026
    %3739 = vmatpush2.bf16.msra.mxu0 %v3025
    %3740 = vmatprep.subr.bf16.mxu0 %v3022
    %3741 = vmatpush2.bf16.msra.mxu0 %v3021
    %3742 = vmatprep.subr.bf16.mxu0 %v3018
    %3743 = vmatpush2.bf16.msra.mxu0 %v3017
    %3744 = vmatprep.subr.bf16.mxu0 %v3014
    %3745 = vmatpush2.bf16.msra.mxu0 %v3013
    %3746 = vmatprep.subr.bf16.mxu0 %v3010
    %3747 = vmatpush2.bf16.msra.mxu0 %v3009
    %3748 = vmatprep.subr.bf16.mxu0 %v3006
    %3749 = vmatpush2.bf16.msra.mxu0 %v3005
    %3750 = vmatprep.subr.bf16.mxu0 %v3002
    %3751 = vmatpush2.bf16.msra.mxu0 %v3001
    %3752 = vmatprep.mubr.bf16.mxu0 %v3676
    %3753 = vmatmul.mubr.bf16.gmra.mxu0 %v3669
    %v3754 = vpop.f32.mrf.mxu0
    %v3755 = vadd.f32 %v2766, %v3754
    %v3756 = vpop.f32.mrf.mxu0
    %v3757 = vadd.f32 %v2770, %v3756
    %v3758 = vpop.f32.mrf.mxu0
    %v3759 = vpop.f32.mrf.mxu0
    %3760 = vdwg.mxu0
    %v3761 = vxor.u32 %v3714, 2147483648
    %v3762 = vmul.f32 %v3761, 1.442695
    %v3763 = vpow.pop %v3762
    %v3764 = vadd.f32 %v3763, 1.0
    %v3765 = vrcp.pop %v3764
    %v3766 = vmul.f32 1.0, %v3765
    %v3767 = vxor.u32 %v3716, 2147483648
    %v3768 = vmul.f32 %v3767, 1.442695
    %v3769 = vpow.pop %v3768
    %v3770 = vadd.f32 %v3769, 1.0
    %v3771 = vrcp.pop %v3770
    %v3772 = vmul.f32 1.0, %v3771
    %v3773 = vtanh.pop %v3755
    %v3774 = vxor.u32 %v3757, 2147483648
    %v3775 = vmul.f32 %v3774, 1.442695
    %v3776 = vpow.pop %v3775
    %v3777 = vadd.f32 %v3776, 1.0
    %v3778 = vrcp.pop %v3777
    %v3779 = vmul.f32 1.0, %v3778
    %v3780 = vmul.f32 %v3772, %v3198
    %v3781 = vmul.f32 %v3766, %v3773
    %v3782 = vadd.f32 %v3780, %v3781
    %v3783 = vtanh.pop %v3782
    %v3784 = vmul.f32 %v3779, %v3783
    %v3785 = vpack.c.bf16 %v3627, %v3627
    %v3786 = vpack.c.bf16 %v3628, %v3628
    %v3787 = vpack.c.bf16 %v3629, %v3629
    %v3788 = vpack.c.bf16 %v3630, %v3630
    %v3789 = vpack.c.bf16 %v3631, %v3631
    %v3790 = vpack.c.bf16 %v3632, %v3632
    %v3791 = vpack.c.bf16 %v3633, %v3633
    %v3792 = vpack.c.bf16 %v3634, %v3634
    %v3801 = vunpack.c.l.b16 %v3785
    %v3802 = vunpack.c.l.b16 %v3786
    %v3803 = vunpack.c.l.b16 %v3787
    %v3804 = vunpack.c.l.b16 %v3788
    %v3805 = vunpack.c.l.b16 %v3789
    %v3806 = vunpack.c.l.b16 %v3790
    %v3807 = vunpack.c.l.b16 %v3791
    %v3808 = vunpack.c.l.b16 %v3792
    %v3809 = vrot.slane %v3801, 1
    %v3810 = vsel %vm2731, %v3802, %v3809
    %v3811 = vrot.slane %v3803, 7
    %v3812 = vsel %vm2734, %v3811, %v3810
    %v3813 = vrot.slane %v3804, 6
    %v3814 = vsel %vm2737, %v3813, %v3812
    %v3815 = vrot.slane %v3805, 5
    %v3816 = vsel %vm2740, %v3815, %v3814
    %v3817 = vrot.slane %v3806, 4
    %v3818 = vsel %vm2743, %v3817, %v3816
    %v3819 = vrot.slane %v3807, 3
    %v3820 = vsel %vm2746, %v3819, %v3818
    %v3821 = vrot.slane %v3808, 2
    %v3822 = vsel %vm2749, %v3821, %v3820
    %v3823 = vpack.c.b16 %v3822, %v3822
    %3825 = vmatprep.subr.bf16.mxu0 %v2317
    %3826 = vmatpush1.bf16.msra.mxu0 %v2316
    %3827 = vmatprep.subr.bf16.mxu0 %v2313
    %3828 = vmatpush1.bf16.msra.mxu0 %v2312
    %3829 = vmatprep.subr.bf16.mxu0 %v2309
    %3830 = vmatpush1.bf16.msra.mxu0 %v2308
    %3831 = vmatprep.subr.bf16.mxu0 %v2305
    %3832 = vmatpush1.bf16.msra.mxu0 %v2304
    %3833 = vmatprep.subr.bf16.mxu0 %v2301
    %3834 = vmatpush1.bf16.msra.mxu0 %v2300
    %3835 = vmatprep.subr.bf16.mxu0 %v2297
    %3836 = vmatpush1.bf16.msra.mxu0 %v2296
    %3837 = vmatprep.subr.bf16.mxu0 %v2293
    %3838 = vmatpush1.bf16.msra.mxu0 %v2292
    %3839 = vmatprep.subr.bf16.mxu0 %v2289
    %3840 = vmatpush1.bf16.msra.mxu0 %v2288
    %3841 = vmatprep.subr.bf16.mxu0 0
    %3842 = vmatpush2.bf16.msra.mxu0 0
    %3843 = vmatprep.subr.bf16.mxu0 0
    %3844 = vmatpush2.bf16.msra.mxu0 0
    %3845 = vmatprep.subr.bf16.mxu0 0
    %3846 = vmatpush2.bf16.msra.mxu0 0
    %3847 = vmatprep.subr.bf16.mxu0 0
    %3848 = vmatpush2.bf16.msra.mxu0 0
    %3849 = vmatprep.subr.bf16.mxu0 0
    %3850 = vmatpush2.bf16.msra.mxu0 0
    %3851 = vmatprep.subr.bf16.mxu0 0
    %3852 = vmatpush2.bf16.msra.mxu0 0
    %3853 = vmatprep.subr.bf16.mxu0 0
    %3854 = vmatpush2.bf16.msra.mxu0 0
    %3855 = vmatprep.subr.bf16.mxu0 0
    %3856 = vmatpush2.bf16.msra.mxu0 0
    %3857 = vmatprep.mubr.bf16.mxu0 0
    %3858 = vmatmul.mubr.bf16.gmra.mxu0 %v3823
    %v3859 = vpop.f32.mrf.mxu0
    %v3860 = vadd.f32 0.0, %v3859
    %v3861 = vpop.f32.mrf.mxu0
    %v3862 = vadd.f32 0.0, %v3861
    %v3863 = vpop.f32.mrf.mxu0
    %v3864 = vpop.f32.mrf.mxu0
    %3865 = vdwg.mxu0
    %3866 = vmatprep.subr.bf16.mxu0 %v2319
    %3867 = vmatpush1.bf16.msra.mxu0 %v2318
    %3868 = vmatprep.subr.bf16.mxu0 %v2315
    %3869 = vmatpush1.bf16.msra.mxu0 %v2314
    %3870 = vmatprep.subr.bf16.mxu0 %v2311
    %3871 = vmatpush1.bf16.msra.mxu0 %v2310
    %3872 = vmatprep.subr.bf16.mxu0 %v2307
    %3873 = vmatpush1.bf16.msra.mxu0 %v2306
    %3874 = vmatprep.subr.bf16.mxu0 %v2303
    %3875 = vmatpush1.bf16.msra.mxu0 %v2302
    %3876 = vmatprep.subr.bf16.mxu0 %v2299
    %3877 = vmatpush1.bf16.msra.mxu0 %v2298
    %3878 = vmatprep.subr.bf16.mxu0 %v2295
    %3879 = vmatpush1.bf16.msra.mxu0 %v2294
    %3880 = vmatprep.subr.bf16.mxu0 %v2291
    %3881 = vmatpush1.bf16.msra.mxu0 %v2290
    %3882 = vmatprep.subr.bf16.mxu0 0
    %3883 = vmatpush2.bf16.msra.mxu0 0
    %3884 = vmatprep.subr.bf16.mxu0 0
    %3885 = vmatpush2.bf16.msra.mxu0 0
    %3886 = vmatprep.subr.bf16.mxu0 0
    %3887 = vmatpush2.bf16.msra.mxu0 0
    %3888 = vmatprep.subr.bf16.mxu0 0
    %3889 = vmatpush2.bf16.msra.mxu0 0
    %3890 = vmatprep.subr.bf16.mxu0 0
    %3891 = vmatpush2.bf16.msra.mxu0 0
    %3892 = vmatprep.subr.bf16.mxu0 0
    %3893 = vmatpush2.bf16.msra.mxu0 0
    %3894 = vmatprep.subr.bf16.mxu0 0
    %3895 = vmatpush2.bf16.msra.mxu0 0
    %3896 = vmatprep.subr.bf16.mxu0 0
    %3897 = vmatpush2.bf16.msra.mxu0 0
    %3898 = vmatprep.mubr.bf16.mxu0 0
    %3899 = vmatmul.mubr.bf16.gmra.mxu0 %v3823
    %v3900 = vpop.f32.mrf.mxu0
    %v3901 = vadd.f32 0.0, %v3900
    %v3902 = vpop.f32.mrf.mxu0
    %v3903 = vadd.f32 0.0, %v3902
    %v3904 = vpop.f32.mrf.mxu0
    %v3905 = vpop.f32.mrf.mxu0
    %3906 = vdwg.mxu0
    %v3911 = vrot.slane %v3860, 6
    %v3912 = vrot.slane %v3862, 6
    %v3913 = vrot.slane %v3901, 6
    %v3914 = vrot.slane %v3903, 6
    %v3915 = vrot.slane %v3860, 7
    %v3916 = vrot.slane %v3862, 7
    %v3917 = vrot.slane %v3901, 7
    %v3918 = vrot.slane %v3903, 7
    %v3919 = vrot.slane %v3860, 1
    %v3920 = vrot.slane %v3862, 1
    %v3921 = vrot.slane %v3901, 1
    %v3922 = vrot.slane %v3903, 1
    %v3923 = vrot.slane %v3860, 2
    %v3924 = vrot.slane %v3862, 2
    %v3925 = vrot.slane %v3901, 2
    %v3926 = vrot.slane %v3903, 2
    %v3927 = vrot.slane %v3860, 3
    %v3928 = vrot.slane %v3862, 3
    %v3929 = vrot.slane %v3901, 3
    %v3930 = vrot.slane %v3903, 3
    %v3931 = vrot.slane %v3860, 4
    %v3932 = vrot.slane %v3862, 4
    %v3933 = vrot.slane %v3901, 4
    %v3934 = vrot.slane %v3903, 4
    %v3935 = vrot.slane %v3860, 5
    %v3936 = vrot.slane %v3862, 5
    %v3937 = vrot.slane %v3901, 5
    %v3938 = vrot.slane %v3903, 5
    %v3971 = vadd.f32 %v1830, %v3911
    %v3972 = vadd.f32 %v1832, %v3912
    %v3973 = vadd.f32 %v2049, %v3913
    %v3974 = vadd.f32 %v2051, %v3914
    %v3975 = vadd.f32 %v1834, %v3915
    %v3976 = vadd.f32 %v1836, %v3916
    %v3977 = vadd.f32 %v2053, %v3917
    %v3978 = vadd.f32 %v2055, %v3918
    %v3979 = vadd.f32 %v1840, %v3860
    %v3980 = vadd.f32 %v1842, %v3862
    %v3981 = vadd.f32 %v2059, %v3901
    %v3982 = vadd.f32 %v2061, %v3903
    %v3983 = vadd.f32 %v1844, %v3919
    %v3984 = vadd.f32 %v1846, %v3920
    %v3985 = vadd.f32 %v2063, %v3921
    %v3986 = vadd.f32 %v2065, %v3922
    %v3987 = vadd.f32 %v1850, %v3923
    %v3988 = vadd.f32 %v1852, %v3924
    %v3989 = vadd.f32 %v2069, %v3925
    %v3990 = vadd.f32 %v2071, %v3926
    %v3991 = vadd.f32 %v1854, %v3927
    %v3992 = vadd.f32 %v1856, %v3928
    %v3993 = vadd.f32 %v2073, %v3929
    %v3994 = vadd.f32 %v2075, %v3930
    %v3995 = vadd.f32 %v1860, %v3931
    %v3996 = vadd.f32 %v1862, %v3932
    %v3997 = vadd.f32 %v2079, %v3933
    %v3998 = vadd.f32 %v2081, %v3934
    %v3999 = vadd.f32 %v1864, %v3935
    %v4000 = vadd.f32 %v1866, %v3936
    %v4001 = vadd.f32 %v2083, %v3937
    %v4002 = vadd.f32 %v2085, %v3938
    %v4003 = vxor.u32 %v3971, 2147483648
    %v4004 = vxor.u32 %v3975, 2147483648
    %v4005 = vxor.u32 %v3979, 2147483648
    %v4006 = vxor.u32 %v3983, 2147483648
    %v4007 = vxor.u32 %v3987, 2147483648
    %v4008 = vxor.u32 %v3991, 2147483648
    %v4009 = vxor.u32 %v3995, 2147483648
    %v4010 = vxor.u32 %v3999, 2147483648
    %v4011 = vmul.f32 %v4003, 1.442695
    %v4012 = vpow.pop %v4011
    %v4013 = vmul.f32 %v4004, 1.442695
    %v4014 = vpow.pop %v4013
    %v4015 = vmul.f32 %v4005, 1.442695
    %v4016 = vpow.pop %v4015
    %v4017 = vmul.f32 %v4006, 1.442695
    %v4018 = vpow.pop %v4017
    %v4019 = vmul.f32 %v4007, 1.442695
    %v4020 = vpow.pop %v4019
    %v4021 = vmul.f32 %v4008, 1.442695
    %v4022 = vpow.pop %v4021
    %v4023 = vmul.f32 %v4009, 1.442695
    %v4024 = vpow.pop %v4023
    %v4025 = vmul.f32 %v4010, 1.442695
    %v4026 = vpow.pop %v4025
    %v4027 = vadd.f32 %v4012, 1.0
    %v4028 = vadd.f32 %v4014, 1.0
    %v4029 = vadd.f32 %v4016, 1.0
    %v4030 = vadd.f32 %v4018, 1.0
    %v4031 = vadd.f32 %v4020, 1.0
    %v4032 = vadd.f32 %v4022, 1.0
    %v4033 = vadd.f32 %v4024, 1.0
    %v4034 = vadd.f32 %v4026, 1.0
    %v4035 = vrcp.pop %v4027
    %v4036 = vmul.f32 1.0, %v4035
    %v4037 = vrcp.pop %v4028
    %v4038 = vmul.f32 1.0, %v4037
    %v4039 = vrcp.pop %v4029
    %v4040 = vmul.f32 1.0, %v4039
    %v4041 = vrcp.pop %v4030
    %v4042 = vmul.f32 1.0, %v4041
    %v4043 = vrcp.pop %v4031
    %v4044 = vmul.f32 1.0, %v4043
    %v4045 = vrcp.pop %v4032
    %v4046 = vmul.f32 1.0, %v4045
    %v4047 = vrcp.pop %v4033
    %v4048 = vmul.f32 1.0, %v4047
    %v4049 = vrcp.pop %v4034
    %v4050 = vmul.f32 1.0, %v4049
    %v4051 = vxor.u32 %v3972, 2147483648
    %v4052 = vxor.u32 %v3976, 2147483648
    %v4053 = vxor.u32 %v3980, 2147483648
    %v4054 = vxor.u32 %v3984, 2147483648
    %v4055 = vxor.u32 %v3988, 2147483648
    %v4056 = vxor.u32 %v3992, 2147483648
    %v4057 = vxor.u32 %v3996, 2147483648
    %v4058 = vxor.u32 %v4000, 2147483648
    %v4059 = vmul.f32 %v4051, 1.442695
    %v4060 = vpow.pop %v4059
    %v4061 = vmul.f32 %v4052, 1.442695
    %v4062 = vpow.pop %v4061
    %v4063 = vmul.f32 %v4053, 1.442695
    %v4064 = vpow.pop %v4063
    %v4065 = vmul.f32 %v4054, 1.442695
    %v4066 = vpow.pop %v4065
    %v4067 = vmul.f32 %v4055, 1.442695
    %v4068 = vpow.pop %v4067
    %v4069 = vmul.f32 %v4056, 1.442695
    %v4070 = vpow.pop %v4069
    %v4071 = vmul.f32 %v4057, 1.442695
    %v4072 = vpow.pop %v4071
    %v4073 = vmul.f32 %v4058, 1.442695
    %v4074 = vpow.pop %v4073
    %v4075 = vadd.f32 %v4060, 1.0
    %v4076 = vadd.f32 %v4062, 1.0
    %v4077 = vadd.f32 %v4064, 1.0
    %v4078 = vadd.f32 %v4066, 1.0
    %v4079 = vadd.f32 %v4068, 1.0
    %v4080 = vadd.f32 %v4070, 1.0
    %v4081 = vadd.f32 %v4072, 1.0
    %v4082 = vadd.f32 %v4074, 1.0
    %v4083 = vrcp.pop %v4075
    %v4084 = vmul.f32 1.0, %v4083
    %v4085 = vrcp.pop %v4076
    %v4086 = vmul.f32 1.0, %v4085
    %v4087 = vrcp.pop %v4077
    %v4088 = vmul.f32 1.0, %v4087
    %v4089 = vrcp.pop %v4078
    %v4090 = vmul.f32 1.0, %v4089
    %v4091 = vrcp.pop %v4079
    %v4092 = vmul.f32 1.0, %v4091
    %v4093 = vrcp.pop %v4080
    %v4094 = vmul.f32 1.0, %v4093
    %v4095 = vrcp.pop %v4081
    %v4096 = vmul.f32 1.0, %v4095
    %v4097 = vrcp.pop %v4082
    %v4098 = vmul.f32 1.0, %v4097
    %v4099 = vtanh.pop %v3973
    %v4100 = vtanh.pop %v3977
    %v4101 = vtanh.pop %v3981
    %v4102 = vtanh.pop %v3985
    %v4103 = vtanh.pop %v3989
    %v4104 = vtanh.pop %v3993
    %v4105 = vtanh.pop %v3997
    %v4106 = vtanh.pop %v4001
    %v4107 = vxor.u32 %v3974, 2147483648
    %v4108 = vxor.u32 %v3978, 2147483648
    %v4109 = vxor.u32 %v3982, 2147483648
    %v4110 = vxor.u32 %v3986, 2147483648
    %v4111 = vxor.u32 %v3990, 2147483648
    %v4112 = vxor.u32 %v3994, 2147483648
    %v4113 = vxor.u32 %v3998, 2147483648
    %v4114 = vxor.u32 %v4002, 2147483648
    %v4115 = vmul.f32 %v4107, 1.442695
    %v4116 = vpow.pop %v4115
    %v4117 = vmul.f32 %v4108, 1.442695
    %v4118 = vpow.pop %v4117
    %v4119 = vmul.f32 %v4109, 1.442695
    %v4120 = vpow.pop %v4119
    %v4121 = vmul.f32 %v4110, 1.442695
    %v4122 = vpow.pop %v4121
    %v4123 = vmul.f32 %v4111, 1.442695
    %v4124 = vpow.pop %v4123
    %v4125 = vmul.f32 %v4112, 1.442695
    %v4126 = vpow.pop %v4125
    %v4127 = vmul.f32 %v4113, 1.442695
    %v4128 = vpow.pop %v4127
    %v4129 = vmul.f32 %v4114, 1.442695
    %v4130 = vpow.pop %v4129
    %v4131 = vadd.f32 %v4116, 1.0
    %v4132 = vadd.f32 %v4118, 1.0
    %v4133 = vadd.f32 %v4120, 1.0
    %v4134 = vadd.f32 %v4122, 1.0
    %v4135 = vadd.f32 %v4124, 1.0
    %v4136 = vadd.f32 %v4126, 1.0
    %v4137 = vadd.f32 %v4128, 1.0
    %v4138 = vadd.f32 %v4130, 1.0
    %v4139 = vrcp.pop %v4131
    %v4140 = vmul.f32 1.0, %v4139
    %v4141 = vrcp.pop %v4132
    %v4142 = vmul.f32 1.0, %v4141
    %v4143 = vrcp.pop %v4133
    %v4144 = vmul.f32 1.0, %v4143
    %v4145 = vrcp.pop %v4134
    %v4146 = vmul.f32 1.0, %v4145
    %v4147 = vrcp.pop %v4135
    %v4148 = vmul.f32 1.0, %v4147
    %v4149 = vrcp.pop %v4136
    %v4150 = vmul.f32 1.0, %v4149
    %v4151 = vrcp.pop %v4137
    %v4152 = vmul.f32 1.0, %v4151
    %v4153 = vrcp.pop %v4138
    %v4154 = vmul.f32 1.0, %v4153
    %v4163 = vrot.slane %v3611, 7
    %v4164 = vrot.slane %v3612, 7
    %v4165 = vrot.slane %v3613, 7
    %v4166 = vrot.slane %v3614, 7
    %v4167 = vrot.slane %v3615, 7
    %v4168 = vrot.slane %v3616, 7
    %v4169 = vrot.slane %v3617, 7
    %v4170 = vrot.slane %v3618, 7
    %v4179 = vmul.f32 %v4084, %v4163
    %v4180 = vmul.f32 %v4086, %v4164
    %v4181 = vmul.f32 %v4088, %v4165
    %v4182 = vmul.f32 %v4090, %v4166
    %v4183 = vmul.f32 %v4092, %v4167
    %v4184 = vmul.f32 %v4094, %v4168
    %v4185 = vmul.f32 %v4096, %v4169
    %v4186 = vmul.f32 %v4098, %v4170
    %v4187 = vmul.f32 %v4036, %v4099
    %v4188 = vmul.f32 %v4038, %v4100
    %v4189 = vmul.f32 %v4040, %v4101
    %v4190 = vmul.f32 %v4042, %v4102
    %v4191 = vmul.f32 %v4044, %v4103
    %v4192 = vmul.f32 %v4046, %v4104
    %v4193 = vmul.f32 %v4048, %v4105
    %v4194 = vmul.f32 %v4050, %v4106
    %v4195 = vadd.f32 %v4179, %v4187
    %v4196 = vadd.f32 %v4180, %v4188
    %v4197 = vadd.f32 %v4181, %v4189
    %v4198 = vadd.f32 %v4182, %v4190
    %v4199 = vadd.f32 %v4183, %v4191
    %v4200 = vadd.f32 %v4184, %v4192
    %v4201 = vadd.f32 %v4185, %v4193
    %v4202 = vadd.f32 %v4186, %v4194
    %v4203 = vtanh.pop %v4195
    %v4204 = vtanh.pop %v4196
    %v4205 = vtanh.pop %v4197
    %v4206 = vtanh.pop %v4198
    %v4207 = vtanh.pop %v4199
    %v4208 = vtanh.pop %v4200
    %v4209 = vtanh.pop %v4201
    %v4210 = vtanh.pop %v4202
    %v4211 = vmul.f32 %v4140, %v4203
    %v4212 = vmul.f32 %v4142, %v4204
    %v4213 = vmul.f32 %v4144, %v4205
    %v4214 = vmul.f32 %v4146, %v4206
    %v4215 = vmul.f32 %v4148, %v4207
    %v4216 = vmul.f32 %v4150, %v4208
    %v4217 = vmul.f32 %v4152, %v4209
    %v4218 = vmul.f32 %v4154, %v4210
    %v4227 = vrot.slane %v4212, 7
    %v4228 = vsel %vm2737, %v4227, %v4211
    %v4229 = vrot.slane %v4213, 6
    %v4230 = vsel %vm2740, %v4229, %v4228
    %v4231 = vrot.slane %v4214, 5
    %v4232 = vsel %vm2743, %v4231, %v4230
    %v4233 = vrot.slane %v4215, 4
    %v4234 = vsel %vm2746, %v4233, %v4232
    %v4235 = vrot.slane %v4216, 3
    %v4236 = vsel %vm2749, %v4235, %v4234
    %v4237 = vrot.slane %v4217, 2
    %v4238 = vrot.slane %v4218, 1
    %v4239 = vsel %vm2731, %v4238, %v4237
    %v4243 = vrot.slane %v3784, 6
    %v4245 = vpack.c.bf16 %v4239, %v4236
    %v4246 = vpack.c.bf16 %v4243, %v4243
    %v4249 = vrot.slane %v4245, 1
    %v4250 = vrot.slane %v4246, 1
    %4253 = vmatprep.subr.bf16.mxu0 %v2996
    %4254 = vmatpush1.bf16.msra.mxu0 %v2995
    %4255 = vmatprep.subr.bf16.mxu0 %v2992
    %4256 = vmatpush1.bf16.msra.mxu0 %v2991
    %4257 = vmatprep.subr.bf16.mxu0 %v2988
    %4258 = vmatpush1.bf16.msra.mxu0 %v2987
    %4259 = vmatprep.subr.bf16.mxu0 %v2984
    %4260 = vmatpush1.bf16.msra.mxu0 %v2983
    %4261 = vmatprep.subr.bf16.mxu0 %v2980
    %4262 = vmatpush1.bf16.msra.mxu0 %v2979
    %4263 = vmatprep.subr.bf16.mxu0 %v2976
    %4264 = vmatpush1.bf16.msra.mxu0 %v2975
    %4265 = vmatprep.subr.bf16.mxu0 %v2972
    %4266 = vmatpush1.bf16.msra.mxu0 %v2971
    %4267 = vmatprep.subr.bf16.mxu0 %v2968
    %4268 = vmatpush1.bf16.msra.mxu0 %v2967
    %4269 = vmatprep.subr.bf16.mxu0 %v3028
    %4270 = vmatpush2.bf16.msra.mxu0 %v3027
    %4271 = vmatprep.subr.bf16.mxu0 %v3024
    %4272 = vmatpush2.bf16.msra.mxu0 %v3023
    %4273 = vmatprep.subr.bf16.mxu0 %v3020
    %4274 = vmatpush2.bf16.msra.mxu0 %v3019
    %4275 = vmatprep.subr.bf16.mxu0 %v3016
    %4276 = vmatpush2.bf16.msra.mxu0 %v3015
    %4277 = vmatprep.subr.bf16.mxu0 %v3012
    %4278 = vmatpush2.bf16.msra.mxu0 %v3011
    %4279 = vmatprep.subr.bf16.mxu0 %v3008
    %4280 = vmatpush2.bf16.msra.mxu0 %v3007
    %4281 = vmatprep.subr.bf16.mxu0 %v3004
    %4282 = vmatpush2.bf16.msra.mxu0 %v3003
    %4283 = vmatprep.subr.bf16.mxu0 %v3000
    %4284 = vmatpush2.bf16.msra.mxu0 %v2999
    %4285 = vmatprep.mubr.bf16.mxu0 %v4250
    %4286 = vmatmul.mubr.bf16.gmra.mxu0 %v4249
    %v4287 = vpop.f32.mrf.mxu0
    %v4288 = vadd.f32 %v2758, %v4287
    %v4289 = vpop.f32.mrf.mxu0
    %v4290 = vadd.f32 %v2762, %v4289
    %v4291 = vpop.f32.mrf.mxu0
    %v4292 = vpop.f32.mrf.mxu0
    %4293 = vdwg.mxu0
    %4294 = vmatprep.subr.bf16.mxu0 %v2998
    %4295 = vmatpush1.bf16.msra.mxu0 %v2997
    %4296 = vmatprep.subr.bf16.mxu0 %v2994
    %4297 = vmatpush1.bf16.msra.mxu0 %v2993
    %4298 = vmatprep.subr.bf16.mxu0 %v2990
    %4299 = vmatpush1.bf16.msra.mxu0 %v2989
    %4300 = vmatprep.subr.bf16.mxu0 %v2986
    %4301 = vmatpush1.bf16.msra.mxu0 %v2985
    %4302 = vmatprep.subr.bf16.mxu0 %v2982
    %4303 = vmatpush1.bf16.msra.mxu0 %v2981
    %4304 = vmatprep.subr.bf16.mxu0 %v2978
    %4305 = vmatpush1.bf16.msra.mxu0 %v2977
    %4306 = vmatprep.subr.bf16.mxu0 %v2974
    %4307 = vmatpush1.bf16.msra.mxu0 %v2973
    %4308 = vmatprep.subr.bf16.mxu0 %v2970
    %4309 = vmatpush1.bf16.msra.mxu0 %v2969
    %4310 = vmatprep.subr.bf16.mxu0 %v3030
    %4311 = vmatpush2.bf16.msra.mxu0 %v3029
    %4312 = vmatprep.subr.bf16.mxu0 %v3026
    %4313 = vmatpush2.bf16.msra.mxu0 %v3025
    %4314 = vmatprep.subr.bf16.mxu0 %v3022
    %4315 = vmatpush2.bf16.msra.mxu0 %v3021
    %4316 = vmatprep.subr.bf16.mxu0 %v3018
    %4317 = vmatpush2.bf16.msra.mxu0 %v3017
    %4318 = vmatprep.subr.bf16.mxu0 %v3014
    %4319 = vmatpush2.bf16.msra.mxu0 %v3013
    %4320 = vmatprep.subr.bf16.mxu0 %v3010
    %4321 = vmatpush2.bf16.msra.mxu0 %v3009
    %4322 = vmatprep.subr.bf16.mxu0 %v3006
    %4323 = vmatpush2.bf16.msra.mxu0 %v3005
    %4324 = vmatprep.subr.bf16.mxu0 %v3002
    %4325 = vmatpush2.bf16.msra.mxu0 %v3001
    %4326 = vmatprep.mubr.bf16.mxu0 %v4250
    %4327 = vmatmul.mubr.bf16.gmra.mxu0 %v4249
    %v4328 = vpop.f32.mrf.mxu0
    %v4329 = vadd.f32 %v2766, %v4328
    %v4330 = vpop.f32.mrf.mxu0
    %v4331 = vadd.f32 %v2770, %v4330
    %v4332 = vpop.f32.mrf.mxu0
    %v4333 = vpop.f32.mrf.mxu0
    %4334 = vdwg.mxu0
    %v4335 = vxor.u32 %v4288, 2147483648
    %v4336 = vmul.f32 %v4335, 1.442695
    %v4337 = vpow.pop %v4336
    %v4338 = vadd.f32 %v4337, 1.0
    %v4339 = vrcp.pop %v4338
    %v4340 = vmul.f32 1.0, %v4339
    %v4341 = vxor.u32 %v4290, 2147483648
    %v4342 = vmul.f32 %v4341, 1.442695
    %v4343 = vpow.pop %v4342
    %v4344 = vadd.f32 %v4343, 1.0
    %v4345 = vrcp.pop %v4344
    %v4346 = vmul.f32 1.0, %v4345
    %v4347 = vtanh.pop %v4329
    %v4348 = vxor.u32 %v4331, 2147483648
    %v4349 = vmul.f32 %v4348, 1.442695
    %v4350 = vpow.pop %v4349
    %v4351 = vadd.f32 %v4350, 1.0
    %v4352 = vrcp.pop %v4351
    %v4353 = vmul.f32 1.0, %v4352
    %v4354 = vmul.f32 %v4346, %v3782
    %v4355 = vmul.f32 %v4340, %v4347
    %v4356 = vadd.f32 %v4354, %v4355
    %v4357 = vtanh.pop %v4356
    %v4358 = vmul.f32 %v4353, %v4357
    %v4359 = vpack.c.bf16 %v4211, %v4211
    %v4360 = vpack.c.bf16 %v4212, %v4212
    %v4361 = vpack.c.bf16 %v4213, %v4213
    %v4362 = vpack.c.bf16 %v4214, %v4214
    %v4363 = vpack.c.bf16 %v4215, %v4215
    %v4364 = vpack.c.bf16 %v4216, %v4216
    %v4365 = vpack.c.bf16 %v4217, %v4217
    %v4366 = vpack.c.bf16 %v4218, %v4218
    %v4375 = vunpack.c.l.b16 %v4359
    %v4376 = vunpack.c.l.b16 %v4360
    %v4377 = vunpack.c.l.b16 %v4361
    %v4378 = vunpack.c.l.b16 %v4362
    %v4379 = vunpack.c.l.b16 %v4363
    %v4380 = vunpack.c.l.b16 %v4364
    %v4381 = vunpack.c.l.b16 %v4365
    %v4382 = vunpack.c.l.b16 %v4366
    %v4383 = vrot.slane %v4375, 2
    %v4384 = vrot.slane %v4376, 1
    %v4385 = vsel %vm2731, %v4384, %v4383
    %v4386 = vsel %vm2734, %v4377, %v4385
    %v4387 = vrot.slane %v4378, 7
    %v4388 = vsel %vm2737, %v4387, %v4386
    %v4389 = vrot.slane %v4379, 6
    %v4390 = vsel %vm2740, %v4389, %v4388
    %v4391 = vrot.slane %v4380, 5
    %v4392 = vsel %vm2743, %v4391, %v4390
    %v4393 = vrot.slane %v4381, 4
    %v4394 = vsel %vm2746, %v4393, %v4392
    %v4395 = vrot.slane %v4382, 3
    %v4396 = vsel %vm2749, %v4395, %v4394
    %v4397 = vpack.c.b16 %v4396, %v4396
    %4399 = vmatprep.subr.bf16.mxu0 %v2317
    %4400 = vmatpush1.bf16.msra.mxu0 %v2316
    %4401 = vmatprep.subr.bf16.mxu0 %v2313
    %4402 = vmatpush1.bf16.msra.mxu0 %v2312
    %4403 = vmatprep.subr.bf16.mxu0 %v2309
    %4404 = vmatpush1.bf16.msra.mxu0 %v2308
    %4405 = vmatprep.subr.bf16.mxu0 %v2305
    %4406 = vmatpush1.bf16.msra.mxu0 %v2304
    %4407 = vmatprep.subr.bf16.mxu0 %v2301
    %4408 = vmatpush1.bf16.msra.mxu0 %v2300
    %4409 = vmatprep.subr.bf16.mxu0 %v2297
    %4410 = vmatpush1.bf16.msra.mxu0 %v2296
    %4411 = vmatprep.subr.bf16.mxu0 %v2293
    %4412 = vmatpush1.bf16.msra.mxu0 %v2292
    %4413 = vmatprep.subr.bf16.mxu0 %v2289
    %4414 = vmatpush1.bf16.msra.mxu0 %v2288
    %4415 = vmatprep.subr.bf16.mxu0 0
    %4416 = vmatpush2.bf16.msra.mxu0 0
    %4417 = vmatprep.subr.bf16.mxu0 0
    %4418 = vmatpush2.bf16.msra.mxu0 0
    %4419 = vmatprep.subr.bf16.mxu0 0
    %4420 = vmatpush2.bf16.msra.mxu0 0
    %4421 = vmatprep.subr.bf16.mxu0 0
    %4422 = vmatpush2.bf16.msra.mxu0 0
    %4423 = vmatprep.subr.bf16.mxu0 0
    %4424 = vmatpush2.bf16.msra.mxu0 0
    %4425 = vmatprep.subr.bf16.mxu0 0
    %4426 = vmatpush2.bf16.msra.mxu0 0
    %4427 = vmatprep.subr.bf16.mxu0 0
    %4428 = vmatpush2.bf16.msra.mxu0 0
    %4429 = vmatprep.subr.bf16.mxu0 0
    %4430 = vmatpush2.bf16.msra.mxu0 0
    %4431 = vmatprep.mubr.bf16.mxu0 0
    %4432 = vmatmul.mubr.bf16.gmra.mxu0 %v4397
    %v4433 = vpop.f32.mrf.mxu0
    %v4434 = vadd.f32 0.0, %v4433
    %v4435 = vpop.f32.mrf.mxu0
    %v4436 = vadd.f32 0.0, %v4435
    %v4437 = vpop.f32.mrf.mxu0
    %v4438 = vpop.f32.mrf.mxu0
    %4439 = vdwg.mxu0
    %4440 = vmatprep.subr.bf16.mxu0 %v2319
    %4441 = vmatpush1.bf16.msra.mxu0 %v2318
    %4442 = vmatprep.subr.bf16.mxu0 %v2315
    %4443 = vmatpush1.bf16.msra.mxu0 %v2314
    %4444 = vmatprep.subr.bf16.mxu0 %v2311
    %4445 = vmatpush1.bf16.msra.mxu0 %v2310
    %4446 = vmatprep.subr.bf16.mxu0 %v2307
    %4447 = vmatpush1.bf16.msra.mxu0 %v2306
    %4448 = vmatprep.subr.bf16.mxu0 %v2303
    %4449 = vmatpush1.bf16.msra.mxu0 %v2302
    %4450 = vmatprep.subr.bf16.mxu0 %v2299
    %4451 = vmatpush1.bf16.msra.mxu0 %v2298
    %4452 = vmatprep.subr.bf16.mxu0 %v2295
    %4453 = vmatpush1.bf16.msra.mxu0 %v2294
    %4454 = vmatprep.subr.bf16.mxu0 %v2291
    %4455 = vmatpush1.bf16.msra.mxu0 %v2290
    %4456 = vmatprep.subr.bf16.mxu0 0
    %4457 = vmatpush2.bf16.msra.mxu0 0
    %4458 = vmatprep.subr.bf16.mxu0 0
    %4459 = vmatpush2.bf16.msra.mxu0 0
    %4460 = vmatprep.subr.bf16.mxu0 0
    %4461 = vmatpush2.bf16.msra.mxu0 0
    %4462 = vmatprep.subr.bf16.mxu0 0
    %4463 = vmatpush2.bf16.msra.mxu0 0
    %4464 = vmatprep.subr.bf16.mxu0 0
    %4465 = vmatpush2.bf16.msra.mxu0 0
    %4466 = vmatprep.subr.bf16.mxu0 0
    %4467 = vmatpush2.bf16.msra.mxu0 0
    %4468 = vmatprep.subr.bf16.mxu0 0
    %4469 = vmatpush2.bf16.msra.mxu0 0
    %4470 = vmatprep.subr.bf16.mxu0 0
    %4471 = vmatpush2.bf16.msra.mxu0 0
    %4472 = vmatprep.mubr.bf16.mxu0 0
    %4473 = vmatmul.mubr.bf16.gmra.mxu0 %v4397
    %v4474 = vpop.f32.mrf.mxu0
    %v4475 = vadd.f32 0.0, %v4474
    %v4476 = vpop.f32.mrf.mxu0
    %v4477 = vadd.f32 0.0, %v4476
    %v4478 = vpop.f32.mrf.mxu0
    %v4479 = vpop.f32.mrf.mxu0
    %4480 = vdwg.mxu0
    %v4485 = vrot.slane %v4434, 5
    %v4486 = vrot.slane %v4436, 5
    %v4487 = vrot.slane %v4475, 5
    %v4488 = vrot.slane %v4477, 5
    %v4489 = vrot.slane %v4434, 6
    %v4490 = vrot.slane %v4436, 6
    %v4491 = vrot.slane %v4475, 6
    %v4492 = vrot.slane %v4477, 6
    %v4493 = vrot.slane %v4434, 7
    %v4494 = vrot.slane %v4436, 7
    %v4495 = vrot.slane %v4475, 7
    %v4496 = vrot.slane %v4477, 7
    %v4497 = vrot.slane %v4434, 1
    %v4498 = vrot.slane %v4436, 1
    %v4499 = vrot.slane %v4475, 1
    %v4500 = vrot.slane %v4477, 1
    %v4501 = vrot.slane %v4434, 2
    %v4502 = vrot.slane %v4436, 2
    %v4503 = vrot.slane %v4475, 2
    %v4504 = vrot.slane %v4477, 2
    %v4505 = vrot.slane %v4434, 3
    %v4506 = vrot.slane %v4436, 3
    %v4507 = vrot.slane %v4475, 3
    %v4508 = vrot.slane %v4477, 3
    %v4509 = vrot.slane %v4434, 4
    %v4510 = vrot.slane %v4436, 4
    %v4511 = vrot.slane %v4475, 4
    %v4512 = vrot.slane %v4477, 4
    %v4545 = vadd.f32 %v1830, %v4485
    %v4546 = vadd.f32 %v1832, %v4486
    %v4547 = vadd.f32 %v2049, %v4487
    %v4548 = vadd.f32 %v2051, %v4488
    %v4549 = vadd.f32 %v1834, %v4489
    %v4550 = vadd.f32 %v1836, %v4490
    %v4551 = vadd.f32 %v2053, %v4491
    %v4552 = vadd.f32 %v2055, %v4492
    %v4553 = vadd.f32 %v1840, %v4493
    %v4554 = vadd.f32 %v1842, %v4494
    %v4555 = vadd.f32 %v2059, %v4495
    %v4556 = vadd.f32 %v2061, %v4496
    %v4557 = vadd.f32 %v1844, %v4434
    %v4558 = vadd.f32 %v1846, %v4436
    %v4559 = vadd.f32 %v2063, %v4475
    %v4560 = vadd.f32 %v2065, %v4477
    %v4561 = vadd.f32 %v1850, %v4497
    %v4562 = vadd.f32 %v1852, %v4498
    %v4563 = vadd.f32 %v2069, %v4499
    %v4564 = vadd.f32 %v2071, %v4500
    %v4565 = vadd.f32 %v1854, %v4501
    %v4566 = vadd.f32 %v1856, %v4502
    %v4567 = vadd.f32 %v2073, %v4503
    %v4568 = vadd.f32 %v2075, %v4504
    %v4569 = vadd.f32 %v1860, %v4505
    %v4570 = vadd.f32 %v1862, %v4506
    %v4571 = vadd.f32 %v2079, %v4507
    %v4572 = vadd.f32 %v2081, %v4508
    %v4573 = vadd.f32 %v1864, %v4509
    %v4574 = vadd.f32 %v1866, %v4510
    %v4575 = vadd.f32 %v2083, %v4511
    %v4576 = vadd.f32 %v2085, %v4512
    %v4577 = vxor.u32 %v4545, 2147483648
    %v4578 = vxor.u32 %v4549, 2147483648
    %v4579 = vxor.u32 %v4553, 2147483648
    %v4580 = vxor.u32 %v4557, 2147483648
    %v4581 = vxor.u32 %v4561, 2147483648
    %v4582 = vxor.u32 %v4565, 2147483648
    %v4583 = vxor.u32 %v4569, 2147483648
    %v4584 = vxor.u32 %v4573, 2147483648
    %v4585 = vmul.f32 %v4577, 1.442695
    %v4586 = vpow.pop %v4585
    %v4587 = vmul.f32 %v4578, 1.442695
    %v4588 = vpow.pop %v4587
    %v4589 = vmul.f32 %v4579, 1.442695
    %v4590 = vpow.pop %v4589
    %v4591 = vmul.f32 %v4580, 1.442695
    %v4592 = vpow.pop %v4591
    %v4593 = vmul.f32 %v4581, 1.442695
    %v4594 = vpow.pop %v4593
    %v4595 = vmul.f32 %v4582, 1.442695
    %v4596 = vpow.pop %v4595
    %v4597 = vmul.f32 %v4583, 1.442695
    %v4598 = vpow.pop %v4597
    %v4599 = vmul.f32 %v4584, 1.442695
    %v4600 = vpow.pop %v4599
    %v4601 = vadd.f32 %v4586, 1.0
    %v4602 = vadd.f32 %v4588, 1.0
    %v4603 = vadd.f32 %v4590, 1.0
    %v4604 = vadd.f32 %v4592, 1.0
    %v4605 = vadd.f32 %v4594, 1.0
    %v4606 = vadd.f32 %v4596, 1.0
    %v4607 = vadd.f32 %v4598, 1.0
    %v4608 = vadd.f32 %v4600, 1.0
    %v4609 = vrcp.pop %v4601
    %v4610 = vmul.f32 1.0, %v4609
    %v4611 = vrcp.pop %v4602
    %v4612 = vmul.f32 1.0, %v4611
    %v4613 = vrcp.pop %v4603
    %v4614 = vmul.f32 1.0, %v4613
    %v4615 = vrcp.pop %v4604
    %v4616 = vmul.f32 1.0, %v4615
    %v4617 = vrcp.pop %v4605
    %v4618 = vmul.f32 1.0, %v4617
    %v4619 = vrcp.pop %v4606
    %v4620 = vmul.f32 1.0, %v4619
    %v4621 = vrcp.pop %v4607
    %v4622 = vmul.f32 1.0, %v4621
    %v4623 = vrcp.pop %v4608
    %v4624 = vmul.f32 1.0, %v4623
    %v4625 = vxor.u32 %v4546, 2147483648
    %v4626 = vxor.u32 %v4550, 2147483648
    %v4627 = vxor.u32 %v4554, 2147483648
    %v4628 = vxor.u32 %v4558, 2147483648
    %v4629 = vxor.u32 %v4562, 2147483648
    %v4630 = vxor.u32 %v4566, 2147483648
    %v4631 = vxor.u32 %v4570, 2147483648
    %v4632 = vxor.u32 %v4574, 2147483648
    %v4633 = vmul.f32 %v4625, 1.442695
    %v4634 = vpow.pop %v4633
    %v4635 = vmul.f32 %v4626, 1.442695
    %v4636 = vpow.pop %v4635
    %v4637 = vmul.f32 %v4627, 1.442695
    %v4638 = vpow.pop %v4637
    %v4639 = vmul.f32 %v4628, 1.442695
    %v4640 = vpow.pop %v4639
    %v4641 = vmul.f32 %v4629, 1.442695
    %v4642 = vpow.pop %v4641
    %v4643 = vmul.f32 %v4630, 1.442695
    %v4644 = vpow.pop %v4643
    %v4645 = vmul.f32 %v4631, 1.442695
    %v4646 = vpow.pop %v4645
    %v4647 = vmul.f32 %v4632, 1.442695
    %v4648 = vpow.pop %v4647
    %v4649 = vadd.f32 %v4634, 1.0
    %v4650 = vadd.f32 %v4636, 1.0
    %v4651 = vadd.f32 %v4638, 1.0
    %v4652 = vadd.f32 %v4640, 1.0
    %v4653 = vadd.f32 %v4642, 1.0
    %v4654 = vadd.f32 %v4644, 1.0
    %v4655 = vadd.f32 %v4646, 1.0
    %v4656 = vadd.f32 %v4648, 1.0
    %v4657 = vrcp.pop %v4649
    %v4658 = vmul.f32 1.0, %v4657
    %v4659 = vrcp.pop %v4650
    %v4660 = vmul.f32 1.0, %v4659
    %v4661 = vrcp.pop %v4651
    %v4662 = vmul.f32 1.0, %v4661
    %v4663 = vrcp.pop %v4652
    %v4664 = vmul.f32 1.0, %v4663
    %v4665 = vrcp.pop %v4653
    %v4666 = vmul.f32 1.0, %v4665
    %v4667 = vrcp.pop %v4654
    %v4668 = vmul.f32 1.0, %v4667
    %v4669 = vrcp.pop %v4655
    %v4670 = vmul.f32 1.0, %v4669
    %v4671 = vrcp.pop %v4656
    %v4672 = vmul.f32 1.0, %v4671
    %v4673 = vtanh.pop %v4547
    %v4674 = vtanh.pop %v4551
    %v4675 = vtanh.pop %v4555
    %v4676 = vtanh.pop %v4559
    %v4677 = vtanh.pop %v4563
    %v4678 = vtanh.pop %v4567
    %v4679 = vtanh.pop %v4571
    %v4680 = vtanh.pop %v4575
    %v4681 = vxor.u32 %v4548, 2147483648
    %v4682 = vxor.u32 %v4552, 2147483648
    %v4683 = vxor.u32 %v4556, 2147483648
    %v4684 = vxor.u32 %v4560, 2147483648
    %v4685 = vxor.u32 %v4564, 2147483648
    %v4686 = vxor.u32 %v4568, 2147483648
    %v4687 = vxor.u32 %v4572, 2147483648
    %v4688 = vxor.u32 %v4576, 2147483648
    %v4689 = vmul.f32 %v4681, 1.442695
    %v4690 = vpow.pop %v4689
    %v4691 = vmul.f32 %v4682, 1.442695
    %v4692 = vpow.pop %v4691
    %v4693 = vmul.f32 %v4683, 1.442695
    %v4694 = vpow.pop %v4693
    %v4695 = vmul.f32 %v4684, 1.442695
    %v4696 = vpow.pop %v4695
    %v4697 = vmul.f32 %v4685, 1.442695
    %v4698 = vpow.pop %v4697
    %v4699 = vmul.f32 %v4686, 1.442695
    %v4700 = vpow.pop %v4699
    %v4701 = vmul.f32 %v4687, 1.442695
    %v4702 = vpow.pop %v4701
    %v4703 = vmul.f32 %v4688, 1.442695
    %v4704 = vpow.pop %v4703
    %v4705 = vadd.f32 %v4690, 1.0
    %v4706 = vadd.f32 %v4692, 1.0
    %v4707 = vadd.f32 %v4694, 1.0
    %v4708 = vadd.f32 %v4696, 1.0
    %v4709 = vadd.f32 %v4698, 1.0
    %v4710 = vadd.f32 %v4700, 1.0
    %v4711 = vadd.f32 %v4702, 1.0
    %v4712 = vadd.f32 %v4704, 1.0
    %v4713 = vrcp.pop %v4705
    %v4714 = vmul.f32 1.0, %v4713
    %v4715 = vrcp.pop %v4706
    %v4716 = vmul.f32 1.0, %v4715
    %v4717 = vrcp.pop %v4707
    %v4718 = vmul.f32 1.0, %v4717
    %v4719 = vrcp.pop %v4708
    %v4720 = vmul.f32 1.0, %v4719
    %v4721 = vrcp.pop %v4709
    %v4722 = vmul.f32 1.0, %v4721
    %v4723 = vrcp.pop %v4710
    %v4724 = vmul.f32 1.0, %v4723
    %v4725 = vrcp.pop %v4711
    %v4726 = vmul.f32 1.0, %v4725
    %v4727 = vrcp.pop %v4712
    %v4728 = vmul.f32 1.0, %v4727
    %v4737 = vrot.slane %v4195, 7
    %v4738 = vrot.slane %v4196, 7
    %v4739 = vrot.slane %v4197, 7
    %v4740 = vrot.slane %v4198, 7
    %v4741 = vrot.slane %v4199, 7
    %v4742 = vrot.slane %v4200, 7
    %v4743 = vrot.slane %v4201, 7
    %v4744 = vrot.slane %v4202, 7
    %v4753 = vmul.f32 %v4658, %v4737
    %v4754 = vmul.f32 %v4660, %v4738
    %v4755 = vmul.f32 %v4662, %v4739
    %v4756 = vmul.f32 %v4664, %v4740
    %v4757 = vmul.f32 %v4666, %v4741
    %v4758 = vmul.f32 %v4668, %v4742
    %v4759 = vmul.f32 %v4670, %v4743
    %v4760 = vmul.f32 %v4672, %v4744
    %v4761 = vmul.f32 %v4610, %v4673
    %v4762 = vmul.f32 %v4612, %v4674
    %v4763 = vmul.f32 %v4614, %v4675
    %v4764 = vmul.f32 %v4616, %v4676
    %v4765 = vmul.f32 %v4618, %v4677
    %v4766 = vmul.f32 %v4620, %v4678
    %v4767 = vmul.f32 %v4622, %v4679
    %v4768 = vmul.f32 %v4624, %v4680
    %v4769 = vadd.f32 %v4753, %v4761
    %v4770 = vadd.f32 %v4754, %v4762
    %v4771 = vadd.f32 %v4755, %v4763
    %v4772 = vadd.f32 %v4756, %v4764
    %v4773 = vadd.f32 %v4757, %v4765
    %v4774 = vadd.f32 %v4758, %v4766
    %v4775 = vadd.f32 %v4759, %v4767
    %v4776 = vadd.f32 %v4760, %v4768
    %v4777 = vtanh.pop %v4769
    %v4778 = vtanh.pop %v4770
    %v4779 = vtanh.pop %v4771
    %v4780 = vtanh.pop %v4772
    %v4781 = vtanh.pop %v4773
    %v4782 = vtanh.pop %v4774
    %v4783 = vtanh.pop %v4775
    %v4784 = vtanh.pop %v4776
    %v4785 = vmul.f32 %v4714, %v4777
    %v4786 = vmul.f32 %v4716, %v4778
    %v4787 = vmul.f32 %v4718, %v4779
    %v4788 = vmul.f32 %v4720, %v4780
    %v4789 = vmul.f32 %v4722, %v4781
    %v4790 = vmul.f32 %v4724, %v4782
    %v4791 = vmul.f32 %v4726, %v4783
    %v4792 = vmul.f32 %v4728, %v4784
    %v4801 = vrot.slane %v4786, 7
    %v4802 = vsel %vm2740, %v4801, %v4785
    %v4803 = vrot.slane %v4787, 6
    %v4804 = vsel %vm2743, %v4803, %v4802
    %v4805 = vrot.slane %v4788, 5
    %v4806 = vsel %vm2746, %v4805, %v4804
    %v4807 = vrot.slane %v4789, 4
    %v4808 = vsel %vm2749, %v4807, %v4806
    %v4809 = vrot.slane %v4790, 3
    %v4810 = vrot.slane %v4791, 2
    %v4811 = vsel %vm2731, %v4810, %v4809
    %v4812 = vrot.slane %v4792, 1
    %v4813 = vsel %vm2734, %v4812, %v4811
    %v4817 = vrot.slane %v4358, 5
    %v4819 = vpack.c.bf16 %v4813, %v4808
    %v4820 = vpack.c.bf16 %v4817, %v4817
    %v4822 = vshrl.u32 %v4819, 16
    %v4824 = vrot.slane %v4822, 1
    %v4825 = vshll.u32 %v4819, 16
    %v4827 = vrot.slane %v4825, 2
    %v4828 = vor.u32 %v4824, %v4827
    %v4830 = vshrl.u32 %v4820, 16
    %v4832 = vrot.slane %v4830, 1
    %v4833 = vshll.u32 %v4820, 16
    %v4835 = vrot.slane %v4833, 2
    %v4836 = vor.u32 %v4832, %v4835
    %4839 = vmatprep.subr.bf16.mxu0 %v2996
    %4840 = vmatpush1.bf16.msra.mxu0 %v2995
    %4841 = vmatprep.subr.bf16.mxu0 %v2992
    %4842 = vmatpush1.bf16.msra.mxu0 %v2991
    %4843 = vmatprep.subr.bf16.mxu0 %v2988
    %4844 = vmatpush1.bf16.msra.mxu0 %v2987
    %4845 = vmatprep.subr.bf16.mxu0 %v2984
    %4846 = vmatpush1.bf16.msra.mxu0 %v2983
    %4847 = vmatprep.subr.bf16.mxu0 %v2980
    %4848 = vmatpush1.bf16.msra.mxu0 %v2979
    %4849 = vmatprep.subr.bf16.mxu0 %v2976
    %4850 = vmatpush1.bf16.msra.mxu0 %v2975
    %4851 = vmatprep.subr.bf16.mxu0 %v2972
    %4852 = vmatpush1.bf16.msra.mxu0 %v2971
    %4853 = vmatprep.subr.bf16.mxu0 %v2968
    %4854 = vmatpush1.bf16.msra.mxu0 %v2967
    %4855 = vmatprep.subr.bf16.mxu0 %v3028
    %4856 = vmatpush2.bf16.msra.mxu0 %v3027
    %4857 = vmatprep.subr.bf16.mxu0 %v3024
    %4858 = vmatpush2.bf16.msra.mxu0 %v3023
    %4859 = vmatprep.subr.bf16.mxu0 %v3020
    %4860 = vmatpush2.bf16.msra.mxu0 %v3019
    %4861 = vmatprep.subr.bf16.mxu0 %v3016
    %4862 = vmatpush2.bf16.msra.mxu0 %v3015
    %4863 = vmatprep.subr.bf16.mxu0 %v3012
    %4864 = vmatpush2.bf16.msra.mxu0 %v3011
    %4865 = vmatprep.subr.bf16.mxu0 %v3008
    %4866 = vmatpush2.bf16.msra.mxu0 %v3007
    %4867 = vmatprep.subr.bf16.mxu0 %v3004
    %4868 = vmatpush2.bf16.msra.mxu0 %v3003
    %4869 = vmatprep.subr.bf16.mxu0 %v3000
    %4870 = vmatpush2.bf16.msra.mxu0 %v2999
    %4871 = vmatprep.mubr.bf16.mxu0 %v4836
    %4872 = vmatmul.mubr.bf16.gmra.mxu0 %v4828
    %v4873 = vpop.f32.mrf.mxu0
    %v4874 = vadd.f32 %v2758, %v4873
    %v4875 = vpop.f32.mrf.mxu0
    %v4876 = vadd.f32 %v2762, %v4875
    %v4877 = vpop.f32.mrf.mxu0
    %v4878 = vpop.f32.mrf.mxu0
    %4879 = vdwg.mxu0
    %4880 = vmatprep.subr.bf16.mxu0 %v2998
    %4881 = vmatpush1.bf16.msra.mxu0 %v2997
    %4882 = vmatprep.subr.bf16.mxu0 %v2994
    %4883 = vmatpush1.bf16.msra.mxu0 %v2993
    %4884 = vmatprep.subr.bf16.mxu0 %v2990
    %4885 = vmatpush1.bf16.msra.mxu0 %v2989
    %4886 = vmatprep.subr.bf16.mxu0 %v2986
    %4887 = vmatpush1.bf16.msra.mxu0 %v2985
    %4888 = vmatprep.subr.bf16.mxu0 %v2982
    %4889 = vmatpush1.bf16.msra.mxu0 %v2981
    %4890 = vmatprep.subr.bf16.mxu0 %v2978
    %4891 = vmatpush1.bf16.msra.mxu0 %v2977
    %4892 = vmatprep.subr.bf16.mxu0 %v2974
    %4893 = vmatpush1.bf16.msra.mxu0 %v2973
    %4894 = vmatprep.subr.bf16.mxu0 %v2970
    %4895 = vmatpush1.bf16.msra.mxu0 %v2969
    %4896 = vmatprep.subr.bf16.mxu0 %v3030
    %4897 = vmatpush2.bf16.msra.mxu0 %v3029
    %4898 = vmatprep.subr.bf16.mxu0 %v3026
    %4899 = vmatpush2.bf16.msra.mxu0 %v3025
    %4900 = vmatprep.subr.bf16.mxu0 %v3022
    %4901 = vmatpush2.bf16.msra.mxu0 %v3021
    %4902 = vmatprep.subr.bf16.mxu0 %v3018
    %4903 = vmatpush2.bf16.msra.mxu0 %v3017
    %4904 = vmatprep.subr.bf16.mxu0 %v3014
    %4905 = vmatpush2.bf16.msra.mxu0 %v3013
    %4906 = vmatprep.subr.bf16.mxu0 %v3010
    %4907 = vmatpush2.bf16.msra.mxu0 %v3009
    %4908 = vmatprep.subr.bf16.mxu0 %v3006
    %4909 = vmatpush2.bf16.msra.mxu0 %v3005
    %4910 = vmatprep.subr.bf16.mxu0 %v3002
    %4911 = vmatpush2.bf16.msra.mxu0 %v3001
    %4912 = vmatprep.mubr.bf16.mxu0 %v4836
    %4913 = vmatmul.mubr.bf16.gmra.mxu0 %v4828
    %v4914 = vpop.f32.mrf.mxu0
    %v4915 = vadd.f32 %v2766, %v4914
    %v4916 = vpop.f32.mrf.mxu0
    %v4917 = vadd.f32 %v2770, %v4916
    %v4918 = vpop.f32.mrf.mxu0
    %v4919 = vpop.f32.mrf.mxu0
    %4920 = vdwg.mxu0
    %v4921 = vxor.u32 %v4874, 2147483648
    %v4922 = vmul.f32 %v4921, 1.442695
    %v4923 = vpow.pop %v4922
    %v4924 = vadd.f32 %v4923, 1.0
    %v4925 = vrcp.pop %v4924
    %v4926 = vmul.f32 1.0, %v4925
    %v4927 = vxor.u32 %v4876, 2147483648
    %v4928 = vmul.f32 %v4927, 1.442695
    %v4929 = vpow.pop %v4928
    %v4930 = vadd.f32 %v4929, 1.0
    %v4931 = vrcp.pop %v4930
    %v4932 = vmul.f32 1.0, %v4931
    %v4933 = vtanh.pop %v4915
    %v4934 = vxor.u32 %v4917, 2147483648
    %v4935 = vmul.f32 %v4934, 1.442695
    %v4936 = vpow.pop %v4935
    %v4937 = vadd.f32 %v4936, 1.0
    %v4938 = vrcp.pop %v4937
    %v4939 = vmul.f32 1.0, %v4938
    %v4940 = vmul.f32 %v4932, %v4356
    %v4941 = vmul.f32 %v4926, %v4933
    %v4942 = vadd.f32 %v4940, %v4941
    %v4943 = vtanh.pop %v4942
    %v4944 = vmul.f32 %v4939, %v4943
    %v4945 = vpack.c.bf16 %v4785, %v4785
    %v4946 = vpack.c.bf16 %v4786, %v4786
    %v4947 = vpack.c.bf16 %v4787, %v4787
    %v4948 = vpack.c.bf16 %v4788, %v4788
    %v4949 = vpack.c.bf16 %v4789, %v4789
    %v4950 = vpack.c.bf16 %v4790, %v4790
    %v4951 = vpack.c.bf16 %v4791, %v4791
    %v4952 = vpack.c.bf16 %v4792, %v4792
    %v4961 = vunpack.c.l.b16 %v4945
    %v4962 = vunpack.c.l.b16 %v4946
    %v4963 = vunpack.c.l.b16 %v4947
    %v4964 = vunpack.c.l.b16 %v4948
    %v4965 = vunpack.c.l.b16 %v4949
    %v4966 = vunpack.c.l.b16 %v4950
    %v4967 = vunpack.c.l.b16 %v4951
    %v4968 = vunpack.c.l.b16 %v4952
    %v4969 = vrot.slane %v4961, 3
    %v4970 = vrot.slane %v4962, 2
    %v4971 = vsel %vm2731, %v4970, %v4969
    %v4972 = vrot.slane %v4963, 1
    %v4973 = vsel %vm2734, %v4972, %v4971
    %v4974 = vsel %vm2737, %v4964, %v4973
    %v4975 = vrot.slane %v4965, 7
    %v4976 = vsel %vm2740, %v4975, %v4974
    %v4977 = vrot.slane %v4966, 6
    %v4978 = vsel %vm2743, %v4977, %v4976
    %v4979 = vrot.slane %v4967, 5
    %v4980 = vsel %vm2746, %v4979, %v4978
    %v4981 = vrot.slane %v4968, 4
    %v4982 = vsel %vm2749, %v4981, %v4980
    %v4983 = vpack.c.b16 %v4982, %v4982
    %4985 = vmatprep.subr.bf16.mxu0 %v2317
    %4986 = vmatpush1.bf16.msra.mxu0 %v2316
    %4987 = vmatprep.subr.bf16.mxu0 %v2313
    %4988 = vmatpush1.bf16.msra.mxu0 %v2312
    %4989 = vmatprep.subr.bf16.mxu0 %v2309
    %4990 = vmatpush1.bf16.msra.mxu0 %v2308
    %4991 = vmatprep.subr.bf16.mxu0 %v2305
    %4992 = vmatpush1.bf16.msra.mxu0 %v2304
    %4993 = vmatprep.subr.bf16.mxu0 %v2301
    %4994 = vmatpush1.bf16.msra.mxu0 %v2300
    %4995 = vmatprep.subr.bf16.mxu0 %v2297
    %4996 = vmatpush1.bf16.msra.mxu0 %v2296
    %4997 = vmatprep.subr.bf16.mxu0 %v2293
    %4998 = vmatpush1.bf16.msra.mxu0 %v2292
    %4999 = vmatprep.subr.bf16.mxu0 %v2289
    %5000 = vmatpush1.bf16.msra.mxu0 %v2288
    %5001 = vmatprep.subr.bf16.mxu0 0
    %5002 = vmatpush2.bf16.msra.mxu0 0
    %5003 = vmatprep.subr.bf16.mxu0 0
    %5004 = vmatpush2.bf16.msra.mxu0 0
    %5005 = vmatprep.subr.bf16.mxu0 0
    %5006 = vmatpush2.bf16.msra.mxu0 0
    %5007 = vmatprep.subr.bf16.mxu0 0
    %5008 = vmatpush2.bf16.msra.mxu0 0
    %5009 = vmatprep.subr.bf16.mxu0 0
    %5010 = vmatpush2.bf16.msra.mxu0 0
    %5011 = vmatprep.subr.bf16.mxu0 0
    %5012 = vmatpush2.bf16.msra.mxu0 0
    %5013 = vmatprep.subr.bf16.mxu0 0
    %5014 = vmatpush2.bf16.msra.mxu0 0
    %5015 = vmatprep.subr.bf16.mxu0 0
    %5016 = vmatpush2.bf16.msra.mxu0 0
    %5017 = vmatprep.mubr.bf16.mxu0 0
    %5018 = vmatmul.mubr.bf16.gmra.mxu0 %v4983
    %v5019 = vpop.f32.mrf.mxu0
    %v5020 = vadd.f32 0.0, %v5019
    %v5021 = vpop.f32.mrf.mxu0
    %v5022 = vadd.f32 0.0, %v5021
    %v5023 = vpop.f32.mrf.mxu0
    %v5024 = vpop.f32.mrf.mxu0
    %5025 = vdwg.mxu0
    %5026 = vmatprep.subr.bf16.mxu0 %v2319
    %5027 = vmatpush1.bf16.msra.mxu0 %v2318
    %5028 = vmatprep.subr.bf16.mxu0 %v2315
    %5029 = vmatpush1.bf16.msra.mxu0 %v2314
    %5030 = vmatprep.subr.bf16.mxu0 %v2311
    %5031 = vmatpush1.bf16.msra.mxu0 %v2310
    %5032 = vmatprep.subr.bf16.mxu0 %v2307
    %5033 = vmatpush1.bf16.msra.mxu0 %v2306
    %5034 = vmatprep.subr.bf16.mxu0 %v2303
    %5035 = vmatpush1.bf16.msra.mxu0 %v2302
    %5036 = vmatprep.subr.bf16.mxu0 %v2299
    %5037 = vmatpush1.bf16.msra.mxu0 %v2298
    %5038 = vmatprep.subr.bf16.mxu0 %v2295
    %5039 = vmatpush1.bf16.msra.mxu0 %v2294
    %5040 = vmatprep.subr.bf16.mxu0 %v2291
    %5041 = vmatpush1.bf16.msra.mxu0 %v2290
    %5042 = vmatprep.subr.bf16.mxu0 0
    %5043 = vmatpush2.bf16.msra.mxu0 0
    %5044 = vmatprep.subr.bf16.mxu0 0
    %5045 = vmatpush2.bf16.msra.mxu0 0
    %5046 = vmatprep.subr.bf16.mxu0 0
    %5047 = vmatpush2.bf16.msra.mxu0 0
    %5048 = vmatprep.subr.bf16.mxu0 0
    %5049 = vmatpush2.bf16.msra.mxu0 0
    %5050 = vmatprep.subr.bf16.mxu0 0
    %5051 = vmatpush2.bf16.msra.mxu0 0
    %5052 = vmatprep.subr.bf16.mxu0 0
    %5053 = vmatpush2.bf16.msra.mxu0 0
    %5054 = vmatprep.subr.bf16.mxu0 0
    %5055 = vmatpush2.bf16.msra.mxu0 0
    %5056 = vmatprep.subr.bf16.mxu0 0
    %5057 = vmatpush2.bf16.msra.mxu0 0
    %5058 = vmatprep.mubr.bf16.mxu0 0
    %5059 = vmatmul.mubr.bf16.gmra.mxu0 %v4983
    %v5060 = vpop.f32.mrf.mxu0
    %v5061 = vadd.f32 0.0, %v5060
    %v5062 = vpop.f32.mrf.mxu0
    %v5063 = vadd.f32 0.0, %v5062
    %v5064 = vpop.f32.mrf.mxu0
    %v5065 = vpop.f32.mrf.mxu0
    %5066 = vdwg.mxu0
    %v5071 = vrot.slane %v5020, 4
    %v5072 = vrot.slane %v5022, 4
    %v5073 = vrot.slane %v5061, 4
    %v5074 = vrot.slane %v5063, 4
    %v5075 = vrot.slane %v5020, 5
    %v5076 = vrot.slane %v5022, 5
    %v5077 = vrot.slane %v5061, 5
    %v5078 = vrot.slane %v5063, 5
    %v5079 = vrot.slane %v5020, 6
    %v5080 = vrot.slane %v5022, 6
    %v5081 = vrot.slane %v5061, 6
    %v5082 = vrot.slane %v5063, 6
    %v5083 = vrot.slane %v5020, 7
    %v5084 = vrot.slane %v5022, 7
    %v5085 = vrot.slane %v5061, 7
    %v5086 = vrot.slane %v5063, 7
    %v5087 = vrot.slane %v5020, 1
    %v5088 = vrot.slane %v5022, 1
    %v5089 = vrot.slane %v5061, 1
    %v5090 = vrot.slane %v5063, 1
    %v5091 = vrot.slane %v5020, 2
    %v5092 = vrot.slane %v5022, 2
    %v5093 = vrot.slane %v5061, 2
    %v5094 = vrot.slane %v5063, 2
    %v5095 = vrot.slane %v5020, 3
    %v5096 = vrot.slane %v5022, 3
    %v5097 = vrot.slane %v5061, 3
    %v5098 = vrot.slane %v5063, 3
    %v5131 = vadd.f32 %v1830, %v5071
    %v5132 = vadd.f32 %v1832, %v5072
    %v5133 = vadd.f32 %v2049, %v5073
    %v5134 = vadd.f32 %v2051, %v5074
    %v5135 = vadd.f32 %v1834, %v5075
    %v5136 = vadd.f32 %v1836, %v5076
    %v5137 = vadd.f32 %v2053, %v5077
    %v5138 = vadd.f32 %v2055, %v5078
    %v5139 = vadd.f32 %v1840, %v5079
    %v5140 = vadd.f32 %v1842, %v5080
    %v5141 = vadd.f32 %v2059, %v5081
    %v5142 = vadd.f32 %v2061, %v5082
    %v5143 = vadd.f32 %v1844, %v5083
    %v5144 = vadd.f32 %v1846, %v5084
    %v5145 = vadd.f32 %v2063, %v5085
    %v5146 = vadd.f32 %v2065, %v5086
    %v5147 = vadd.f32 %v1850, %v5020
    %v5148 = vadd.f32 %v1852, %v5022
    %v5149 = vadd.f32 %v2069, %v5061
    %v5150 = vadd.f32 %v2071, %v5063
    %v5151 = vadd.f32 %v1854, %v5087
    %v5152 = vadd.f32 %v1856, %v5088
    %v5153 = vadd.f32 %v2073, %v5089
    %v5154 = vadd.f32 %v2075, %v5090
    %v5155 = vadd.f32 %v1860, %v5091
    %v5156 = vadd.f32 %v1862, %v5092
    %v5157 = vadd.f32 %v2079, %v5093
    %v5158 = vadd.f32 %v2081, %v5094
    %v5159 = vadd.f32 %v1864, %v5095
    %v5160 = vadd.f32 %v1866, %v5096
    %v5161 = vadd.f32 %v2083, %v5097
    %v5162 = vadd.f32 %v2085, %v5098
    %v5163 = vxor.u32 %v5131, 2147483648
    %v5164 = vxor.u32 %v5135, 2147483648
    %v5165 = vxor.u32 %v5139, 2147483648
    %v5166 = vxor.u32 %v5143, 2147483648
    %v5167 = vxor.u32 %v5147, 2147483648
    %v5168 = vxor.u32 %v5151, 2147483648
    %v5169 = vxor.u32 %v5155, 2147483648
    %v5170 = vxor.u32 %v5159, 2147483648
    %v5171 = vmul.f32 %v5163, 1.442695
    %v5172 = vpow.pop %v5171
    %v5173 = vmul.f32 %v5164, 1.442695
    %v5174 = vpow.pop %v5173
    %v5175 = vmul.f32 %v5165, 1.442695
    %v5176 = vpow.pop %v5175
    %v5177 = vmul.f32 %v5166, 1.442695
    %v5178 = vpow.pop %v5177
    %v5179 = vmul.f32 %v5167, 1.442695
    %v5180 = vpow.pop %v5179
    %v5181 = vmul.f32 %v5168, 1.442695
    %v5182 = vpow.pop %v5181
    %v5183 = vmul.f32 %v5169, 1.442695
    %v5184 = vpow.pop %v5183
    %v5185 = vmul.f32 %v5170, 1.442695
    %v5186 = vpow.pop %v5185
    %v5187 = vadd.f32 %v5172, 1.0
    %v5188 = vadd.f32 %v5174, 1.0
    %v5189 = vadd.f32 %v5176, 1.0
    %v5190 = vadd.f32 %v5178, 1.0
    %v5191 = vadd.f32 %v5180, 1.0
    %v5192 = vadd.f32 %v5182, 1.0
    %v5193 = vadd.f32 %v5184, 1.0
    %v5194 = vadd.f32 %v5186, 1.0
    %v5195 = vrcp.pop %v5187
    %v5196 = vmul.f32 1.0, %v5195
    %v5197 = vrcp.pop %v5188
    %v5198 = vmul.f32 1.0, %v5197
    %v5199 = vrcp.pop %v5189
    %v5200 = vmul.f32 1.0, %v5199
    %v5201 = vrcp.pop %v5190
    %v5202 = vmul.f32 1.0, %v5201
    %v5203 = vrcp.pop %v5191
    %v5204 = vmul.f32 1.0, %v5203
    %v5205 = vrcp.pop %v5192
    %v5206 = vmul.f32 1.0, %v5205
    %v5207 = vrcp.pop %v5193
    %v5208 = vmul.f32 1.0, %v5207
    %v5209 = vrcp.pop %v5194
    %v5210 = vmul.f32 1.0, %v5209
    %v5211 = vxor.u32 %v5132, 2147483648
    %v5212 = vxor.u32 %v5136, 2147483648
    %v5213 = vxor.u32 %v5140, 2147483648
    %v5214 = vxor.u32 %v5144, 2147483648
    %v5215 = vxor.u32 %v5148, 2147483648
    %v5216 = vxor.u32 %v5152, 2147483648
    %v5217 = vxor.u32 %v5156, 2147483648
    %v5218 = vxor.u32 %v5160, 2147483648
    %v5219 = vmul.f32 %v5211, 1.442695
    %v5220 = vpow.pop %v5219
    %v5221 = vmul.f32 %v5212, 1.442695
    %v5222 = vpow.pop %v5221
    %v5223 = vmul.f32 %v5213, 1.442695
    %v5224 = vpow.pop %v5223
    %v5225 = vmul.f32 %v5214, 1.442695
    %v5226 = vpow.pop %v5225
    %v5227 = vmul.f32 %v5215, 1.442695
    %v5228 = vpow.pop %v5227
    %v5229 = vmul.f32 %v5216, 1.442695
    %v5230 = vpow.pop %v5229
    %v5231 = vmul.f32 %v5217, 1.442695
    %v5232 = vpow.pop %v5231
    %v5233 = vmul.f32 %v5218, 1.442695
    %v5234 = vpow.pop %v5233
    %v5235 = vadd.f32 %v5220, 1.0
    %v5236 = vadd.f32 %v5222, 1.0
    %v5237 = vadd.f32 %v5224, 1.0
    %v5238 = vadd.f32 %v5226, 1.0
    %v5239 = vadd.f32 %v5228, 1.0
    %v5240 = vadd.f32 %v5230, 1.0
    %v5241 = vadd.f32 %v5232, 1.0
    %v5242 = vadd.f32 %v5234, 1.0
    %v5243 = vrcp.pop %v5235
    %v5244 = vmul.f32 1.0, %v5243
    %v5245 = vrcp.pop %v5236
    %v5246 = vmul.f32 1.0, %v5245
    %v5247 = vrcp.pop %v5237
    %v5248 = vmul.f32 1.0, %v5247
    %v5249 = vrcp.pop %v5238
    %v5250 = vmul.f32 1.0, %v5249
    %v5251 = vrcp.pop %v5239
    %v5252 = vmul.f32 1.0, %v5251
    %v5253 = vrcp.pop %v5240
    %v5254 = vmul.f32 1.0, %v5253
    %v5255 = vrcp.pop %v5241
    %v5256 = vmul.f32 1.0, %v5255
    %v5257 = vrcp.pop %v5242
    %v5258 = vmul.f32 1.0, %v5257
    %v5259 = vtanh.pop %v5133
    %v5260 = vtanh.pop %v5137
    %v5261 = vtanh.pop %v5141
    %v5262 = vtanh.pop %v5145
    %v5263 = vtanh.pop %v5149
    %v5264 = vtanh.pop %v5153
    %v5265 = vtanh.pop %v5157
    %v5266 = vtanh.pop %v5161
    %v5267 = vxor.u32 %v5134, 2147483648
    %v5268 = vxor.u32 %v5138, 2147483648
    %v5269 = vxor.u32 %v5142, 2147483648
    %v5270 = vxor.u32 %v5146, 2147483648
    %v5271 = vxor.u32 %v5150, 2147483648
    %v5272 = vxor.u32 %v5154, 2147483648
    %v5273 = vxor.u32 %v5158, 2147483648
    %v5274 = vxor.u32 %v5162, 2147483648
    %v5275 = vmul.f32 %v5267, 1.442695
    %v5276 = vpow.pop %v5275
    %v5277 = vmul.f32 %v5268, 1.442695
    %v5278 = vpow.pop %v5277
    %v5279 = vmul.f32 %v5269, 1.442695
    %v5280 = vpow.pop %v5279
    %v5281 = vmul.f32 %v5270, 1.442695
    %v5282 = vpow.pop %v5281
    %v5283 = vmul.f32 %v5271, 1.442695
    %v5284 = vpow.pop %v5283
    %v5285 = vmul.f32 %v5272, 1.442695
    %v5286 = vpow.pop %v5285
    %v5287 = vmul.f32 %v5273, 1.442695
    %v5288 = vpow.pop %v5287
    %v5289 = vmul.f32 %v5274, 1.442695
    %v5290 = vpow.pop %v5289
    %v5291 = vadd.f32 %v5276, 1.0
    %v5292 = vadd.f32 %v5278, 1.0
    %v5293 = vadd.f32 %v5280, 1.0
    %v5294 = vadd.f32 %v5282, 1.0
    %v5295 = vadd.f32 %v5284, 1.0
    %v5296 = vadd.f32 %v5286, 1.0
    %v5297 = vadd.f32 %v5288, 1.0
    %v5298 = vadd.f32 %v5290, 1.0
    %v5299 = vrcp.pop %v5291
    %v5300 = vmul.f32 1.0, %v5299
    %v5301 = vrcp.pop %v5292
    %v5302 = vmul.f32 1.0, %v5301
    %v5303 = vrcp.pop %v5293
    %v5304 = vmul.f32 1.0, %v5303
    %v5305 = vrcp.pop %v5294
    %v5306 = vmul.f32 1.0, %v5305
    %v5307 = vrcp.pop %v5295
    %v5308 = vmul.f32 1.0, %v5307
    %v5309 = vrcp.pop %v5296
    %v5310 = vmul.f32 1.0, %v5309
    %v5311 = vrcp.pop %v5297
    %v5312 = vmul.f32 1.0, %v5311
    %v5313 = vrcp.pop %v5298
    %v5314 = vmul.f32 1.0, %v5313
    %v5323 = vrot.slane %v4769, 7
    %v5324 = vrot.slane %v4770, 7
    %v5325 = vrot.slane %v4771, 7
    %v5326 = vrot.slane %v4772, 7
    %v5327 = vrot.slane %v4773, 7
    %v5328 = vrot.slane %v4774, 7
    %v5329 = vrot.slane %v4775, 7
    %v5330 = vrot.slane %v4776, 7
    %v5339 = vmul.f32 %v5244, %v5323
    %v5340 = vmul.f32 %v5246, %v5324
    %v5341 = vmul.f32 %v5248, %v5325
    %v5342 = vmul.f32 %v5250, %v5326
    %v5343 = vmul.f32 %v5252, %v5327
    %v5344 = vmul.f32 %v5254, %v5328
    %v5345 = vmul.f32 %v5256, %v5329
    %v5346 = vmul.f32 %v5258, %v5330
    %v5347 = vmul.f32 %v5196, %v5259
    %v5348 = vmul.f32 %v5198, %v5260
    %v5349 = vmul.f32 %v5200, %v5261
    %v5350 = vmul.f32 %v5202, %v5262
    %v5351 = vmul.f32 %v5204, %v5263
    %v5352 = vmul.f32 %v5206, %v5264
    %v5353 = vmul.f32 %v5208, %v5265
    %v5354 = vmul.f32 %v5210, %v5266
    %v5355 = vadd.f32 %v5339, %v5347
    %v5356 = vadd.f32 %v5340, %v5348
    %v5357 = vadd.f32 %v5341, %v5349
    %v5358 = vadd.f32 %v5342, %v5350
    %v5359 = vadd.f32 %v5343, %v5351
    %v5360 = vadd.f32 %v5344, %v5352
    %v5361 = vadd.f32 %v5345, %v5353
    %v5362 = vadd.f32 %v5346, %v5354
    %v5363 = vtanh.pop %v5355
    %v5364 = vtanh.pop %v5356
    %v5365 = vtanh.pop %v5357
    %v5366 = vtanh.pop %v5358
    %v5367 = vtanh.pop %v5359
    %v5368 = vtanh.pop %v5360
    %v5369 = vtanh.pop %v5361
    %v5370 = vtanh.pop %v5362
    %v5371 = vmul.f32 %v5300, %v5363
    %v5372 = vmul.f32 %v5302, %v5364
    %v5373 = vmul.f32 %v5304, %v5365
    %v5374 = vmul.f32 %v5306, %v5366
    %v5375 = vmul.f32 %v5308, %v5367
    %v5376 = vmul.f32 %v5310, %v5368
    %v5377 = vmul.f32 %v5312, %v5369
    %v5378 = vmul.f32 %v5314, %v5370
    %v5387 = vrot.slane %v5372, 7
    %v5388 = vsel %vm2743, %v5387, %v5371
    %v5389 = vrot.slane %v5373, 6
    %v5390 = vsel %vm2746, %v5389, %v5388
    %v5391 = vrot.slane %v5374, 5
    %v5392 = vsel %vm2749, %v5391, %v5390
    %v5393 = vrot.slane %v5375, 4
    %v5394 = vrot.slane %v5376, 3
    %v5395 = vsel %vm2731, %v5394, %v5393
    %v5396 = vrot.slane %v5377, 2
    %v5397 = vsel %vm2734, %v5396, %v5395
    %v5398 = vrot.slane %v5378, 1
    %v5399 = vsel %vm2737, %v5398, %v5397
    %v5403 = vrot.slane %v4944, 4
    %v5405 = vpack.c.bf16 %v5399, %v5392
    %v5406 = vpack.c.bf16 %v5403, %v5403
    %v5409 = vrot.slane %v5405, 2
    %v5410 = vrot.slane %v5406, 2
    %5413 = vmatprep.subr.bf16.mxu0 %v2996
    %5414 = vmatpush1.bf16.msra.mxu0 %v2995
    %5415 = vmatprep.subr.bf16.mxu0 %v2992
    %5416 = vmatpush1.bf16.msra.mxu0 %v2991
    %5417 = vmatprep.subr.bf16.mxu0 %v2988
    %5418 = vmatpush1.bf16.msra.mxu0 %v2987
    %5419 = vmatprep.subr.bf16.mxu0 %v2984
    %5420 = vmatpush1.bf16.msra.mxu0 %v2983
    %5421 = vmatprep.subr.bf16.mxu0 %v2980
    %5422 = vmatpush1.bf16.msra.mxu0 %v2979
    %5423 = vmatprep.subr.bf16.mxu0 %v2976
    %5424 = vmatpush1.bf16.msra.mxu0 %v2975
    %5425 = vmatprep.subr.bf16.mxu0 %v2972
    %5426 = vmatpush1.bf16.msra.mxu0 %v2971
    %5427 = vmatprep.subr.bf16.mxu0 %v2968
    %5428 = vmatpush1.bf16.msra.mxu0 %v2967
    %5429 = vmatprep.subr.bf16.mxu0 %v3028
    %5430 = vmatpush2.bf16.msra.mxu0 %v3027
    %5431 = vmatprep.subr.bf16.mxu0 %v3024
    %5432 = vmatpush2.bf16.msra.mxu0 %v3023
    %5433 = vmatprep.subr.bf16.mxu0 %v3020
    %5434 = vmatpush2.bf16.msra.mxu0 %v3019
    %5435 = vmatprep.subr.bf16.mxu0 %v3016
    %5436 = vmatpush2.bf16.msra.mxu0 %v3015
    %5437 = vmatprep.subr.bf16.mxu0 %v3012
    %5438 = vmatpush2.bf16.msra.mxu0 %v3011
    %5439 = vmatprep.subr.bf16.mxu0 %v3008
    %5440 = vmatpush2.bf16.msra.mxu0 %v3007
    %5441 = vmatprep.subr.bf16.mxu0 %v3004
    %5442 = vmatpush2.bf16.msra.mxu0 %v3003
    %5443 = vmatprep.subr.bf16.mxu0 %v3000
    %5444 = vmatpush2.bf16.msra.mxu0 %v2999
    %5445 = vmatprep.mubr.bf16.mxu0 %v5410
    %5446 = vmatmul.mubr.bf16.gmra.mxu0 %v5409
    %v5447 = vpop.f32.mrf.mxu0
    %v5448 = vadd.f32 %v2758, %v5447
    %v5449 = vpop.f32.mrf.mxu0
    %v5450 = vadd.f32 %v2762, %v5449
    %v5451 = vpop.f32.mrf.mxu0
    %v5452 = vpop.f32.mrf.mxu0
    %5453 = vdwg.mxu0
    %5454 = vmatprep.subr.bf16.mxu0 %v2998
    %5455 = vmatpush1.bf16.msra.mxu0 %v2997
    %5456 = vmatprep.subr.bf16.mxu0 %v2994
    %5457 = vmatpush1.bf16.msra.mxu0 %v2993
    %5458 = vmatprep.subr.bf16.mxu0 %v2990
    %5459 = vmatpush1.bf16.msra.mxu0 %v2989
    %5460 = vmatprep.subr.bf16.mxu0 %v2986
    %5461 = vmatpush1.bf16.msra.mxu0 %v2985
    %5462 = vmatprep.subr.bf16.mxu0 %v2982
    %5463 = vmatpush1.bf16.msra.mxu0 %v2981
    %5464 = vmatprep.subr.bf16.mxu0 %v2978
    %5465 = vmatpush1.bf16.msra.mxu0 %v2977
    %5466 = vmatprep.subr.bf16.mxu0 %v2974
    %5467 = vmatpush1.bf16.msra.mxu0 %v2973
    %5468 = vmatprep.subr.bf16.mxu0 %v2970
    %5469 = vmatpush1.bf16.msra.mxu0 %v2969
    %5470 = vmatprep.subr.bf16.mxu0 %v3030
    %5471 = vmatpush2.bf16.msra.mxu0 %v3029
    %5472 = vmatprep.subr.bf16.mxu0 %v3026
    %5473 = vmatpush2.bf16.msra.mxu0 %v3025
    %5474 = vmatprep.subr.bf16.mxu0 %v3022
    %5475 = vmatpush2.bf16.msra.mxu0 %v3021
    %5476 = vmatprep.subr.bf16.mxu0 %v3018
    %5477 = vmatpush2.bf16.msra.mxu0 %v3017
    %5478 = vmatprep.subr.bf16.mxu0 %v3014
    %5479 = vmatpush2.bf16.msra.mxu0 %v3013
    %5480 = vmatprep.subr.bf16.mxu0 %v3010
    %5481 = vmatpush2.bf16.msra.mxu0 %v3009
    %5482 = vmatprep.subr.bf16.mxu0 %v3006
    %5483 = vmatpush2.bf16.msra.mxu0 %v3005
    %5484 = vmatprep.subr.bf16.mxu0 %v3002
    %5485 = vmatpush2.bf16.msra.mxu0 %v3001
    %5486 = vmatprep.mubr.bf16.mxu0 %v5410
    %5487 = vmatmul.mubr.bf16.gmra.mxu0 %v5409
    %v5488 = vpop.f32.mrf.mxu0
    %v5489 = vadd.f32 %v2766, %v5488
    %v5490 = vpop.f32.mrf.mxu0
    %v5491 = vadd.f32 %v2770, %v5490
    %v5492 = vpop.f32.mrf.mxu0
    %v5493 = vpop.f32.mrf.mxu0
    %5494 = vdwg.mxu0
    %v5495 = vxor.u32 %v5448, 2147483648
    %v5496 = vmul.f32 %v5495, 1.442695
    %v5497 = vpow.pop %v5496
    %v5498 = vadd.f32 %v5497, 1.0
    %v5499 = vrcp.pop %v5498
    %v5500 = vmul.f32 1.0, %v5499
    %v5501 = vxor.u32 %v5450, 2147483648
    %v5502 = vmul.f32 %v5501, 1.442695
    %v5503 = vpow.pop %v5502
    %v5504 = vadd.f32 %v5503, 1.0
    %v5505 = vrcp.pop %v5504
    %v5506 = vmul.f32 1.0, %v5505
    %v5507 = vtanh.pop %v5489
    %v5508 = vxor.u32 %v5491, 2147483648
    %v5509 = vmul.f32 %v5508, 1.442695
    %v5510 = vpow.pop %v5509
    %v5511 = vadd.f32 %v5510, 1.0
    %v5512 = vrcp.pop %v5511
    %v5513 = vmul.f32 1.0, %v5512
    %v5514 = vmul.f32 %v5506, %v4942
    %v5515 = vmul.f32 %v5500, %v5507
    %v5516 = vadd.f32 %v5514, %v5515
    %v5517 = vtanh.pop %v5516
    %v5518 = vmul.f32 %v5513, %v5517
    %v5519 = vpack.c.bf16 %v5371, %v5371
    %v5520 = vpack.c.bf16 %v5372, %v5372
    %v5521 = vpack.c.bf16 %v5373, %v5373
    %v5522 = vpack.c.bf16 %v5374, %v5374
    %v5523 = vpack.c.bf16 %v5375, %v5375
    %v5524 = vpack.c.bf16 %v5376, %v5376
    %v5525 = vpack.c.bf16 %v5377, %v5377
    %v5526 = vpack.c.bf16 %v5378, %v5378
    %v5535 = vunpack.c.l.b16 %v5519
    %v5536 = vunpack.c.l.b16 %v5520
    %v5537 = vunpack.c.l.b16 %v5521
    %v5538 = vunpack.c.l.b16 %v5522
    %v5539 = vunpack.c.l.b16 %v5523
    %v5540 = vunpack.c.l.b16 %v5524
    %v5541 = vunpack.c.l.b16 %v5525
    %v5542 = vunpack.c.l.b16 %v5526
    %v5543 = vrot.slane %v5535, 4
    %v5544 = vrot.slane %v5536, 3
    %v5545 = vsel %vm2731, %v5544, %v5543
    %v5546 = vrot.slane %v5537, 2
    %v5547 = vsel %vm2734, %v5546, %v5545
    %v5548 = vrot.slane %v5538, 1
    %v5549 = vsel %vm2737, %v5548, %v5547
    %v5550 = vsel %vm2740, %v5539, %v5549
    %v5551 = vrot.slane %v5540, 7
    %v5552 = vsel %vm2743, %v5551, %v5550
    %v5553 = vrot.slane %v5541, 6
    %v5554 = vsel %vm2746, %v5553, %v5552
    %v5555 = vrot.slane %v5542, 5
    %v5556 = vsel %vm2749, %v5555, %v5554
    %v5557 = vpack.c.b16 %v5556, %v5556
    %5559 = vmatprep.subr.bf16.mxu0 %v2317
    %5560 = vmatpush1.bf16.msra.mxu0 %v2316
    %5561 = vmatprep.subr.bf16.mxu0 %v2313
    %5562 = vmatpush1.bf16.msra.mxu0 %v2312
    %5563 = vmatprep.subr.bf16.mxu0 %v2309
    %5564 = vmatpush1.bf16.msra.mxu0 %v2308
    %5565 = vmatprep.subr.bf16.mxu0 %v2305
    %5566 = vmatpush1.bf16.msra.mxu0 %v2304
    %5567 = vmatprep.subr.bf16.mxu0 %v2301
    %5568 = vmatpush1.bf16.msra.mxu0 %v2300
    %5569 = vmatprep.subr.bf16.mxu0 %v2297
    %5570 = vmatpush1.bf16.msra.mxu0 %v2296
    %5571 = vmatprep.subr.bf16.mxu0 %v2293
    %5572 = vmatpush1.bf16.msra.mxu0 %v2292
    %5573 = vmatprep.subr.bf16.mxu0 %v2289
    %5574 = vmatpush1.bf16.msra.mxu0 %v2288
    %5575 = vmatprep.subr.bf16.mxu0 0
    %5576 = vmatpush2.bf16.msra.mxu0 0
    %5577 = vmatprep.subr.bf16.mxu0 0
    %5578 = vmatpush2.bf16.msra.mxu0 0
    %5579 = vmatprep.subr.bf16.mxu0 0
    %5580 = vmatpush2.bf16.msra.mxu0 0
    %5581 = vmatprep.subr.bf16.mxu0 0
    %5582 = vmatpush2.bf16.msra.mxu0 0
    %5583 = vmatprep.subr.bf16.mxu0 0
    %5584 = vmatpush2.bf16.msra.mxu0 0
    %5585 = vmatprep.subr.bf16.mxu0 0
    %5586 = vmatpush2.bf16.msra.mxu0 0
    %5587 = vmatprep.subr.bf16.mxu0 0
    %5588 = vmatpush2.bf16.msra.mxu0 0
    %5589 = vmatprep.subr.bf16.mxu0 0
    %5590 = vmatpush2.bf16.msra.mxu0 0
    %5591 = vmatprep.mubr.bf16.mxu0 0
    %5592 = vmatmul.mubr.bf16.gmra.mxu0 %v5557
    %v5593 = vpop.f32.mrf.mxu0
    %v5594 = vadd.f32 0.0, %v5593
    %v5595 = vpop.f32.mrf.mxu0
    %v5596 = vadd.f32 0.0, %v5595
    %v5597 = vpop.f32.mrf.mxu0
    %v5598 = vpop.f32.mrf.mxu0
    %5599 = vdwg.mxu0
    %5600 = vmatprep.subr.bf16.mxu0 %v2319
    %5601 = vmatpush1.bf16.msra.mxu0 %v2318
    %5602 = vmatprep.subr.bf16.mxu0 %v2315
    %5603 = vmatpush1.bf16.msra.mxu0 %v2314
    %5604 = vmatprep.subr.bf16.mxu0 %v2311
    %5605 = vmatpush1.bf16.msra.mxu0 %v2310
    %5606 = vmatprep.subr.bf16.mxu0 %v2307
    %5607 = vmatpush1.bf16.msra.mxu0 %v2306
    %5608 = vmatprep.subr.bf16.mxu0 %v2303
    %5609 = vmatpush1.bf16.msra.mxu0 %v2302
    %5610 = vmatprep.subr.bf16.mxu0 %v2299
    %5611 = vmatpush1.bf16.msra.mxu0 %v2298
    %5612 = vmatprep.subr.bf16.mxu0 %v2295
    %5613 = vmatpush1.bf16.msra.mxu0 %v2294
    %5614 = vmatprep.subr.bf16.mxu0 %v2291
    %5615 = vmatpush1.bf16.msra.mxu0 %v2290
    %5616 = vmatprep.subr.bf16.mxu0 0
    %5617 = vmatpush2.bf16.msra.mxu0 0
    %5618 = vmatprep.subr.bf16.mxu0 0
    %5619 = vmatpush2.bf16.msra.mxu0 0
    %5620 = vmatprep.subr.bf16.mxu0 0
    %5621 = vmatpush2.bf16.msra.mxu0 0
    %5622 = vmatprep.subr.bf16.mxu0 0
    %5623 = vmatpush2.bf16.msra.mxu0 0
    %5624 = vmatprep.subr.bf16.mxu0 0
    %5625 = vmatpush2.bf16.msra.mxu0 0
    %5626 = vmatprep.subr.bf16.mxu0 0
    %5627 = vmatpush2.bf16.msra.mxu0 0
    %5628 = vmatprep.subr.bf16.mxu0 0
    %5629 = vmatpush2.bf16.msra.mxu0 0
    %5630 = vmatprep.subr.bf16.mxu0 0
    %5631 = vmatpush2.bf16.msra.mxu0 0
    %5632 = vmatprep.mubr.bf16.mxu0 0
    %5633 = vmatmul.mubr.bf16.gmra.mxu0 %v5557
    %v5634 = vpop.f32.mrf.mxu0
    %v5635 = vadd.f32 0.0, %v5634
    %v5636 = vpop.f32.mrf.mxu0
    %v5637 = vadd.f32 0.0, %v5636
    %v5638 = vpop.f32.mrf.mxu0
    %v5639 = vpop.f32.mrf.mxu0
    %5640 = vdwg.mxu0
    %v5645 = vrot.slane %v5594, 3
    %v5646 = vrot.slane %v5596, 3
    %v5647 = vrot.slane %v5635, 3
    %v5648 = vrot.slane %v5637, 3
    %v5649 = vrot.slane %v5594, 4
    %v5650 = vrot.slane %v5596, 4
    %v5651 = vrot.slane %v5635, 4
    %v5652 = vrot.slane %v5637, 4
    %v5653 = vrot.slane %v5594, 5
    %v5654 = vrot.slane %v5596, 5
    %v5655 = vrot.slane %v5635, 5
    %v5656 = vrot.slane %v5637, 5
    %v5657 = vrot.slane %v5594, 6
    %v5658 = vrot.slane %v5596, 6
    %v5659 = vrot.slane %v5635, 6
    %v5660 = vrot.slane %v5637, 6
    %v5661 = vrot.slane %v5594, 7
    %v5662 = vrot.slane %v5596, 7
    %v5663 = vrot.slane %v5635, 7
    %v5664 = vrot.slane %v5637, 7
    %v5665 = vrot.slane %v5594, 1
    %v5666 = vrot.slane %v5596, 1
    %v5667 = vrot.slane %v5635, 1
    %v5668 = vrot.slane %v5637, 1
    %v5669 = vrot.slane %v5594, 2
    %v5670 = vrot.slane %v5596, 2
    %v5671 = vrot.slane %v5635, 2
    %v5672 = vrot.slane %v5637, 2
    %v5705 = vadd.f32 %v1830, %v5645
    %v5706 = vadd.f32 %v1832, %v5646
    %v5707 = vadd.f32 %v2049, %v5647
    %v5708 = vadd.f32 %v2051, %v5648
    %v5709 = vadd.f32 %v1834, %v5649
    %v5710 = vadd.f32 %v1836, %v5650
    %v5711 = vadd.f32 %v2053, %v5651
    %v5712 = vadd.f32 %v2055, %v5652
    %v5713 = vadd.f32 %v1840, %v5653
    %v5714 = vadd.f32 %v1842, %v5654
    %v5715 = vadd.f32 %v2059, %v5655
    %v5716 = vadd.f32 %v2061, %v5656
    %v5717 = vadd.f32 %v1844, %v5657
    %v5718 = vadd.f32 %v1846, %v5658
    %v5719 = vadd.f32 %v2063, %v5659
    %v5720 = vadd.f32 %v2065, %v5660
    %v5721 = vadd.f32 %v1850, %v5661
    %v5722 = vadd.f32 %v1852, %v5662
    %v5723 = vadd.f32 %v2069, %v5663
    %v5724 = vadd.f32 %v2071, %v5664
    %v5725 = vadd.f32 %v1854, %v5594
    %v5726 = vadd.f32 %v1856, %v5596
    %v5727 = vadd.f32 %v2073, %v5635
    %v5728 = vadd.f32 %v2075, %v5637
    %v5729 = vadd.f32 %v1860, %v5665
    %v5730 = vadd.f32 %v1862, %v5666
    %v5731 = vadd.f32 %v2079, %v5667
    %v5732 = vadd.f32 %v2081, %v5668
    %v5733 = vadd.f32 %v1864, %v5669
    %v5734 = vadd.f32 %v1866, %v5670
    %v5735 = vadd.f32 %v2083, %v5671
    %v5736 = vadd.f32 %v2085, %v5672
    %v5737 = vxor.u32 %v5705, 2147483648
    %v5738 = vxor.u32 %v5709, 2147483648
    %v5739 = vxor.u32 %v5713, 2147483648
    %v5740 = vxor.u32 %v5717, 2147483648
    %v5741 = vxor.u32 %v5721, 2147483648
    %v5742 = vxor.u32 %v5725, 2147483648
    %v5743 = vxor.u32 %v5729, 2147483648
    %v5744 = vxor.u32 %v5733, 2147483648
    %v5745 = vmul.f32 %v5737, 1.442695
    %v5746 = vpow.pop %v5745
    %v5747 = vmul.f32 %v5738, 1.442695
    %v5748 = vpow.pop %v5747
    %v5749 = vmul.f32 %v5739, 1.442695
    %v5750 = vpow.pop %v5749
    %v5751 = vmul.f32 %v5740, 1.442695
    %v5752 = vpow.pop %v5751
    %v5753 = vmul.f32 %v5741, 1.442695
    %v5754 = vpow.pop %v5753
    %v5755 = vmul.f32 %v5742, 1.442695
    %v5756 = vpow.pop %v5755
    %v5757 = vmul.f32 %v5743, 1.442695
    %v5758 = vpow.pop %v5757
    %v5759 = vmul.f32 %v5744, 1.442695
    %v5760 = vpow.pop %v5759
    %v5761 = vadd.f32 %v5746, 1.0
    %v5762 = vadd.f32 %v5748, 1.0
    %v5763 = vadd.f32 %v5750, 1.0
    %v5764 = vadd.f32 %v5752, 1.0
    %v5765 = vadd.f32 %v5754, 1.0
    %v5766 = vadd.f32 %v5756, 1.0
    %v5767 = vadd.f32 %v5758, 1.0
    %v5768 = vadd.f32 %v5760, 1.0
    %v5769 = vrcp.pop %v5761
    %v5770 = vmul.f32 1.0, %v5769
    %v5771 = vrcp.pop %v5762
    %v5772 = vmul.f32 1.0, %v5771
    %v5773 = vrcp.pop %v5763
    %v5774 = vmul.f32 1.0, %v5773
    %v5775 = vrcp.pop %v5764
    %v5776 = vmul.f32 1.0, %v5775
    %v5777 = vrcp.pop %v5765
    %v5778 = vmul.f32 1.0, %v5777
    %v5779 = vrcp.pop %v5766
    %v5780 = vmul.f32 1.0, %v5779
    %v5781 = vrcp.pop %v5767
    %v5782 = vmul.f32 1.0, %v5781
    %v5783 = vrcp.pop %v5768
    %v5784 = vmul.f32 1.0, %v5783
    %v5785 = vxor.u32 %v5706, 2147483648
    %v5786 = vxor.u32 %v5710, 2147483648
    %v5787 = vxor.u32 %v5714, 2147483648
    %v5788 = vxor.u32 %v5718, 2147483648
    %v5789 = vxor.u32 %v5722, 2147483648
    %v5790 = vxor.u32 %v5726, 2147483648
    %v5791 = vxor.u32 %v5730, 2147483648
    %v5792 = vxor.u32 %v5734, 2147483648
    %v5793 = vmul.f32 %v5785, 1.442695
    %v5794 = vpow.pop %v5793
    %v5795 = vmul.f32 %v5786, 1.442695
    %v5796 = vpow.pop %v5795
    %v5797 = vmul.f32 %v5787, 1.442695
    %v5798 = vpow.pop %v5797
    %v5799 = vmul.f32 %v5788, 1.442695
    %v5800 = vpow.pop %v5799
    %v5801 = vmul.f32 %v5789, 1.442695
    %v5802 = vpow.pop %v5801
    %v5803 = vmul.f32 %v5790, 1.442695
    %v5804 = vpow.pop %v5803
    %v5805 = vmul.f32 %v5791, 1.442695
    %v5806 = vpow.pop %v5805
    %v5807 = vmul.f32 %v5792, 1.442695
    %v5808 = vpow.pop %v5807
    %v5809 = vadd.f32 %v5794, 1.0
    %v5810 = vadd.f32 %v5796, 1.0
    %v5811 = vadd.f32 %v5798, 1.0
    %v5812 = vadd.f32 %v5800, 1.0
    %v5813 = vadd.f32 %v5802, 1.0
    %v5814 = vadd.f32 %v5804, 1.0
    %v5815 = vadd.f32 %v5806, 1.0
    %v5816 = vadd.f32 %v5808, 1.0
    %v5817 = vrcp.pop %v5809
    %v5818 = vmul.f32 1.0, %v5817
    %v5819 = vrcp.pop %v5810
    %v5820 = vmul.f32 1.0, %v5819
    %v5821 = vrcp.pop %v5811
    %v5822 = vmul.f32 1.0, %v5821
    %v5823 = vrcp.pop %v5812
    %v5824 = vmul.f32 1.0, %v5823
    %v5825 = vrcp.pop %v5813
    %v5826 = vmul.f32 1.0, %v5825
    %v5827 = vrcp.pop %v5814
    %v5828 = vmul.f32 1.0, %v5827
    %v5829 = vrcp.pop %v5815
    %v5830 = vmul.f32 1.0, %v5829
    %v5831 = vrcp.pop %v5816
    %v5832 = vmul.f32 1.0, %v5831
    %v5833 = vtanh.pop %v5707
    %v5834 = vtanh.pop %v5711
    %v5835 = vtanh.pop %v5715
    %v5836 = vtanh.pop %v5719
    %v5837 = vtanh.pop %v5723
    %v5838 = vtanh.pop %v5727
    %v5839 = vtanh.pop %v5731
    %v5840 = vtanh.pop %v5735
    %v5841 = vxor.u32 %v5708, 2147483648
    %v5842 = vxor.u32 %v5712, 2147483648
    %v5843 = vxor.u32 %v5716, 2147483648
    %v5844 = vxor.u32 %v5720, 2147483648
    %v5845 = vxor.u32 %v5724, 2147483648
    %v5846 = vxor.u32 %v5728, 2147483648
    %v5847 = vxor.u32 %v5732, 2147483648
    %v5848 = vxor.u32 %v5736, 2147483648
    %v5849 = vmul.f32 %v5841, 1.442695
    %v5850 = vpow.pop %v5849
    %v5851 = vmul.f32 %v5842, 1.442695
    %v5852 = vpow.pop %v5851
    %v5853 = vmul.f32 %v5843, 1.442695
    %v5854 = vpow.pop %v5853
    %v5855 = vmul.f32 %v5844, 1.442695
    %v5856 = vpow.pop %v5855
    %v5857 = vmul.f32 %v5845, 1.442695
    %v5858 = vpow.pop %v5857
    %v5859 = vmul.f32 %v5846, 1.442695
    %v5860 = vpow.pop %v5859
    %v5861 = vmul.f32 %v5847, 1.442695
    %v5862 = vpow.pop %v5861
    %v5863 = vmul.f32 %v5848, 1.442695
    %v5864 = vpow.pop %v5863
    %v5865 = vadd.f32 %v5850, 1.0
    %v5866 = vadd.f32 %v5852, 1.0
    %v5867 = vadd.f32 %v5854, 1.0
    %v5868 = vadd.f32 %v5856, 1.0
    %v5869 = vadd.f32 %v5858, 1.0
    %v5870 = vadd.f32 %v5860, 1.0
    %v5871 = vadd.f32 %v5862, 1.0
    %v5872 = vadd.f32 %v5864, 1.0
    %v5873 = vrcp.pop %v5865
    %v5874 = vmul.f32 1.0, %v5873
    %v5875 = vrcp.pop %v5866
    %v5876 = vmul.f32 1.0, %v5875
    %v5877 = vrcp.pop %v5867
    %v5878 = vmul.f32 1.0, %v5877
    %v5879 = vrcp.pop %v5868
    %v5880 = vmul.f32 1.0, %v5879
    %v5881 = vrcp.pop %v5869
    %v5882 = vmul.f32 1.0, %v5881
    %v5883 = vrcp.pop %v5870
    %v5884 = vmul.f32 1.0, %v5883
    %v5885 = vrcp.pop %v5871
    %v5886 = vmul.f32 1.0, %v5885
    %v5887 = vrcp.pop %v5872
    %v5888 = vmul.f32 1.0, %v5887
    %v5897 = vrot.slane %v5355, 7
    %v5898 = vrot.slane %v5356, 7
    %v5899 = vrot.slane %v5357, 7
    %v5900 = vrot.slane %v5358, 7
    %v5901 = vrot.slane %v5359, 7
    %v5902 = vrot.slane %v5360, 7
    %v5903 = vrot.slane %v5361, 7
    %v5904 = vrot.slane %v5362, 7
    %v5913 = vmul.f32 %v5818, %v5897
    %v5914 = vmul.f32 %v5820, %v5898
    %v5915 = vmul.f32 %v5822, %v5899
    %v5916 = vmul.f32 %v5824, %v5900
    %v5917 = vmul.f32 %v5826, %v5901
    %v5918 = vmul.f32 %v5828, %v5902
    %v5919 = vmul.f32 %v5830, %v5903
    %v5920 = vmul.f32 %v5832, %v5904
    %v5921 = vmul.f32 %v5770, %v5833
    %v5922 = vmul.f32 %v5772, %v5834
    %v5923 = vmul.f32 %v5774, %v5835
    %v5924 = vmul.f32 %v5776, %v5836
    %v5925 = vmul.f32 %v5778, %v5837
    %v5926 = vmul.f32 %v5780, %v5838
    %v5927 = vmul.f32 %v5782, %v5839
    %v5928 = vmul.f32 %v5784, %v5840
    %v5929 = vadd.f32 %v5913, %v5921
    %v5930 = vadd.f32 %v5914, %v5922
    %v5931 = vadd.f32 %v5915, %v5923
    %v5932 = vadd.f32 %v5916, %v5924
    %v5933 = vadd.f32 %v5917, %v5925
    %v5934 = vadd.f32 %v5918, %v5926
    %v5935 = vadd.f32 %v5919, %v5927
    %v5936 = vadd.f32 %v5920, %v5928
    %v5937 = vtanh.pop %v5929
    %v5938 = vtanh.pop %v5930
    %v5939 = vtanh.pop %v5931
    %v5940 = vtanh.pop %v5932
    %v5941 = vtanh.pop %v5933
    %v5942 = vtanh.pop %v5934
    %v5943 = vtanh.pop %v5935
    %v5944 = vtanh.pop %v5936
    %v5945 = vmul.f32 %v5874, %v5937
    %v5946 = vmul.f32 %v5876, %v5938
    %v5947 = vmul.f32 %v5878, %v5939
    %v5948 = vmul.f32 %v5880, %v5940
    %v5949 = vmul.f32 %v5882, %v5941
    %v5950 = vmul.f32 %v5884, %v5942
    %v5951 = vmul.f32 %v5886, %v5943
    %v5952 = vmul.f32 %v5888, %v5944
    %v5961 = vrot.slane %v5946, 7
    %v5962 = vsel %vm2746, %v5961, %v5945
    %v5963 = vrot.slane %v5947, 6
    %v5964 = vsel %vm2749, %v5963, %v5962
    %v5965 = vrot.slane %v5948, 5
    %v5966 = vrot.slane %v5949, 4
    %v5967 = vsel %vm2731, %v5966, %v5965
    %v5968 = vrot.slane %v5950, 3
    %v5969 = vsel %vm2734, %v5968, %v5967
    %v5970 = vrot.slane %v5951, 2
    %v5971 = vsel %vm2737, %v5970, %v5969
    %v5972 = vrot.slane %v5952, 1
    %v5973 = vsel %vm2740, %v5972, %v5971
    %v5977 = vrot.slane %v5518, 3
    %v5979 = vpack.c.bf16 %v5973, %v5964
    %v5980 = vpack.c.bf16 %v5977, %v5977
    %v5982 = vshrl.u32 %v5979, 16
    %v5984 = vrot.slane %v5982, 2
    %v5985 = vshll.u32 %v5979, 16
    %v5987 = vrot.slane %v5985, 3
    %v5988 = vor.u32 %v5984, %v5987
    %v5990 = vshrl.u32 %v5980, 16
    %v5992 = vrot.slane %v5990, 2
    %v5993 = vshll.u32 %v5980, 16
    %v5995 = vrot.slane %v5993, 3
    %v5996 = vor.u32 %v5992, %v5995
    %5999 = vmatprep.subr.bf16.mxu0 %v2996
    %6000 = vmatpush1.bf16.msra.mxu0 %v2995
    %6001 = vmatprep.subr.bf16.mxu0 %v2992
    %6002 = vmatpush1.bf16.msra.mxu0 %v2991
    %6003 = vmatprep.subr.bf16.mxu0 %v2988
    %6004 = vmatpush1.bf16.msra.mxu0 %v2987
    %6005 = vmatprep.subr.bf16.mxu0 %v2984
    %6006 = vmatpush1.bf16.msra.mxu0 %v2983
    %6007 = vmatprep.subr.bf16.mxu0 %v2980
    %6008 = vmatpush1.bf16.msra.mxu0 %v2979
    %6009 = vmatprep.subr.bf16.mxu0 %v2976
    %6010 = vmatpush1.bf16.msra.mxu0 %v2975
    %6011 = vmatprep.subr.bf16.mxu0 %v2972
    %6012 = vmatpush1.bf16.msra.mxu0 %v2971
    %6013 = vmatprep.subr.bf16.mxu0 %v2968
    %6014 = vmatpush1.bf16.msra.mxu0 %v2967
    %6015 = vmatprep.subr.bf16.mxu0 %v3028
    %6016 = vmatpush2.bf16.msra.mxu0 %v3027
    %6017 = vmatprep.subr.bf16.mxu0 %v3024
    %6018 = vmatpush2.bf16.msra.mxu0 %v3023
    %6019 = vmatprep.subr.bf16.mxu0 %v3020
    %6020 = vmatpush2.bf16.msra.mxu0 %v3019
    %6021 = vmatprep.subr.bf16.mxu0 %v3016
    %6022 = vmatpush2.bf16.msra.mxu0 %v3015
    %6023 = vmatprep.subr.bf16.mxu0 %v3012
    %6024 = vmatpush2.bf16.msra.mxu0 %v3011
    %6025 = vmatprep.subr.bf16.mxu0 %v3008
    %6026 = vmatpush2.bf16.msra.mxu0 %v3007
    %6027 = vmatprep.subr.bf16.mxu0 %v3004
    %6028 = vmatpush2.bf16.msra.mxu0 %v3003
    %6029 = vmatprep.subr.bf16.mxu0 %v3000
    %6030 = vmatpush2.bf16.msra.mxu0 %v2999
    %6031 = vmatprep.mubr.bf16.mxu0 %v5996
    %6032 = vmatmul.mubr.bf16.gmra.mxu0 %v5988
    %v6033 = vpop.f32.mrf.mxu0
    %v6034 = vadd.f32 %v2758, %v6033
    %v6035 = vpop.f32.mrf.mxu0
    %v6036 = vadd.f32 %v2762, %v6035
    %v6037 = vpop.f32.mrf.mxu0
    %v6038 = vpop.f32.mrf.mxu0
    %6039 = vdwg.mxu0
    %6040 = vmatprep.subr.bf16.mxu0 %v2998
    %6041 = vmatpush1.bf16.msra.mxu0 %v2997
    %6042 = vmatprep.subr.bf16.mxu0 %v2994
    %6043 = vmatpush1.bf16.msra.mxu0 %v2993
    %6044 = vmatprep.subr.bf16.mxu0 %v2990
    %6045 = vmatpush1.bf16.msra.mxu0 %v2989
    %6046 = vmatprep.subr.bf16.mxu0 %v2986
    %6047 = vmatpush1.bf16.msra.mxu0 %v2985
    %6048 = vmatprep.subr.bf16.mxu0 %v2982
    %6049 = vmatpush1.bf16.msra.mxu0 %v2981
    %6050 = vmatprep.subr.bf16.mxu0 %v2978
    %6051 = vmatpush1.bf16.msra.mxu0 %v2977
    %6052 = vmatprep.subr.bf16.mxu0 %v2974
    %6053 = vmatpush1.bf16.msra.mxu0 %v2973
    %6054 = vmatprep.subr.bf16.mxu0 %v2970
    %6055 = vmatpush1.bf16.msra.mxu0 %v2969
    %6056 = vmatprep.subr.bf16.mxu0 %v3030
    %6057 = vmatpush2.bf16.msra.mxu0 %v3029
    %6058 = vmatprep.subr.bf16.mxu0 %v3026
    %6059 = vmatpush2.bf16.msra.mxu0 %v3025
    %6060 = vmatprep.subr.bf16.mxu0 %v3022
    %6061 = vmatpush2.bf16.msra.mxu0 %v3021
    %6062 = vmatprep.subr.bf16.mxu0 %v3018
    %6063 = vmatpush2.bf16.msra.mxu0 %v3017
    %6064 = vmatprep.subr.bf16.mxu0 %v3014
    %6065 = vmatpush2.bf16.msra.mxu0 %v3013
    %6066 = vmatprep.subr.bf16.mxu0 %v3010
    %6067 = vmatpush2.bf16.msra.mxu0 %v3009
    %6068 = vmatprep.subr.bf16.mxu0 %v3006
    %6069 = vmatpush2.bf16.msra.mxu0 %v3005
    %6070 = vmatprep.subr.bf16.mxu0 %v3002
    %6071 = vmatpush2.bf16.msra.mxu0 %v3001
    %6072 = vmatprep.mubr.bf16.mxu0 %v5996
    %6073 = vmatmul.mubr.bf16.gmra.mxu0 %v5988
    %v6074 = vpop.f32.mrf.mxu0
    %v6075 = vadd.f32 %v2766, %v6074
    %v6076 = vpop.f32.mrf.mxu0
    %v6077 = vadd.f32 %v2770, %v6076
    %v6078 = vpop.f32.mrf.mxu0
    %v6079 = vpop.f32.mrf.mxu0
    %6080 = vdwg.mxu0
    %v6081 = vxor.u32 %v6034, 2147483648
    %v6082 = vmul.f32 %v6081, 1.442695
    %v6083 = vpow.pop %v6082
    %v6084 = vadd.f32 %v6083, 1.0
    %v6085 = vrcp.pop %v6084
    %v6086 = vmul.f32 1.0, %v6085
    %v6087 = vxor.u32 %v6036, 2147483648
    %v6088 = vmul.f32 %v6087, 1.442695
    %v6089 = vpow.pop %v6088
    %v6090 = vadd.f32 %v6089, 1.0
    %v6091 = vrcp.pop %v6090
    %v6092 = vmul.f32 1.0, %v6091
    %v6093 = vtanh.pop %v6075
    %v6094 = vxor.u32 %v6077, 2147483648
    %v6095 = vmul.f32 %v6094, 1.442695
    %v6096 = vpow.pop %v6095
    %v6097 = vadd.f32 %v6096, 1.0
    %v6098 = vrcp.pop %v6097
    %v6099 = vmul.f32 1.0, %v6098
    %v6100 = vmul.f32 %v6092, %v5516
    %v6101 = vmul.f32 %v6086, %v6093
    %v6102 = vadd.f32 %v6100, %v6101
    %v6103 = vtanh.pop %v6102
    %v6104 = vmul.f32 %v6099, %v6103
    %v6105 = vpack.c.bf16 %v5945, %v5945
    %v6106 = vpack.c.bf16 %v5946, %v5946
    %v6107 = vpack.c.bf16 %v5947, %v5947
    %v6108 = vpack.c.bf16 %v5948, %v5948
    %v6109 = vpack.c.bf16 %v5949, %v5949
    %v6110 = vpack.c.bf16 %v5950, %v5950
    %v6111 = vpack.c.bf16 %v5951, %v5951
    %v6112 = vpack.c.bf16 %v5952, %v5952
    %v6121 = vunpack.c.l.b16 %v6105
    %v6122 = vunpack.c.l.b16 %v6106
    %v6123 = vunpack.c.l.b16 %v6107
    %v6124 = vunpack.c.l.b16 %v6108
    %v6125 = vunpack.c.l.b16 %v6109
    %v6126 = vunpack.c.l.b16 %v6110
    %v6127 = vunpack.c.l.b16 %v6111
    %v6128 = vunpack.c.l.b16 %v6112
    %v6129 = vrot.slane %v6121, 5
    %v6130 = vrot.slane %v6122, 4
    %v6131 = vsel %vm2731, %v6130, %v6129
    %v6132 = vrot.slane %v6123, 3
    %v6133 = vsel %vm2734, %v6132, %v6131
    %v6134 = vrot.slane %v6124, 2
    %v6135 = vsel %vm2737, %v6134, %v6133
    %v6136 = vrot.slane %v6125, 1
    %v6137 = vsel %vm2740, %v6136, %v6135
    %v6138 = vsel %vm2743, %v6126, %v6137
    %v6139 = vrot.slane %v6127, 7
    %v6140 = vsel %vm2746, %v6139, %v6138
    %v6141 = vrot.slane %v6128, 6
    %v6142 = vsel %vm2749, %v6141, %v6140
    %v6143 = vpack.c.b16 %v6142, %v6142
    %6145 = vmatprep.subr.bf16.mxu0 %v2317
    %6146 = vmatpush1.bf16.msra.mxu0 %v2316
    %6147 = vmatprep.subr.bf16.mxu0 %v2313
    %6148 = vmatpush1.bf16.msra.mxu0 %v2312
    %6149 = vmatprep.subr.bf16.mxu0 %v2309
    %6150 = vmatpush1.bf16.msra.mxu0 %v2308
    %6151 = vmatprep.subr.bf16.mxu0 %v2305
    %6152 = vmatpush1.bf16.msra.mxu0 %v2304
    %6153 = vmatprep.subr.bf16.mxu0 %v2301
    %6154 = vmatpush1.bf16.msra.mxu0 %v2300
    %6155 = vmatprep.subr.bf16.mxu0 %v2297
    %6156 = vmatpush1.bf16.msra.mxu0 %v2296
    %6157 = vmatprep.subr.bf16.mxu0 %v2293
    %6158 = vmatpush1.bf16.msra.mxu0 %v2292
    %6159 = vmatprep.subr.bf16.mxu0 %v2289
    %6160 = vmatpush1.bf16.msra.mxu0 %v2288
    %6161 = vmatprep.subr.bf16.mxu0 0
    %6162 = vmatpush2.bf16.msra.mxu0 0
    %6163 = vmatprep.subr.bf16.mxu0 0
    %6164 = vmatpush2.bf16.msra.mxu0 0
    %6165 = vmatprep.subr.bf16.mxu0 0
    %6166 = vmatpush2.bf16.msra.mxu0 0
    %6167 = vmatprep.subr.bf16.mxu0 0
    %6168 = vmatpush2.bf16.msra.mxu0 0
    %6169 = vmatprep.subr.bf16.mxu0 0
    %6170 = vmatpush2.bf16.msra.mxu0 0
    %6171 = vmatprep.subr.bf16.mxu0 0
    %6172 = vmatpush2.bf16.msra.mxu0 0
    %6173 = vmatprep.subr.bf16.mxu0 0
    %6174 = vmatpush2.bf16.msra.mxu0 0
    %6175 = vmatprep.subr.bf16.mxu0 0
    %6176 = vmatpush2.bf16.msra.mxu0 0
    %6177 = vmatprep.mubr.bf16.mxu0 0
    %6178 = vmatmul.mubr.bf16.gmra.mxu0 %v6143
    %v6179 = vpop.f32.mrf.mxu0
    %v6180 = vadd.f32 0.0, %v6179
    %v6181 = vpop.f32.mrf.mxu0
    %v6182 = vadd.f32 0.0, %v6181
    %v6183 = vpop.f32.mrf.mxu0
    %v6184 = vpop.f32.mrf.mxu0
    %6185 = vdwg.mxu0
    %6186 = vmatprep.subr.bf16.mxu0 %v2319
    %6187 = vmatpush1.bf16.msra.mxu0 %v2318
    %6188 = vmatprep.subr.bf16.mxu0 %v2315
    %6189 = vmatpush1.bf16.msra.mxu0 %v2314
    %6190 = vmatprep.subr.bf16.mxu0 %v2311
    %6191 = vmatpush1.bf16.msra.mxu0 %v2310
    %6192 = vmatprep.subr.bf16.mxu0 %v2307
    %6193 = vmatpush1.bf16.msra.mxu0 %v2306
    %6194 = vmatprep.subr.bf16.mxu0 %v2303
    %6195 = vmatpush1.bf16.msra.mxu0 %v2302
    %6196 = vmatprep.subr.bf16.mxu0 %v2299
    %6197 = vmatpush1.bf16.msra.mxu0 %v2298
    %6198 = vmatprep.subr.bf16.mxu0 %v2295
    %6199 = vmatpush1.bf16.msra.mxu0 %v2294
    %6200 = vmatprep.subr.bf16.mxu0 %v2291
    %6201 = vmatpush1.bf16.msra.mxu0 %v2290
    %6202 = vmatprep.subr.bf16.mxu0 0
    %6203 = vmatpush2.bf16.msra.mxu0 0
    %6204 = vmatprep.subr.bf16.mxu0 0
    %6205 = vmatpush2.bf16.msra.mxu0 0
    %6206 = vmatprep.subr.bf16.mxu0 0
    %6207 = vmatpush2.bf16.msra.mxu0 0
    %6208 = vmatprep.subr.bf16.mxu0 0
    %6209 = vmatpush2.bf16.msra.mxu0 0
    %6210 = vmatprep.subr.bf16.mxu0 0
    %6211 = vmatpush2.bf16.msra.mxu0 0
    %6212 = vmatprep.subr.bf16.mxu0 0
    %6213 = vmatpush2.bf16.msra.mxu0 0
    %6214 = vmatprep.subr.bf16.mxu0 0
    %6215 = vmatpush2.bf16.msra.mxu0 0
    %6216 = vmatprep.subr.bf16.mxu0 0
    %6217 = vmatpush2.bf16.msra.mxu0 0
    %6218 = vmatprep.mubr.bf16.mxu0 0
    %6219 = vmatmul.mubr.bf16.gmra.mxu0 %v6143
    %v6220 = vpop.f32.mrf.mxu0
    %v6221 = vadd.f32 0.0, %v6220
    %v6222 = vpop.f32.mrf.mxu0
    %v6223 = vadd.f32 0.0, %v6222
    %v6224 = vpop.f32.mrf.mxu0
    %v6225 = vpop.f32.mrf.mxu0
    %6226 = vdwg.mxu0
    %v6231 = vrot.slane %v6180, 2
    %v6232 = vrot.slane %v6182, 2
    %v6233 = vrot.slane %v6221, 2
    %v6234 = vrot.slane %v6223, 2
    %v6235 = vrot.slane %v6180, 3
    %v6236 = vrot.slane %v6182, 3
    %v6237 = vrot.slane %v6221, 3
    %v6238 = vrot.slane %v6223, 3
    %v6239 = vrot.slane %v6180, 4
    %v6240 = vrot.slane %v6182, 4
    %v6241 = vrot.slane %v6221, 4
    %v6242 = vrot.slane %v6223, 4
    %v6243 = vrot.slane %v6180, 5
    %v6244 = vrot.slane %v6182, 5
    %v6245 = vrot.slane %v6221, 5
    %v6246 = vrot.slane %v6223, 5
    %v6247 = vrot.slane %v6180, 6
    %v6248 = vrot.slane %v6182, 6
    %v6249 = vrot.slane %v6221, 6
    %v6250 = vrot.slane %v6223, 6
    %v6251 = vrot.slane %v6180, 7
    %v6252 = vrot.slane %v6182, 7
    %v6253 = vrot.slane %v6221, 7
    %v6254 = vrot.slane %v6223, 7
    %v6255 = vrot.slane %v6180, 1
    %v6256 = vrot.slane %v6182, 1
    %v6257 = vrot.slane %v6221, 1
    %v6258 = vrot.slane %v6223, 1
    %v6291 = vadd.f32 %v1830, %v6231
    %v6292 = vadd.f32 %v1832, %v6232
    %v6293 = vadd.f32 %v2049, %v6233
    %v6294 = vadd.f32 %v2051, %v6234
    %v6295 = vadd.f32 %v1834, %v6235
    %v6296 = vadd.f32 %v1836, %v6236
    %v6297 = vadd.f32 %v2053, %v6237
    %v6298 = vadd.f32 %v2055, %v6238
    %v6299 = vadd.f32 %v1840, %v6239
    %v6300 = vadd.f32 %v1842, %v6240
    %v6301 = vadd.f32 %v2059, %v6241
    %v6302 = vadd.f32 %v2061, %v6242
    %v6303 = vadd.f32 %v1844, %v6243
    %v6304 = vadd.f32 %v1846, %v6244
    %v6305 = vadd.f32 %v2063, %v6245
    %v6306 = vadd.f32 %v2065, %v6246
    %v6307 = vadd.f32 %v1850, %v6247
    %v6308 = vadd.f32 %v1852, %v6248
    %v6309 = vadd.f32 %v2069, %v6249
    %v6310 = vadd.f32 %v2071, %v6250
    %v6311 = vadd.f32 %v1854, %v6251
    %v6312 = vadd.f32 %v1856, %v6252
    %v6313 = vadd.f32 %v2073, %v6253
    %v6314 = vadd.f32 %v2075, %v6254
    %v6315 = vadd.f32 %v1860, %v6180
    %v6316 = vadd.f32 %v1862, %v6182
    %v6317 = vadd.f32 %v2079, %v6221
    %v6318 = vadd.f32 %v2081, %v6223
    %v6319 = vadd.f32 %v1864, %v6255
    %v6320 = vadd.f32 %v1866, %v6256
    %v6321 = vadd.f32 %v2083, %v6257
    %v6322 = vadd.f32 %v2085, %v6258
    %v6323 = vxor.u32 %v6291, 2147483648
    %v6324 = vxor.u32 %v6295, 2147483648
    %v6325 = vxor.u32 %v6299, 2147483648
    %v6326 = vxor.u32 %v6303, 2147483648
    %v6327 = vxor.u32 %v6307, 2147483648
    %v6328 = vxor.u32 %v6311, 2147483648
    %v6329 = vxor.u32 %v6315, 2147483648
    %v6330 = vxor.u32 %v6319, 2147483648
    %v6331 = vmul.f32 %v6323, 1.442695
    %v6332 = vpow.pop %v6331
    %v6333 = vmul.f32 %v6324, 1.442695
    %v6334 = vpow.pop %v6333
    %v6335 = vmul.f32 %v6325, 1.442695
    %v6336 = vpow.pop %v6335
    %v6337 = vmul.f32 %v6326, 1.442695
    %v6338 = vpow.pop %v6337
    %v6339 = vmul.f32 %v6327, 1.442695
    %v6340 = vpow.pop %v6339
    %v6341 = vmul.f32 %v6328, 1.442695
    %v6342 = vpow.pop %v6341
    %v6343 = vmul.f32 %v6329, 1.442695
    %v6344 = vpow.pop %v6343
    %v6345 = vmul.f32 %v6330, 1.442695
    %v6346 = vpow.pop %v6345
    %v6347 = vadd.f32 %v6332, 1.0
    %v6348 = vadd.f32 %v6334, 1.0
    %v6349 = vadd.f32 %v6336, 1.0
    %v6350 = vadd.f32 %v6338, 1.0
    %v6351 = vadd.f32 %v6340, 1.0
    %v6352 = vadd.f32 %v6342, 1.0
    %v6353 = vadd.f32 %v6344, 1.0
    %v6354 = vadd.f32 %v6346, 1.0
    %v6355 = vrcp.pop %v6347
    %v6356 = vmul.f32 1.0, %v6355
    %v6357 = vrcp.pop %v6348
    %v6358 = vmul.f32 1.0, %v6357
    %v6359 = vrcp.pop %v6349
    %v6360 = vmul.f32 1.0, %v6359
    %v6361 = vrcp.pop %v6350
    %v6362 = vmul.f32 1.0, %v6361
    %v6363 = vrcp.pop %v6351
    %v6364 = vmul.f32 1.0, %v6363
    %v6365 = vrcp.pop %v6352
    %v6366 = vmul.f32 1.0, %v6365
    %v6367 = vrcp.pop %v6353
    %v6368 = vmul.f32 1.0, %v6367
    %v6369 = vrcp.pop %v6354
    %v6370 = vmul.f32 1.0, %v6369
    %v6371 = vxor.u32 %v6292, 2147483648
    %v6372 = vxor.u32 %v6296, 2147483648
    %v6373 = vxor.u32 %v6300, 2147483648
    %v6374 = vxor.u32 %v6304, 2147483648
    %v6375 = vxor.u32 %v6308, 2147483648
    %v6376 = vxor.u32 %v6312, 2147483648
    %v6377 = vxor.u32 %v6316, 2147483648
    %v6378 = vxor.u32 %v6320, 2147483648
    %v6379 = vmul.f32 %v6371, 1.442695
    %v6380 = vpow.pop %v6379
    %v6381 = vmul.f32 %v6372, 1.442695
    %v6382 = vpow.pop %v6381
    %v6383 = vmul.f32 %v6373, 1.442695
    %v6384 = vpow.pop %v6383
    %v6385 = vmul.f32 %v6374, 1.442695
    %v6386 = vpow.pop %v6385
    %v6387 = vmul.f32 %v6375, 1.442695
    %v6388 = vpow.pop %v6387
    %v6389 = vmul.f32 %v6376, 1.442695
    %v6390 = vpow.pop %v6389
    %v6391 = vmul.f32 %v6377, 1.442695
    %v6392 = vpow.pop %v6391
    %v6393 = vmul.f32 %v6378, 1.442695
    %v6394 = vpow.pop %v6393
    %v6395 = vadd.f32 %v6380, 1.0
    %v6396 = vadd.f32 %v6382, 1.0
    %v6397 = vadd.f32 %v6384, 1.0
    %v6398 = vadd.f32 %v6386, 1.0
    %v6399 = vadd.f32 %v6388, 1.0
    %v6400 = vadd.f32 %v6390, 1.0
    %v6401 = vadd.f32 %v6392, 1.0
    %v6402 = vadd.f32 %v6394, 1.0
    %v6403 = vrcp.pop %v6395
    %v6404 = vmul.f32 1.0, %v6403
    %v6405 = vrcp.pop %v6396
    %v6406 = vmul.f32 1.0, %v6405
    %v6407 = vrcp.pop %v6397
    %v6408 = vmul.f32 1.0, %v6407
    %v6409 = vrcp.pop %v6398
    %v6410 = vmul.f32 1.0, %v6409
    %v6411 = vrcp.pop %v6399
    %v6412 = vmul.f32 1.0, %v6411
    %v6413 = vrcp.pop %v6400
    %v6414 = vmul.f32 1.0, %v6413
    %v6415 = vrcp.pop %v6401
    %v6416 = vmul.f32 1.0, %v6415
    %v6417 = vrcp.pop %v6402
    %v6418 = vmul.f32 1.0, %v6417
    %v6419 = vtanh.pop %v6293
    %v6420 = vtanh.pop %v6297
    %v6421 = vtanh.pop %v6301
    %v6422 = vtanh.pop %v6305
    %v6423 = vtanh.pop %v6309
    %v6424 = vtanh.pop %v6313
    %v6425 = vtanh.pop %v6317
    %v6426 = vtanh.pop %v6321
    %v6427 = vxor.u32 %v6294, 2147483648
    %v6428 = vxor.u32 %v6298, 2147483648
    %v6429 = vxor.u32 %v6302, 2147483648
    %v6430 = vxor.u32 %v6306, 2147483648
    %v6431 = vxor.u32 %v6310, 2147483648
    %v6432 = vxor.u32 %v6314, 2147483648
    %v6433 = vxor.u32 %v6318, 2147483648
    %v6434 = vxor.u32 %v6322, 2147483648
    %v6435 = vmul.f32 %v6427, 1.442695
    %v6436 = vpow.pop %v6435
    %v6437 = vmul.f32 %v6428, 1.442695
    %v6438 = vpow.pop %v6437
    %v6439 = vmul.f32 %v6429, 1.442695
    %v6440 = vpow.pop %v6439
    %v6441 = vmul.f32 %v6430, 1.442695
    %v6442 = vpow.pop %v6441
    %v6443 = vmul.f32 %v6431, 1.442695
    %v6444 = vpow.pop %v6443
    %v6445 = vmul.f32 %v6432, 1.442695
    %v6446 = vpow.pop %v6445
    %v6447 = vmul.f32 %v6433, 1.442695
    %v6448 = vpow.pop %v6447
    %v6449 = vmul.f32 %v6434, 1.442695
    %v6450 = vpow.pop %v6449
    %v6451 = vadd.f32 %v6436, 1.0
    %v6452 = vadd.f32 %v6438, 1.0
    %v6453 = vadd.f32 %v6440, 1.0
    %v6454 = vadd.f32 %v6442, 1.0
    %v6455 = vadd.f32 %v6444, 1.0
    %v6456 = vadd.f32 %v6446, 1.0
    %v6457 = vadd.f32 %v6448, 1.0
    %v6458 = vadd.f32 %v6450, 1.0
    %v6459 = vrcp.pop %v6451
    %v6460 = vmul.f32 1.0, %v6459
    %v6461 = vrcp.pop %v6452
    %v6462 = vmul.f32 1.0, %v6461
    %v6463 = vrcp.pop %v6453
    %v6464 = vmul.f32 1.0, %v6463
    %v6465 = vrcp.pop %v6454
    %v6466 = vmul.f32 1.0, %v6465
    %v6467 = vrcp.pop %v6455
    %v6468 = vmul.f32 1.0, %v6467
    %v6469 = vrcp.pop %v6456
    %v6470 = vmul.f32 1.0, %v6469
    %v6471 = vrcp.pop %v6457
    %v6472 = vmul.f32 1.0, %v6471
    %v6473 = vrcp.pop %v6458
    %v6474 = vmul.f32 1.0, %v6473
    %v6483 = vrot.slane %v5929, 7
    %v6484 = vrot.slane %v5930, 7
    %v6485 = vrot.slane %v5931, 7
    %v6486 = vrot.slane %v5932, 7
    %v6487 = vrot.slane %v5933, 7
    %v6488 = vrot.slane %v5934, 7
    %v6489 = vrot.slane %v5935, 7
    %v6490 = vrot.slane %v5936, 7
    %v6499 = vmul.f32 %v6404, %v6483
    %v6500 = vmul.f32 %v6406, %v6484
    %v6501 = vmul.f32 %v6408, %v6485
    %v6502 = vmul.f32 %v6410, %v6486
    %v6503 = vmul.f32 %v6412, %v6487
    %v6504 = vmul.f32 %v6414, %v6488
    %v6505 = vmul.f32 %v6416, %v6489
    %v6506 = vmul.f32 %v6418, %v6490
    %v6507 = vmul.f32 %v6356, %v6419
    %v6508 = vmul.f32 %v6358, %v6420
    %v6509 = vmul.f32 %v6360, %v6421
    %v6510 = vmul.f32 %v6362, %v6422
    %v6511 = vmul.f32 %v6364, %v6423
    %v6512 = vmul.f32 %v6366, %v6424
    %v6513 = vmul.f32 %v6368, %v6425
    %v6514 = vmul.f32 %v6370, %v6426
    %v6515 = vadd.f32 %v6499, %v6507
    %v6516 = vadd.f32 %v6500, %v6508
    %v6517 = vadd.f32 %v6501, %v6509
    %v6518 = vadd.f32 %v6502, %v6510
    %v6519 = vadd.f32 %v6503, %v6511
    %v6520 = vadd.f32 %v6504, %v6512
    %v6521 = vadd.f32 %v6505, %v6513
    %v6522 = vadd.f32 %v6506, %v6514
    %v6523 = vtanh.pop %v6515
    %v6524 = vtanh.pop %v6516
    %v6525 = vtanh.pop %v6517
    %v6526 = vtanh.pop %v6518
    %v6527 = vtanh.pop %v6519
    %v6528 = vtanh.pop %v6520
    %v6529 = vtanh.pop %v6521
    %v6530 = vtanh.pop %v6522
    %v6531 = vmul.f32 %v6460, %v6523
    %v6532 = vmul.f32 %v6462, %v6524
    %v6533 = vmul.f32 %v6464, %v6525
    %v6534 = vmul.f32 %v6466, %v6526
    %v6535 = vmul.f32 %v6468, %v6527
    %v6536 = vmul.f32 %v6470, %v6528
    %v6537 = vmul.f32 %v6472, %v6529
    %v6538 = vmul.f32 %v6474, %v6530
    %v6547 = vrot.slane %v6532, 7
    %v6548 = vsel %vm2749, %v6547, %v6531
    %v6549 = vrot.slane %v6533, 6
    %v6550 = vrot.slane %v6534, 5
    %v6551 = vsel %vm2731, %v6550, %v6549
    %v6552 = vrot.slane %v6535, 4
    %v6553 = vsel %vm2734, %v6552, %v6551
    %v6554 = vrot.slane %v6536, 3
    %v6555 = vsel %vm2737, %v6554, %v6553
    %v6556 = vrot.slane %v6537, 2
    %v6557 = vsel %vm2740, %v6556, %v6555
    %v6558 = vrot.slane %v6538, 1
    %v6559 = vsel %vm2743, %v6558, %v6557
    %v6563 = vrot.slane %v6104, 2
    %v6565 = vpack.c.bf16 %v6559, %v6548
    %v6566 = vpack.c.bf16 %v6563, %v6563
    %v6569 = vrot.slane %v6565, 3
    %v6570 = vrot.slane %v6566, 3
    %6573 = vmatprep.subr.bf16.mxu0 %v2996
    %6574 = vmatpush1.bf16.msra.mxu0 %v2995
    %6575 = vmatprep.subr.bf16.mxu0 %v2992
    %6576 = vmatpush1.bf16.msra.mxu0 %v2991
    %6577 = vmatprep.subr.bf16.mxu0 %v2988
    %6578 = vmatpush1.bf16.msra.mxu0 %v2987
    %6579 = vmatprep.subr.bf16.mxu0 %v2984
    %6580 = vmatpush1.bf16.msra.mxu0 %v2983
    %6581 = vmatprep.subr.bf16.mxu0 %v2980
    %6582 = vmatpush1.bf16.msra.mxu0 %v2979
    %6583 = vmatprep.subr.bf16.mxu0 %v2976
    %6584 = vmatpush1.bf16.msra.mxu0 %v2975
    %6585 = vmatprep.subr.bf16.mxu0 %v2972
    %6586 = vmatpush1.bf16.msra.mxu0 %v2971
    %6587 = vmatprep.subr.bf16.mxu0 %v2968
    %6588 = vmatpush1.bf16.msra.mxu0 %v2967
    %6589 = vmatprep.subr.bf16.mxu0 %v3028
    %6590 = vmatpush2.bf16.msra.mxu0 %v3027
    %6591 = vmatprep.subr.bf16.mxu0 %v3024
    %6592 = vmatpush2.bf16.msra.mxu0 %v3023
    %6593 = vmatprep.subr.bf16.mxu0 %v3020
    %6594 = vmatpush2.bf16.msra.mxu0 %v3019
    %6595 = vmatprep.subr.bf16.mxu0 %v3016
    %6596 = vmatpush2.bf16.msra.mxu0 %v3015
    %6597 = vmatprep.subr.bf16.mxu0 %v3012
    %6598 = vmatpush2.bf16.msra.mxu0 %v3011
    %6599 = vmatprep.subr.bf16.mxu0 %v3008
    %6600 = vmatpush2.bf16.msra.mxu0 %v3007
    %6601 = vmatprep.subr.bf16.mxu0 %v3004
    %6602 = vmatpush2.bf16.msra.mxu0 %v3003
    %6603 = vmatprep.subr.bf16.mxu0 %v3000
    %6604 = vmatpush2.bf16.msra.mxu0 %v2999
    %6605 = vmatprep.mubr.bf16.mxu0 %v6570
    %6606 = vmatmul.mubr.bf16.gmra.mxu0 %v6569
    %v6607 = vpop.f32.mrf.mxu0
    %v6608 = vadd.f32 %v2758, %v6607
    %v6609 = vpop.f32.mrf.mxu0
    %v6610 = vadd.f32 %v2762, %v6609
    %v6611 = vpop.f32.mrf.mxu0
    %v6612 = vpop.f32.mrf.mxu0
    %6613 = vdwg.mxu0
    %6614 = vmatprep.subr.bf16.mxu0 %v2998
    %6615 = vmatpush1.bf16.msra.mxu0 %v2997
    %6616 = vmatprep.subr.bf16.mxu0 %v2994
    %6617 = vmatpush1.bf16.msra.mxu0 %v2993
    %6618 = vmatprep.subr.bf16.mxu0 %v2990
    %6619 = vmatpush1.bf16.msra.mxu0 %v2989
    %6620 = vmatprep.subr.bf16.mxu0 %v2986
    %6621 = vmatpush1.bf16.msra.mxu0 %v2985
    %6622 = vmatprep.subr.bf16.mxu0 %v2982
    %6623 = vmatpush1.bf16.msra.mxu0 %v2981
    %6624 = vmatprep.subr.bf16.mxu0 %v2978
    %6625 = vmatpush1.bf16.msra.mxu0 %v2977
    %6626 = vmatprep.subr.bf16.mxu0 %v2974
    %6627 = vmatpush1.bf16.msra.mxu0 %v2973
    %6628 = vmatprep.subr.bf16.mxu0 %v2970
    %6629 = vmatpush1.bf16.msra.mxu0 %v2969
    %6630 = vmatprep.subr.bf16.mxu0 %v3030
    %6631 = vmatpush2.bf16.msra.mxu0 %v3029
    %6632 = vmatprep.subr.bf16.mxu0 %v3026
    %6633 = vmatpush2.bf16.msra.mxu0 %v3025
    %6634 = vmatprep.subr.bf16.mxu0 %v3022
    %6635 = vmatpush2.bf16.msra.mxu0 %v3021
    %6636 = vmatprep.subr.bf16.mxu0 %v3018
    %6637 = vmatpush2.bf16.msra.mxu0 %v3017
    %6638 = vmatprep.subr.bf16.mxu0 %v3014
    %6639 = vmatpush2.bf16.msra.mxu0 %v3013
    %6640 = vmatprep.subr.bf16.mxu0 %v3010
    %6641 = vmatpush2.bf16.msra.mxu0 %v3009
    %6642 = vmatprep.subr.bf16.mxu0 %v3006
    %6643 = vmatpush2.bf16.msra.mxu0 %v3005
    %6644 = vmatprep.subr.bf16.mxu0 %v3002
    %6645 = vmatpush2.bf16.msra.mxu0 %v3001
    %6646 = vmatprep.mubr.bf16.mxu0 %v6570
    %6647 = vmatmul.mubr.bf16.gmra.mxu0 %v6569
    %v6648 = vpop.f32.mrf.mxu0
    %v6649 = vadd.f32 %v2766, %v6648
    %v6650 = vpop.f32.mrf.mxu0
    %v6651 = vadd.f32 %v2770, %v6650
    %v6652 = vpop.f32.mrf.mxu0
    %v6653 = vpop.f32.mrf.mxu0
    %6654 = vdwg.mxu0
    %v6655 = vxor.u32 %v6608, 2147483648
    %v6656 = vmul.f32 %v6655, 1.442695
    %v6657 = vpow.pop %v6656
    %v6658 = vadd.f32 %v6657, 1.0
    %v6659 = vrcp.pop %v6658
    %v6660 = vmul.f32 1.0, %v6659
    %v6661 = vxor.u32 %v6610, 2147483648
    %v6662 = vmul.f32 %v6661, 1.442695
    %v6663 = vpow.pop %v6662
    %v6664 = vadd.f32 %v6663, 1.0
    %v6665 = vrcp.pop %v6664
    %v6666 = vmul.f32 1.0, %v6665
    %v6667 = vtanh.pop %v6649
    %v6668 = vxor.u32 %v6651, 2147483648
    %v6669 = vmul.f32 %v6668, 1.442695
    %v6670 = vpow.pop %v6669
    %v6671 = vadd.f32 %v6670, 1.0
    %v6672 = vrcp.pop %v6671
    %v6673 = vmul.f32 1.0, %v6672
    %v6674 = vmul.f32 %v6666, %v6102
    %v6675 = vmul.f32 %v6660, %v6667
    %v6676 = vadd.f32 %v6674, %v6675
    %v6677 = vtanh.pop %v6676
    %v6678 = vmul.f32 %v6673, %v6677
    %v6679 = vpack.c.bf16 %v6531, %v6531
    %v6680 = vpack.c.bf16 %v6532, %v6532
    %v6681 = vpack.c.bf16 %v6533, %v6533
    %v6682 = vpack.c.bf16 %v6534, %v6534
    %v6683 = vpack.c.bf16 %v6535, %v6535
    %v6684 = vpack.c.bf16 %v6536, %v6536
    %v6685 = vpack.c.bf16 %v6537, %v6537
    %v6686 = vpack.c.bf16 %v6538, %v6538
    %v6695 = vunpack.c.l.b16 %v6679
    %v6696 = vunpack.c.l.b16 %v6680
    %v6697 = vunpack.c.l.b16 %v6681
    %v6698 = vunpack.c.l.b16 %v6682
    %v6699 = vunpack.c.l.b16 %v6683
    %v6700 = vunpack.c.l.b16 %v6684
    %v6701 = vunpack.c.l.b16 %v6685
    %v6702 = vunpack.c.l.b16 %v6686
    %v6703 = vrot.slane %v6695, 6
    %v6704 = vrot.slane %v6696, 5
    %v6705 = vsel %vm2731, %v6704, %v6703
    %v6706 = vrot.slane %v6697, 4
    %v6707 = vsel %vm2734, %v6706, %v6705
    %v6708 = vrot.slane %v6698, 3
    %v6709 = vsel %vm2737, %v6708, %v6707
    %v6710 = vrot.slane %v6699, 2
    %v6711 = vsel %vm2740, %v6710, %v6709
    %v6712 = vrot.slane %v6700, 1
    %v6713 = vsel %vm2743, %v6712, %v6711
    %v6714 = vsel %vm2746, %v6701, %v6713
    %v6715 = vrot.slane %v6702, 7
    %v6716 = vsel %vm2749, %v6715, %v6714
    %v6717 = vpack.c.b16 %v6716, %v6716
    %6719 = vmatprep.subr.bf16.mxu0 %v2317
    %6720 = vmatpush1.bf16.msra.mxu0 %v2316
    %6721 = vmatprep.subr.bf16.mxu0 %v2313
    %6722 = vmatpush1.bf16.msra.mxu0 %v2312
    %6723 = vmatprep.subr.bf16.mxu0 %v2309
    %6724 = vmatpush1.bf16.msra.mxu0 %v2308
    %6725 = vmatprep.subr.bf16.mxu0 %v2305
    %6726 = vmatpush1.bf16.msra.mxu0 %v2304
    %6727 = vmatprep.subr.bf16.mxu0 %v2301
    %6728 = vmatpush1.bf16.msra.mxu0 %v2300
    %6729 = vmatprep.subr.bf16.mxu0 %v2297
    %6730 = vmatpush1.bf16.msra.mxu0 %v2296
    %6731 = vmatprep.subr.bf16.mxu0 %v2293
    %6732 = vmatpush1.bf16.msra.mxu0 %v2292
    %6733 = vmatprep.subr.bf16.mxu0 %v2289
    %6734 = vmatpush1.bf16.msra.mxu0 %v2288
    %6735 = vmatprep.subr.bf16.mxu0 0
    %6736 = vmatpush2.bf16.msra.mxu0 0
    %6737 = vmatprep.subr.bf16.mxu0 0
    %6738 = vmatpush2.bf16.msra.mxu0 0
    %6739 = vmatprep.subr.bf16.mxu0 0
    %6740 = vmatpush2.bf16.msra.mxu0 0
    %6741 = vmatprep.subr.bf16.mxu0 0
    %6742 = vmatpush2.bf16.msra.mxu0 0
    %6743 = vmatprep.subr.bf16.mxu0 0
    %6744 = vmatpush2.bf16.msra.mxu0 0
    %6745 = vmatprep.subr.bf16.mxu0 0
    %6746 = vmatpush2.bf16.msra.mxu0 0
    %6747 = vmatprep.subr.bf16.mxu0 0
    %6748 = vmatpush2.bf16.msra.mxu0 0
    %6749 = vmatprep.subr.bf16.mxu0 0
    %6750 = vmatpush2.bf16.msra.mxu0 0
    %6751 = vmatprep.mubr.bf16.mxu0 0
    %6752 = vmatmul.mubr.bf16.gmra.mxu0 %v6717
    %v6753 = vpop.f32.mrf.mxu0
    %v6754 = vadd.f32 0.0, %v6753
    %v6755 = vpop.f32.mrf.mxu0
    %v6756 = vadd.f32 0.0, %v6755
    %v6757 = vpop.f32.mrf.mxu0
    %v6758 = vpop.f32.mrf.mxu0
    %6759 = vdwg.mxu0
    %6760 = vmatprep.subr.bf16.mxu0 %v2319
    %6761 = vmatpush1.bf16.msra.mxu0 %v2318
    %6762 = vmatprep.subr.bf16.mxu0 %v2315
    %6763 = vmatpush1.bf16.msra.mxu0 %v2314
    %6764 = vmatprep.subr.bf16.mxu0 %v2311
    %6765 = vmatpush1.bf16.msra.mxu0 %v2310
    %6766 = vmatprep.subr.bf16.mxu0 %v2307
    %6767 = vmatpush1.bf16.msra.mxu0 %v2306
    %6768 = vmatprep.subr.bf16.mxu0 %v2303
    %6769 = vmatpush1.bf16.msra.mxu0 %v2302
    %6770 = vmatprep.subr.bf16.mxu0 %v2299
    %6771 = vmatpush1.bf16.msra.mxu0 %v2298
    %6772 = vmatprep.subr.bf16.mxu0 %v2295
    %6773 = vmatpush1.bf16.msra.mxu0 %v2294
    %6774 = vmatprep.subr.bf16.mxu0 %v2291
    %6775 = vmatpush1.bf16.msra.mxu0 %v2290
    %6776 = vmatprep.subr.bf16.mxu0 0
    %6777 = vmatpush2.bf16.msra.mxu0 0
    %6778 = vmatprep.subr.bf16.mxu0 0
    %6779 = vmatpush2.bf16.msra.mxu0 0
    %6780 = vmatprep.subr.bf16.mxu0 0
    %6781 = vmatpush2.bf16.msra.mxu0 0
    %6782 = vmatprep.subr.bf16.mxu0 0
    %6783 = vmatpush2.bf16.msra.mxu0 0
    %6784 = vmatprep.subr.bf16.mxu0 0
    %6785 = vmatpush2.bf16.msra.mxu0 0
    %6786 = vmatprep.subr.bf16.mxu0 0
    %6787 = vmatpush2.bf16.msra.mxu0 0
    %6788 = vmatprep.subr.bf16.mxu0 0
    %6789 = vmatpush2.bf16.msra.mxu0 0
    %6790 = vmatprep.subr.bf16.mxu0 0
    %6791 = vmatpush2.bf16.msra.mxu0 0
    %6792 = vmatprep.mubr.bf16.mxu0 0
    %6793 = vmatmul.mubr.bf16.gmra.mxu0 %v6717
    %v6794 = vpop.f32.mrf.mxu0
    %v6795 = vadd.f32 0.0, %v6794
    %v6796 = vpop.f32.mrf.mxu0
    %v6797 = vadd.f32 0.0, %v6796
    %v6798 = vpop.f32.mrf.mxu0
    %v6799 = vpop.f32.mrf.mxu0
    %6800 = vdwg.mxu0
    %v6805 = vrot.slane %v6754, 1
    %v6806 = vrot.slane %v6756, 1
    %v6807 = vrot.slane %v6795, 1
    %v6808 = vrot.slane %v6797, 1
    %v6809 = vrot.slane %v6754, 2
    %v6810 = vrot.slane %v6756, 2
    %v6811 = vrot.slane %v6795, 2
    %v6812 = vrot.slane %v6797, 2
    %v6813 = vrot.slane %v6754, 3
    %v6814 = vrot.slane %v6756, 3
    %v6815 = vrot.slane %v6795, 3
    %v6816 = vrot.slane %v6797, 3
    %v6817 = vrot.slane %v6754, 4
    %v6818 = vrot.slane %v6756, 4
    %v6819 = vrot.slane %v6795, 4
    %v6820 = vrot.slane %v6797, 4
    %v6821 = vrot.slane %v6754, 5
    %v6822 = vrot.slane %v6756, 5
    %v6823 = vrot.slane %v6795, 5
    %v6824 = vrot.slane %v6797, 5
    %v6825 = vrot.slane %v6754, 6
    %v6826 = vrot.slane %v6756, 6
    %v6827 = vrot.slane %v6795, 6
    %v6828 = vrot.slane %v6797, 6
    %v6829 = vrot.slane %v6754, 7
    %v6830 = vrot.slane %v6756, 7
    %v6831 = vrot.slane %v6795, 7
    %v6832 = vrot.slane %v6797, 7
    %v6865 = vadd.f32 %v1830, %v6805
    %v6866 = vadd.f32 %v1832, %v6806
    %v6867 = vadd.f32 %v2049, %v6807
    %v6868 = vadd.f32 %v2051, %v6808
    %v6869 = vadd.f32 %v1834, %v6809
    %v6870 = vadd.f32 %v1836, %v6810
    %v6871 = vadd.f32 %v2053, %v6811
    %v6872 = vadd.f32 %v2055, %v6812
    %v6873 = vadd.f32 %v1840, %v6813
    %v6874 = vadd.f32 %v1842, %v6814
    %v6875 = vadd.f32 %v2059, %v6815
    %v6876 = vadd.f32 %v2061, %v6816
    %v6877 = vadd.f32 %v1844, %v6817
    %v6878 = vadd.f32 %v1846, %v6818
    %v6879 = vadd.f32 %v2063, %v6819
    %v6880 = vadd.f32 %v2065, %v6820
    %v6881 = vadd.f32 %v1850, %v6821
    %v6882 = vadd.f32 %v1852, %v6822
    %v6883 = vadd.f32 %v2069, %v6823
    %v6884 = vadd.f32 %v2071, %v6824
    %v6885 = vadd.f32 %v1854, %v6825
    %v6886 = vadd.f32 %v1856, %v6826
    %v6887 = vadd.f32 %v2073, %v6827
    %v6888 = vadd.f32 %v2075, %v6828
    %v6889 = vadd.f32 %v1860, %v6829
    %v6890 = vadd.f32 %v1862, %v6830
    %v6891 = vadd.f32 %v2079, %v6831
    %v6892 = vadd.f32 %v2081, %v6832
    %v6893 = vadd.f32 %v1864, %v6754
    %v6894 = vadd.f32 %v1866, %v6756
    %v6895 = vadd.f32 %v2083, %v6795
    %v6896 = vadd.f32 %v2085, %v6797
    %v6897 = vxor.u32 %v6865, 2147483648
    %v6898 = vxor.u32 %v6869, 2147483648
    %v6899 = vxor.u32 %v6873, 2147483648
    %v6900 = vxor.u32 %v6877, 2147483648
    %v6901 = vxor.u32 %v6881, 2147483648
    %v6902 = vxor.u32 %v6885, 2147483648
    %v6903 = vxor.u32 %v6889, 2147483648
    %v6904 = vxor.u32 %v6893, 2147483648
    %v6905 = vmul.f32 %v6897, 1.442695
    %v6906 = vpow.pop %v6905
    %v6907 = vmul.f32 %v6898, 1.442695
    %v6908 = vpow.pop %v6907
    %v6909 = vmul.f32 %v6899, 1.442695
    %v6910 = vpow.pop %v6909
    %v6911 = vmul.f32 %v6900, 1.442695
    %v6912 = vpow.pop %v6911
    %v6913 = vmul.f32 %v6901, 1.442695
    %v6914 = vpow.pop %v6913
    %v6915 = vmul.f32 %v6902, 1.442695
    %v6916 = vpow.pop %v6915
    %v6917 = vmul.f32 %v6903, 1.442695
    %v6918 = vpow.pop %v6917
    %v6919 = vmul.f32 %v6904, 1.442695
    %v6920 = vpow.pop %v6919
    %v6921 = vadd.f32 %v6906, 1.0
    %v6922 = vadd.f32 %v6908, 1.0
    %v6923 = vadd.f32 %v6910, 1.0
    %v6924 = vadd.f32 %v6912, 1.0
    %v6925 = vadd.f32 %v6914, 1.0
    %v6926 = vadd.f32 %v6916, 1.0
    %v6927 = vadd.f32 %v6918, 1.0
    %v6928 = vadd.f32 %v6920, 1.0
    %v6929 = vrcp.pop %v6921
    %v6930 = vmul.f32 1.0, %v6929
    %v6931 = vrcp.pop %v6922
    %v6932 = vmul.f32 1.0, %v6931
    %v6933 = vrcp.pop %v6923
    %v6934 = vmul.f32 1.0, %v6933
    %v6935 = vrcp.pop %v6924
    %v6936 = vmul.f32 1.0, %v6935
    %v6937 = vrcp.pop %v6925
    %v6938 = vmul.f32 1.0, %v6937
    %v6939 = vrcp.pop %v6926
    %v6940 = vmul.f32 1.0, %v6939
    %v6941 = vrcp.pop %v6927
    %v6942 = vmul.f32 1.0, %v6941
    %v6943 = vrcp.pop %v6928
    %v6944 = vmul.f32 1.0, %v6943
    %v6945 = vxor.u32 %v6866, 2147483648
    %v6946 = vxor.u32 %v6870, 2147483648
    %v6947 = vxor.u32 %v6874, 2147483648
    %v6948 = vxor.u32 %v6878, 2147483648
    %v6949 = vxor.u32 %v6882, 2147483648
    %v6950 = vxor.u32 %v6886, 2147483648
    %v6951 = vxor.u32 %v6890, 2147483648
    %v6952 = vxor.u32 %v6894, 2147483648
    %v6953 = vmul.f32 %v6945, 1.442695
    %v6954 = vpow.pop %v6953
    %v6955 = vmul.f32 %v6946, 1.442695
    %v6956 = vpow.pop %v6955
    %v6957 = vmul.f32 %v6947, 1.442695
    %v6958 = vpow.pop %v6957
    %v6959 = vmul.f32 %v6948, 1.442695
    %v6960 = vpow.pop %v6959
    %v6961 = vmul.f32 %v6949, 1.442695
    %v6962 = vpow.pop %v6961
    %v6963 = vmul.f32 %v6950, 1.442695
    %v6964 = vpow.pop %v6963
    %v6965 = vmul.f32 %v6951, 1.442695
    %v6966 = vpow.pop %v6965
    %v6967 = vmul.f32 %v6952, 1.442695
    %v6968 = vpow.pop %v6967
    %v6969 = vadd.f32 %v6954, 1.0
    %v6970 = vadd.f32 %v6956, 1.0
    %v6971 = vadd.f32 %v6958, 1.0
    %v6972 = vadd.f32 %v6960, 1.0
    %v6973 = vadd.f32 %v6962, 1.0
    %v6974 = vadd.f32 %v6964, 1.0
    %v6975 = vadd.f32 %v6966, 1.0
    %v6976 = vadd.f32 %v6968, 1.0
    %v6977 = vrcp.pop %v6969
    %v6978 = vmul.f32 1.0, %v6977
    %v6979 = vrcp.pop %v6970
    %v6980 = vmul.f32 1.0, %v6979
    %v6981 = vrcp.pop %v6971
    %v6982 = vmul.f32 1.0, %v6981
    %v6983 = vrcp.pop %v6972
    %v6984 = vmul.f32 1.0, %v6983
    %v6985 = vrcp.pop %v6973
    %v6986 = vmul.f32 1.0, %v6985
    %v6987 = vrcp.pop %v6974
    %v6988 = vmul.f32 1.0, %v6987
    %v6989 = vrcp.pop %v6975
    %v6990 = vmul.f32 1.0, %v6989
    %v6991 = vrcp.pop %v6976
    %v6992 = vmul.f32 1.0, %v6991
    %v6993 = vtanh.pop %v6867
    %v6994 = vtanh.pop %v6871
    %v6995 = vtanh.pop %v6875
    %v6996 = vtanh.pop %v6879
    %v6997 = vtanh.pop %v6883
    %v6998 = vtanh.pop %v6887
    %v6999 = vtanh.pop %v6891
    %v7000 = vtanh.pop %v6895
    %v7001 = vxor.u32 %v6868, 2147483648
    %v7002 = vxor.u32 %v6872, 2147483648
    %v7003 = vxor.u32 %v6876, 2147483648
    %v7004 = vxor.u32 %v6880, 2147483648
    %v7005 = vxor.u32 %v6884, 2147483648
    %v7006 = vxor.u32 %v6888, 2147483648
    %v7007 = vxor.u32 %v6892, 2147483648
    %v7008 = vxor.u32 %v6896, 2147483648
    %v7009 = vmul.f32 %v7001, 1.442695
    %v7010 = vpow.pop %v7009
    %v7011 = vmul.f32 %v7002, 1.442695
    %v7012 = vpow.pop %v7011
    %v7013 = vmul.f32 %v7003, 1.442695
    %v7014 = vpow.pop %v7013
    %v7015 = vmul.f32 %v7004, 1.442695
    %v7016 = vpow.pop %v7015
    %v7017 = vmul.f32 %v7005, 1.442695
    %v7018 = vpow.pop %v7017
    %v7019 = vmul.f32 %v7006, 1.442695
    %v7020 = vpow.pop %v7019
    %v7021 = vmul.f32 %v7007, 1.442695
    %v7022 = vpow.pop %v7021
    %v7023 = vmul.f32 %v7008, 1.442695
    %v7024 = vpow.pop %v7023
    %v7025 = vadd.f32 %v7010, 1.0
    %v7026 = vadd.f32 %v7012, 1.0
    %v7027 = vadd.f32 %v7014, 1.0
    %v7028 = vadd.f32 %v7016, 1.0
    %v7029 = vadd.f32 %v7018, 1.0
    %v7030 = vadd.f32 %v7020, 1.0
    %v7031 = vadd.f32 %v7022, 1.0
    %v7032 = vadd.f32 %v7024, 1.0
    %v7033 = vrcp.pop %v7025
    %v7034 = vmul.f32 1.0, %v7033
    %v7035 = vrcp.pop %v7026
    %v7036 = vmul.f32 1.0, %v7035
    %v7037 = vrcp.pop %v7027
    %v7038 = vmul.f32 1.0, %v7037
    %v7039 = vrcp.pop %v7028
    %v7040 = vmul.f32 1.0, %v7039
    %v7041 = vrcp.pop %v7029
    %v7042 = vmul.f32 1.0, %v7041
    %v7043 = vrcp.pop %v7030
    %v7044 = vmul.f32 1.0, %v7043
    %v7045 = vrcp.pop %v7031
    %v7046 = vmul.f32 1.0, %v7045
    %v7047 = vrcp.pop %v7032
    %v7048 = vmul.f32 1.0, %v7047
    %v7057 = vrot.slane %v6515, 7
    %v7058 = vrot.slane %v6516, 7
    %v7059 = vrot.slane %v6517, 7
    %v7060 = vrot.slane %v6518, 7
    %v7061 = vrot.slane %v6519, 7
    %v7062 = vrot.slane %v6520, 7
    %v7063 = vrot.slane %v6521, 7
    %v7064 = vrot.slane %v6522, 7
    %v7073 = vmul.f32 %v6978, %v7057
    %v7074 = vmul.f32 %v6980, %v7058
    %v7075 = vmul.f32 %v6982, %v7059
    %v7076 = vmul.f32 %v6984, %v7060
    %v7077 = vmul.f32 %v6986, %v7061
    %v7078 = vmul.f32 %v6988, %v7062
    %v7079 = vmul.f32 %v6990, %v7063
    %v7080 = vmul.f32 %v6992, %v7064
    %v7081 = vmul.f32 %v6930, %v6993
    %v7082 = vmul.f32 %v6932, %v6994
    %v7083 = vmul.f32 %v6934, %v6995
    %v7084 = vmul.f32 %v6936, %v6996
    %v7085 = vmul.f32 %v6938, %v6997
    %v7086 = vmul.f32 %v6940, %v6998
    %v7087 = vmul.f32 %v6942, %v6999
    %v7088 = vmul.f32 %v6944, %v7000
    %v7089 = vadd.f32 %v7073, %v7081
    %v7090 = vadd.f32 %v7074, %v7082
    %v7091 = vadd.f32 %v7075, %v7083
    %v7092 = vadd.f32 %v7076, %v7084
    %v7093 = vadd.f32 %v7077, %v7085
    %v7094 = vadd.f32 %v7078, %v7086
    %v7095 = vadd.f32 %v7079, %v7087
    %v7096 = vadd.f32 %v7080, %v7088
    %v7097 = vtanh.pop %v7089
    %v7098 = vtanh.pop %v7090
    %v7099 = vtanh.pop %v7091
    %v7100 = vtanh.pop %v7092
    %v7101 = vtanh.pop %v7093
    %v7102 = vtanh.pop %v7094
    %v7103 = vtanh.pop %v7095
    %v7104 = vtanh.pop %v7096
    %v7105 = vmul.f32 %v7034, %v7097
    %v7106 = vmul.f32 %v7036, %v7098
    %v7107 = vmul.f32 %v7038, %v7099
    %v7108 = vmul.f32 %v7040, %v7100
    %v7109 = vmul.f32 %v7042, %v7101
    %v7110 = vmul.f32 %v7044, %v7102
    %v7111 = vmul.f32 %v7046, %v7103
    %v7112 = vmul.f32 %v7048, %v7104
    %v7121 = vrot.slane %v7106, 7
    %v7122 = vrot.slane %v7107, 6
    %v7123 = vsel %vm2731, %v7122, %v7121
    %v7124 = vrot.slane %v7108, 5
    %v7125 = vsel %vm2734, %v7124, %v7123
    %v7126 = vrot.slane %v7109, 4
    %v7127 = vsel %vm2737, %v7126, %v7125
    %v7128 = vrot.slane %v7110, 3
    %v7129 = vsel %vm2740, %v7128, %v7127
    %v7130 = vrot.slane %v7111, 2
    %v7131 = vsel %vm2743, %v7130, %v7129
    %v7132 = vrot.slane %v7112, 1
    %v7133 = vsel %vm2746, %v7132, %v7131
    %v7137 = vrot.slane %v6678, 1
    %v7139 = vpack.c.bf16 %v7133, %v7105
    %v7140 = vpack.c.bf16 %v7137, %v7137
    %v7142 = vshrl.u32 %v7139, 16
    %v7144 = vrot.slane %v7142, 3
    %v7145 = vshll.u32 %v7139, 16
    %v7147 = vrot.slane %v7145, 4
    %v7148 = vor.u32 %v7144, %v7147
    %v7150 = vshrl.u32 %v7140, 16
    %v7152 = vrot.slane %v7150, 3
    %v7153 = vshll.u32 %v7140, 16
    %v7155 = vrot.slane %v7153, 4
    %v7156 = vor.u32 %v7152, %v7155
    %7159 = vmatprep.subr.bf16.mxu0 %v2996
    %7160 = vmatpush1.bf16.msra.mxu0 %v2995
    %7161 = vmatprep.subr.bf16.mxu0 %v2992
    %7162 = vmatpush1.bf16.msra.mxu0 %v2991
    %7163 = vmatprep.subr.bf16.mxu0 %v2988
    %7164 = vmatpush1.bf16.msra.mxu0 %v2987
    %7165 = vmatprep.subr.bf16.mxu0 %v2984
    %7166 = vmatpush1.bf16.msra.mxu0 %v2983
    %7167 = vmatprep.subr.bf16.mxu0 %v2980
    %7168 = vmatpush1.bf16.msra.mxu0 %v2979
    %7169 = vmatprep.subr.bf16.mxu0 %v2976
    %7170 = vmatpush1.bf16.msra.mxu0 %v2975
    %7171 = vmatprep.subr.bf16.mxu0 %v2972
    %7172 = vmatpush1.bf16.msra.mxu0 %v2971
    %7173 = vmatprep.subr.bf16.mxu0 %v2968
    %7174 = vmatpush1.bf16.msra.mxu0 %v2967
    %7175 = vmatprep.subr.bf16.mxu0 %v3028
    %7176 = vmatpush2.bf16.msra.mxu0 %v3027
    %7177 = vmatprep.subr.bf16.mxu0 %v3024
    %7178 = vmatpush2.bf16.msra.mxu0 %v3023
    %7179 = vmatprep.subr.bf16.mxu0 %v3020
    %7180 = vmatpush2.bf16.msra.mxu0 %v3019
    %7181 = vmatprep.subr.bf16.mxu0 %v3016
    %7182 = vmatpush2.bf16.msra.mxu0 %v3015
    %7183 = vmatprep.subr.bf16.mxu0 %v3012
    %7184 = vmatpush2.bf16.msra.mxu0 %v3011
    %7185 = vmatprep.subr.bf16.mxu0 %v3008
    %7186 = vmatpush2.bf16.msra.mxu0 %v3007
    %7187 = vmatprep.subr.bf16.mxu0 %v3004
    %7188 = vmatpush2.bf16.msra.mxu0 %v3003
    %7189 = vmatprep.subr.bf16.mxu0 %v3000
    %7190 = vmatpush2.bf16.msra.mxu0 %v2999
    %7191 = vmatprep.mubr.bf16.mxu0 %v7156
    %7192 = vmatmul.mubr.bf16.gmra.mxu0 %v7148
    %v7193 = vpop.f32.mrf.mxu0
    %v7194 = vadd.f32 %v2758, %v7193
    %v7195 = vpop.f32.mrf.mxu0
    %v7196 = vadd.f32 %v2762, %v7195
    %v7197 = vpop.f32.mrf.mxu0
    %v7198 = vpop.f32.mrf.mxu0
    %7199 = vdwg.mxu0
    %7200 = vmatprep.subr.bf16.mxu0 %v2998
    %7201 = vmatpush1.bf16.msra.mxu0 %v2997
    %7202 = vmatprep.subr.bf16.mxu0 %v2994
    %7203 = vmatpush1.bf16.msra.mxu0 %v2993
    %7204 = vmatprep.subr.bf16.mxu0 %v2990
    %7205 = vmatpush1.bf16.msra.mxu0 %v2989
    %7206 = vmatprep.subr.bf16.mxu0 %v2986
    %7207 = vmatpush1.bf16.msra.mxu0 %v2985
    %7208 = vmatprep.subr.bf16.mxu0 %v2982
    %7209 = vmatpush1.bf16.msra.mxu0 %v2981
    %7210 = vmatprep.subr.bf16.mxu0 %v2978
    %7211 = vmatpush1.bf16.msra.mxu0 %v2977
    %7212 = vmatprep.subr.bf16.mxu0 %v2974
    %7213 = vmatpush1.bf16.msra.mxu0 %v2973
    %7214 = vmatprep.subr.bf16.mxu0 %v2970
    %7215 = vmatpush1.bf16.msra.mxu0 %v2969
    %7216 = vmatprep.subr.bf16.mxu0 %v3030
    %7217 = vmatpush2.bf16.msra.mxu0 %v3029
    %7218 = vmatprep.subr.bf16.mxu0 %v3026
    %7219 = vmatpush2.bf16.msra.mxu0 %v3025
    %7220 = vmatprep.subr.bf16.mxu0 %v3022
    %7221 = vmatpush2.bf16.msra.mxu0 %v3021
    %7222 = vmatprep.subr.bf16.mxu0 %v3018
    %7223 = vmatpush2.bf16.msra.mxu0 %v3017
    %7224 = vmatprep.subr.bf16.mxu0 %v3014
    %7225 = vmatpush2.bf16.msra.mxu0 %v3013
    %7226 = vmatprep.subr.bf16.mxu0 %v3010
    %7227 = vmatpush2.bf16.msra.mxu0 %v3009
    %7228 = vmatprep.subr.bf16.mxu0 %v3006
    %7229 = vmatpush2.bf16.msra.mxu0 %v3005
    %7230 = vmatprep.subr.bf16.mxu0 %v3002
    %7231 = vmatpush2.bf16.msra.mxu0 %v3001
    %7232 = vmatprep.mubr.bf16.mxu0 %v7156
    %7233 = vmatmul.mubr.bf16.gmra.mxu0 %v7148
    %v7234 = vpop.f32.mrf.mxu0
    %v7235 = vadd.f32 %v2766, %v7234
    %v7236 = vpop.f32.mrf.mxu0
    %v7237 = vadd.f32 %v2770, %v7236
    %v7238 = vpop.f32.mrf.mxu0
    %v7239 = vpop.f32.mrf.mxu0
    %7240 = vdwg.mxu0
    %v7241 = vxor.u32 %v7194, 2147483648
    %v7242 = vmul.f32 %v7241, 1.442695
    %v7243 = vpow.pop %v7242
    %v7244 = vadd.f32 %v7243, 1.0
    %v7245 = vrcp.pop %v7244
    %v7246 = vmul.f32 1.0, %v7245
    %v7247 = vxor.u32 %v7196, 2147483648
    %v7248 = vmul.f32 %v7247, 1.442695
    %v7249 = vpow.pop %v7248
    %v7250 = vadd.f32 %v7249, 1.0
    %v7251 = vrcp.pop %v7250
    %v7252 = vmul.f32 1.0, %v7251
    %v7253 = vtanh.pop %v7235
    %v7254 = vxor.u32 %v7237, 2147483648
    %v7255 = vmul.f32 %v7254, 1.442695
    %v7256 = vpow.pop %v7255
    %v7257 = vadd.f32 %v7256, 1.0
    %v7258 = vrcp.pop %v7257
    %v7259 = vmul.f32 1.0, %v7258
    %v7260 = vmul.f32 %v7252, %v6676
    %v7261 = vmul.f32 %v7246, %v7253
    %v7262 = vadd.f32 %v7260, %v7261
    %v7263 = vtanh.pop %v7262
    %v7264 = vmul.f32 %v7259, %v7263
    %s7265 = smul.u32 4, 128
    %s7266 = smul.u32 %s7265, 1
    %s7267 = sshll.u32 %s7266, 4
    %7268 = dma.done %s233, %s7267
    %v7269 = vpack.c.bf16 %v3200, %v3200
    %v7270 = vpack.c.bf16 %v3784, %v3784
    %v7271 = vpack.c.bf16 %v4358, %v4358
    %v7272 = vpack.c.bf16 %v4944, %v4944
    %v7273 = vpack.c.bf16 %v5518, %v5518
    %v7274 = vpack.c.bf16 %v6104, %v6104
    %v7275 = vpack.c.bf16 %v6678, %v6678
    %v7276 = vpack.c.bf16 %v7264, %v7264
    %v7277 = vld [vmem:[#allocation4] sm:$0xf]
    %v7278 = vld [vmem:[#allocation4 + $0x4] sm:$0xf]
    %v7279 = vld [vmem:[#allocation4 + $0x8] sm:$0xf]
    %v7280 = vld [vmem:[#allocation4 + $0xc] sm:$0xf]
    %v7281 = vld [vmem:[#allocation4 + $0x10] sm:$0xf]
    %v7282 = vld [vmem:[#allocation4 + $0x14] sm:$0xf]
    %v7283 = vld [vmem:[#allocation4 + $0x18] sm:$0xf]
    %v7284 = vld [vmem:[#allocation4 + $0x1c] sm:$0xf]
    %v7285 = vld [vmem:[#allocation4 + $0x20] sm:$0xf]
    %v7286 = vld [vmem:[#allocation4 + $0x24] sm:$0xf]
    %v7287 = vld [vmem:[#allocation4 + $0x28] sm:$0xf]
    %v7288 = vld [vmem:[#allocation4 + $0x2c] sm:$0xf]
    %v7289 = vld [vmem:[#allocation4 + $0x30] sm:$0xf]
    %v7290 = vld [vmem:[#allocation4 + $0x34] sm:$0xf]
    %v7291 = vld [vmem:[#allocation4 + $0x38] sm:$0xf]
    %v7292 = vld [vmem:[#allocation4 + $0x3c] sm:$0xf]
    %v7293 = vld [vmem:[#allocation4 + $0x40] sm:$0xf]
    %v7294 = vld [vmem:[#allocation4 + $0x44] sm:$0xf]
    %v7295 = vld [vmem:[#allocation4 + $0x48] sm:$0xf]
    %v7296 = vld [vmem:[#allocation4 + $0x4c] sm:$0xf]
    %v7297 = vld [vmem:[#allocation4 + $0x50] sm:$0xf]
    %v7298 = vld [vmem:[#allocation4 + $0x54] sm:$0xf]
    %v7299 = vld [vmem:[#allocation4 + $0x58] sm:$0xf]
    %v7300 = vld [vmem:[#allocation4 + $0x5c] sm:$0xf]
    %v7301 = vld [vmem:[#allocation4 + $0x60] sm:$0xf]
    %v7302 = vld [vmem:[#allocation4 + $0x64] sm:$0xf]
    %v7303 = vld [vmem:[#allocation4 + $0x68] sm:$0xf]
    %v7304 = vld [vmem:[#allocation4 + $0x6c] sm:$0xf]
    %v7305 = vld [vmem:[#allocation4 + $0x70] sm:$0xf]
    %v7306 = vld [vmem:[#allocation4 + $0x74] sm:$0xf]
    %v7307 = vld [vmem:[#allocation4 + $0x78] sm:$0xf]
    %v7308 = vld [vmem:[#allocation4 + $0x7c] sm:$0xf]
    %v7309 = vld [vmem:[#allocation4 + $0x80] sm:$0xf]
    %v7310 = vld [vmem:[#allocation4 + $0x84] sm:$0xf]
    %v7311 = vld [vmem:[#allocation4 + $0x88] sm:$0xf]
    %v7312 = vld [vmem:[#allocation4 + $0x8c] sm:$0xf]
    %v7313 = vld [vmem:[#allocation4 + $0x90] sm:$0xf]
    %v7314 = vld [vmem:[#allocation4 + $0x94] sm:$0xf]
    %v7315 = vld [vmem:[#allocation4 + $0x98] sm:$0xf]
    %v7316 = vld [vmem:[#allocation4 + $0x9c] sm:$0xf]
    %v7317 = vld [vmem:[#allocation4 + $0xa0] sm:$0xf]
    %v7318 = vld [vmem:[#allocation4 + $0xa4] sm:$0xf]
    %v7319 = vld [vmem:[#allocation4 + $0xa8] sm:$0xf]
    %v7320 = vld [vmem:[#allocation4 + $0xac] sm:$0xf]
    %v7321 = vld [vmem:[#allocation4 + $0xb0] sm:$0xf]
    %v7322 = vld [vmem:[#allocation4 + $0xb4] sm:$0xf]
    %v7323 = vld [vmem:[#allocation4 + $0xb8] sm:$0xf]
    %v7324 = vld [vmem:[#allocation4 + $0xbc] sm:$0xf]
    %v7325 = vld [vmem:[#allocation4 + $0xc0] sm:$0xf]
    %v7326 = vld [vmem:[#allocation4 + $0xc4] sm:$0xf]
    %v7327 = vld [vmem:[#allocation4 + $0xc8] sm:$0xf]
    %v7328 = vld [vmem:[#allocation4 + $0xcc] sm:$0xf]
    %v7329 = vld [vmem:[#allocation4 + $0xd0] sm:$0xf]
    %v7330 = vld [vmem:[#allocation4 + $0xd4] sm:$0xf]
    %v7331 = vld [vmem:[#allocation4 + $0xd8] sm:$0xf]
    %v7332 = vld [vmem:[#allocation4 + $0xdc] sm:$0xf]
    %v7333 = vld [vmem:[#allocation4 + $0xe0] sm:$0xf]
    %v7334 = vld [vmem:[#allocation4 + $0xe4] sm:$0xf]
    %v7335 = vld [vmem:[#allocation4 + $0xe8] sm:$0xf]
    %v7336 = vld [vmem:[#allocation4 + $0xec] sm:$0xf]
    %v7337 = vld [vmem:[#allocation4 + $0xf0] sm:$0xf]
    %v7338 = vld [vmem:[#allocation4 + $0xf4] sm:$0xf]
    %v7339 = vld [vmem:[#allocation4 + $0xf8] sm:$0xf]
    %v7340 = vld [vmem:[#allocation4 + $0xfc] sm:$0xf]
    %v7341 = vld [vmem:[#allocation4 + $0x100] sm:$0xf]
    %v7342 = vld [vmem:[#allocation4 + $0x104] sm:$0xf]
    %v7343 = vld [vmem:[#allocation4 + $0x108] sm:$0xf]
    %v7344 = vld [vmem:[#allocation4 + $0x10c] sm:$0xf]
    %v7345 = vld [vmem:[#allocation4 + $0x110] sm:$0xf]
    %v7346 = vld [vmem:[#allocation4 + $0x114] sm:$0xf]
    %v7347 = vld [vmem:[#allocation4 + $0x118] sm:$0xf]
    %v7348 = vld [vmem:[#allocation4 + $0x11c] sm:$0xf]
    %v7349 = vld [vmem:[#allocation4 + $0x120] sm:$0xf]
    %v7350 = vld [vmem:[#allocation4 + $0x124] sm:$0xf]
    %v7351 = vld [vmem:[#allocation4 + $0x128] sm:$0xf]
    %v7352 = vld [vmem:[#allocation4 + $0x12c] sm:$0xf]
    %v7353 = vld [vmem:[#allocation4 + $0x130] sm:$0xf]
    %v7354 = vld [vmem:[#allocation4 + $0x134] sm:$0xf]
    %v7355 = vld [vmem:[#allocation4 + $0x138] sm:$0xf]
    %v7356 = vld [vmem:[#allocation4 + $0x13c] sm:$0xf]
    %v7357 = vld [vmem:[#allocation4 + $0x140] sm:$0xf]
    %v7358 = vld [vmem:[#allocation4 + $0x144] sm:$0xf]
    %v7359 = vld [vmem:[#allocation4 + $0x148] sm:$0xf]
    %v7360 = vld [vmem:[#allocation4 + $0x14c] sm:$0xf]
    %v7361 = vld [vmem:[#allocation4 + $0x150] sm:$0xf]
    %v7362 = vld [vmem:[#allocation4 + $0x154] sm:$0xf]
    %v7363 = vld [vmem:[#allocation4 + $0x158] sm:$0xf]
    %v7364 = vld [vmem:[#allocation4 + $0x15c] sm:$0xf]
    %v7365 = vld [vmem:[#allocation4 + $0x160] sm:$0xf]
    %v7366 = vld [vmem:[#allocation4 + $0x164] sm:$0xf]
    %v7367 = vld [vmem:[#allocation4 + $0x168] sm:$0xf]
    %v7368 = vld [vmem:[#allocation4 + $0x16c] sm:$0xf]
    %v7369 = vld [vmem:[#allocation4 + $0x170] sm:$0xf]
    %v7370 = vld [vmem:[#allocation4 + $0x174] sm:$0xf]
    %v7371 = vld [vmem:[#allocation4 + $0x178] sm:$0xf]
    %v7372 = vld [vmem:[#allocation4 + $0x17c] sm:$0xf]
    %v7373 = vld [vmem:[#allocation4 + $0x180] sm:$0xf]
    %v7374 = vld [vmem:[#allocation4 + $0x184] sm:$0xf]
    %v7375 = vld [vmem:[#allocation4 + $0x188] sm:$0xf]
    %v7376 = vld [vmem:[#allocation4 + $0x18c] sm:$0xf]
    %v7377 = vld [vmem:[#allocation4 + $0x190] sm:$0xf]
    %v7378 = vld [vmem:[#allocation4 + $0x194] sm:$0xf]
    %v7379 = vld [vmem:[#allocation4 + $0x198] sm:$0xf]
    %v7380 = vld [vmem:[#allocation4 + $0x19c] sm:$0xf]
    %v7381 = vld [vmem:[#allocation4 + $0x1a0] sm:$0xf]
    %v7382 = vld [vmem:[#allocation4 + $0x1a4] sm:$0xf]
    %v7383 = vld [vmem:[#allocation4 + $0x1a8] sm:$0xf]
    %v7384 = vld [vmem:[#allocation4 + $0x1ac] sm:$0xf]
    %v7385 = vld [vmem:[#allocation4 + $0x1b0] sm:$0xf]
    %v7386 = vld [vmem:[#allocation4 + $0x1b4] sm:$0xf]
    %v7387 = vld [vmem:[#allocation4 + $0x1b8] sm:$0xf]
    %v7388 = vld [vmem:[#allocation4 + $0x1bc] sm:$0xf]
    %v7389 = vld [vmem:[#allocation4 + $0x1c0] sm:$0xf]
    %v7390 = vld [vmem:[#allocation4 + $0x1c4] sm:$0xf]
    %v7391 = vld [vmem:[#allocation4 + $0x1c8] sm:$0xf]
    %v7392 = vld [vmem:[#allocation4 + $0x1cc] sm:$0xf]
    %v7393 = vld [vmem:[#allocation4 + $0x1d0] sm:$0xf]
    %v7394 = vld [vmem:[#allocation4 + $0x1d4] sm:$0xf]
    %v7395 = vld [vmem:[#allocation4 + $0x1d8] sm:$0xf]
    %v7396 = vld [vmem:[#allocation4 + $0x1dc] sm:$0xf]
    %v7397 = vld [vmem:[#allocation4 + $0x1e0] sm:$0xf]
    %v7398 = vld [vmem:[#allocation4 + $0x1e4] sm:$0xf]
    %v7399 = vld [vmem:[#allocation4 + $0x1e8] sm:$0xf]
    %v7400 = vld [vmem:[#allocation4 + $0x1ec] sm:$0xf]
    %v7401 = vld [vmem:[#allocation4 + $0x1f0] sm:$0xf]
    %v7402 = vld [vmem:[#allocation4 + $0x1f4] sm:$0xf]
    %v7403 = vld [vmem:[#allocation4 + $0x1f8] sm:$0xf]
    %v7404 = vld [vmem:[#allocation4 + $0x1fc] sm:$0xf]
    %v7405 = vld [vmem:[%s7] sm:$0x1]
    %v7407 = vlaneseq
    %v7408 = vshrl.u32 %v7407, 7
    %v7409 = vsub.s32 0, %v7408
    %v7410 = vrot.slane %v7405, %v7409
    %v7540 = vunpack.c.l.b16 %v7277
    %v7541 = vunpack.c.l.b16 %v7278
    %v7542 = vunpack.c.l.b16 %v7279
    %v7543 = vunpack.c.l.b16 %v7280
    %v7544 = vunpack.c.l.b16 %v7281
    %v7545 = vunpack.c.l.b16 %v7282
    %v7546 = vunpack.c.l.b16 %v7283
    %v7547 = vunpack.c.l.b16 %v7284
    %v7548 = vunpack.c.l.b16 %v7285
    %v7549 = vunpack.c.l.b16 %v7286
    %v7550 = vunpack.c.l.b16 %v7287
    %v7551 = vunpack.c.l.b16 %v7288
    %v7552 = vunpack.c.l.b16 %v7289
    %v7553 = vunpack.c.l.b16 %v7290
    %v7554 = vunpack.c.l.b16 %v7291
    %v7555 = vunpack.c.l.b16 %v7292
    %v7556 = vunpack.c.l.b16 %v7293
    %v7557 = vunpack.c.l.b16 %v7294
    %v7558 = vunpack.c.l.b16 %v7295
    %v7559 = vunpack.c.l.b16 %v7296
    %v7560 = vunpack.c.l.b16 %v7297
    %v7561 = vunpack.c.l.b16 %v7298
    %v7562 = vunpack.c.l.b16 %v7299
    %v7563 = vunpack.c.l.b16 %v7300
    %v7564 = vunpack.c.l.b16 %v7301
    %v7565 = vunpack.c.l.b16 %v7302
    %v7566 = vunpack.c.l.b16 %v7303
    %v7567 = vunpack.c.l.b16 %v7304
    %v7568 = vunpack.c.l.b16 %v7305
    %v7569 = vunpack.c.l.b16 %v7306
    %v7570 = vunpack.c.l.b16 %v7307
    %v7571 = vunpack.c.l.b16 %v7308
    %v7572 = vunpack.c.l.b16 %v7309
    %v7573 = vunpack.c.l.b16 %v7310
    %v7574 = vunpack.c.l.b16 %v7311
    %v7575 = vunpack.c.l.b16 %v7312
    %v7576 = vunpack.c.l.b16 %v7313
    %v7577 = vunpack.c.l.b16 %v7314
    %v7578 = vunpack.c.l.b16 %v7315
    %v7579 = vunpack.c.l.b16 %v7316
    %v7580 = vunpack.c.l.b16 %v7317
    %v7581 = vunpack.c.l.b16 %v7318
    %v7582 = vunpack.c.l.b16 %v7319
    %v7583 = vunpack.c.l.b16 %v7320
    %v7584 = vunpack.c.l.b16 %v7321
    %v7585 = vunpack.c.l.b16 %v7322
    %v7586 = vunpack.c.l.b16 %v7323
    %v7587 = vunpack.c.l.b16 %v7324
    %v7588 = vunpack.c.l.b16 %v7325
    %v7589 = vunpack.c.l.b16 %v7326
    %v7590 = vunpack.c.l.b16 %v7327
    %v7591 = vunpack.c.l.b16 %v7328
    %v7592 = vunpack.c.l.b16 %v7329
    %v7593 = vunpack.c.l.b16 %v7330
    %v7594 = vunpack.c.l.b16 %v7331
    %v7595 = vunpack.c.l.b16 %v7332
    %v7596 = vunpack.c.l.b16 %v7333
    %v7597 = vunpack.c.l.b16 %v7334
    %v7598 = vunpack.c.l.b16 %v7335
    %v7599 = vunpack.c.l.b16 %v7336
    %v7600 = vunpack.c.l.b16 %v7337
    %v7601 = vunpack.c.l.b16 %v7338
    %v7602 = vunpack.c.l.b16 %v7339
    %v7603 = vunpack.c.l.b16 %v7340
    %v7604 = vunpack.c.l.b16 %v7341
    %v7605 = vunpack.c.l.b16 %v7342
    %v7606 = vunpack.c.l.b16 %v7343
    %v7607 = vunpack.c.l.b16 %v7344
    %v7608 = vunpack.c.l.b16 %v7345
    %v7609 = vunpack.c.l.b16 %v7346
    %v7610 = vunpack.c.l.b16 %v7347
    %v7611 = vunpack.c.l.b16 %v7348
    %v7612 = vunpack.c.l.b16 %v7349
    %v7613 = vunpack.c.l.b16 %v7350
    %v7614 = vunpack.c.l.b16 %v7351
    %v7615 = vunpack.c.l.b16 %v7352
    %v7616 = vunpack.c.l.b16 %v7353
    %v7617 = vunpack.c.l.b16 %v7354
    %v7618 = vunpack.c.l.b16 %v7355
    %v7619 = vunpack.c.l.b16 %v7356
    %v7620 = vunpack.c.l.b16 %v7357
    %v7621 = vunpack.c.l.b16 %v7358
    %v7622 = vunpack.c.l.b16 %v7359
    %v7623 = vunpack.c.l.b16 %v7360
    %v7624 = vunpack.c.l.b16 %v7361
    %v7625 = vunpack.c.l.b16 %v7362
    %v7626 = vunpack.c.l.b16 %v7363
    %v7627 = vunpack.c.l.b16 %v7364
    %v7628 = vunpack.c.l.b16 %v7365
    %v7629 = vunpack.c.l.b16 %v7366
    %v7630 = vunpack.c.l.b16 %v7367
    %v7631 = vunpack.c.l.b16 %v7368
    %v7632 = vunpack.c.l.b16 %v7369
    %v7633 = vunpack.c.l.b16 %v7370
    %v7634 = vunpack.c.l.b16 %v7371
    %v7635 = vunpack.c.l.b16 %v7372
    %v7636 = vunpack.c.l.b16 %v7373
    %v7637 = vunpack.c.l.b16 %v7374
    %v7638 = vunpack.c.l.b16 %v7375
    %v7639 = vunpack.c.l.b16 %v7376
    %v7640 = vunpack.c.l.b16 %v7377
    %v7641 = vunpack.c.l.b16 %v7378
    %v7642 = vunpack.c.l.b16 %v7379
    %v7643 = vunpack.c.l.b16 %v7380
    %v7644 = vunpack.c.l.b16 %v7381
    %v7645 = vunpack.c.l.b16 %v7382
    %v7646 = vunpack.c.l.b16 %v7383
    %v7647 = vunpack.c.l.b16 %v7384
    %v7648 = vunpack.c.l.b16 %v7385
    %v7649 = vunpack.c.l.b16 %v7386
    %v7650 = vunpack.c.l.b16 %v7387
    %v7651 = vunpack.c.l.b16 %v7388
    %v7652 = vunpack.c.l.b16 %v7389
    %v7653 = vunpack.c.l.b16 %v7390
    %v7654 = vunpack.c.l.b16 %v7391
    %v7655 = vunpack.c.l.b16 %v7392
    %v7656 = vunpack.c.l.b16 %v7393
    %v7657 = vunpack.c.l.b16 %v7394
    %v7658 = vunpack.c.l.b16 %v7395
    %v7659 = vunpack.c.l.b16 %v7396
    %v7660 = vunpack.c.l.b16 %v7397
    %v7661 = vunpack.c.l.b16 %v7398
    %v7662 = vunpack.c.l.b16 %v7399
    %v7663 = vunpack.c.l.b16 %v7400
    %v7664 = vunpack.c.l.b16 %v7401
    %v7665 = vunpack.c.l.b16 %v7402
    %v7666 = vunpack.c.l.b16 %v7403
    %v7667 = vunpack.c.l.b16 %v7404
    %v7668 = vpack.c.b16 %v7541, %v7540
    %v7669 = vpack.c.b16 %v7543, %v7542
    %v7670 = vpack.c.b16 %v7545, %v7544
    %v7671 = vpack.c.b16 %v7547, %v7546
    %v7672 = vpack.c.b16 %v7549, %v7548
    %v7673 = vpack.c.b16 %v7551, %v7550
    %v7674 = vpack.c.b16 %v7553, %v7552
    %v7675 = vpack.c.b16 %v7555, %v7554
    %v7676 = vpack.c.b16 %v7557, %v7556
    %v7677 = vpack.c.b16 %v7559, %v7558
    %v7678 = vpack.c.b16 %v7561, %v7560
    %v7679 = vpack.c.b16 %v7563, %v7562
    %v7680 = vpack.c.b16 %v7565, %v7564
    %v7681 = vpack.c.b16 %v7567, %v7566
    %v7682 = vpack.c.b16 %v7569, %v7568
    %v7683 = vpack.c.b16 %v7571, %v7570
    %v7684 = vpack.c.b16 %v7573, %v7572
    %v7685 = vpack.c.b16 %v7575, %v7574
    %v7686 = vpack.c.b16 %v7577, %v7576
    %v7687 = vpack.c.b16 %v7579, %v7578
    %v7688 = vpack.c.b16 %v7581, %v7580
    %v7689 = vpack.c.b16 %v7583, %v7582
    %v7690 = vpack.c.b16 %v7585, %v7584
    %v7691 = vpack.c.b16 %v7587, %v7586
    %v7692 = vpack.c.b16 %v7589, %v7588
    %v7693 = vpack.c.b16 %v7591, %v7590
    %v7694 = vpack.c.b16 %v7593, %v7592
    %v7695 = vpack.c.b16 %v7595, %v7594
    %v7696 = vpack.c.b16 %v7597, %v7596
    %v7697 = vpack.c.b16 %v7599, %v7598
    %v7698 = vpack.c.b16 %v7601, %v7600
    %v7699 = vpack.c.b16 %v7603, %v7602
    %v7700 = vpack.c.b16 %v7605, %v7604
    %v7701 = vpack.c.b16 %v7607, %v7606
    %v7702 = vpack.c.b16 %v7609, %v7608
    %v7703 = vpack.c.b16 %v7611, %v7610
    %v7704 = vpack.c.b16 %v7613, %v7612
    %v7705 = vpack.c.b16 %v7615, %v7614
    %v7706 = vpack.c.b16 %v7617, %v7616
    %v7707 = vpack.c.b16 %v7619, %v7618
    %v7708 = vpack.c.b16 %v7621, %v7620
    %v7709 = vpack.c.b16 %v7623, %v7622
    %v7710 = vpack.c.b16 %v7625, %v7624
    %v7711 = vpack.c.b16 %v7627, %v7626
    %v7712 = vpack.c.b16 %v7629, %v7628
    %v7713 = vpack.c.b16 %v7631, %v7630
    %v7714 = vpack.c.b16 %v7633, %v7632
    %v7715 = vpack.c.b16 %v7635, %v7634
    %v7716 = vpack.c.b16 %v7637, %v7636
    %v7717 = vpack.c.b16 %v7639, %v7638
    %v7718 = vpack.c.b16 %v7641, %v7640
    %v7719 = vpack.c.b16 %v7643, %v7642
    %v7720 = vpack.c.b16 %v7645, %v7644
    %v7721 = vpack.c.b16 %v7647, %v7646
    %v7722 = vpack.c.b16 %v7649, %v7648
    %v7723 = vpack.c.b16 %v7651, %v7650
    %v7724 = vpack.c.b16 %v7653, %v7652
    %v7725 = vpack.c.b16 %v7655, %v7654
    %v7726 = vpack.c.b16 %v7657, %v7656
    %v7727 = vpack.c.b16 %v7659, %v7658
    %v7728 = vpack.c.b16 %v7661, %v7660
    %v7729 = vpack.c.b16 %v7663, %v7662
    %v7730 = vpack.c.b16 %v7665, %v7664
    %v7731 = vpack.c.b16 %v7667, %v7666
    %7796 = vmatprep.subr.bf16.mxu0 0
    %7797 = vmatpush1.bf16.msra.mxu0 %v7675
    %7798 = vmatprep.subr.bf16.mxu0 0
    %7799 = vmatpush1.bf16.msra.mxu0 %v7674
    %7800 = vmatprep.subr.bf16.mxu0 0
    %7801 = vmatpush1.bf16.msra.mxu0 %v7673
    %7802 = vmatprep.subr.bf16.mxu0 0
    %7803 = vmatpush1.bf16.msra.mxu0 %v7672
    %7804 = vmatprep.subr.bf16.mxu0 0
    %7805 = vmatpush1.bf16.msra.mxu0 %v7671
    %7806 = vmatprep.subr.bf16.mxu0 0
    %7807 = vmatpush1.bf16.msra.mxu0 %v7670
    %7808 = vmatprep.subr.bf16.mxu0 0
    %7809 = vmatpush1.bf16.msra.mxu0 %v7669
    %7810 = vmatprep.subr.bf16.mxu0 0
    %7811 = vmatpush1.bf16.msra.mxu0 %v7668
    %7812 = vmatprep.subr.bf16.mxu0 0
    %7813 = vmatpush2.bf16.msra.mxu0 %v7683
    %7814 = vmatprep.subr.bf16.mxu0 0
    %7815 = vmatpush2.bf16.msra.mxu0 %v7682
    %7816 = vmatprep.subr.bf16.mxu0 0
    %7817 = vmatpush2.bf16.msra.mxu0 %v7681
    %7818 = vmatprep.subr.bf16.mxu0 0
    %7819 = vmatpush2.bf16.msra.mxu0 %v7680
    %7820 = vmatprep.subr.bf16.mxu0 0
    %7821 = vmatpush2.bf16.msra.mxu0 %v7679
    %7822 = vmatprep.subr.bf16.mxu0 0
    %7823 = vmatpush2.bf16.msra.mxu0 %v7678
    %7824 = vmatprep.subr.bf16.mxu0 0
    %7825 = vmatpush2.bf16.msra.mxu0 %v7677
    %7826 = vmatprep.subr.bf16.mxu0 0
    %7827 = vmatpush2.bf16.msra.mxu0 %v7676
    %7828 = vmatprep.mubr.bf16.mxu0 %v7270
    %7829 = vmatmul.mubr.bf16.gmra.mxu0 %v7269
    %v7830 = vpop.f32.mrf.mxu0
    %v7831 = vadd.f32 %v7410, %v7830
    %v7832 = vpop.f32.mrf.mxu0
    %v7833 = vpop.f32.mrf.mxu0
    %v7834 = vpop.f32.mrf.mxu0
    %7835 = vdwg.mxu0
    %7836 = vmatprep.subr.bf16.mxu0 0
    %7837 = vmatpush1.bf16.msra.mxu0 %v7691
    %7838 = vmatprep.subr.bf16.mxu0 0
    %7839 = vmatpush1.bf16.msra.mxu0 %v7690
    %7840 = vmatprep.subr.bf16.mxu0 0
    %7841 = vmatpush1.bf16.msra.mxu0 %v7689
    %7842 = vmatprep.subr.bf16.mxu0 0
    %7843 = vmatpush1.bf16.msra.mxu0 %v7688
    %7844 = vmatprep.subr.bf16.mxu0 0
    %7845 = vmatpush1.bf16.msra.mxu0 %v7687
    %7846 = vmatprep.subr.bf16.mxu0 0
    %7847 = vmatpush1.bf16.msra.mxu0 %v7686
    %7848 = vmatprep.subr.bf16.mxu0 0
    %7849 = vmatpush1.bf16.msra.mxu0 %v7685
    %7850 = vmatprep.subr.bf16.mxu0 0
    %7851 = vmatpush1.bf16.msra.mxu0 %v7684
    %7852 = vmatprep.subr.bf16.mxu0 0
    %7853 = vmatpush2.bf16.msra.mxu0 %v7699
    %7854 = vmatprep.subr.bf16.mxu0 0
    %7855 = vmatpush2.bf16.msra.mxu0 %v7698
    %7856 = vmatprep.subr.bf16.mxu0 0
    %7857 = vmatpush2.bf16.msra.mxu0 %v7697
    %7858 = vmatprep.subr.bf16.mxu0 0
    %7859 = vmatpush2.bf16.msra.mxu0 %v7696
    %7860 = vmatprep.subr.bf16.mxu0 0
    %7861 = vmatpush2.bf16.msra.mxu0 %v7695
    %7862 = vmatprep.subr.bf16.mxu0 0
    %7863 = vmatpush2.bf16.msra.mxu0 %v7694
    %7864 = vmatprep.subr.bf16.mxu0 0
    %7865 = vmatpush2.bf16.msra.mxu0 %v7693
    %7866 = vmatprep.subr.bf16.mxu0 0
    %7867 = vmatpush2.bf16.msra.mxu0 %v7692
    %7868 = vmatprep.mubr.bf16.mxu0 %v7272
    %7869 = vmatmul.mubr.bf16.gmra.mxu0 %v7271
    %v7870 = vpop.f32.mrf.mxu0
    %v7871 = vadd.f32 %v7831, %v7870
    %v7872 = vpop.f32.mrf.mxu0
    %v7873 = vpop.f32.mrf.mxu0
    %v7874 = vpop.f32.mrf.mxu0
    %7875 = vdwg.mxu0
    %7876 = vmatprep.subr.bf16.mxu0 0
    %7877 = vmatpush1.bf16.msra.mxu0 %v7707
    %7878 = vmatprep.subr.bf16.mxu0 0
    %7879 = vmatpush1.bf16.msra.mxu0 %v7706
    %7880 = vmatprep.subr.bf16.mxu0 0
    %7881 = vmatpush1.bf16.msra.mxu0 %v7705
    %7882 = vmatprep.subr.bf16.mxu0 0
    %7883 = vmatpush1.bf16.msra.mxu0 %v7704
    %7884 = vmatprep.subr.bf16.mxu0 0
    %7885 = vmatpush1.bf16.msra.mxu0 %v7703
    %7886 = vmatprep.subr.bf16.mxu0 0
    %7887 = vmatpush1.bf16.msra.mxu0 %v7702
    %7888 = vmatprep.subr.bf16.mxu0 0
    %7889 = vmatpush1.bf16.msra.mxu0 %v7701
    %7890 = vmatprep.subr.bf16.mxu0 0
    %7891 = vmatpush1.bf16.msra.mxu0 %v7700
    %7892 = vmatprep.subr.bf16.mxu0 0
    %7893 = vmatpush2.bf16.msra.mxu0 %v7715
    %7894 = vmatprep.subr.bf16.mxu0 0
    %7895 = vmatpush2.bf16.msra.mxu0 %v7714
    %7896 = vmatprep.subr.bf16.mxu0 0
    %7897 = vmatpush2.bf16.msra.mxu0 %v7713
    %7898 = vmatprep.subr.bf16.mxu0 0
    %7899 = vmatpush2.bf16.msra.mxu0 %v7712
    %7900 = vmatprep.subr.bf16.mxu0 0
    %7901 = vmatpush2.bf16.msra.mxu0 %v7711
    %7902 = vmatprep.subr.bf16.mxu0 0
    %7903 = vmatpush2.bf16.msra.mxu0 %v7710
    %7904 = vmatprep.subr.bf16.mxu0 0
    %7905 = vmatpush2.bf16.msra.mxu0 %v7709
    %7906 = vmatprep.subr.bf16.mxu0 0
    %7907 = vmatpush2.bf16.msra.mxu0 %v7708
    %7908 = vmatprep.mubr.bf16.mxu0 %v7274
    %7909 = vmatmul.mubr.bf16.gmra.mxu0 %v7273
    %v7910 = vpop.f32.mrf.mxu0
    %v7911 = vadd.f32 %v7871, %v7910
    %v7912 = vpop.f32.mrf.mxu0
    %v7913 = vpop.f32.mrf.mxu0
    %v7914 = vpop.f32.mrf.mxu0
    %7915 = vdwg.mxu0
    %7916 = vmatprep.subr.bf16.mxu0 0
    %7917 = vmatpush1.bf16.msra.mxu0 %v7723
    %7918 = vmatprep.subr.bf16.mxu0 0
    %7919 = vmatpush1.bf16.msra.mxu0 %v7722
    %7920 = vmatprep.subr.bf16.mxu0 0
    %7921 = vmatpush1.bf16.msra.mxu0 %v7721
    %7922 = vmatprep.subr.bf16.mxu0 0
    %7923 = vmatpush1.bf16.msra.mxu0 %v7720
    %7924 = vmatprep.subr.bf16.mxu0 0
    %7925 = vmatpush1.bf16.msra.mxu0 %v7719
    %7926 = vmatprep.subr.bf16.mxu0 0
    %7927 = vmatpush1.bf16.msra.mxu0 %v7718
    %7928 = vmatprep.subr.bf16.mxu0 0
    %7929 = vmatpush1.bf16.msra.mxu0 %v7717
    %7930 = vmatprep.subr.bf16.mxu0 0
    %7931 = vmatpush1.bf16.msra.mxu0 %v7716
    %7932 = vmatprep.subr.bf16.mxu0 0
    %7933 = vmatpush2.bf16.msra.mxu0 %v7731
    %7934 = vmatprep.subr.bf16.mxu0 0
    %7935 = vmatpush2.bf16.msra.mxu0 %v7730
    %7936 = vmatprep.subr.bf16.mxu0 0
    %7937 = vmatpush2.bf16.msra.mxu0 %v7729
    %7938 = vmatprep.subr.bf16.mxu0 0
    %7939 = vmatpush2.bf16.msra.mxu0 %v7728
    %7940 = vmatprep.subr.bf16.mxu0 0
    %7941 = vmatpush2.bf16.msra.mxu0 %v7727
    %7942 = vmatprep.subr.bf16.mxu0 0
    %7943 = vmatpush2.bf16.msra.mxu0 %v7726
    %7944 = vmatprep.subr.bf16.mxu0 0
    %7945 = vmatpush2.bf16.msra.mxu0 %v7725
    %7946 = vmatprep.subr.bf16.mxu0 0
    %7947 = vmatpush2.bf16.msra.mxu0 %v7724
    %7948 = vmatprep.mubr.bf16.mxu0 %v7276
    %7949 = vmatmul.mubr.bf16.gmra.mxu0 %v7275
    %v7950 = vpop.f32.mrf.mxu0
    %v7951 = vadd.f32 %v7911, %v7950
    %v7952 = vpop.f32.mrf.mxu0
    %v7953 = vpop.f32.mrf.mxu0
    %v7954 = vpop.f32.mrf.mxu0
    %7955 = vdwg.mxu0
    %vm7956 = vcmask 15360
    %7957 = vst.msk [vmem:[%s8] sm:$0xff] %vm7956, %v7951
    // Predicated region
    $region102: #{tpu_custom_call.1} parent=1 // pred_check
      _
    $region103: #{tpu_custom_call.1} parent=1 // pred_check_branch
      %7959 = sbr.rel (0) target = $region105
    $region104: #{tpu_custom_call.1} parent=1 // pred_region
      _
    $region105: #{tpu_custom_call.1} parent=1 // pred_fallthru
      _
    // Predicated region
    $region106: #{tpu_custom_call.1} parent=1 // pred_check
      _
    $region107: #{tpu_custom_call.1} parent=1 // pred_check_branch
      %7961 = sbr.rel (0) target = $region109
    $region108: #{tpu_custom_call.1} parent=1 // pred_region
      _
    $region109: #{tpu_custom_call.1} parent=1 // pred_fallthru
      _
    %7962 = vsyncpa [#allocation7], 1
    %7963 = vsyncpa [#allocation9], 1
  %7964 = vsyncmov [#allocation5]
  %s7965 = vpop.sfrf %7964
  %p7966 = scmp.eq.s32.totalorder %s7965, 0
  %p7967 = pneg %p7966
  %7969 = shalt.err (%p7967)
  %s7970 = scalar_lea.sflag [#allocation5], 1
  %7971 = vsyncmov %s7970
  %s7972 = vpop.sfrf %7971
  %p7973 = scmp.eq.s32.totalorder %s7972, 0
  %p7974 = pneg %p7973
  %7976 = shalt.err (%p7974)
  %s7977 = scalar_lea.sflag [#allocation5], 2
  %7978 = vsyncmov %s7977
  %s7979 = vpop.sfrf %7978
  %p7980 = scmp.eq.s32.totalorder %s7979, 0
  %p7981 = pneg %p7980
  %7983 = shalt.err (%p7981)

</llo_original>
